<compile_context>
chip_gen: v7x
topology: tpu7x:2x2x1
jax: 0.10.0
libtpu: 0.0.40
codegen_flags: <defaults>
</compile_context>

<pallas_src>
import functools

import jax
import jax.numpy as jnp
from jax.experimental import pallas as pl
from jax.experimental.pallas import tpu as pltpu

# ----------------------------- configuration -------------------------------
IMAGE_SIZE = 4
PATCH_SIZE = 1
NUM_CLASSES = 10
NUM_FRAMES = 2
DIM = 32
DEPTH = 2
HEADS = 4
DIM_HEAD = 8
IN_CHANNELS = 8          # == patch_dim because PATCH_SIZE == 1
SCALE_DIM = 4
BATCH = 2

MLP_DIM = DIM * SCALE_DIM                      # 128 (lane-dense)
INNER = HEADS * DIM_HEAD                       # 32
NUM_PATCHES = (IMAGE_SIZE // PATCH_SIZE) ** 2  # 16
TOKENS = NUM_FRAMES * NUM_PATCHES              # 32 patch tokens per batch elem
SEQ = TOKENS + 1                               # 33 (includes cls token)
SEQ_PAD = 40                                   # next multiple of 8 sublanes
HEAD_PAD = 128                                 # lane-dense logits width
EPS = 1e-5
ATTN_SCALE = DIM_HEAD ** -0.5


# ------------------------------ kernel helpers ------------------------------
def _layernorm(x, gamma, beta):
    """PyTorch-style LayerNorm over the last axis (biased variance), f32."""
    mu = jnp.mean(x, axis=-1, keepdims=True)
    var = jnp.mean((x - mu) ** 2, axis=-1, keepdims=True)
    return (x - mu) * jax.lax.rsqrt(var + EPS) * gamma + beta


# ------------------------------- fused kernel -------------------------------
def fused_vanilla_tr_kernel(
    batch,
    tokens_ref, w_patch_ref, tok_bias_ref, misc_ref, lvec_ref,
    w_qkv_ref, w_out_ref, w1_ref, w2_ref, w_head_ref,
    o_ref,
):
    f32 = jnp.float32
    bf16 = jnp.bfloat16

    # ---- unpack coalesced small-parameter slabs ----
    misc = misc_ref[...]                       # (8, 128) f32
    cls_row = misc[0:1, :DIM]                  # cls_token + pos[0]
    fln_g, fln_b = misc[1:2, :DIM], misc[2:3, :DIM]
    hln_g, hln_b = misc[3:4, :DIM], misc[4:5, :DIM]
    b_head = misc[5:6, :]                      # (1, 128), zero-padded past 10

    # ---- patch embedding: (B*TOKENS, C) @ (C, DIM) ----
    emb = jnp.dot(tokens_ref[...].astype(bf16), w_patch_ref[...],
                  preferred_element_type=f32)          # (B*TOKENS, DIM)

    # ---- assemble (B*SEQ_PAD, DIM); per batch [cls ; tokens+bias ; zero pad] ----
    tok_bias = tok_bias_ref[...]                       # (TOKENS, DIM)
    zero_pad = jnp.zeros((SEQ_PAD - SEQ, DIM), f32)
    pieces = []
    for b in range(batch):                             # static, B=2
        pieces.append(cls_row)
        pieces.append(emb[b * TOKENS:(b + 1) * TOKENS, :] + tok_bias)
        pieces.append(zero_pad)
    seq = jnp.concatenate(pieces, axis=0)              # (B*SEQ_PAD, DIM)

    # padded key columns (>= SEQ) masked out of every softmax
    col = jax.lax.broadcasted_iota(jnp.int32, (1, SEQ_PAD), 1)
    key_mask = jnp.where(col < SEQ, 0.0, -1e30).astype(f32)   # (1, SEQ_PAD)

    for l in range(DEPTH):                             # static unrolled depth loop
        lv = lvec_ref[l]                               # (8, MLP_DIM) f32
        ln1_g, ln1_b = lv[0:1, :DIM], lv[1:2, :DIM]
        b_out = lv[2:3, :DIM]
        ln2_g, ln2_b = lv[3:4, :DIM], lv[4:5, :DIM]
        b2 = lv[5:6, :DIM]
        b1 = lv[6:7, :]                                # (1, MLP_DIM)

        # ===== PreNorm(Attention) + residual =====
        hn = _layernorm(seq, ln1_g, ln1_b)
        # fused QKV projection: one (rows, DIM) @ (DIM, 3*INNER) matmul.
        qkv = jnp.dot(hn.astype(bf16), w_qkv_ref[l],
                      preferred_element_type=f32)      # (rows, 3*INNER)

        ctx_pieces = []
        for b in range(batch):                         # per-batch softmax, unrolled
            r0 = b * SEQ_PAD                           # sublane-aligned offset
            head_ctx = []
            for h in range(HEADS):                     # static, 8-lane slices
                c0 = h * DIM_HEAD
                q = qkv[r0:r0 + SEQ_PAD, c0:c0 + DIM_HEAD]
                k = qkv[r0:r0 + SEQ_PAD, INNER + c0:INNER + c0 + DIM_HEAD]
                v = qkv[r0:r0 + SEQ_PAD, 2 * INNER + c0:2 * INNER + c0 + DIM_HEAD]
                # attention scale already folded into the Q weight columns
                s = jax.lax.dot_general(
                    q.astype(bf16), k.astype(bf16),
                    dimension_numbers=(((1,), (1,)), ((), ())),
                    preferred_element_type=f32)        # (SEQ_PAD, SEQ_PAD)
                s = s + key_mask
                s = s - jnp.max(s, axis=-1, keepdims=True)
                e = jnp.exp(s)
                # TODO(synk): approx reciprocal (~1e-3 rel err) vs exact divide.
                attn = e * pl.reciprocal(jnp.sum(e, axis=-1, keepdims=True),
                                         approx=True)
                head_ctx.append(jnp.dot(attn.astype(bf16), v.astype(bf16),
                                        preferred_element_type=f32))  # (SEQ_PAD, DH)
            ctx_pieces.append(jnp.concatenate(head_ctx, axis=1))      # (SEQ_PAD, INNER)
        ctx = jnp.concatenate(ctx_pieces, axis=0)      # (rows, INNER)

        # out-projection: concat(heads) @ W_out as one matmul
        seq = seq + jnp.dot(ctx.astype(bf16), w_out_ref[l],
                            preferred_element_type=f32) + b_out

        # ===== PreNorm(FeedForward) + residual =====
        hn = _layernorm(seq, ln2_g, ln2_b)
        h1 = jnp.dot(hn.astype(bf16), w1_ref[l], preferred_element_type=f32) + b1
        # TODO(synk): torch nn.GELU uses the exact erf form; tanh approximation here.
        h1 = jax.nn.gelu(h1, approximate=True)
        ff = jnp.dot(h1.astype(bf16), w2_ref[l], preferred_element_type=f32) + b2
        seq = seq + ff

    # ---- final LN + cls pooling + mlp head (lane-dense, padded to 128) ----
    # LayerNorm is row-wise, so pooling the cls row first == norm-then-pool.
    cls = jnp.concatenate(
        [seq[b * SEQ_PAD:b * SEQ_PAD + 1, :] for b in range(batch)], axis=0)
    cls = _layernorm(cls, fln_g, fln_b)                # Transformer.norm
    cls = _layernorm(cls, hln_g, hln_b)                # mlp_head LayerNorm
    o_ref[...] = (jnp.dot(cls.astype(bf16), w_head_ref[...],
                          preferred_element_type=f32) + b_head)


# ------------------------------ pallas_call glue -----------------------------
def vanilla_tr_forward(x, prep):
    # x: (B, T, C, H, W) float32
    B, T, C, H, W = x.shape
    # Rearrange 'b t c h w -> b t (h w) c' -> flat (B*T*H*W, C) token rows.
    tokens = jnp.transpose(x, (0, 1, 3, 4, 2)).reshape(B * T * H * W, C)
    args = (
        tokens, prep["w_patch"], prep["tok_bias"], prep["misc"], prep["lvec"],
        prep["w_qkv"], prep["w_out"], prep["w1"], prep["w2"], prep["w_head"],
    )
    logits_padded = pl.pallas_call(
        functools.partial(fused_vanilla_tr_kernel, B),
        out_shape=jax.ShapeDtypeStruct((B, HEAD_PAD), jnp.float32),
        in_specs=[pl.BlockSpec(memory_space=pltpu.MemorySpace.VMEM)] * len(args),
        out_specs=pl.BlockSpec(memory_space=pltpu.MemorySpace.VMEM),
    )(*args)
    return logits_padded[:, :NUM_CLASSES]


# ------------------------------- parameter init ------------------------------
def init_params(key):
    """PyTorch-layout parameters (same structure as the nn.Module)."""
    keys = iter(jax.random.split(key, 8 + DEPTH * 8))

    def nrm(shape, scale=0.02):
        return scale * jax.random.normal(next(keys), shape, dtype=jnp.float32)

    params = {
        "w_patch": nrm((IN_CHANNELS, DIM)),
        "b_patch": nrm((1, DIM)),
        "cls_token": nrm((1, 1, DIM), scale=1.0),
        "pos_embedding": nrm((1, SEQ, DIM), scale=1.0),
        "final_ln_g": jnp.ones((1, DIM), jnp.float32),
        "final_ln_b": jnp.zeros((1, DIM), jnp.float32),
        "head_ln_g": jnp.ones((1, DIM), jnp.float32),
        "head_ln_b": jnp.zeros((1, DIM), jnp.float32),
        "w_head": nrm((DIM, NUM_CLASSES)),
        "b_head": nrm((1, NUM_CLASSES)),
        "layers": [],
    }
    for _ in range(DEPTH):
        params["layers"].append({
            "ln1_g": jnp.ones((1, DIM), jnp.float32),
            "ln1_b": jnp.zeros((1, DIM), jnp.float32),
            "w_qkv": nrm((DIM, 3 * INNER)),          # to_qkv (no bias)
            "w_out": nrm((INNER, DIM)),
            "b_out": nrm((1, DIM)),
            "ln2_g": jnp.ones((1, DIM), jnp.float32),
            "ln2_b": jnp.zeros((1, DIM), jnp.float32),
            "w1": nrm((DIM, MLP_DIM)),
            "b1": nrm((1, MLP_DIM)),
            "w2": nrm((MLP_DIM, DIM)),
            "b2": nrm((1, DIM)),
        })
    return params


def prepare_params(params):
    """One-time, exact restructuring of PyTorch-layout params for the kernel.

    - attention scale folded into the Q columns of the fused (DIM, 3*INNER)
      qkv weight (exact, to_qkv has no bias); big matrices cast to bf16.
    - patch-embedding bias and positional embedding pre-summed.
    - per-layer LN params / biases packed into one (DEPTH, 8, MLP_DIM) slab;
      cls row, final/head LN params and head bias into one (8, 128) slab.
    - head weight/bias padded to 128 output columns (lane-dense logits).
    """
    bf16 = jnp.bfloat16

    def stack(name):
        return jnp.stack([lyr[name] for lyr in params["layers"]], axis=0)

    def pad_lanes(v, width):
        return jnp.pad(v, ((0, 0), (0, width - v.shape[-1])))

    w_qkv = stack("w_qkv")                                        # (L, DIM, 3*INNER)
    w_qkv = w_qkv.at[:, :, :INNER].multiply(ATTN_SCALE)           # fold scale into Q

    lvec = jnp.stack([
        jnp.concatenate([
            pad_lanes(lyr["ln1_g"], MLP_DIM), pad_lanes(lyr["ln1_b"], MLP_DIM),
            pad_lanes(lyr["b_out"], MLP_DIM),
            pad_lanes(lyr["ln2_g"], MLP_DIM), pad_lanes(lyr["ln2_b"], MLP_DIM),
            pad_lanes(lyr["b2"], MLP_DIM),
            lyr["b1"],                                            # (1, MLP_DIM)
            jnp.zeros((1, MLP_DIM), jnp.float32),
        ], axis=0)
        for lyr in params["layers"]], axis=0)                     # (L, 8, MLP_DIM)

    cls_row = params["cls_token"][0] + params["pos_embedding"][0, :1, :]
    misc = jnp.concatenate([
        pad_lanes(cls_row, HEAD_PAD),
        pad_lanes(params["final_ln_g"], HEAD_PAD),
        pad_lanes(params["final_ln_b"], HEAD_PAD),
        pad_lanes(params["head_ln_g"], HEAD_PAD),
        pad_lanes(params["head_ln_b"], HEAD_PAD),
        pad_lanes(params["b_head"], HEAD_PAD),
        jnp.zeros((2, HEAD_PAD), jnp.float32),
    ], axis=0)                                                    # (8, 128)

    return {
        "w_patch": params["w_patch"].astype(bf16),
        "tok_bias": params["b_patch"] + params["pos_embedding"][0, 1:, :],
        "misc": misc,
        "lvec": lvec,
        "w_qkv": w_qkv.astype(bf16),                              # (L, DIM, 3*INNER)
        "w_out": stack("w_out").astype(bf16),                     # (L, INNER, DIM)
        "w1": stack("w1").astype(bf16),                           # (L, DIM, MLP_DIM)
        "w2": stack("w2").astype(bf16),                           # (L, MLP_DIM, DIM)
        "w_head": pad_lanes(params["w_head"], HEAD_PAD).astype(bf16),  # (DIM, 128)
    }


# ----------------------------------- main -------------------------------------
if __name__ == "__main__":
    key = jax.random.PRNGKey(0)
    k_x, k_p = jax.random.split(key)
    x = jax.random.normal(
        k_x, (BATCH, NUM_FRAMES, IN_CHANNELS, IMAGE_SIZE, IMAGE_SIZE),
        dtype=jnp.float32)
    params = init_params(k_p)
    prep = prepare_params(params)

    fwd = jax.jit(vanilla_tr_forward)
    out = jax.block_until_ready(fwd(x, prep))
    assert out.shape == (BATCH, NUM_CLASSES), out.shape
    assert bool(jnp.all(jnp.isfinite(out))), "non-finite logits"
    print("KERNEL_OK")
</pallas_src>

<mosaic_0001>
module attributes {stable_mosaic.version = 11 : i64} {
  func.func @fused_vanilla_tr_kernel(%arg0: memref<64x8xf32, #tpu.memory_space<vmem>>, %arg1: memref<8x32xbf16, #tpu.memory_space<vmem>>, %arg2: memref<32x32xf32, #tpu.memory_space<vmem>>, %arg3: memref<8x128xf32, #tpu.memory_space<vmem>>, %arg4: memref<2x8x128xf32, #tpu.memory_space<vmem>>, %arg5: memref<2x32x96xbf16, #tpu.memory_space<vmem>>, %arg6: memref<2x32x32xbf16, #tpu.memory_space<vmem>>, %arg7: memref<2x32x128xbf16, #tpu.memory_space<vmem>>, %arg8: memref<2x128x32xbf16, #tpu.memory_space<vmem>>, %arg9: memref<32x128xbf16, #tpu.memory_space<vmem>>, %arg10: memref<2x128xf32, #tpu.memory_space<vmem>>) attributes {dimension_semantics = [], scalar_prefetch = 0 : i64, scratch_operands = 0 : i64, tpu.core_type = #tpu.core_type<tc>} {
    %c0 = arith.constant 0 : index
    %c0_0 = arith.constant 0 : index
    %0 = vector.load %arg3[%c0, %c0_0] : memref<8x128xf32, #tpu.memory_space<vmem>>, vector<8x128xf32>
    %1 = vector.extract_strided_slice %0 {offsets = [0, 0], sizes = [1, 32], strides = [1, 1]} : vector<8x128xf32> to vector<1x32xf32>
    %2 = vector.extract_strided_slice %0 {offsets = [1, 0], sizes = [1, 32], strides = [1, 1]} : vector<8x128xf32> to vector<1x32xf32>
    %3 = vector.extract_strided_slice %0 {offsets = [2, 0], sizes = [1, 32], strides = [1, 1]} : vector<8x128xf32> to vector<1x32xf32>
    %4 = vector.extract_strided_slice %0 {offsets = [3, 0], sizes = [1, 32], strides = [1, 1]} : vector<8x128xf32> to vector<1x32xf32>
    %5 = vector.extract_strided_slice %0 {offsets = [4, 0], sizes = [1, 32], strides = [1, 1]} : vector<8x128xf32> to vector<1x32xf32>
    %6 = vector.extract_strided_slice %0 {offsets = [5, 0], sizes = [1, 128], strides = [1, 1]} : vector<8x128xf32> to vector<1x128xf32>
    %c0_1 = arith.constant 0 : index
    %c0_2 = arith.constant 0 : index
    %7 = vector.load %arg0[%c0_1, %c0_2] : memref<64x8xf32, #tpu.memory_space<vmem>>, vector<64x8xf32>
    %8 = arith.truncf %7 : vector<64x8xf32> to vector<64x8xbf16>
    %c0_3 = arith.constant 0 : index
    %c0_4 = arith.constant 0 : index
    %9 = vector.load %arg1[%c0_3, %c0_4] : memref<8x32xbf16, #tpu.memory_space<vmem>>, vector<8x32xbf16>
    %cst = arith.constant dense<0.000000e+00> : vector<64x32xf32>
    %10 = tpu.matmul %8, %9, %cst {dimension_numbers = #tpu.dot_dimension_numbers<[1], [0], [0], [1], [0, 0, 1, 1], [], []>} : vector<64x8xbf16>, vector<8x32xbf16>, vector<64x32xf32> -> vector<64x32xf32>
    %c0_5 = arith.constant 0 : index
    %c0_6 = arith.constant 0 : index
    %11 = vector.load %arg2[%c0_5, %c0_6] : memref<32x32xf32, #tpu.memory_space<vmem>>, vector<32x32xf32>
    %cst_7 = arith.constant 0.000000e+00 : f32
    %12 = vector.broadcast %cst_7 : f32 to vector<7x32xf32>
    %13 = vector.extract_strided_slice %10 {offsets = [0, 0], sizes = [32, 32], strides = [1, 1]} : vector<64x32xf32> to vector<32x32xf32>
    %14 = arith.addf %13, %11 : vector<32x32xf32>
    %15 = vector.extract_strided_slice %10 {offsets = [32, 0], sizes = [32, 32], strides = [1, 1]} : vector<64x32xf32> to vector<32x32xf32>
    %16 = arith.addf %15, %11 : vector<32x32xf32>
    %17 = tpu.concatenate %1, %14, %12, %1, %16, %12 in 0 : vector<1x32xf32>, vector<32x32xf32>, vector<7x32xf32>, vector<1x32xf32>, vector<32x32xf32>, vector<7x32xf32> -> vector<80x32xf32>
    %18 = tpu.iota {dimensions = array<i32: 1>} : vector<1x40xi32>
    %c33_i32 = arith.constant 33 : i32
    %19 = vector.broadcast %c33_i32 : i32 to vector<1x40xi32>
    %20 = arith.cmpi slt, %18, %19 : vector<1x40xi32>
    %cst_8 = arith.constant 0.000000e+00 : f32
    %cst_9 = arith.constant -1.000000e+30 : f32
    %21 = vector.broadcast %cst_8 : f32 to vector<1x40xf32>
    %22 = vector.broadcast %cst_9 : f32 to vector<1x40xf32>
    %23 = arith.select %20, %21, %22 : vector<1x40xi1>, vector<1x40xf32>
    %c0_10 = arith.constant 0 : index
    %c0_11 = arith.constant 0 : index
    %c0_12 = arith.constant 0 : index
    %24 = vector.load %arg4[%c0_10, %c0_11, %c0_12] : memref<2x8x128xf32, #tpu.memory_space<vmem>>, vector<1x8x128xf32>
    %25 = vector.shape_cast %24 : vector<1x8x128xf32> to vector<8x128xf32>
    %26 = vector.extract_strided_slice %25 {offsets = [0, 0], sizes = [1, 32], strides = [1, 1]} : vector<8x128xf32> to vector<1x32xf32>
    %27 = vector.extract_strided_slice %25 {offsets = [1, 0], sizes = [1, 32], strides = [1, 1]} : vector<8x128xf32> to vector<1x32xf32>
    %28 = vector.extract_strided_slice %25 {offsets = [2, 0], sizes = [1, 32], strides = [1, 1]} : vector<8x128xf32> to vector<1x32xf32>
    %29 = vector.extract_strided_slice %25 {offsets = [3, 0], sizes = [1, 32], strides = [1, 1]} : vector<8x128xf32> to vector<1x32xf32>
    %30 = vector.extract_strided_slice %25 {offsets = [4, 0], sizes = [1, 32], strides = [1, 1]} : vector<8x128xf32> to vector<1x32xf32>
    %31 = vector.extract_strided_slice %25 {offsets = [5, 0], sizes = [1, 32], strides = [1, 1]} : vector<8x128xf32> to vector<1x32xf32>
    %32 = vector.extract_strided_slice %25 {offsets = [6, 0], sizes = [1, 128], strides = [1, 1]} : vector<8x128xf32> to vector<1x128xf32>
    %cst_13 = arith.constant dense<0.000000e+00> : vector<80xf32>
    %33 = vector.multi_reduction <add>, %17, %cst_13 [1] : vector<80x32xf32> to vector<80xf32>
    %34 = vector.shape_cast %33 : vector<80xf32> to vector<80x1xf32>
    %cst_14 = arith.constant 3.200000e+01 : f32
    %35 = vector.broadcast %cst_14 : f32 to vector<80x1xf32>
    %36 = arith.divf %34, %35 : vector<80x1xf32>
    %37 = vector.broadcast %36 : vector<80x1xf32> to vector<80x32xf32>
    %38 = arith.subf %17, %37 : vector<80x32xf32>
    %39 = arith.mulf %38, %38 : vector<80x32xf32>
    %cst_15 = arith.constant dense<0.000000e+00> : vector<80xf32>
    %40 = vector.multi_reduction <add>, %39, %cst_15 [1] : vector<80x32xf32> to vector<80xf32>
    %41 = vector.shape_cast %40 : vector<80xf32> to vector<80x1xf32>
    %cst_16 = arith.constant 3.200000e+01 : f32
    %42 = vector.broadcast %cst_16 : f32 to vector<80x1xf32>
    %43 = arith.divf %41, %42 : vector<80x1xf32>
    %44 = vector.broadcast %36 : vector<80x1xf32> to vector<80x32xf32>
    %45 = arith.subf %17, %44 : vector<80x32xf32>
    %cst_17 = arith.constant 9.99999974E-6 : f32
    %46 = vector.broadcast %cst_17 : f32 to vector<80x1xf32>
    %47 = arith.addf %43, %46 : vector<80x1xf32>
    %48 = math.rsqrt %47 : vector<80x1xf32>
    %49 = vector.broadcast %48 : vector<80x1xf32> to vector<80x32xf32>
    %50 = arith.mulf %45, %49 : vector<80x32xf32>
    %51 = vector.broadcast %26 : vector<1x32xf32> to vector<80x32xf32>
    %52 = arith.mulf %50, %51 : vector<80x32xf32>
    %53 = vector.broadcast %27 : vector<1x32xf32> to vector<80x32xf32>
    %54 = arith.addf %52, %53 : vector<80x32xf32>
    %55 = arith.truncf %54 : vector<80x32xf32> to vector<80x32xbf16>
    %c0_18 = arith.constant 0 : index
    %c0_19 = arith.constant 0 : index
    %c0_20 = arith.constant 0 : index
    %56 = vector.load %arg5[%c0_18, %c0_19, %c0_20] : memref<2x32x96xbf16, #tpu.memory_space<vmem>>, vector<1x32x96xbf16>
    %57 = vector.shape_cast %56 : vector<1x32x96xbf16> to vector<32x96xbf16>
    %cst_21 = arith.constant dense<0.000000e+00> : vector<80x96xf32>
    %58 = tpu.matmul %55, %57, %cst_21 {dimension_numbers = #tpu.dot_dimension_numbers<[1], [0], [0], [1], [0, 0, 1, 1], [], []>} : vector<80x32xbf16>, vector<32x96xbf16>, vector<80x96xf32> -> vector<80x96xf32>
    %59 = vector.extract_strided_slice %58 {offsets = [0, 0], sizes = [40, 8], strides = [1, 1]} : vector<80x96xf32> to vector<40x8xf32>
    %60 = vector.extract_strided_slice %58 {offsets = [0, 32], sizes = [40, 8], strides = [1, 1]} : vector<80x96xf32> to vector<40x8xf32>
    %61 = vector.extract_strided_slice %58 {offsets = [0, 64], sizes = [40, 8], strides = [1, 1]} : vector<80x96xf32> to vector<40x8xf32>
    %62 = arith.truncf %59 : vector<40x8xf32> to vector<40x8xbf16>
    %63 = arith.truncf %60 : vector<40x8xf32> to vector<40x8xbf16>
    %cst_22 = arith.constant dense<0.000000e+00> : vector<40x40xf32>
    %64 = tpu.matmul %62, %63, %cst_22 {dimension_numbers = #tpu.dot_dimension_numbers<[1], [1], [0], [0], [0, 0, 1, 0], [], []>} : vector<40x8xbf16>, vector<40x8xbf16>, vector<40x40xf32> -> vector<40x40xf32>
    %65 = vector.broadcast %23 : vector<1x40xf32> to vector<40x40xf32>
    %66 = arith.addf %64, %65 : vector<40x40xf32>
    %cst_23 = arith.constant dense<0xFF800000> : vector<40xf32>
    %67 = vector.multi_reduction <maximumf>, %66, %cst_23 [1] : vector<40x40xf32> to vector<40xf32>
    %68 = vector.shape_cast %67 : vector<40xf32> to vector<40x1xf32>
    %69 = vector.broadcast %68 : vector<40x1xf32> to vector<40x40xf32>
    %70 = arith.subf %66, %69 : vector<40x40xf32>
    %71 = math.exp %70 : vector<40x40xf32>
    %cst_24 = arith.constant dense<0.000000e+00> : vector<40xf32>
    %72 = vector.multi_reduction <add>, %71, %cst_24 [1] : vector<40x40xf32> to vector<40xf32>
    %73 = vector.shape_cast %72 : vector<40xf32> to vector<40x1xf32>
    %74 = tpu.reciprocal %73 {approx = true} : vector<40x1xf32> -> vector<40x1xf32>
    %75 = vector.broadcast %74 : vector<40x1xf32> to vector<40x40xf32>
    %76 = arith.mulf %71, %75 : vector<40x40xf32>
    %77 = arith.truncf %76 : vector<40x40xf32> to vector<40x40xbf16>
    %78 = arith.truncf %61 : vector<40x8xf32> to vector<40x8xbf16>
    %cst_25 = arith.constant dense<0.000000e+00> : vector<40x8xf32>
    %79 = tpu.matmul %77, %78, %cst_25 {dimension_numbers = #tpu.dot_dimension_numbers<[1], [0], [0], [1], [0, 0, 1, 1], [], []>} : vector<40x40xbf16>, vector<40x8xbf16>, vector<40x8xf32> -> vector<40x8xf32>
    %80 = vector.extract_strided_slice %58 {offsets = [0, 8], sizes = [40, 8], strides = [1, 1]} : vector<80x96xf32> to vector<40x8xf32>
    %81 = vector.extract_strided_slice %58 {offsets = [0, 40], sizes = [40, 8], strides = [1, 1]} : vector<80x96xf32> to vector<40x8xf32>
    %82 = vector.extract_strided_slice %58 {offsets = [0, 72], sizes = [40, 8], strides = [1, 1]} : vector<80x96xf32> to vector<40x8xf32>
    %83 = arith.truncf %80 : vector<40x8xf32> to vector<40x8xbf16>
    %84 = arith.truncf %81 : vector<40x8xf32> to vector<40x8xbf16>
    %cst_26 = arith.constant dense<0.000000e+00> : vector<40x40xf32>
    %85 = tpu.matmul %83, %84, %cst_26 {dimension_numbers = #tpu.dot_dimension_numbers<[1], [1], [0], [0], [0, 0, 1, 0], [], []>} : vector<40x8xbf16>, vector<40x8xbf16>, vector<40x40xf32> -> vector<40x40xf32>
    %86 = vector.broadcast %23 : vector<1x40xf32> to vector<40x40xf32>
    %87 = arith.addf %85, %86 : vector<40x40xf32>
    %cst_27 = arith.constant dense<0xFF800000> : vector<40xf32>
    %88 = vector.multi_reduction <maximumf>, %87, %cst_27 [1] : vector<40x40xf32> to vector<40xf32>
    %89 = vector.shape_cast %88 : vector<40xf32> to vector<40x1xf32>
    %90 = vector.broadcast %89 : vector<40x1xf32> to vector<40x40xf32>
    %91 = arith.subf %87, %90 : vector<40x40xf32>
    %92 = math.exp %91 : vector<40x40xf32>
    %cst_28 = arith.constant dense<0.000000e+00> : vector<40xf32>
    %93 = vector.multi_reduction <add>, %92, %cst_28 [1] : vector<40x40xf32> to vector<40xf32>
    %94 = vector.shape_cast %93 : vector<40xf32> to vector<40x1xf32>
    %95 = tpu.reciprocal %94 {approx = true} : vector<40x1xf32> -> vector<40x1xf32>
    %96 = vector.broadcast %95 : vector<40x1xf32> to vector<40x40xf32>
    %97 = arith.mulf %92, %96 : vector<40x40xf32>
    %98 = arith.truncf %97 : vector<40x40xf32> to vector<40x40xbf16>
    %99 = arith.truncf %82 : vector<40x8xf32> to vector<40x8xbf16>
    %cst_29 = arith.constant dense<0.000000e+00> : vector<40x8xf32>
    %100 = tpu.matmul %98, %99, %cst_29 {dimension_numbers = #tpu.dot_dimension_numbers<[1], [0], [0], [1], [0, 0, 1, 1], [], []>} : vector<40x40xbf16>, vector<40x8xbf16>, vector<40x8xf32> -> vector<40x8xf32>
    %101 = vector.extract_strided_slice %58 {offsets = [0, 16], sizes = [40, 8], strides = [1, 1]} : vector<80x96xf32> to vector<40x8xf32>
    %102 = vector.extract_strided_slice %58 {offsets = [0, 48], sizes = [40, 8], strides = [1, 1]} : vector<80x96xf32> to vector<40x8xf32>
    %103 = vector.extract_strided_slice %58 {offsets = [0, 80], sizes = [40, 8], strides = [1, 1]} : vector<80x96xf32> to vector<40x8xf32>
    %104 = arith.truncf %101 : vector<40x8xf32> to vector<40x8xbf16>
    %105 = arith.truncf %102 : vector<40x8xf32> to vector<40x8xbf16>
    %cst_30 = arith.constant dense<0.000000e+00> : vector<40x40xf32>
    %106 = tpu.matmul %104, %105, %cst_30 {dimension_numbers = #tpu.dot_dimension_numbers<[1], [1], [0], [0], [0, 0, 1, 0], [], []>} : vector<40x8xbf16>, vector<40x8xbf16>, vector<40x40xf32> -> vector<40x40xf32>
    %107 = vector.broadcast %23 : vector<1x40xf32> to vector<40x40xf32>
    %108 = arith.addf %106, %107 : vector<40x40xf32>
    %cst_31 = arith.constant dense<0xFF800000> : vector<40xf32>
    %109 = vector.multi_reduction <maximumf>, %108, %cst_31 [1] : vector<40x40xf32> to vector<40xf32>
    %110 = vector.shape_cast %109 : vector<40xf32> to vector<40x1xf32>
    %111 = vector.broadcast %110 : vector<40x1xf32> to vector<40x40xf32>
    %112 = arith.subf %108, %111 : vector<40x40xf32>
    %113 = math.exp %112 : vector<40x40xf32>
    %cst_32 = arith.constant dense<0.000000e+00> : vector<40xf32>
    %114 = vector.multi_reduction <add>, %113, %cst_32 [1] : vector<40x40xf32> to vector<40xf32>
    %115 = vector.shape_cast %114 : vector<40xf32> to vector<40x1xf32>
    %116 = tpu.reciprocal %115 {approx = true} : vector<40x1xf32> -> vector<40x1xf32>
    %117 = vector.broadcast %116 : vector<40x1xf32> to vector<40x40xf32>
    %118 = arith.mulf %113, %117 : vector<40x40xf32>
    %119 = arith.truncf %118 : vector<40x40xf32> to vector<40x40xbf16>
    %120 = arith.truncf %103 : vector<40x8xf32> to vector<40x8xbf16>
    %cst_33 = arith.constant dense<0.000000e+00> : vector<40x8xf32>
    %121 = tpu.matmul %119, %120, %cst_33 {dimension_numbers = #tpu.dot_dimension_numbers<[1], [0], [0], [1], [0, 0, 1, 1], [], []>} : vector<40x40xbf16>, vector<40x8xbf16>, vector<40x8xf32> -> vector<40x8xf32>
    %122 = vector.extract_strided_slice %58 {offsets = [0, 24], sizes = [40, 8], strides = [1, 1]} : vector<80x96xf32> to vector<40x8xf32>
    %123 = vector.extract_strided_slice %58 {offsets = [0, 56], sizes = [40, 8], strides = [1, 1]} : vector<80x96xf32> to vector<40x8xf32>
    %124 = vector.extract_strided_slice %58 {offsets = [0, 88], sizes = [40, 8], strides = [1, 1]} : vector<80x96xf32> to vector<40x8xf32>
    %125 = arith.truncf %122 : vector<40x8xf32> to vector<40x8xbf16>
    %126 = arith.truncf %123 : vector<40x8xf32> to vector<40x8xbf16>
    %cst_34 = arith.constant dense<0.000000e+00> : vector<40x40xf32>
    %127 = tpu.matmul %125, %126, %cst_34 {dimension_numbers = #tpu.dot_dimension_numbers<[1], [1], [0], [0], [0, 0, 1, 0], [], []>} : vector<40x8xbf16>, vector<40x8xbf16>, vector<40x40xf32> -> vector<40x40xf32>
    %128 = vector.broadcast %23 : vector<1x40xf32> to vector<40x40xf32>
    %129 = arith.addf %127, %128 : vector<40x40xf32>
    %cst_35 = arith.constant dense<0xFF800000> : vector<40xf32>
    %130 = vector.multi_reduction <maximumf>, %129, %cst_35 [1] : vector<40x40xf32> to vector<40xf32>
    %131 = vector.shape_cast %130 : vector<40xf32> to vector<40x1xf32>
    %132 = vector.broadcast %131 : vector<40x1xf32> to vector<40x40xf32>
    %133 = arith.subf %129, %132 : vector<40x40xf32>
    %134 = math.exp %133 : vector<40x40xf32>
    %cst_36 = arith.constant dense<0.000000e+00> : vector<40xf32>
    %135 = vector.multi_reduction <add>, %134, %cst_36 [1] : vector<40x40xf32> to vector<40xf32>
    %136 = vector.shape_cast %135 : vector<40xf32> to vector<40x1xf32>
    %137 = tpu.reciprocal %136 {approx = true} : vector<40x1xf32> -> vector<40x1xf32>
    %138 = vector.broadcast %137 : vector<40x1xf32> to vector<40x40xf32>
    %139 = arith.mulf %134, %138 : vector<40x40xf32>
    %140 = arith.truncf %139 : vector<40x40xf32> to vector<40x40xbf16>
    %141 = arith.truncf %124 : vector<40x8xf32> to vector<40x8xbf16>
    %cst_37 = arith.constant dense<0.000000e+00> : vector<40x8xf32>
    %142 = tpu.matmul %140, %141, %cst_37 {dimension_numbers = #tpu.dot_dimension_numbers<[1], [0], [0], [1], [0, 0, 1, 1], [], []>} : vector<40x40xbf16>, vector<40x8xbf16>, vector<40x8xf32> -> vector<40x8xf32>
    %143 = tpu.concatenate %79, %100, %121, %142 in 1 : vector<40x8xf32>, vector<40x8xf32>, vector<40x8xf32>, vector<40x8xf32> -> vector<40x32xf32>
    %144 = vector.extract_strided_slice %58 {offsets = [40, 0], sizes = [40, 8], strides = [1, 1]} : vector<80x96xf32> to vector<40x8xf32>
    %145 = vector.extract_strided_slice %58 {offsets = [40, 32], sizes = [40, 8], strides = [1, 1]} : vector<80x96xf32> to vector<40x8xf32>
    %146 = vector.extract_strided_slice %58 {offsets = [40, 64], sizes = [40, 8], strides = [1, 1]} : vector<80x96xf32> to vector<40x8xf32>
    %147 = arith.truncf %144 : vector<40x8xf32> to vector<40x8xbf16>
    %148 = arith.truncf %145 : vector<40x8xf32> to vector<40x8xbf16>
    %cst_38 = arith.constant dense<0.000000e+00> : vector<40x40xf32>
    %149 = tpu.matmul %147, %148, %cst_38 {dimension_numbers = #tpu.dot_dimension_numbers<[1], [1], [0], [0], [0, 0, 1, 0], [], []>} : vector<40x8xbf16>, vector<40x8xbf16>, vector<40x40xf32> -> vector<40x40xf32>
    %150 = vector.broadcast %23 : vector<1x40xf32> to vector<40x40xf32>
    %151 = arith.addf %149, %150 : vector<40x40xf32>
    %cst_39 = arith.constant dense<0xFF800000> : vector<40xf32>
    %152 = vector.multi_reduction <maximumf>, %151, %cst_39 [1] : vector<40x40xf32> to vector<40xf32>
    %153 = vector.shape_cast %152 : vector<40xf32> to vector<40x1xf32>
    %154 = vector.broadcast %153 : vector<40x1xf32> to vector<40x40xf32>
    %155 = arith.subf %151, %154 : vector<40x40xf32>
    %156 = math.exp %155 : vector<40x40xf32>
    %cst_40 = arith.constant dense<0.000000e+00> : vector<40xf32>
    %157 = vector.multi_reduction <add>, %156, %cst_40 [1] : vector<40x40xf32> to vector<40xf32>
    %158 = vector.shape_cast %157 : vector<40xf32> to vector<40x1xf32>
    %159 = tpu.reciprocal %158 {approx = true} : vector<40x1xf32> -> vector<40x1xf32>
    %160 = vector.broadcast %159 : vector<40x1xf32> to vector<40x40xf32>
    %161 = arith.mulf %156, %160 : vector<40x40xf32>
    %162 = arith.truncf %161 : vector<40x40xf32> to vector<40x40xbf16>
    %163 = arith.truncf %146 : vector<40x8xf32> to vector<40x8xbf16>
    %cst_41 = arith.constant dense<0.000000e+00> : vector<40x8xf32>
    %164 = tpu.matmul %162, %163, %cst_41 {dimension_numbers = #tpu.dot_dimension_numbers<[1], [0], [0], [1], [0, 0, 1, 1], [], []>} : vector<40x40xbf16>, vector<40x8xbf16>, vector<40x8xf32> -> vector<40x8xf32>
    %165 = vector.extract_strided_slice %58 {offsets = [40, 8], sizes = [40, 8], strides = [1, 1]} : vector<80x96xf32> to vector<40x8xf32>
    %166 = vector.extract_strided_slice %58 {offsets = [40, 40], sizes = [40, 8], strides = [1, 1]} : vector<80x96xf32> to vector<40x8xf32>
    %167 = vector.extract_strided_slice %58 {offsets = [40, 72], sizes = [40, 8], strides = [1, 1]} : vector<80x96xf32> to vector<40x8xf32>
    %168 = arith.truncf %165 : vector<40x8xf32> to vector<40x8xbf16>
    %169 = arith.truncf %166 : vector<40x8xf32> to vector<40x8xbf16>
    %cst_42 = arith.constant dense<0.000000e+00> : vector<40x40xf32>
    %170 = tpu.matmul %168, %169, %cst_42 {dimension_numbers = #tpu.dot_dimension_numbers<[1], [1], [0], [0], [0, 0, 1, 0], [], []>} : vector<40x8xbf16>, vector<40x8xbf16>, vector<40x40xf32> -> vector<40x40xf32>
    %171 = vector.broadcast %23 : vector<1x40xf32> to vector<40x40xf32>
    %172 = arith.addf %170, %171 : vector<40x40xf32>
    %cst_43 = arith.constant dense<0xFF800000> : vector<40xf32>
    %173 = vector.multi_reduction <maximumf>, %172, %cst_43 [1] : vector<40x40xf32> to vector<40xf32>
    %174 = vector.shape_cast %173 : vector<40xf32> to vector<40x1xf32>
    %175 = vector.broadcast %174 : vector<40x1xf32> to vector<40x40xf32>
    %176 = arith.subf %172, %175 : vector<40x40xf32>
    %177 = math.exp %176 : vector<40x40xf32>
    %cst_44 = arith.constant dense<0.000000e+00> : vector<40xf32>
    %178 = vector.multi_reduction <add>, %177, %cst_44 [1] : vector<40x40xf32> to vector<40xf32>
    %179 = vector.shape_cast %178 : vector<40xf32> to vector<40x1xf32>
    %180 = tpu.reciprocal %179 {approx = true} : vector<40x1xf32> -> vector<40x1xf32>
    %181 = vector.broadcast %180 : vector<40x1xf32> to vector<40x40xf32>
    %182 = arith.mulf %177, %181 : vector<40x40xf32>
    %183 = arith.truncf %182 : vector<40x40xf32> to vector<40x40xbf16>
    %184 = arith.truncf %167 : vector<40x8xf32> to vector<40x8xbf16>
    %cst_45 = arith.constant dense<0.000000e+00> : vector<40x8xf32>
    %185 = tpu.matmul %183, %184, %cst_45 {dimension_numbers = #tpu.dot_dimension_numbers<[1], [0], [0], [1], [0, 0, 1, 1], [], []>} : vector<40x40xbf16>, vector<40x8xbf16>, vector<40x8xf32> -> vector<40x8xf32>
    %186 = vector.extract_strided_slice %58 {offsets = [40, 16], sizes = [40, 8], strides = [1, 1]} : vector<80x96xf32> to vector<40x8xf32>
    %187 = vector.extract_strided_slice %58 {offsets = [40, 48], sizes = [40, 8], strides = [1, 1]} : vector<80x96xf32> to vector<40x8xf32>
    %188 = vector.extract_strided_slice %58 {offsets = [40, 80], sizes = [40, 8], strides = [1, 1]} : vector<80x96xf32> to vector<40x8xf32>
    %189 = arith.truncf %186 : vector<40x8xf32> to vector<40x8xbf16>
    %190 = arith.truncf %187 : vector<40x8xf32> to vector<40x8xbf16>
    %cst_46 = arith.constant dense<0.000000e+00> : vector<40x40xf32>
    %191 = tpu.matmul %189, %190, %cst_46 {dimension_numbers = #tpu.dot_dimension_numbers<[1], [1], [0], [0], [0, 0, 1, 0], [], []>} : vector<40x8xbf16>, vector<40x8xbf16>, vector<40x40xf32> -> vector<40x40xf32>
    %192 = vector.broadcast %23 : vector<1x40xf32> to vector<40x40xf32>
    %193 = arith.addf %191, %192 : vector<40x40xf32>
    %cst_47 = arith.constant dense<0xFF800000> : vector<40xf32>
    %194 = vector.multi_reduction <maximumf>, %193, %cst_47 [1] : vector<40x40xf32> to vector<40xf32>
    %195 = vector.shape_cast %194 : vector<40xf32> to vector<40x1xf32>
    %196 = vector.broadcast %195 : vector<40x1xf32> to vector<40x40xf32>
    %197 = arith.subf %193, %196 : vector<40x40xf32>
    %198 = math.exp %197 : vector<40x40xf32>
    %cst_48 = arith.constant dense<0.000000e+00> : vector<40xf32>
    %199 = vector.multi_reduction <add>, %198, %cst_48 [1] : vector<40x40xf32> to vector<40xf32>
    %200 = vector.shape_cast %199 : vector<40xf32> to vector<40x1xf32>
    %201 = tpu.reciprocal %200 {approx = true} : vector<40x1xf32> -> vector<40x1xf32>
    %202 = vector.broadcast %201 : vector<40x1xf32> to vector<40x40xf32>
    %203 = arith.mulf %198, %202 : vector<40x40xf32>
    %204 = arith.truncf %203 : vector<40x40xf32> to vector<40x40xbf16>
    %205 = arith.truncf %188 : vector<40x8xf32> to vector<40x8xbf16>
    %cst_49 = arith.constant dense<0.000000e+00> : vector<40x8xf32>
    %206 = tpu.matmul %204, %205, %cst_49 {dimension_numbers = #tpu.dot_dimension_numbers<[1], [0], [0], [1], [0, 0, 1, 1], [], []>} : vector<40x40xbf16>, vector<40x8xbf16>, vector<40x8xf32> -> vector<40x8xf32>
    %207 = vector.extract_strided_slice %58 {offsets = [40, 24], sizes = [40, 8], strides = [1, 1]} : vector<80x96xf32> to vector<40x8xf32>
    %208 = vector.extract_strided_slice %58 {offsets = [40, 56], sizes = [40, 8], strides = [1, 1]} : vector<80x96xf32> to vector<40x8xf32>
    %209 = vector.extract_strided_slice %58 {offsets = [40, 88], sizes = [40, 8], strides = [1, 1]} : vector<80x96xf32> to vector<40x8xf32>
    %210 = arith.truncf %207 : vector<40x8xf32> to vector<40x8xbf16>
    %211 = arith.truncf %208 : vector<40x8xf32> to vector<40x8xbf16>
    %cst_50 = arith.constant dense<0.000000e+00> : vector<40x40xf32>
    %212 = tpu.matmul %210, %211, %cst_50 {dimension_numbers = #tpu.dot_dimension_numbers<[1], [1], [0], [0], [0, 0, 1, 0], [], []>} : vector<40x8xbf16>, vector<40x8xbf16>, vector<40x40xf32> -> vector<40x40xf32>
    %213 = vector.broadcast %23 : vector<1x40xf32> to vector<40x40xf32>
    %214 = arith.addf %212, %213 : vector<40x40xf32>
    %cst_51 = arith.constant dense<0xFF800000> : vector<40xf32>
    %215 = vector.multi_reduction <maximumf>, %214, %cst_51 [1] : vector<40x40xf32> to vector<40xf32>
    %216 = vector.shape_cast %215 : vector<40xf32> to vector<40x1xf32>
    %217 = vector.broadcast %216 : vector<40x1xf32> to vector<40x40xf32>
    %218 = arith.subf %214, %217 : vector<40x40xf32>
    %219 = math.exp %218 : vector<40x40xf32>
    %cst_52 = arith.constant dense<0.000000e+00> : vector<40xf32>
    %220 = vector.multi_reduction <add>, %219, %cst_52 [1] : vector<40x40xf32> to vector<40xf32>
    %221 = vector.shape_cast %220 : vector<40xf32> to vector<40x1xf32>
    %222 = tpu.reciprocal %221 {approx = true} : vector<40x1xf32> -> vector<40x1xf32>
    %223 = vector.broadcast %222 : vector<40x1xf32> to vector<40x40xf32>
    %224 = arith.mulf %219, %223 : vector<40x40xf32>
    %225 = arith.truncf %224 : vector<40x40xf32> to vector<40x40xbf16>
    %226 = arith.truncf %209 : vector<40x8xf32> to vector<40x8xbf16>
    %cst_53 = arith.constant dense<0.000000e+00> : vector<40x8xf32>
    %227 = tpu.matmul %225, %226, %cst_53 {dimension_numbers = #tpu.dot_dimension_numbers<[1], [0], [0], [1], [0, 0, 1, 1], [], []>} : vector<40x40xbf16>, vector<40x8xbf16>, vector<40x8xf32> -> vector<40x8xf32>
    %228 = tpu.concatenate %164, %185, %206, %227 in 1 : vector<40x8xf32>, vector<40x8xf32>, vector<40x8xf32>, vector<40x8xf32> -> vector<40x32xf32>
    %229 = tpu.concatenate %143, %228 in 0 : vector<40x32xf32>, vector<40x32xf32> -> vector<80x32xf32>
    %230 = arith.truncf %229 : vector<80x32xf32> to vector<80x32xbf16>
    %c0_54 = arith.constant 0 : index
    %c0_55 = arith.constant 0 : index
    %c0_56 = arith.constant 0 : index
    %231 = vector.load %arg6[%c0_54, %c0_55, %c0_56] : memref<2x32x32xbf16, #tpu.memory_space<vmem>>, vector<1x32x32xbf16>
    %232 = vector.shape_cast %231 : vector<1x32x32xbf16> to vector<32x32xbf16>
    %cst_57 = arith.constant dense<0.000000e+00> : vector<80x32xf32>
    %233 = tpu.matmul %230, %232, %cst_57 {dimension_numbers = #tpu.dot_dimension_numbers<[1], [0], [0], [1], [0, 0, 1, 1], [], []>} : vector<80x32xbf16>, vector<32x32xbf16>, vector<80x32xf32> -> vector<80x32xf32>
    %234 = arith.addf %17, %233 : vector<80x32xf32>
    %235 = vector.broadcast %28 : vector<1x32xf32> to vector<80x32xf32>
    %236 = arith.addf %234, %235 : vector<80x32xf32>
    %cst_58 = arith.constant dense<0.000000e+00> : vector<80xf32>
    %237 = vector.multi_reduction <add>, %236, %cst_58 [1] : vector<80x32xf32> to vector<80xf32>
    %238 = vector.shape_cast %237 : vector<80xf32> to vector<80x1xf32>
    %cst_59 = arith.constant 3.200000e+01 : f32
    %239 = vector.broadcast %cst_59 : f32 to vector<80x1xf32>
    %240 = arith.divf %238, %239 : vector<80x1xf32>
    %241 = vector.broadcast %240 : vector<80x1xf32> to vector<80x32xf32>
    %242 = arith.subf %236, %241 : vector<80x32xf32>
    %243 = arith.mulf %242, %242 : vector<80x32xf32>
    %cst_60 = arith.constant dense<0.000000e+00> : vector<80xf32>
    %244 = vector.multi_reduction <add>, %243, %cst_60 [1] : vector<80x32xf32> to vector<80xf32>
    %245 = vector.shape_cast %244 : vector<80xf32> to vector<80x1xf32>
    %cst_61 = arith.constant 3.200000e+01 : f32
    %246 = vector.broadcast %cst_61 : f32 to vector<80x1xf32>
    %247 = arith.divf %245, %246 : vector<80x1xf32>
    %248 = vector.broadcast %240 : vector<80x1xf32> to vector<80x32xf32>
    %249 = arith.subf %236, %248 : vector<80x32xf32>
    %cst_62 = arith.constant 9.99999974E-6 : f32
    %250 = vector.broadcast %cst_62 : f32 to vector<80x1xf32>
    %251 = arith.addf %247, %250 : vector<80x1xf32>
    %252 = math.rsqrt %251 : vector<80x1xf32>
    %253 = vector.broadcast %252 : vector<80x1xf32> to vector<80x32xf32>
    %254 = arith.mulf %249, %253 : vector<80x32xf32>
    %255 = vector.broadcast %29 : vector<1x32xf32> to vector<80x32xf32>
    %256 = arith.mulf %254, %255 : vector<80x32xf32>
    %257 = vector.broadcast %30 : vector<1x32xf32> to vector<80x32xf32>
    %258 = arith.addf %256, %257 : vector<80x32xf32>
    %259 = arith.truncf %258 : vector<80x32xf32> to vector<80x32xbf16>
    %c0_63 = arith.constant 0 : index
    %c0_64 = arith.constant 0 : index
    %c0_65 = arith.constant 0 : index
    %260 = vector.load %arg7[%c0_63, %c0_64, %c0_65] : memref<2x32x128xbf16, #tpu.memory_space<vmem>>, vector<1x32x128xbf16>
    %261 = vector.shape_cast %260 : vector<1x32x128xbf16> to vector<32x128xbf16>
    %cst_66 = arith.constant dense<0.000000e+00> : vector<80x128xf32>
    %262 = tpu.matmul %259, %261, %cst_66 {dimension_numbers = #tpu.dot_dimension_numbers<[1], [0], [0], [1], [0, 0, 1, 1], [], []>} : vector<80x32xbf16>, vector<32x128xbf16>, vector<80x128xf32> -> vector<80x128xf32>
    %263 = vector.broadcast %32 : vector<1x128xf32> to vector<80x128xf32>
    %264 = arith.addf %262, %263 : vector<80x128xf32>
    %265 = arith.mulf %264, %264 : vector<80x128xf32>
    %266 = arith.mulf %264, %265 : vector<80x128xf32>
    %cst_67 = arith.constant 4.471500e-02 : f32
    %267 = vector.broadcast %cst_67 : f32 to vector<80x128xf32>
    %268 = arith.mulf %267, %266 : vector<80x128xf32>
    %269 = arith.addf %264, %268 : vector<80x128xf32>
    %cst_68 = arith.constant 0.797884583 : f32
    %270 = vector.broadcast %cst_68 : f32 to vector<80x128xf32>
    %271 = arith.mulf %270, %269 : vector<80x128xf32>
    %272 = math.tanh %271 : vector<80x128xf32>
    %cst_69 = arith.constant 1.000000e+00 : f32
    %273 = vector.broadcast %cst_69 : f32 to vector<80x128xf32>
    %274 = arith.addf %273, %272 : vector<80x128xf32>
    %cst_70 = arith.constant 5.000000e-01 : f32
    %275 = vector.broadcast %cst_70 : f32 to vector<80x128xf32>
    %276 = arith.mulf %275, %274 : vector<80x128xf32>
    %277 = arith.mulf %264, %276 : vector<80x128xf32>
    %278 = arith.truncf %277 : vector<80x128xf32> to vector<80x128xbf16>
    %c0_71 = arith.constant 0 : index
    %c0_72 = arith.constant 0 : index
    %c0_73 = arith.constant 0 : index
    %279 = vector.load %arg8[%c0_71, %c0_72, %c0_73] : memref<2x128x32xbf16, #tpu.memory_space<vmem>>, vector<1x128x32xbf16>
    %280 = vector.shape_cast %279 : vector<1x128x32xbf16> to vector<128x32xbf16>
    %cst_74 = arith.constant dense<0.000000e+00> : vector<80x32xf32>
    %281 = tpu.matmul %278, %280, %cst_74 {dimension_numbers = #tpu.dot_dimension_numbers<[1], [0], [0], [1], [0, 0, 1, 1], [], []>} : vector<80x128xbf16>, vector<128x32xbf16>, vector<80x32xf32> -> vector<80x32xf32>
    %282 = vector.broadcast %31 : vector<1x32xf32> to vector<80x32xf32>
    %283 = arith.addf %281, %282 : vector<80x32xf32>
    %284 = arith.addf %236, %283 : vector<80x32xf32>
    %c1 = arith.constant 1 : index
    %c0_75 = arith.constant 0 : index
    %c0_76 = arith.constant 0 : index
    %285 = vector.load %arg4[%c1, %c0_75, %c0_76] : memref<2x8x128xf32, #tpu.memory_space<vmem>>, vector<1x8x128xf32>
    %286 = vector.shape_cast %285 : vector<1x8x128xf32> to vector<8x128xf32>
    %287 = vector.extract_strided_slice %286 {offsets = [0, 0], sizes = [1, 32], strides = [1, 1]} : vector<8x128xf32> to vector<1x32xf32>
    %288 = vector.extract_strided_slice %286 {offsets = [1, 0], sizes = [1, 32], strides = [1, 1]} : vector<8x128xf32> to vector<1x32xf32>
    %289 = vector.extract_strided_slice %286 {offsets = [2, 0], sizes = [1, 32], strides = [1, 1]} : vector<8x128xf32> to vector<1x32xf32>
    %290 = vector.extract_strided_slice %286 {offsets = [3, 0], sizes = [1, 32], strides = [1, 1]} : vector<8x128xf32> to vector<1x32xf32>
    %291 = vector.extract_strided_slice %286 {offsets = [4, 0], sizes = [1, 32], strides = [1, 1]} : vector<8x128xf32> to vector<1x32xf32>
    %292 = vector.extract_strided_slice %286 {offsets = [5, 0], sizes = [1, 32], strides = [1, 1]} : vector<8x128xf32> to vector<1x32xf32>
    %293 = vector.extract_strided_slice %286 {offsets = [6, 0], sizes = [1, 128], strides = [1, 1]} : vector<8x128xf32> to vector<1x128xf32>
    %cst_77 = arith.constant dense<0.000000e+00> : vector<80xf32>
    %294 = vector.multi_reduction <add>, %284, %cst_77 [1] : vector<80x32xf32> to vector<80xf32>
    %295 = vector.shape_cast %294 : vector<80xf32> to vector<80x1xf32>
    %cst_78 = arith.constant 3.200000e+01 : f32
    %296 = vector.broadcast %cst_78 : f32 to vector<80x1xf32>
    %297 = arith.divf %295, %296 : vector<80x1xf32>
    %298 = vector.broadcast %297 : vector<80x1xf32> to vector<80x32xf32>
    %299 = arith.subf %284, %298 : vector<80x32xf32>
    %300 = arith.mulf %299, %299 : vector<80x32xf32>
    %cst_79 = arith.constant dense<0.000000e+00> : vector<80xf32>
    %301 = vector.multi_reduction <add>, %300, %cst_79 [1] : vector<80x32xf32> to vector<80xf32>
    %302 = vector.shape_cast %301 : vector<80xf32> to vector<80x1xf32>
    %cst_80 = arith.constant 3.200000e+01 : f32
    %303 = vector.broadcast %cst_80 : f32 to vector<80x1xf32>
    %304 = arith.divf %302, %303 : vector<80x1xf32>
    %305 = vector.broadcast %297 : vector<80x1xf32> to vector<80x32xf32>
    %306 = arith.subf %284, %305 : vector<80x32xf32>
    %cst_81 = arith.constant 9.99999974E-6 : f32
    %307 = vector.broadcast %cst_81 : f32 to vector<80x1xf32>
    %308 = arith.addf %304, %307 : vector<80x1xf32>
    %309 = math.rsqrt %308 : vector<80x1xf32>
    %310 = vector.broadcast %309 : vector<80x1xf32> to vector<80x32xf32>
    %311 = arith.mulf %306, %310 : vector<80x32xf32>
    %312 = vector.broadcast %287 : vector<1x32xf32> to vector<80x32xf32>
    %313 = arith.mulf %311, %312 : vector<80x32xf32>
    %314 = vector.broadcast %288 : vector<1x32xf32> to vector<80x32xf32>
    %315 = arith.addf %313, %314 : vector<80x32xf32>
    %316 = arith.truncf %315 : vector<80x32xf32> to vector<80x32xbf16>
    %c1_82 = arith.constant 1 : index
    %c0_83 = arith.constant 0 : index
    %c0_84 = arith.constant 0 : index
    %317 = vector.load %arg5[%c1_82, %c0_83, %c0_84] : memref<2x32x96xbf16, #tpu.memory_space<vmem>>, vector<1x32x96xbf16>
    %318 = vector.shape_cast %317 : vector<1x32x96xbf16> to vector<32x96xbf16>
    %cst_85 = arith.constant dense<0.000000e+00> : vector<80x96xf32>
    %319 = tpu.matmul %316, %318, %cst_85 {dimension_numbers = #tpu.dot_dimension_numbers<[1], [0], [0], [1], [0, 0, 1, 1], [], []>} : vector<80x32xbf16>, vector<32x96xbf16>, vector<80x96xf32> -> vector<80x96xf32>
    %320 = vector.extract_strided_slice %319 {offsets = [0, 0], sizes = [40, 8], strides = [1, 1]} : vector<80x96xf32> to vector<40x8xf32>
    %321 = vector.extract_strided_slice %319 {offsets = [0, 32], sizes = [40, 8], strides = [1, 1]} : vector<80x96xf32> to vector<40x8xf32>
    %322 = vector.extract_strided_slice %319 {offsets = [0, 64], sizes = [40, 8], strides = [1, 1]} : vector<80x96xf32> to vector<40x8xf32>
    %323 = arith.truncf %320 : vector<40x8xf32> to vector<40x8xbf16>
    %324 = arith.truncf %321 : vector<40x8xf32> to vector<40x8xbf16>
    %cst_86 = arith.constant dense<0.000000e+00> : vector<40x40xf32>
    %325 = tpu.matmul %323, %324, %cst_86 {dimension_numbers = #tpu.dot_dimension_numbers<[1], [1], [0], [0], [0, 0, 1, 0], [], []>} : vector<40x8xbf16>, vector<40x8xbf16>, vector<40x40xf32> -> vector<40x40xf32>
    %326 = vector.broadcast %23 : vector<1x40xf32> to vector<40x40xf32>
    %327 = arith.addf %325, %326 : vector<40x40xf32>
    %cst_87 = arith.constant dense<0xFF800000> : vector<40xf32>
    %328 = vector.multi_reduction <maximumf>, %327, %cst_87 [1] : vector<40x40xf32> to vector<40xf32>
    %329 = vector.shape_cast %328 : vector<40xf32> to vector<40x1xf32>
    %330 = vector.broadcast %329 : vector<40x1xf32> to vector<40x40xf32>
    %331 = arith.subf %327, %330 : vector<40x40xf32>
    %332 = math.exp %331 : vector<40x40xf32>
    %cst_88 = arith.constant dense<0.000000e+00> : vector<40xf32>
    %333 = vector.multi_reduction <add>, %332, %cst_88 [1] : vector<40x40xf32> to vector<40xf32>
    %334 = vector.shape_cast %333 : vector<40xf32> to vector<40x1xf32>
    %335 = tpu.reciprocal %334 {approx = true} : vector<40x1xf32> -> vector<40x1xf32>
    %336 = vector.broadcast %335 : vector<40x1xf32> to vector<40x40xf32>
    %337 = arith.mulf %332, %336 : vector<40x40xf32>
    %338 = arith.truncf %337 : vector<40x40xf32> to vector<40x40xbf16>
    %339 = arith.truncf %322 : vector<40x8xf32> to vector<40x8xbf16>
    %cst_89 = arith.constant dense<0.000000e+00> : vector<40x8xf32>
    %340 = tpu.matmul %338, %339, %cst_89 {dimension_numbers = #tpu.dot_dimension_numbers<[1], [0], [0], [1], [0, 0, 1, 1], [], []>} : vector<40x40xbf16>, vector<40x8xbf16>, vector<40x8xf32> -> vector<40x8xf32>
    %341 = vector.extract_strided_slice %319 {offsets = [0, 8], sizes = [40, 8], strides = [1, 1]} : vector<80x96xf32> to vector<40x8xf32>
    %342 = vector.extract_strided_slice %319 {offsets = [0, 40], sizes = [40, 8], strides = [1, 1]} : vector<80x96xf32> to vector<40x8xf32>
    %343 = vector.extract_strided_slice %319 {offsets = [0, 72], sizes = [40, 8], strides = [1, 1]} : vector<80x96xf32> to vector<40x8xf32>
    %344 = arith.truncf %341 : vector<40x8xf32> to vector<40x8xbf16>
    %345 = arith.truncf %342 : vector<40x8xf32> to vector<40x8xbf16>
    %cst_90 = arith.constant dense<0.000000e+00> : vector<40x40xf32>
    %346 = tpu.matmul %344, %345, %cst_90 {dimension_numbers = #tpu.dot_dimension_numbers<[1], [1], [0], [0], [0, 0, 1, 0], [], []>} : vector<40x8xbf16>, vector<40x8xbf16>, vector<40x40xf32> -> vector<40x40xf32>
    %347 = vector.broadcast %23 : vector<1x40xf32> to vector<40x40xf32>
    %348 = arith.addf %346, %347 : vector<40x40xf32>
    %cst_91 = arith.constant dense<0xFF800000> : vector<40xf32>
    %349 = vector.multi_reduction <maximumf>, %348, %cst_91 [1] : vector<40x40xf32> to vector<40xf32>
    %350 = vector.shape_cast %349 : vector<40xf32> to vector<40x1xf32>
    %351 = vector.broadcast %350 : vector<40x1xf32> to vector<40x40xf32>
    %352 = arith.subf %348, %351 : vector<40x40xf32>
    %353 = math.exp %352 : vector<40x40xf32>
    %cst_92 = arith.constant dense<0.000000e+00> : vector<40xf32>
    %354 = vector.multi_reduction <add>, %353, %cst_92 [1] : vector<40x40xf32> to vector<40xf32>
    %355 = vector.shape_cast %354 : vector<40xf32> to vector<40x1xf32>
    %356 = tpu.reciprocal %355 {approx = true} : vector<40x1xf32> -> vector<40x1xf32>
    %357 = vector.broadcast %356 : vector<40x1xf32> to vector<40x40xf32>
    %358 = arith.mulf %353, %357 : vector<40x40xf32>
    %359 = arith.truncf %358 : vector<40x40xf32> to vector<40x40xbf16>
    %360 = arith.truncf %343 : vector<40x8xf32> to vector<40x8xbf16>
    %cst_93 = arith.constant dense<0.000000e+00> : vector<40x8xf32>
    %361 = tpu.matmul %359, %360, %cst_93 {dimension_numbers = #tpu.dot_dimension_numbers<[1], [0], [0], [1], [0, 0, 1, 1], [], []>} : vector<40x40xbf16>, vector<40x8xbf16>, vector<40x8xf32> -> vector<40x8xf32>
    %362 = vector.extract_strided_slice %319 {offsets = [0, 16], sizes = [40, 8], strides = [1, 1]} : vector<80x96xf32> to vector<40x8xf32>
    %363 = vector.extract_strided_slice %319 {offsets = [0, 48], sizes = [40, 8], strides = [1, 1]} : vector<80x96xf32> to vector<40x8xf32>
    %364 = vector.extract_strided_slice %319 {offsets = [0, 80], sizes = [40, 8], strides = [1, 1]} : vector<80x96xf32> to vector<40x8xf32>
    %365 = arith.truncf %362 : vector<40x8xf32> to vector<40x8xbf16>
    %366 = arith.truncf %363 : vector<40x8xf32> to vector<40x8xbf16>
    %cst_94 = arith.constant dense<0.000000e+00> : vector<40x40xf32>
    %367 = tpu.matmul %365, %366, %cst_94 {dimension_numbers = #tpu.dot_dimension_numbers<[1], [1], [0], [0], [0, 0, 1, 0], [], []>} : vector<40x8xbf16>, vector<40x8xbf16>, vector<40x40xf32> -> vector<40x40xf32>
    %368 = vector.broadcast %23 : vector<1x40xf32> to vector<40x40xf32>
    %369 = arith.addf %367, %368 : vector<40x40xf32>
    %cst_95 = arith.constant dense<0xFF800000> : vector<40xf32>
    %370 = vector.multi_reduction <maximumf>, %369, %cst_95 [1] : vector<40x40xf32> to vector<40xf32>
    %371 = vector.shape_cast %370 : vector<40xf32> to vector<40x1xf32>
    %372 = vector.broadcast %371 : vector<40x1xf32> to vector<40x40xf32>
    %373 = arith.subf %369, %372 : vector<40x40xf32>
    %374 = math.exp %373 : vector<40x40xf32>
    %cst_96 = arith.constant dense<0.000000e+00> : vector<40xf32>
    %375 = vector.multi_reduction <add>, %374, %cst_96 [1] : vector<40x40xf32> to vector<40xf32>
    %376 = vector.shape_cast %375 : vector<40xf32> to vector<40x1xf32>
    %377 = tpu.reciprocal %376 {approx = true} : vector<40x1xf32> -> vector<40x1xf32>
    %378 = vector.broadcast %377 : vector<40x1xf32> to vector<40x40xf32>
    %379 = arith.mulf %374, %378 : vector<40x40xf32>
    %380 = arith.truncf %379 : vector<40x40xf32> to vector<40x40xbf16>
    %381 = arith.truncf %364 : vector<40x8xf32> to vector<40x8xbf16>
    %cst_97 = arith.constant dense<0.000000e+00> : vector<40x8xf32>
    %382 = tpu.matmul %380, %381, %cst_97 {dimension_numbers = #tpu.dot_dimension_numbers<[1], [0], [0], [1], [0, 0, 1, 1], [], []>} : vector<40x40xbf16>, vector<40x8xbf16>, vector<40x8xf32> -> vector<40x8xf32>
    %383 = vector.extract_strided_slice %319 {offsets = [0, 24], sizes = [40, 8], strides = [1, 1]} : vector<80x96xf32> to vector<40x8xf32>
    %384 = vector.extract_strided_slice %319 {offsets = [0, 56], sizes = [40, 8], strides = [1, 1]} : vector<80x96xf32> to vector<40x8xf32>
    %385 = vector.extract_strided_slice %319 {offsets = [0, 88], sizes = [40, 8], strides = [1, 1]} : vector<80x96xf32> to vector<40x8xf32>
    %386 = arith.truncf %383 : vector<40x8xf32> to vector<40x8xbf16>
    %387 = arith.truncf %384 : vector<40x8xf32> to vector<40x8xbf16>
    %cst_98 = arith.constant dense<0.000000e+00> : vector<40x40xf32>
    %388 = tpu.matmul %386, %387, %cst_98 {dimension_numbers = #tpu.dot_dimension_numbers<[1], [1], [0], [0], [0, 0, 1, 0], [], []>} : vector<40x8xbf16>, vector<40x8xbf16>, vector<40x40xf32> -> vector<40x40xf32>
    %389 = vector.broadcast %23 : vector<1x40xf32> to vector<40x40xf32>
    %390 = arith.addf %388, %389 : vector<40x40xf32>
    %cst_99 = arith.constant dense<0xFF800000> : vector<40xf32>
    %391 = vector.multi_reduction <maximumf>, %390, %cst_99 [1] : vector<40x40xf32> to vector<40xf32>
    %392 = vector.shape_cast %391 : vector<40xf32> to vector<40x1xf32>
    %393 = vector.broadcast %392 : vector<40x1xf32> to vector<40x40xf32>
    %394 = arith.subf %390, %393 : vector<40x40xf32>
    %395 = math.exp %394 : vector<40x40xf32>
    %cst_100 = arith.constant dense<0.000000e+00> : vector<40xf32>
    %396 = vector.multi_reduction <add>, %395, %cst_100 [1] : vector<40x40xf32> to vector<40xf32>
    %397 = vector.shape_cast %396 : vector<40xf32> to vector<40x1xf32>
    %398 = tpu.reciprocal %397 {approx = true} : vector<40x1xf32> -> vector<40x1xf32>
    %399 = vector.broadcast %398 : vector<40x1xf32> to vector<40x40xf32>
    %400 = arith.mulf %395, %399 : vector<40x40xf32>
    %401 = arith.truncf %400 : vector<40x40xf32> to vector<40x40xbf16>
    %402 = arith.truncf %385 : vector<40x8xf32> to vector<40x8xbf16>
    %cst_101 = arith.constant dense<0.000000e+00> : vector<40x8xf32>
    %403 = tpu.matmul %401, %402, %cst_101 {dimension_numbers = #tpu.dot_dimension_numbers<[1], [0], [0], [1], [0, 0, 1, 1], [], []>} : vector<40x40xbf16>, vector<40x8xbf16>, vector<40x8xf32> -> vector<40x8xf32>
    %404 = tpu.concatenate %340, %361, %382, %403 in 1 : vector<40x8xf32>, vector<40x8xf32>, vector<40x8xf32>, vector<40x8xf32> -> vector<40x32xf32>
    %405 = vector.extract_strided_slice %319 {offsets = [40, 0], sizes = [40, 8], strides = [1, 1]} : vector<80x96xf32> to vector<40x8xf32>
    %406 = vector.extract_strided_slice %319 {offsets = [40, 32], sizes = [40, 8], strides = [1, 1]} : vector<80x96xf32> to vector<40x8xf32>
    %407 = vector.extract_strided_slice %319 {offsets = [40, 64], sizes = [40, 8], strides = [1, 1]} : vector<80x96xf32> to vector<40x8xf32>
    %408 = arith.truncf %405 : vector<40x8xf32> to vector<40x8xbf16>
    %409 = arith.truncf %406 : vector<40x8xf32> to vector<40x8xbf16>
    %cst_102 = arith.constant dense<0.000000e+00> : vector<40x40xf32>
    %410 = tpu.matmul %408, %409, %cst_102 {dimension_numbers = #tpu.dot_dimension_numbers<[1], [1], [0], [0], [0, 0, 1, 0], [], []>} : vector<40x8xbf16>, vector<40x8xbf16>, vector<40x40xf32> -> vector<40x40xf32>
    %411 = vector.broadcast %23 : vector<1x40xf32> to vector<40x40xf32>
    %412 = arith.addf %410, %411 : vector<40x40xf32>
    %cst_103 = arith.constant dense<0xFF800000> : vector<40xf32>
    %413 = vector.multi_reduction <maximumf>, %412, %cst_103 [1] : vector<40x40xf32> to vector<40xf32>
    %414 = vector.shape_cast %413 : vector<40xf32> to vector<40x1xf32>
    %415 = vector.broadcast %414 : vector<40x1xf32> to vector<40x40xf32>
    %416 = arith.subf %412, %415 : vector<40x40xf32>
    %417 = math.exp %416 : vector<40x40xf32>
    %cst_104 = arith.constant dense<0.000000e+00> : vector<40xf32>
    %418 = vector.multi_reduction <add>, %417, %cst_104 [1] : vector<40x40xf32> to vector<40xf32>
    %419 = vector.shape_cast %418 : vector<40xf32> to vector<40x1xf32>
    %420 = tpu.reciprocal %419 {approx = true} : vector<40x1xf32> -> vector<40x1xf32>
    %421 = vector.broadcast %420 : vector<40x1xf32> to vector<40x40xf32>
    %422 = arith.mulf %417, %421 : vector<40x40xf32>
    %423 = arith.truncf %422 : vector<40x40xf32> to vector<40x40xbf16>
    %424 = arith.truncf %407 : vector<40x8xf32> to vector<40x8xbf16>
    %cst_105 = arith.constant dense<0.000000e+00> : vector<40x8xf32>
    %425 = tpu.matmul %423, %424, %cst_105 {dimension_numbers = #tpu.dot_dimension_numbers<[1], [0], [0], [1], [0, 0, 1, 1], [], []>} : vector<40x40xbf16>, vector<40x8xbf16>, vector<40x8xf32> -> vector<40x8xf32>
    %426 = vector.extract_strided_slice %319 {offsets = [40, 8], sizes = [40, 8], strides = [1, 1]} : vector<80x96xf32> to vector<40x8xf32>
    %427 = vector.extract_strided_slice %319 {offsets = [40, 40], sizes = [40, 8], strides = [1, 1]} : vector<80x96xf32> to vector<40x8xf32>
    %428 = vector.extract_strided_slice %319 {offsets = [40, 72], sizes = [40, 8], strides = [1, 1]} : vector<80x96xf32> to vector<40x8xf32>
    %429 = arith.truncf %426 : vector<40x8xf32> to vector<40x8xbf16>
    %430 = arith.truncf %427 : vector<40x8xf32> to vector<40x8xbf16>
    %cst_106 = arith.constant dense<0.000000e+00> : vector<40x40xf32>
    %431 = tpu.matmul %429, %430, %cst_106 {dimension_numbers = #tpu.dot_dimension_numbers<[1], [1], [0], [0], [0, 0, 1, 0], [], []>} : vector<40x8xbf16>, vector<40x8xbf16>, vector<40x40xf32> -> vector<40x40xf32>
    %432 = vector.broadcast %23 : vector<1x40xf32> to vector<40x40xf32>
    %433 = arith.addf %431, %432 : vector<40x40xf32>
    %cst_107 = arith.constant dense<0xFF800000> : vector<40xf32>
    %434 = vector.multi_reduction <maximumf>, %433, %cst_107 [1] : vector<40x40xf32> to vector<40xf32>
    %435 = vector.shape_cast %434 : vector<40xf32> to vector<40x1xf32>
    %436 = vector.broadcast %435 : vector<40x1xf32> to vector<40x40xf32>
    %437 = arith.subf %433, %436 : vector<40x40xf32>
    %438 = math.exp %437 : vector<40x40xf32>
    %cst_108 = arith.constant dense<0.000000e+00> : vector<40xf32>
    %439 = vector.multi_reduction <add>, %438, %cst_108 [1] : vector<40x40xf32> to vector<40xf32>
    %440 = vector.shape_cast %439 : vector<40xf32> to vector<40x1xf32>
    %441 = tpu.reciprocal %440 {approx = true} : vector<40x1xf32> -> vector<40x1xf32>
    %442 = vector.broadcast %441 : vector<40x1xf32> to vector<40x40xf32>
    %443 = arith.mulf %438, %442 : vector<40x40xf32>
    %444 = arith.truncf %443 : vector<40x40xf32> to vector<40x40xbf16>
    %445 = arith.truncf %428 : vector<40x8xf32> to vector<40x8xbf16>
    %cst_109 = arith.constant dense<0.000000e+00> : vector<40x8xf32>
    %446 = tpu.matmul %444, %445, %cst_109 {dimension_numbers = #tpu.dot_dimension_numbers<[1], [0], [0], [1], [0, 0, 1, 1], [], []>} : vector<40x40xbf16>, vector<40x8xbf16>, vector<40x8xf32> -> vector<40x8xf32>
    %447 = vector.extract_strided_slice %319 {offsets = [40, 16], sizes = [40, 8], strides = [1, 1]} : vector<80x96xf32> to vector<40x8xf32>
    %448 = vector.extract_strided_slice %319 {offsets = [40, 48], sizes = [40, 8], strides = [1, 1]} : vector<80x96xf32> to vector<40x8xf32>
    %449 = vector.extract_strided_slice %319 {offsets = [40, 80], sizes = [40, 8], strides = [1, 1]} : vector<80x96xf32> to vector<40x8xf32>
    %450 = arith.truncf %447 : vector<40x8xf32> to vector<40x8xbf16>
    %451 = arith.truncf %448 : vector<40x8xf32> to vector<40x8xbf16>
    %cst_110 = arith.constant dense<0.000000e+00> : vector<40x40xf32>
    %452 = tpu.matmul %450, %451, %cst_110 {dimension_numbers = #tpu.dot_dimension_numbers<[1], [1], [0], [0], [0, 0, 1, 0], [], []>} : vector<40x8xbf16>, vector<40x8xbf16>, vector<40x40xf32> -> vector<40x40xf32>
    %453 = vector.broadcast %23 : vector<1x40xf32> to vector<40x40xf32>
    %454 = arith.addf %452, %453 : vector<40x40xf32>
    %cst_111 = arith.constant dense<0xFF800000> : vector<40xf32>
    %455 = vector.multi_reduction <maximumf>, %454, %cst_111 [1] : vector<40x40xf32> to vector<40xf32>
    %456 = vector.shape_cast %455 : vector<40xf32> to vector<40x1xf32>
    %457 = vector.broadcast %456 : vector<40x1xf32> to vector<40x40xf32>
    %458 = arith.subf %454, %457 : vector<40x40xf32>
    %459 = math.exp %458 : vector<40x40xf32>
    %cst_112 = arith.constant dense<0.000000e+00> : vector<40xf32>
    %460 = vector.multi_reduction <add>, %459, %cst_112 [1] : vector<40x40xf32> to vector<40xf32>
    %461 = vector.shape_cast %460 : vector<40xf32> to vector<40x1xf32>
    %462 = tpu.reciprocal %461 {approx = true} : vector<40x1xf32> -> vector<40x1xf32>
    %463 = vector.broadcast %462 : vector<40x1xf32> to vector<40x40xf32>
    %464 = arith.mulf %459, %463 : vector<40x40xf32>
    %465 = arith.truncf %464 : vector<40x40xf32> to vector<40x40xbf16>
    %466 = arith.truncf %449 : vector<40x8xf32> to vector<40x8xbf16>
    %cst_113 = arith.constant dense<0.000000e+00> : vector<40x8xf32>
    %467 = tpu.matmul %465, %466, %cst_113 {dimension_numbers = #tpu.dot_dimension_numbers<[1], [0], [0], [1], [0, 0, 1, 1], [], []>} : vector<40x40xbf16>, vector<40x8xbf16>, vector<40x8xf32> -> vector<40x8xf32>
    %468 = vector.extract_strided_slice %319 {offsets = [40, 24], sizes = [40, 8], strides = [1, 1]} : vector<80x96xf32> to vector<40x8xf32>
    %469 = vector.extract_strided_slice %319 {offsets = [40, 56], sizes = [40, 8], strides = [1, 1]} : vector<80x96xf32> to vector<40x8xf32>
    %470 = vector.extract_strided_slice %319 {offsets = [40, 88], sizes = [40, 8], strides = [1, 1]} : vector<80x96xf32> to vector<40x8xf32>
    %471 = arith.truncf %468 : vector<40x8xf32> to vector<40x8xbf16>
    %472 = arith.truncf %469 : vector<40x8xf32> to vector<40x8xbf16>
    %cst_114 = arith.constant dense<0.000000e+00> : vector<40x40xf32>
    %473 = tpu.matmul %471, %472, %cst_114 {dimension_numbers = #tpu.dot_dimension_numbers<[1], [1], [0], [0], [0, 0, 1, 0], [], []>} : vector<40x8xbf16>, vector<40x8xbf16>, vector<40x40xf32> -> vector<40x40xf32>
    %474 = vector.broadcast %23 : vector<1x40xf32> to vector<40x40xf32>
    %475 = arith.addf %473, %474 : vector<40x40xf32>
    %cst_115 = arith.constant dense<0xFF800000> : vector<40xf32>
    %476 = vector.multi_reduction <maximumf>, %475, %cst_115 [1] : vector<40x40xf32> to vector<40xf32>
    %477 = vector.shape_cast %476 : vector<40xf32> to vector<40x1xf32>
    %478 = vector.broadcast %477 : vector<40x1xf32> to vector<40x40xf32>
    %479 = arith.subf %475, %478 : vector<40x40xf32>
    %480 = math.exp %479 : vector<40x40xf32>
    %cst_116 = arith.constant dense<0.000000e+00> : vector<40xf32>
    %481 = vector.multi_reduction <add>, %480, %cst_116 [1] : vector<40x40xf32> to vector<40xf32>
    %482 = vector.shape_cast %481 : vector<40xf32> to vector<40x1xf32>
    %483 = tpu.reciprocal %482 {approx = true} : vector<40x1xf32> -> vector<40x1xf32>
    %484 = vector.broadcast %483 : vector<40x1xf32> to vector<40x40xf32>
    %485 = arith.mulf %480, %484 : vector<40x40xf32>
    %486 = arith.truncf %485 : vector<40x40xf32> to vector<40x40xbf16>
    %487 = arith.truncf %470 : vector<40x8xf32> to vector<40x8xbf16>
    %cst_117 = arith.constant dense<0.000000e+00> : vector<40x8xf32>
    %488 = tpu.matmul %486, %487, %cst_117 {dimension_numbers = #tpu.dot_dimension_numbers<[1], [0], [0], [1], [0, 0, 1, 1], [], []>} : vector<40x40xbf16>, vector<40x8xbf16>, vector<40x8xf32> -> vector<40x8xf32>
    %489 = tpu.concatenate %425, %446, %467, %488 in 1 : vector<40x8xf32>, vector<40x8xf32>, vector<40x8xf32>, vector<40x8xf32> -> vector<40x32xf32>
    %490 = tpu.concatenate %404, %489 in 0 : vector<40x32xf32>, vector<40x32xf32> -> vector<80x32xf32>
    %491 = arith.truncf %490 : vector<80x32xf32> to vector<80x32xbf16>
    %c1_118 = arith.constant 1 : index
    %c0_119 = arith.constant 0 : index
    %c0_120 = arith.constant 0 : index
    %492 = vector.load %arg6[%c1_118, %c0_119, %c0_120] : memref<2x32x32xbf16, #tpu.memory_space<vmem>>, vector<1x32x32xbf16>
    %493 = vector.shape_cast %492 : vector<1x32x32xbf16> to vector<32x32xbf16>
    %cst_121 = arith.constant dense<0.000000e+00> : vector<80x32xf32>
    %494 = tpu.matmul %491, %493, %cst_121 {dimension_numbers = #tpu.dot_dimension_numbers<[1], [0], [0], [1], [0, 0, 1, 1], [], []>} : vector<80x32xbf16>, vector<32x32xbf16>, vector<80x32xf32> -> vector<80x32xf32>
    %495 = arith.addf %284, %494 : vector<80x32xf32>
    %496 = vector.broadcast %289 : vector<1x32xf32> to vector<80x32xf32>
    %497 = arith.addf %495, %496 : vector<80x32xf32>
    %cst_122 = arith.constant dense<0.000000e+00> : vector<80xf32>
    %498 = vector.multi_reduction <add>, %497, %cst_122 [1] : vector<80x32xf32> to vector<80xf32>
    %499 = vector.shape_cast %498 : vector<80xf32> to vector<80x1xf32>
    %cst_123 = arith.constant 3.200000e+01 : f32
    %500 = vector.broadcast %cst_123 : f32 to vector<80x1xf32>
    %501 = arith.divf %499, %500 : vector<80x1xf32>
    %502 = vector.broadcast %501 : vector<80x1xf32> to vector<80x32xf32>
    %503 = arith.subf %497, %502 : vector<80x32xf32>
    %504 = arith.mulf %503, %503 : vector<80x32xf32>
    %cst_124 = arith.constant dense<0.000000e+00> : vector<80xf32>
    %505 = vector.multi_reduction <add>, %504, %cst_124 [1] : vector<80x32xf32> to vector<80xf32>
    %506 = vector.shape_cast %505 : vector<80xf32> to vector<80x1xf32>
    %cst_125 = arith.constant 3.200000e+01 : f32
    %507 = vector.broadcast %cst_125 : f32 to vector<80x1xf32>
    %508 = arith.divf %506, %507 : vector<80x1xf32>
    %509 = vector.broadcast %501 : vector<80x1xf32> to vector<80x32xf32>
    %510 = arith.subf %497, %509 : vector<80x32xf32>
    %cst_126 = arith.constant 9.99999974E-6 : f32
    %511 = vector.broadcast %cst_126 : f32 to vector<80x1xf32>
    %512 = arith.addf %508, %511 : vector<80x1xf32>
    %513 = math.rsqrt %512 : vector<80x1xf32>
    %514 = vector.broadcast %513 : vector<80x1xf32> to vector<80x32xf32>
    %515 = arith.mulf %510, %514 : vector<80x32xf32>
    %516 = vector.broadcast %290 : vector<1x32xf32> to vector<80x32xf32>
    %517 = arith.mulf %515, %516 : vector<80x32xf32>
    %518 = vector.broadcast %291 : vector<1x32xf32> to vector<80x32xf32>
    %519 = arith.addf %517, %518 : vector<80x32xf32>
    %520 = arith.truncf %519 : vector<80x32xf32> to vector<80x32xbf16>
    %c1_127 = arith.constant 1 : index
    %c0_128 = arith.constant 0 : index
    %c0_129 = arith.constant 0 : index
    %521 = vector.load %arg7[%c1_127, %c0_128, %c0_129] : memref<2x32x128xbf16, #tpu.memory_space<vmem>>, vector<1x32x128xbf16>
    %522 = vector.shape_cast %521 : vector<1x32x128xbf16> to vector<32x128xbf16>
    %cst_130 = arith.constant dense<0.000000e+00> : vector<80x128xf32>
    %523 = tpu.matmul %520, %522, %cst_130 {dimension_numbers = #tpu.dot_dimension_numbers<[1], [0], [0], [1], [0, 0, 1, 1], [], []>} : vector<80x32xbf16>, vector<32x128xbf16>, vector<80x128xf32> -> vector<80x128xf32>
    %524 = vector.broadcast %293 : vector<1x128xf32> to vector<80x128xf32>
    %525 = arith.addf %523, %524 : vector<80x128xf32>
    %526 = arith.mulf %525, %525 : vector<80x128xf32>
    %527 = arith.mulf %525, %526 : vector<80x128xf32>
    %cst_131 = arith.constant 4.471500e-02 : f32
    %528 = vector.broadcast %cst_131 : f32 to vector<80x128xf32>
    %529 = arith.mulf %528, %527 : vector<80x128xf32>
    %530 = arith.addf %525, %529 : vector<80x128xf32>
    %cst_132 = arith.constant 0.797884583 : f32
    %531 = vector.broadcast %cst_132 : f32 to vector<80x128xf32>
    %532 = arith.mulf %531, %530 : vector<80x128xf32>
    %533 = math.tanh %532 : vector<80x128xf32>
    %cst_133 = arith.constant 1.000000e+00 : f32
    %534 = vector.broadcast %cst_133 : f32 to vector<80x128xf32>
    %535 = arith.addf %534, %533 : vector<80x128xf32>
    %cst_134 = arith.constant 5.000000e-01 : f32
    %536 = vector.broadcast %cst_134 : f32 to vector<80x128xf32>
    %537 = arith.mulf %536, %535 : vector<80x128xf32>
    %538 = arith.mulf %525, %537 : vector<80x128xf32>
    %539 = arith.truncf %538 : vector<80x128xf32> to vector<80x128xbf16>
    %c1_135 = arith.constant 1 : index
    %c0_136 = arith.constant 0 : index
    %c0_137 = arith.constant 0 : index
    %540 = vector.load %arg8[%c1_135, %c0_136, %c0_137] : memref<2x128x32xbf16, #tpu.memory_space<vmem>>, vector<1x128x32xbf16>
    %541 = vector.shape_cast %540 : vector<1x128x32xbf16> to vector<128x32xbf16>
    %cst_138 = arith.constant dense<0.000000e+00> : vector<80x32xf32>
    %542 = tpu.matmul %539, %541, %cst_138 {dimension_numbers = #tpu.dot_dimension_numbers<[1], [0], [0], [1], [0, 0, 1, 1], [], []>} : vector<80x128xbf16>, vector<128x32xbf16>, vector<80x32xf32> -> vector<80x32xf32>
    %543 = vector.broadcast %292 : vector<1x32xf32> to vector<80x32xf32>
    %544 = arith.addf %542, %543 : vector<80x32xf32>
    %545 = arith.addf %497, %544 : vector<80x32xf32>
    %546 = vector.extract_strided_slice %545 {offsets = [0, 0], sizes = [1, 32], strides = [1, 1]} : vector<80x32xf32> to vector<1x32xf32>
    %547 = vector.extract_strided_slice %545 {offsets = [40, 0], sizes = [1, 32], strides = [1, 1]} : vector<80x32xf32> to vector<1x32xf32>
    %548 = tpu.concatenate %546, %547 in 0 : vector<1x32xf32>, vector<1x32xf32> -> vector<2x32xf32>
    %cst_139 = arith.constant dense<0.000000e+00> : vector<2xf32>
    %549 = vector.multi_reduction <add>, %548, %cst_139 [1] : vector<2x32xf32> to vector<2xf32>
    %550 = vector.shape_cast %549 : vector<2xf32> to vector<2x1xf32>
    %cst_140 = arith.constant 3.200000e+01 : f32
    %551 = vector.broadcast %cst_140 : f32 to vector<2x1xf32>
    %552 = arith.divf %550, %551 : vector<2x1xf32>
    %553 = vector.broadcast %552 : vector<2x1xf32> to vector<2x32xf32>
    %554 = arith.subf %548, %553 : vector<2x32xf32>
    %555 = arith.mulf %554, %554 : vector<2x32xf32>
    %cst_141 = arith.constant dense<0.000000e+00> : vector<2xf32>
    %556 = vector.multi_reduction <add>, %555, %cst_141 [1] : vector<2x32xf32> to vector<2xf32>
    %557 = vector.shape_cast %556 : vector<2xf32> to vector<2x1xf32>
    %cst_142 = arith.constant 3.200000e+01 : f32
    %558 = vector.broadcast %cst_142 : f32 to vector<2x1xf32>
    %559 = arith.divf %557, %558 : vector<2x1xf32>
    %560 = vector.broadcast %552 : vector<2x1xf32> to vector<2x32xf32>
    %561 = arith.subf %548, %560 : vector<2x32xf32>
    %cst_143 = arith.constant 9.99999974E-6 : f32
    %562 = vector.broadcast %cst_143 : f32 to vector<2x1xf32>
    %563 = arith.addf %559, %562 : vector<2x1xf32>
    %564 = math.rsqrt %563 : vector<2x1xf32>
    %565 = vector.broadcast %564 : vector<2x1xf32> to vector<2x32xf32>
    %566 = arith.mulf %561, %565 : vector<2x32xf32>
    %567 = vector.broadcast %2 : vector<1x32xf32> to vector<2x32xf32>
    %568 = arith.mulf %566, %567 : vector<2x32xf32>
    %569 = vector.broadcast %3 : vector<1x32xf32> to vector<2x32xf32>
    %570 = arith.addf %568, %569 : vector<2x32xf32>
    %cst_144 = arith.constant dense<0.000000e+00> : vector<2xf32>
    %571 = vector.multi_reduction <add>, %570, %cst_144 [1] : vector<2x32xf32> to vector<2xf32>
    %572 = vector.shape_cast %571 : vector<2xf32> to vector<2x1xf32>
    %cst_145 = arith.constant 3.200000e+01 : f32
    %573 = vector.broadcast %cst_145 : f32 to vector<2x1xf32>
    %574 = arith.divf %572, %573 : vector<2x1xf32>
    %575 = vector.broadcast %574 : vector<2x1xf32> to vector<2x32xf32>
    %576 = arith.subf %570, %575 : vector<2x32xf32>
    %577 = arith.mulf %576, %576 : vector<2x32xf32>
    %cst_146 = arith.constant dense<0.000000e+00> : vector<2xf32>
    %578 = vector.multi_reduction <add>, %577, %cst_146 [1] : vector<2x32xf32> to vector<2xf32>
    %579 = vector.shape_cast %578 : vector<2xf32> to vector<2x1xf32>
    %cst_147 = arith.constant 3.200000e+01 : f32
    %580 = vector.broadcast %cst_147 : f32 to vector<2x1xf32>
    %581 = arith.divf %579, %580 : vector<2x1xf32>
    %582 = vector.broadcast %574 : vector<2x1xf32> to vector<2x32xf32>
    %583 = arith.subf %570, %582 : vector<2x32xf32>
    %cst_148 = arith.constant 9.99999974E-6 : f32
    %584 = vector.broadcast %cst_148 : f32 to vector<2x1xf32>
    %585 = arith.addf %581, %584 : vector<2x1xf32>
    %586 = math.rsqrt %585 : vector<2x1xf32>
    %587 = vector.broadcast %586 : vector<2x1xf32> to vector<2x32xf32>
    %588 = arith.mulf %583, %587 : vector<2x32xf32>
    %589 = vector.broadcast %4 : vector<1x32xf32> to vector<2x32xf32>
    %590 = arith.mulf %588, %589 : vector<2x32xf32>
    %591 = vector.broadcast %5 : vector<1x32xf32> to vector<2x32xf32>
    %592 = arith.addf %590, %591 : vector<2x32xf32>
    %593 = arith.truncf %592 : vector<2x32xf32> to vector<2x32xbf16>
    %c0_149 = arith.constant 0 : index
    %c0_150 = arith.constant 0 : index
    %594 = vector.load %arg9[%c0_149, %c0_150] : memref<32x128xbf16, #tpu.memory_space<vmem>>, vector<32x128xbf16>
    %cst_151 = arith.constant dense<0.000000e+00> : vector<2x128xf32>
    %595 = tpu.matmul %593, %594, %cst_151 {dimension_numbers = #tpu.dot_dimension_numbers<[1], [0], [0], [1], [0, 0, 1, 1], [], []>} : vector<2x32xbf16>, vector<32x128xbf16>, vector<2x128xf32> -> vector<2x128xf32>
    %596 = vector.broadcast %6 : vector<1x128xf32> to vector<2x128xf32>
    %597 = arith.addf %595, %596 : vector<2x128xf32>
    %c0_152 = arith.constant 0 : index
    %c0_153 = arith.constant 0 : index
    %598 = vector.load %arg10[%c0_152, %c0_153] : memref<2x128xf32, #tpu.memory_space<vmem>>, vector<2x128xf32>
    tpu.vector_store %arg10[%c0_152, %c0_153], %597 {strides = array<i32>} : memref<2x128xf32, #tpu.memory_space<vmem>>, vector<2x128xf32>,
    return
  }
}

</mosaic_0001>

<llo_original>
// kernel: vanilla_tr_forward.1
$region0: #{vanilla_tr_forward.1}
  #allocation0 [shape = 'u32[]', space=smem, size = 0x4, offset = 0x4, fixed_abs, tag = 'smem constant byte address 0x4 - core index']
  #allocation1 [shape = 'u32[144,128]{1,0:T(1,128)}', space=vmem, size = 0x12000, scoped, tag = 'internal scratch']
  %s0 = inlined_call_operand.vmem [shape: f32[64,8], index: 0, kind: input, shape index: {}]
  %s1 = inlined_call_operand.vmem [shape: bf16[8,32], index: 1, kind: input, shape index: {}]
  %s2 = inlined_call_operand.vmem [shape: f32[32,32], index: 2, kind: input, shape index: {}]
  %s3 = inlined_call_operand.hbm [shape: f32[8,128], index: 3, kind: input, shape index: {}]
  %s4 = inlined_call_operand.hbm [shape: f32[2,8,128], index: 4, kind: input, shape index: {}]
  %s5 = inlined_call_operand.vmem [shape: bf16[2,32,96], index: 5, kind: input, shape index: {}]
  %s6 = inlined_call_operand.vmem [shape: bf16[2,32,32], index: 6, kind: input, shape index: {}]
  %s7 = inlined_call_operand.hbm [shape: bf16[2,32,128], index: 7, kind: input, shape index: {}]
  %s8 = inlined_call_operand.vmem [shape: bf16[2,128,32], index: 8, kind: input, shape index: {}]
  %s9 = inlined_call_operand.vmem [shape: bf16[32,128], index: 9, kind: input, shape index: {}]
  %s10 = inlined_call_operand.hbm [shape: f32[2,128], index: 10, kind: output, shape index: {}]
  %s11 = sld [smem:[#allocation0]]
  $region62: #{vanilla_tr_forward.1} parent=0
    _
  %s13 = ssub.s32 1, %s11
  %s14 = scalar_select 0, %s13, %s11
  $region1: #{vanilla_tr_forward.1} parent=0
    #allocation2 [shape = 'u8[4096]{0}', space=vmem, size = 0x1000, scoped, tag = 'input window, operand 3, single buffered']
    #allocation3 [shape = 's32[1]{0}', space=sflag, size = 0x4, scoped, tag = 'scoped memory for vanilla_tr_forward.1']
    #allocation4 [shape = 's32[1]{0}', space=sflag, size = 0x4, scoped, tag = 'scoped memory for vanilla_tr_forward.1']
    #allocation5 [shape = 'u8[8192]{0}', space=vmem, size = 0x2000, scoped, tag = 'input window, operand 4, single buffered']
    #allocation6 [shape = 's32[1]{0}', space=sflag, size = 0x4, scoped, tag = 'scoped memory for vanilla_tr_forward.1']
    #allocation7 [shape = 'u8[16384]{0}', space=vmem, size = 0x4000, scoped, tag = 'input window, operand 7, single buffered']
    #allocation8 [shape = 'u8[1024]{0}', space=vmem, size = 0x400, scoped, tag = 'output window, operand 0, single buffered']
    %15 = vsyncpa [#allocation3], 0
    %16 = vsyncpa [#allocation6], 0
    %17 = vsyncpa [#allocation4], 0
    // Predicated region
    $region2: #{vanilla_tr_forward.1} parent=1 // pred_check
      _
    $region3: #{vanilla_tr_forward.1} parent=1 // pred_check_branch
      %19 = sbr.rel (0) target = $region5
    $region4: #{vanilla_tr_forward.1} parent=1 // pred_region
      _
    $region5: #{vanilla_tr_forward.1} parent=1 // pred_fallthru
      _
    // Predicated region
    $region6: #{vanilla_tr_forward.1} parent=1 // pred_check
      _
    $region7: #{vanilla_tr_forward.1} parent=1 // pred_check_branch
      %21 = sbr.rel (0) target = $region9
    $region8: #{vanilla_tr_forward.1} parent=1 // pred_region
      _
    $region9: #{vanilla_tr_forward.1} parent=1 // pred_fallthru
      _
    // Predicated region
    $region10: #{vanilla_tr_forward.1} parent=1 // pred_check
      _
    $region11: #{vanilla_tr_forward.1} parent=1 // pred_check_branch
      %23 = sbr.rel (0) target = $region13
    $region12: #{vanilla_tr_forward.1} parent=1 // pred_region
      _
    $region13: #{vanilla_tr_forward.1} parent=1 // pred_fallthru
      _
    // Predicated region
    $region14: #{vanilla_tr_forward.1} parent=1 // pred_check
      _
    $region15: #{vanilla_tr_forward.1} parent=1 // pred_check_branch
      %25 = sbr.rel (0) target = $region17
    $region16: #{vanilla_tr_forward.1} parent=1 // pred_region
      %s27 = ssub.s32 128, 128
      %28 = vsyncadd [#allocation3], %s27
      %s30 = sshll.u32 [#allocation2], 4
      %s31 = int_to_ptr.vmem [resolvable:$true] %s30
      %33 = dma.hbm_to_vmem [thread:$0]  %s3, 128, %s31, [#allocation3]
    $region17: #{vanilla_tr_forward.1} parent=1 // pred_fallthru
      _
    // Predicated region
    $region18: #{vanilla_tr_forward.1} parent=1 // pred_check
      _
    $region19: #{vanilla_tr_forward.1} parent=1 // pred_check_branch
      %35 = sbr.rel (0) target = $region21
    $region20: #{vanilla_tr_forward.1} parent=1 // pred_region
      %s37 = ssub.s32 256, 256
      %38 = vsyncadd [#allocation6], %s37
      %s39 = sshll.u32 [#allocation5], 4
      %s40 = int_to_ptr.vmem [resolvable:$true] %s39
      %45 = dma.hbm_to_vmem [thread:$0]  %s4, 256, %s40, [#allocation6], 128, 128, 8
    $region21: #{vanilla_tr_forward.1} parent=1 // pred_fallthru
      _
    // Predicated region
    $region22: #{vanilla_tr_forward.1} parent=1 // pred_check
      _
    $region23: #{vanilla_tr_forward.1} parent=1 // pred_check_branch
      %47 = sbr.rel (0) target = $region25
    $region24: #{vanilla_tr_forward.1} parent=1 // pred_region
      _
    $region25: #{vanilla_tr_forward.1} parent=1 // pred_fallthru
      _
    // Predicated region
    $region26: #{vanilla_tr_forward.1} parent=1 // pred_check
      _
    $region27: #{vanilla_tr_forward.1} parent=1 // pred_check_branch
      %49 = sbr.rel (0) target = $region29
    $region28: #{vanilla_tr_forward.1} parent=1 // pred_region
      _
    $region29: #{vanilla_tr_forward.1} parent=1 // pred_fallthru
      _
    // Predicated region
    $region30: #{vanilla_tr_forward.1} parent=1 // pred_check
      _
    $region31: #{vanilla_tr_forward.1} parent=1 // pred_check_branch
      %51 = sbr.rel (0) target = $region33
    $region32: #{vanilla_tr_forward.1} parent=1 // pred_region
      %s53 = ssub.s32 512, 512
      %54 = vsyncadd [#allocation6], %s53
      %s55 = sshll.u32 [#allocation7], 4
      %s56 = int_to_ptr.vmem [resolvable:$true] %s55
      %61 = dma.hbm_to_vmem [thread:$0]  %s7, 512, %s56, [#allocation6], 64, 64, 4
    $region33: #{vanilla_tr_forward.1} parent=1 // pred_fallthru
      _
    // Predicated region
    $region34: #{vanilla_tr_forward.1} parent=1 // pred_check
      _
    $region35: #{vanilla_tr_forward.1} parent=1 // pred_check_branch
      %63 = sbr.rel (0) target = $region37
    $region36: #{vanilla_tr_forward.1} parent=1 // pred_region
      _
    $region37: #{vanilla_tr_forward.1} parent=1 // pred_fallthru
      _
    // Predicated region
    $region38: #{vanilla_tr_forward.1} parent=1 // pred_check
      _
    $region39: #{vanilla_tr_forward.1} parent=1 // pred_check_branch
      %65 = sbr.rel (0) target = $region41
    $region40: #{vanilla_tr_forward.1} parent=1 // pred_region
      _
    $region41: #{vanilla_tr_forward.1} parent=1 // pred_fallthru
      _
    // Predicated region
    $region42: #{vanilla_tr_forward.1} parent=1 // pred_check
      _
    $region43: #{vanilla_tr_forward.1} parent=1 // pred_check_branch
      %67 = sbr.rel (0) target = $region45
    $region44: #{vanilla_tr_forward.1} parent=1 // pred_region
      %68 = dma.done [#allocation3], 128
    $region45: #{vanilla_tr_forward.1} parent=1 // pred_fallthru
      _
    // Predicated region
    $region46: #{vanilla_tr_forward.1} parent=1 // pred_check
      _
    $region47: #{vanilla_tr_forward.1} parent=1 // pred_check_branch
      %70 = sbr.rel (0) target = $region49
    $region48: #{vanilla_tr_forward.1} parent=1 // pred_region
      %71 = dma.done [#allocation6], 256
    $region49: #{vanilla_tr_forward.1} parent=1 // pred_fallthru
      _
    // Predicated region
    $region50: #{vanilla_tr_forward.1} parent=1 // pred_check
      _
    $region51: #{vanilla_tr_forward.1} parent=1 // pred_check_branch
      %73 = sbr.rel (0) target = $region53
    $region52: #{vanilla_tr_forward.1} parent=1 // pred_region
      %74 = dma.done [#allocation6], 512
    $region53: #{vanilla_tr_forward.1} parent=1 // pred_fallthru
      _
    %v76 = vld [vmem:[#allocation2] sm:$0xff]
    %v77 = vld [vmem:[%s0] sm:$0xff]
    %v78 = vld [vmem:[%s0 + $0x8] sm:$0xff]
    %v79 = vld [vmem:[%s0 + $0x10] sm:$0xff]
    %v80 = vld [vmem:[%s0 + $0x18] sm:$0xff]
    %v81 = vld [vmem:[%s0 + $0x20] sm:$0xff]
    %v82 = vld [vmem:[%s0 + $0x28] sm:$0xff]
    %v83 = vld [vmem:[%s0 + $0x30] sm:$0xff]
    %v84 = vld [vmem:[%s0 + $0x38] sm:$0xff]
    %v85 = vpack.c.bf16 %v78, %v77
    %v86 = vpack.c.bf16 %v80, %v79
    %v87 = vpack.c.bf16 %v82, %v81
    %v88 = vpack.c.bf16 %v84, %v83
    %v89 = vld [vmem:[%s1] sm:$0xf]
    %vm90 = vcmask 64512
    %v92 = vsel %vm90, %v85, 0
    %v95 = vsel %vm90, %v86, 0
    %v98 = vsel %vm90, %v87, 0
    %v101 = vsel %vm90, %v88, 0
    %vm103 = vcmask 1043456
    %v105 = vsel %vm103, %v89, 0
    %107 = vmatprep.subr.bf16.mxu0 0
    %108 = vmatpush1.bf16.msra.mxu0 %v105
    %109 = vmatprep.subr.bf16.mxu0 0
    %110 = vmatpush1.bf16.msra.mxu0 0
    %111 = vmatprep.subr.bf16.mxu0 0
    %112 = vmatpush1.bf16.msra.mxu0 0
    %113 = vmatprep.subr.bf16.mxu0 0
    %114 = vmatpush1.bf16.msra.mxu0 0
    %115 = vmatprep.subr.bf16.mxu0 0
    %116 = vmatpush1.bf16.msra.mxu0 0
    %117 = vmatprep.subr.bf16.mxu0 0
    %118 = vmatpush1.bf16.msra.mxu0 0
    %119 = vmatprep.subr.bf16.mxu0 0
    %120 = vmatpush1.bf16.msra.mxu0 0
    %121 = vmatprep.subr.bf16.mxu0 0
    %122 = vmatpush1.bf16.msra.mxu0 0
    %123 = vmatprep.subr.bf16.mxu0 0
    %124 = vmatpush1.bf16.msra.mxu0 0
    %125 = vmatprep.subr.bf16.mxu0 0
    %126 = vmatpush1.bf16.msra.mxu0 0
    %127 = vmatprep.subr.bf16.mxu0 0
    %128 = vmatpush1.bf16.msra.mxu0 0
    %129 = vmatprep.subr.bf16.mxu0 0
    %130 = vmatpush1.bf16.msra.mxu0 0
    %131 = vmatprep.subr.bf16.mxu0 0
    %132 = vmatpush1.bf16.msra.mxu0 0
    %133 = vmatprep.subr.bf16.mxu0 0
    %134 = vmatpush1.bf16.msra.mxu0 0
    %135 = vmatprep.subr.bf16.mxu0 0
    %136 = vmatpush1.bf16.msra.mxu0 0
    %137 = vmatprep.subr.bf16.mxu0 0
    %138 = vmatpush1.bf16.msra.mxu0 0
    %139 = vmatprep.mubr.bf16.mxu0 0
    %140 = vmatmul.mubr.bf16.gmra.mrb[0].mxu0 %v92
    %v141 = vpop.f32.mrb[0].mxu0
    %v142 = vadd.f32 0.0, %v141
    %v143 = vpop.f32.mrb[0].mxu0
    %v144 = vpop.f32.mrb[0].mxu0
    %v145 = vadd.f32 0.0, %v144
    %v146 = vpop.f32.mrb[0].mxu0
    %147 = vmatprep.mubr.bf16.mxu0 0
    %148 = vmatmul.mubr.bf16.gmra.mrb[0].mxu0 %v95
    %v149 = vpop.f32.mrb[0].mxu0
    %v150 = vadd.f32 0.0, %v149
    %v151 = vpop.f32.mrb[0].mxu0
    %v152 = vpop.f32.mrb[0].mxu0
    %v153 = vadd.f32 0.0, %v152
    %v154 = vpop.f32.mrb[0].mxu0
    %155 = vmatprep.mubr.bf16.mxu0 0
    %156 = vmatmul.mubr.bf16.gmra.mrb[0].mxu0 %v98
    %v157 = vpop.f32.mrb[0].mxu0
    %v158 = vadd.f32 0.0, %v157
    %v159 = vpop.f32.mrb[0].mxu0
    %v160 = vpop.f32.mrb[0].mxu0
    %v161 = vadd.f32 0.0, %v160
    %v162 = vpop.f32.mrb[0].mxu0
    %163 = vmatprep.mubr.bf16.mxu0 0
    %164 = vmatmul.mubr.bf16.gmra.mrb[0].mxu0 %v101
    %v165 = vpop.f32.mrb[0].mxu0
    %v166 = vadd.f32 0.0, %v165
    %v167 = vpop.f32.mrb[0].mxu0
    %v168 = vpop.f32.mrb[0].mxu0
    %v169 = vadd.f32 0.0, %v168
    %v170 = vpop.f32.mrb[0].mxu0
    %171 = vdwg.mxu0
    %v172 = vld [vmem:[%s2] sm:$0xff]
    %v173 = vld [vmem:[%s2 + $0x8] sm:$0xff]
    %v174 = vld [vmem:[%s2 + $0x10] sm:$0xff]
    %v175 = vld [vmem:[%s2 + $0x18] sm:$0xff]
    %v176 = vadd.f32 %v142, %v172
    %v177 = vadd.f32 %v145, %v173
    %v178 = vadd.f32 %v150, %v174
    %v179 = vadd.f32 %v153, %v175
    %v180 = vadd.f32 %v158, %v172
    %v181 = vadd.f32 %v161, %v173
    %v182 = vadd.f32 %v166, %v174
    %v183 = vadd.f32 %v169, %v175
    %vm188 = vcmask 1040384
    %v189 = vrot.slane %v176, 7
    %v190 = vrot.slane %v177, 7
    %v191 = vsel %vm188, %v189, %v190
    %v192 = vrot.slane %v178, 7
    %v193 = vsel %vm188, %v190, %v192
    %v194 = vrot.slane %v179, 7
    %v195 = vsel %vm188, %v192, %v194
    %v205 = vrot.slane %v180, 7
    %v206 = vrot.slane %v181, 7
    %v207 = vsel %vm188, %v205, %v206
    %v208 = vrot.slane %v182, 7
    %v209 = vsel %vm188, %v206, %v208
    %v210 = vrot.slane %v183, 7
    %v211 = vsel %vm188, %v208, %v210
    %v217 = vsel %vm188, %v76, %v189
    %v218 = vsel %vm188, %v194, 0.0
    %v219 = vsel %vm188, %v76, %v205
    %v220 = vsel %vm188, %v210, 0.0
    %v221 = vlaneseq
    %v222 = vand.u32 %v221, 127
    %vm223 = vcmp.lt.s32.totalorder %v222, 33
    %v224 = vsel %vm223, 0.0, -1e+30
    %v225 = vld [vmem:[#allocation5] sm:$0xff]
    %vm226 = vcmask 261120
    %v227 = vsel %vm226, %v217, 0.0
    %228 = vadd.xlane.f32.xlu0 %v227
    %v229 = vpop.xlane.xlu0 %228
    %v230 = vsel %vm226, %v191, 0.0
    %231 = vadd.xlane.f32.xlu0 %v230
    %v232 = vpop.xlane.xlu0 %231
    %v233 = vsel %vm226, %v193, 0.0
    %234 = vadd.xlane.f32.xlu0 %v233
    %v235 = vpop.xlane.xlu0 %234
    %v236 = vsel %vm226, %v195, 0.0
    %237 = vadd.xlane.f32.xlu0 %v236
    %v238 = vpop.xlane.xlu0 %237
    %v239 = vsel %vm226, %v218, 0.0
    %240 = vadd.xlane.f32.xlu0 %v239
    %v241 = vpop.xlane.xlu0 %240
    %v242 = vsel %vm226, %v219, 0.0
    %243 = vadd.xlane.f32.xlu0 %v242
    %v244 = vpop.xlane.xlu0 %243
    %v245 = vsel %vm226, %v207, 0.0
    %246 = vadd.xlane.f32.xlu0 %v245
    %v247 = vpop.xlane.xlu0 %246
    %v248 = vsel %vm226, %v209, 0.0
    %249 = vadd.xlane.f32.xlu0 %v248
    %v250 = vpop.xlane.xlu0 %249
    %v251 = vsel %vm226, %v211, 0.0
    %252 = vadd.xlane.f32.xlu0 %v251
    %v253 = vpop.xlane.xlu0 %252
    %v254 = vsel %vm226, %v220, 0.0
    %255 = vadd.xlane.f32.xlu0 %v254
    %v256 = vpop.xlane.xlu0 %255
    %v257 = vrcp.pop 32.0
    %v258 = vmul.f32 %v229, %v257
    %v259 = vmul.f32 %v232, %v257
    %v260 = vmul.f32 %v235, %v257
    %v261 = vmul.f32 %v238, %v257
    %v262 = vmul.f32 %v241, %v257
    %v263 = vmul.f32 %v244, %v257
    %v264 = vmul.f32 %v247, %v257
    %v265 = vmul.f32 %v250, %v257
    %v266 = vmul.f32 %v253, %v257
    %v267 = vmul.f32 %v256, %v257
    %v268 = vsub.f32 %v217, %v258
    %v269 = vsub.f32 %v191, %v259
    %v270 = vsub.f32 %v193, %v260
    %v271 = vsub.f32 %v195, %v261
    %v272 = vsub.f32 %v218, %v262
    %v273 = vsub.f32 %v219, %v263
    %v274 = vsub.f32 %v207, %v264
    %v275 = vsub.f32 %v209, %v265
    %v276 = vsub.f32 %v211, %v266
    %v277 = vsub.f32 %v220, %v267
    %v278 = vmul.f32 %v268, %v268
    %v279 = vmul.f32 %v269, %v269
    %v280 = vmul.f32 %v270, %v270
    %v281 = vmul.f32 %v271, %v271
    %v282 = vmul.f32 %v272, %v272
    %v283 = vmul.f32 %v273, %v273
    %v284 = vmul.f32 %v274, %v274
    %v285 = vmul.f32 %v275, %v275
    %v286 = vmul.f32 %v276, %v276
    %v287 = vmul.f32 %v277, %v277
    %v288 = vsel %vm226, %v278, 0.0
    %289 = vadd.xlane.f32.xlu0 %v288
    %v290 = vpop.xlane.xlu0 %289
    %v291 = vsel %vm226, %v279, 0.0
    %292 = vadd.xlane.f32.xlu0 %v291
    %v293 = vpop.xlane.xlu0 %292
    %v294 = vsel %vm226, %v280, 0.0
    %295 = vadd.xlane.f32.xlu0 %v294
    %v296 = vpop.xlane.xlu0 %295
    %v297 = vsel %vm226, %v281, 0.0
    %298 = vadd.xlane.f32.xlu0 %v297
    %v299 = vpop.xlane.xlu0 %298
    %v300 = vsel %vm226, %v282, 0.0
    %301 = vadd.xlane.f32.xlu0 %v300
    %v302 = vpop.xlane.xlu0 %301
    %v303 = vsel %vm226, %v283, 0.0
    %304 = vadd.xlane.f32.xlu0 %v303
    %v305 = vpop.xlane.xlu0 %304
    %v306 = vsel %vm226, %v284, 0.0
    %307 = vadd.xlane.f32.xlu0 %v306
    %v308 = vpop.xlane.xlu0 %307
    %v309 = vsel %vm226, %v285, 0.0
    %310 = vadd.xlane.f32.xlu0 %v309
    %v311 = vpop.xlane.xlu0 %310
    %v312 = vsel %vm226, %v286, 0.0
    %313 = vadd.xlane.f32.xlu0 %v312
    %v314 = vpop.xlane.xlu0 %313
    %v315 = vsel %vm226, %v287, 0.0
    %316 = vadd.xlane.f32.xlu0 %v315
    %v317 = vpop.xlane.xlu0 %316
    %v318 = vmul.f32 %v290, %v257
    %v319 = vmul.f32 %v293, %v257
    %v320 = vmul.f32 %v296, %v257
    %v321 = vmul.f32 %v299, %v257
    %v322 = vmul.f32 %v302, %v257
    %v323 = vmul.f32 %v305, %v257
    %v324 = vmul.f32 %v308, %v257
    %v325 = vmul.f32 %v311, %v257
    %v326 = vmul.f32 %v314, %v257
    %v327 = vmul.f32 %v317, %v257
    %v328 = vadd.f32 %v318, 1e-05
    %v329 = vadd.f32 %v319, 1e-05
    %v330 = vadd.f32 %v320, 1e-05
    %v331 = vadd.f32 %v321, 1e-05
    %v332 = vadd.f32 %v322, 1e-05
    %v333 = vadd.f32 %v323, 1e-05
    %v334 = vadd.f32 %v324, 1e-05
    %v335 = vadd.f32 %v325, 1e-05
    %v336 = vadd.f32 %v326, 1e-05
    %v337 = vadd.f32 %v327, 1e-05
    %v338 = vrsqrt.pop %v328
    %v339 = vrsqrt.pop %v329
    %v340 = vrsqrt.pop %v330
    %v341 = vrsqrt.pop %v331
    %v342 = vrsqrt.pop %v332
    %v343 = vrsqrt.pop %v333
    %v344 = vrsqrt.pop %v334
    %v345 = vrsqrt.pop %v335
    %v346 = vrsqrt.pop %v336
    %v347 = vrsqrt.pop %v337
    %v348 = vmul.f32 %v268, %v338
    %v349 = vmul.f32 %v269, %v339
    %v350 = vmul.f32 %v270, %v340
    %v351 = vmul.f32 %v271, %v341
    %v352 = vmul.f32 %v272, %v342
    %v353 = vmul.f32 %v273, %v343
    %v354 = vmul.f32 %v274, %v344
    %v355 = vmul.f32 %v275, %v345
    %v356 = vmul.f32 %v276, %v346
    %v357 = vmul.f32 %v277, %v347
    %v358 = vlaneseq
    %v359 = vshrl.u32 %v358, 7
    %v360 = vsub.s32 0, %v359
    %v361 = vrot.slane %v225, %v360
    %v362 = vmul.f32 %v348, %v361
    %v363 = vmul.f32 %v349, %v361
    %v364 = vmul.f32 %v350, %v361
    %v365 = vmul.f32 %v351, %v361
    %v366 = vmul.f32 %v352, %v361
    %v367 = vmul.f32 %v353, %v361
    %v368 = vmul.f32 %v354, %v361
    %v369 = vmul.f32 %v355, %v361
    %v370 = vmul.f32 %v356, %v361
    %v371 = vmul.f32 %v357, %v361
    %v372 = vlaneseq
    %v373 = vshrl.u32 %v372, 7
    %v374 = vsub.s32 1, %v373
    %v375 = vrot.slane %v225, %v374
    %v376 = vadd.f32 %v362, %v375
    %v377 = vadd.f32 %v363, %v375
    %v378 = vadd.f32 %v364, %v375
    %v379 = vadd.f32 %v365, %v375
    %v380 = vadd.f32 %v366, %v375
    %v381 = vadd.f32 %v367, %v375
    %v382 = vadd.f32 %v368, %v375
    %v383 = vadd.f32 %v369, %v375
    %v384 = vadd.f32 %v370, %v375
    %v385 = vadd.f32 %v371, %v375
    %v386 = vpack.c.bf16 %v377, %v376
    %v387 = vpack.c.bf16 %v379, %v378
    %v388 = vpack.c.bf16 %v381, %v380
    %v389 = vpack.c.bf16 %v383, %v382
    %v390 = vpack.c.bf16 %v385, %v384
    %v391 = vld [vmem:[%s5] sm:$0xf]
    %v392 = vld [vmem:[%s5 + $0x4] sm:$0xf]
    %v393 = vld [vmem:[%s5 + $0x8] sm:$0xf]
    %v394 = vld [vmem:[%s5 + $0xc] sm:$0xf]
    %v399 = vunpack.c.l.b16 %v391
    %v400 = vunpack.c.l.b16 %v392
    %v401 = vunpack.c.l.b16 %v393
    %v402 = vunpack.c.l.b16 %v394
    %v403 = vpack.c.b16 %v400, %v399
    %v404 = vpack.c.b16 %v402, %v401
    %v408 = vsel %vm226, %v386, 0
    %v411 = vsel %vm226, %v387, 0
    %v414 = vsel %vm226, %v388, 0
    %v417 = vsel %vm226, %v389, 0
    %v420 = vsel %vm226, %v390, 0
    %422 = vmatprep.subr.bf16.mxu0 0
    %423 = vmatpush1.bf16.msra.mxu0 %v403
    %424 = vmatprep.subr.bf16.mxu0 0
    %425 = vmatpush1.bf16.msra.mxu0 %v404
    %426 = vmatprep.subr.bf16.mxu0 0
    %427 = vmatpush1.bf16.msra.mxu0 0
    %428 = vmatprep.subr.bf16.mxu0 0
    %429 = vmatpush1.bf16.msra.mxu0 0
    %430 = vmatprep.subr.bf16.mxu0 0
    %431 = vmatpush1.bf16.msra.mxu0 0
    %432 = vmatprep.subr.bf16.mxu0 0
    %433 = vmatpush1.bf16.msra.mxu0 0
    %434 = vmatprep.subr.bf16.mxu0 0
    %435 = vmatpush1.bf16.msra.mxu0 0
    %436 = vmatprep.subr.bf16.mxu0 0
    %437 = vmatpush1.bf16.msra.mxu0 0
    %438 = vmatprep.subr.bf16.mxu0 0
    %439 = vmatpush1.bf16.msra.mxu0 0
    %440 = vmatprep.subr.bf16.mxu0 0
    %441 = vmatpush1.bf16.msra.mxu0 0
    %442 = vmatprep.subr.bf16.mxu0 0
    %443 = vmatpush1.bf16.msra.mxu0 0
    %444 = vmatprep.subr.bf16.mxu0 0
    %445 = vmatpush1.bf16.msra.mxu0 0
    %446 = vmatprep.subr.bf16.mxu0 0
    %447 = vmatpush1.bf16.msra.mxu0 0
    %448 = vmatprep.subr.bf16.mxu0 0
    %449 = vmatpush1.bf16.msra.mxu0 0
    %450 = vmatprep.subr.bf16.mxu0 0
    %451 = vmatpush1.bf16.msra.mxu0 0
    %452 = vmatprep.subr.bf16.mxu0 0
    %453 = vmatpush1.bf16.msra.mxu0 0
    %454 = vmatprep.mubr.bf16.mxu0 0
    %455 = vmatmul.mubr.bf16.gmra.mrb[0].mxu0 %v408
    %v456 = vpop.f32.mrb[0].mxu0
    %v457 = vadd.f32 0.0, %v456
    %v458 = vpop.f32.mrb[0].mxu0
    %v459 = vpop.f32.mrb[0].mxu0
    %v460 = vadd.f32 0.0, %v459
    %v461 = vpop.f32.mrb[0].mxu0
    %462 = vmatprep.mubr.bf16.mxu0 0
    %463 = vmatmul.mubr.bf16.gmra.mrb[0].mxu0 %v411
    %v464 = vpop.f32.mrb[0].mxu0
    %v465 = vadd.f32 0.0, %v464
    %v466 = vpop.f32.mrb[0].mxu0
    %v467 = vpop.f32.mrb[0].mxu0
    %v468 = vadd.f32 0.0, %v467
    %v469 = vpop.f32.mrb[0].mxu0
    %470 = vmatprep.mubr.bf16.mxu0 0
    %471 = vmatmul.mubr.bf16.gmra.mrb[0].mxu0 %v414
    %v472 = vpop.f32.mrb[0].mxu0
    %v473 = vadd.f32 0.0, %v472
    %v474 = vpop.f32.mrb[0].mxu0
    %v475 = vpop.f32.mrb[0].mxu0
    %v476 = vadd.f32 0.0, %v475
    %v477 = vpop.f32.mrb[0].mxu0
    %478 = vmatprep.mubr.bf16.mxu0 0
    %479 = vmatmul.mubr.bf16.gmra.mrb[0].mxu0 %v417
    %v480 = vpop.f32.mrb[0].mxu0
    %v481 = vadd.f32 0.0, %v480
    %v482 = vpop.f32.mrb[0].mxu0
    %v483 = vpop.f32.mrb[0].mxu0
    %v484 = vadd.f32 0.0, %v483
    %v485 = vpop.f32.mrb[0].mxu0
    %486 = vmatprep.mubr.bf16.mxu0 0
    %487 = vmatmul.mubr.bf16.gmra.mrb[0].mxu0 %v420
    %v488 = vpop.f32.mrb[0].mxu0
    %v489 = vadd.f32 0.0, %v488
    %v490 = vpop.f32.mrb[0].mxu0
    %v491 = vpop.f32.mrb[0].mxu0
    %v492 = vadd.f32 0.0, %v491
    %v493 = vpop.f32.mrb[0].mxu0
    %494 = vdwg.mxu0
    %v495 = vpack.c.bf16 %v460, %v457
    %v496 = vpack.c.bf16 %v468, %v465
    %v497 = vpack.c.bf16 %v473, %v473
    %501 = vrot.lane.b32.xlu0 %v495, 96
    %v502 = vpop.permute.xlu0 %501
    %503 = vrot.lane.b32.xlu0 %v496, 96
    %v504 = vpop.permute.xlu0 %503
    %505 = vrot.lane.b32.xlu0 %v497, 96
    %v506 = vpop.permute.xlu0 %505
    %v508 = vsel %vm90, %v495, 0
    %v511 = vsel %vm90, %v496, 0
    %v514 = vsel %vm90, %v497, 0
    %v517 = vsel %vm90, %v502, 0
    %v520 = vsel %vm90, %v504, 0
    %v523 = vsel %vm90, %v506, 0
    %525 = vmatprep.subr.bf16.mxu0 0
    %526 = vmatpush1.bf16.xpose.msra.mxu0 %v517
    %527 = vmatprep.subr.bf16.mxu0 0
    %528 = vmatpush1.bf16.xpose.msra.mxu0 %v520
    %529 = vmatprep.subr.bf16.mxu0 0
    %530 = vmatpush1.bf16.xpose.msra.mxu0 %v523
    %531 = vmatprep.subr.bf16.mxu0 0
    %532 = vmatpush1.bf16.xpose.msra.mxu0 0
    %533 = vmatprep.subr.bf16.mxu0 0
    %534 = vmatpush1.bf16.xpose.msra.mxu0 0
    %535 = vmatprep.subr.bf16.mxu0 0
    %536 = vmatpush1.bf16.xpose.msra.mxu0 0
    %537 = vmatprep.subr.bf16.mxu0 0
    %538 = vmatpush1.bf16.xpose.msra.mxu0 0
    %539 = vmatprep.subr.bf16.mxu0 0
    %540 = vmatpush1.bf16.xpose.msra.mxu0 0
    %541 = vmatprep.subr.bf16.mxu0 0
    %542 = vmatpush1.bf16.xpose.msra.mxu0 0
    %543 = vmatprep.subr.bf16.mxu0 0
    %544 = vmatpush1.bf16.xpose.msra.mxu0 0
    %545 = vmatprep.subr.bf16.mxu0 0
    %546 = vmatpush1.bf16.xpose.msra.mxu0 0
    %547 = vmatprep.subr.bf16.mxu0 0
    %548 = vmatpush1.bf16.xpose.msra.mxu0 0
    %549 = vmatprep.subr.bf16.mxu0 0
    %550 = vmatpush1.bf16.xpose.msra.mxu0 0
    %551 = vmatprep.subr.bf16.mxu0 0
    %552 = vmatpush1.bf16.xpose.msra.mxu0 0
    %553 = vmatprep.subr.bf16.mxu0 0
    %554 = vmatpush1.bf16.xpose.msra.mxu0 0
    %555 = vmatprep.subr.bf16.mxu0 0
    %556 = vmatpush1.bf16.xpose.msra.mxu0 0
    %557 = vmatprep.mubr.bf16.mxu0 0
    %558 = vmatmul.mubr.bf16.gmra.mrb[0].mxu0 %v508
    %v559 = vpop.f32.mrb[0].mxu0
    %v560 = vadd.f32 %v224, %v559
    %v561 = vpop.f32.mrb[0].mxu0
    %v562 = vpop.f32.mrb[0].mxu0
    %v563 = vadd.f32 %v224, %v562
    %v564 = vpop.f32.mrb[0].mxu0
    %565 = vmatprep.mubr.bf16.mxu0 0
    %566 = vmatmul.mubr.bf16.gmra.mrb[0].mxu0 %v511
    %v567 = vpop.f32.mrb[0].mxu0
    %v568 = vadd.f32 %v224, %v567
    %v569 = vpop.f32.mrb[0].mxu0
    %v570 = vpop.f32.mrb[0].mxu0
    %v571 = vadd.f32 %v224, %v570
    %v572 = vpop.f32.mrb[0].mxu0
    %573 = vmatprep.mubr.bf16.mxu0 0
    %574 = vmatmul.mubr.bf16.gmra.mrb[0].mxu0 %v514
    %v575 = vpop.f32.mrb[0].mxu0
    %v576 = vadd.f32 %v224, %v575
    %v577 = vpop.f32.mrb[0].mxu0
    %v578 = vpop.f32.mrb[0].mxu0
    %v579 = vpop.f32.mrb[0].mxu0
    %580 = vdwg.mxu0
    %vm581 = vcmask 326656
    %v582 = vsel %vm581, %v560, -inf
    %583 = vmax.xlane.f32.xlu0 %v582
    %v584 = vpop.xlane.xlu0 %583
    %v585 = vsel %vm581, %v563, -inf
    %586 = vmax.xlane.f32.xlu0 %v585
    %v587 = vpop.xlane.xlu0 %586
    %v588 = vsel %vm581, %v568, -inf
    %589 = vmax.xlane.f32.xlu0 %v588
    %v590 = vpop.xlane.xlu0 %589
    %v591 = vsel %vm581, %v571, -inf
    %592 = vmax.xlane.f32.xlu0 %v591
    %v593 = vpop.xlane.xlu0 %592
    %v594 = vsel %vm581, %v576, -inf
    %595 = vmax.xlane.f32.xlu0 %v594
    %v596 = vpop.xlane.xlu0 %595
    %v597 = vsub.f32 %v560, %v584
    %v598 = vsub.f32 %v563, %v587
    %v599 = vsub.f32 %v568, %v590
    %v600 = vsub.f32 %v571, %v593
    %v601 = vsub.f32 %v576, %v596
    %v602 = vmul.f32 %v597, 1.442695
    %v603 = vpow.pop %v602
    %v604 = vmul.f32 %v598, 1.442695
    %v605 = vpow.pop %v604
    %v606 = vmul.f32 %v599, 1.442695
    %v607 = vpow.pop %v606
    %v608 = vmul.f32 %v600, 1.442695
    %v609 = vpow.pop %v608
    %v610 = vmul.f32 %v601, 1.442695
    %v611 = vpow.pop %v610
    %v612 = vsel %vm581, %v603, 0.0
    %613 = vadd.xlane.f32.xlu0 %v612
    %v614 = vpop.xlane.xlu0 %613
    %v615 = vsel %vm581, %v605, 0.0
    %616 = vadd.xlane.f32.xlu0 %v615
    %v617 = vpop.xlane.xlu0 %616
    %v618 = vsel %vm581, %v607, 0.0
    %619 = vadd.xlane.f32.xlu0 %v618
    %v620 = vpop.xlane.xlu0 %619
    %v621 = vsel %vm581, %v609, 0.0
    %622 = vadd.xlane.f32.xlu0 %v621
    %v623 = vpop.xlane.xlu0 %622
    %v624 = vsel %vm581, %v611, 0.0
    %625 = vadd.xlane.f32.xlu0 %v624
    %v626 = vpop.xlane.xlu0 %625
    %v627 = vrcp.pop %v614
    %v628 = vrcp.pop %v617
    %v629 = vrcp.pop %v620
    %v630 = vrcp.pop %v623
    %v631 = vrcp.pop %v626
    %v632 = vmul.f32 %v603, %v627
    %v633 = vmul.f32 %v605, %v628
    %v634 = vmul.f32 %v607, %v629
    %v635 = vmul.f32 %v609, %v630
    %v636 = vmul.f32 %v611, %v631
    %v637 = vpack.c.bf16 %v633, %v632
    %v638 = vpack.c.bf16 %v635, %v634
    %v639 = vpack.c.bf16 %v636, %v636
    %640 = vrot.lane.b32.xlu0 %v495, 64
    %v641 = vpop.permute.xlu0 %640
    %642 = vrot.lane.b32.xlu0 %v496, 64
    %v643 = vpop.permute.xlu0 %642
    %644 = vrot.lane.b32.xlu0 %v497, 64
    %v645 = vpop.permute.xlu0 %644
    %v649 = vsel %vm581, %v637, 0
    %v652 = vsel %vm581, %v638, 0
    %v655 = vsel %vm581, %v639, 0
    %v658 = vsel %vm103, %v645, 0
    %660 = vmatprep.subr.bf16.mxu0 0
    %661 = vmatpush1.bf16.msra.mxu0 %v641
    %662 = vmatprep.subr.bf16.mxu0 0
    %663 = vmatpush1.bf16.msra.mxu0 %v643
    %664 = vmatprep.subr.bf16.mxu0 0
    %665 = vmatpush1.bf16.msra.mxu0 %v658
    %666 = vmatprep.subr.bf16.mxu0 0
    %667 = vmatpush1.bf16.msra.mxu0 0
    %668 = vmatprep.subr.bf16.mxu0 0
    %669 = vmatpush1.bf16.msra.mxu0 0
    %670 = vmatprep.subr.bf16.mxu0 0
    %671 = vmatpush1.bf16.msra.mxu0 0
    %672 = vmatprep.subr.bf16.mxu0 0
    %673 = vmatpush1.bf16.msra.mxu0 0
    %674 = vmatprep.subr.bf16.mxu0 0
    %675 = vmatpush1.bf16.msra.mxu0 0
    %676 = vmatprep.subr.bf16.mxu0 0
    %677 = vmatpush1.bf16.msra.mxu0 0
    %678 = vmatprep.subr.bf16.mxu0 0
    %679 = vmatpush1.bf16.msra.mxu0 0
    %680 = vmatprep.subr.bf16.mxu0 0
    %681 = vmatpush1.bf16.msra.mxu0 0
    %682 = vmatprep.subr.bf16.mxu0 0
    %683 = vmatpush1.bf16.msra.mxu0 0
    %684 = vmatprep.subr.bf16.mxu0 0
    %685 = vmatpush1.bf16.msra.mxu0 0
    %686 = vmatprep.subr.bf16.mxu0 0
    %687 = vmatpush1.bf16.msra.mxu0 0
    %688 = vmatprep.subr.bf16.mxu0 0
    %689 = vmatpush1.bf16.msra.mxu0 0
    %690 = vmatprep.subr.bf16.mxu0 0
    %691 = vmatpush1.bf16.msra.mxu0 0
    %692 = vmatprep.mubr.bf16.mxu0 0
    %693 = vmatmul.mubr.bf16.gmra.mrb[0].mxu0 %v649
    %v694 = vpop.f32.mrb[0].mxu0
    %v695 = vadd.f32 0.0, %v694
    %v696 = vpop.f32.mrb[0].mxu0
    %v697 = vpop.f32.mrb[0].mxu0
    %v698 = vadd.f32 0.0, %v697
    %v699 = vpop.f32.mrb[0].mxu0
    %700 = vmatprep.mubr.bf16.mxu0 0
    %701 = vmatmul.mubr.bf16.gmra.mrb[0].mxu0 %v652
    %v702 = vpop.f32.mrb[0].mxu0
    %v703 = vadd.f32 0.0, %v702
    %v704 = vpop.f32.mrb[0].mxu0
    %v705 = vpop.f32.mrb[0].mxu0
    %v706 = vadd.f32 0.0, %v705
    %v707 = vpop.f32.mrb[0].mxu0
    %708 = vmatprep.mubr.bf16.mxu0 0
    %709 = vmatmul.mubr.bf16.gmra.mrb[0].mxu0 %v655
    %v710 = vpop.f32.mrb[0].mxu0
    %v711 = vadd.f32 0.0, %v710
    %v712 = vpop.f32.mrb[0].mxu0
    %v713 = vpop.f32.mrb[0].mxu0
    %v714 = vpop.f32.mrb[0].mxu0
    %715 = vdwg.mxu0
    %716 = vrot.lane.b32.xlu0 %v495, 120
    %v717 = vpop.permute.xlu0 %716
    %718 = vrot.lane.b32.xlu0 %v496, 120
    %v719 = vpop.permute.xlu0 %718
    %720 = vrot.lane.b32.xlu0 %v497, 120
    %v721 = vpop.permute.xlu0 %720
    %722 = vrot.lane.b32.xlu0 %v495, 88
    %v723 = vpop.permute.xlu0 %722
    %724 = vrot.lane.b32.xlu0 %v496, 88
    %v725 = vpop.permute.xlu0 %724
    %726 = vrot.lane.b32.xlu0 %v497, 88
    %v727 = vpop.permute.xlu0 %726
    %v729 = vsel %vm90, %v717, 0
    %v732 = vsel %vm90, %v719, 0
    %v735 = vsel %vm90, %v721, 0
    %v738 = vsel %vm90, %v723, 0
    %v741 = vsel %vm90, %v725, 0
    %v744 = vsel %vm90, %v727, 0
    %746 = vmatprep.subr.bf16.mxu0 0
    %747 = vmatpush1.bf16.xpose.msra.mxu0 %v738
    %748 = vmatprep.subr.bf16.mxu0 0
    %749 = vmatpush1.bf16.xpose.msra.mxu0 %v741
    %750 = vmatprep.subr.bf16.mxu0 0
    %751 = vmatpush1.bf16.xpose.msra.mxu0 %v744
    %752 = vmatprep.subr.bf16.mxu0 0
    %753 = vmatpush1.bf16.xpose.msra.mxu0 0
    %754 = vmatprep.subr.bf16.mxu0 0
    %755 = vmatpush1.bf16.xpose.msra.mxu0 0
    %756 = vmatprep.subr.bf16.mxu0 0
    %757 = vmatpush1.bf16.xpose.msra.mxu0 0
    %758 = vmatprep.subr.bf16.mxu0 0
    %759 = vmatpush1.bf16.xpose.msra.mxu0 0
    %760 = vmatprep.subr.bf16.mxu0 0
    %761 = vmatpush1.bf16.xpose.msra.mxu0 0
    %762 = vmatprep.subr.bf16.mxu0 0
    %763 = vmatpush1.bf16.xpose.msra.mxu0 0
    %764 = vmatprep.subr.bf16.mxu0 0
    %765 = vmatpush1.bf16.xpose.msra.mxu0 0
    %766 = vmatprep.subr.bf16.mxu0 0
    %767 = vmatpush1.bf16.xpose.msra.mxu0 0
    %768 = vmatprep.subr.bf16.mxu0 0
    %769 = vmatpush1.bf16.xpose.msra.mxu0 0
    %770 = vmatprep.subr.bf16.mxu0 0
    %771 = vmatpush1.bf16.xpose.msra.mxu0 0
    %772 = vmatprep.subr.bf16.mxu0 0
    %773 = vmatpush1.bf16.xpose.msra.mxu0 0
    %774 = vmatprep.subr.bf16.mxu0 0
    %775 = vmatpush1.bf16.xpose.msra.mxu0 0
    %776 = vmatprep.subr.bf16.mxu0 0
    %777 = vmatpush1.bf16.xpose.msra.mxu0 0
    %778 = vmatprep.mubr.bf16.mxu0 0
    %779 = vmatmul.mubr.bf16.gmra.mrb[0].mxu0 %v729
    %v780 = vpop.f32.mrb[0].mxu0
    %v781 = vadd.f32 %v224, %v780
    %v782 = vpop.f32.mrb[0].mxu0
    %v783 = vpop.f32.mrb[0].mxu0
    %v784 = vadd.f32 %v224, %v783
    %v785 = vpop.f32.mrb[0].mxu0
    %786 = vmatprep.mubr.bf16.mxu0 0
    %787 = vmatmul.mubr.bf16.gmra.mrb[0].mxu0 %v732
    %v788 = vpop.f32.mrb[0].mxu0
    %v789 = vadd.f32 %v224, %v788
    %v790 = vpop.f32.mrb[0].mxu0
    %v791 = vpop.f32.mrb[0].mxu0
    %v792 = vadd.f32 %v224, %v791
    %v793 = vpop.f32.mrb[0].mxu0
    %794 = vmatprep.mubr.bf16.mxu0 0
    %795 = vmatmul.mubr.bf16.gmra.mrb[0].mxu0 %v735
    %v796 = vpop.f32.mrb[0].mxu0
    %v797 = vadd.f32 %v224, %v796
    %v798 = vpop.f32.mrb[0].mxu0
    %v799 = vpop.f32.mrb[0].mxu0
    %v800 = vpop.f32.mrb[0].mxu0
    %801 = vdwg.mxu0
    %v802 = vsel %vm581, %v781, -inf
    %803 = vmax.xlane.f32.xlu0 %v802
    %v804 = vpop.xlane.xlu0 %803
    %v805 = vsel %vm581, %v784, -inf
    %806 = vmax.xlane.f32.xlu0 %v805
    %v807 = vpop.xlane.xlu0 %806
    %v808 = vsel %vm581, %v789, -inf
    %809 = vmax.xlane.f32.xlu0 %v808
    %v810 = vpop.xlane.xlu0 %809
    %v811 = vsel %vm581, %v792, -inf
    %812 = vmax.xlane.f32.xlu0 %v811
    %v813 = vpop.xlane.xlu0 %812
    %v814 = vsel %vm581, %v797, -inf
    %815 = vmax.xlane.f32.xlu0 %v814
    %v816 = vpop.xlane.xlu0 %815
    %v817 = vsub.f32 %v781, %v804
    %v818 = vsub.f32 %v784, %v807
    %v819 = vsub.f32 %v789, %v810
    %v820 = vsub.f32 %v792, %v813
    %v821 = vsub.f32 %v797, %v816
    %v822 = vmul.f32 %v817, 1.442695
    %v823 = vpow.pop %v822
    %v824 = vmul.f32 %v818, 1.442695
    %v825 = vpow.pop %v824
    %v826 = vmul.f32 %v819, 1.442695
    %v827 = vpow.pop %v826
    %v828 = vmul.f32 %v820, 1.442695
    %v829 = vpow.pop %v828
    %v830 = vmul.f32 %v821, 1.442695
    %v831 = vpow.pop %v830
    %v832 = vsel %vm581, %v823, 0.0
    %833 = vadd.xlane.f32.xlu0 %v832
    %v834 = vpop.xlane.xlu0 %833
    %v835 = vsel %vm581, %v825, 0.0
    %836 = vadd.xlane.f32.xlu0 %v835
    %v837 = vpop.xlane.xlu0 %836
    %v838 = vsel %vm581, %v827, 0.0
    %839 = vadd.xlane.f32.xlu0 %v838
    %v840 = vpop.xlane.xlu0 %839
    %v841 = vsel %vm581, %v829, 0.0
    %842 = vadd.xlane.f32.xlu0 %v841
    %v843 = vpop.xlane.xlu0 %842
    %v844 = vsel %vm581, %v831, 0.0
    %845 = vadd.xlane.f32.xlu0 %v844
    %v846 = vpop.xlane.xlu0 %845
    %v847 = vrcp.pop %v834
    %v848 = vrcp.pop %v837
    %v849 = vrcp.pop %v840
    %v850 = vrcp.pop %v843
    %v851 = vrcp.pop %v846
    %v852 = vmul.f32 %v823, %v847
    %v853 = vmul.f32 %v825, %v848
    %v854 = vmul.f32 %v827, %v849
    %v855 = vmul.f32 %v829, %v850
    %v856 = vmul.f32 %v831, %v851
    %v857 = vpack.c.bf16 %v853, %v852
    %v858 = vpack.c.bf16 %v855, %v854
    %v859 = vpack.c.bf16 %v856, %v856
    %860 = vrot.lane.b32.xlu0 %v495, 56
    %v861 = vpop.permute.xlu0 %860
    %862 = vrot.lane.b32.xlu0 %v496, 56
    %v863 = vpop.permute.xlu0 %862
    %864 = vrot.lane.b32.xlu0 %v497, 56
    %v865 = vpop.permute.xlu0 %864
    %v869 = vsel %vm581, %v857, 0
    %v872 = vsel %vm581, %v858, 0
    %v875 = vsel %vm581, %v859, 0
    %v878 = vsel %vm103, %v865, 0
    %880 = vmatprep.subr.bf16.mxu0 0
    %881 = vmatpush1.bf16.msra.mxu0 %v861
    %882 = vmatprep.subr.bf16.mxu0 0
    %883 = vmatpush1.bf16.msra.mxu0 %v863
    %884 = vmatprep.subr.bf16.mxu0 0
    %885 = vmatpush1.bf16.msra.mxu0 %v878
    %886 = vmatprep.subr.bf16.mxu0 0
    %887 = vmatpush1.bf16.msra.mxu0 0
    %888 = vmatprep.subr.bf16.mxu0 0
    %889 = vmatpush1.bf16.msra.mxu0 0
    %890 = vmatprep.subr.bf16.mxu0 0
    %891 = vmatpush1.bf16.msra.mxu0 0
    %892 = vmatprep.subr.bf16.mxu0 0
    %893 = vmatpush1.bf16.msra.mxu0 0
    %894 = vmatprep.subr.bf16.mxu0 0
    %895 = vmatpush1.bf16.msra.mxu0 0
    %896 = vmatprep.subr.bf16.mxu0 0
    %897 = vmatpush1.bf16.msra.mxu0 0
    %898 = vmatprep.subr.bf16.mxu0 0
    %899 = vmatpush1.bf16.msra.mxu0 0
    %900 = vmatprep.subr.bf16.mxu0 0
    %901 = vmatpush1.bf16.msra.mxu0 0
    %902 = vmatprep.subr.bf16.mxu0 0
    %903 = vmatpush1.bf16.msra.mxu0 0
    %904 = vmatprep.subr.bf16.mxu0 0
    %905 = vmatpush1.bf16.msra.mxu0 0
    %906 = vmatprep.subr.bf16.mxu0 0
    %907 = vmatpush1.bf16.msra.mxu0 0
    %908 = vmatprep.subr.bf16.mxu0 0
    %909 = vmatpush1.bf16.msra.mxu0 0
    %910 = vmatprep.subr.bf16.mxu0 0
    %911 = vmatpush1.bf16.msra.mxu0 0
    %912 = vmatprep.mubr.bf16.mxu0 0
    %913 = vmatmul.mubr.bf16.gmra.mrb[0].mxu0 %v869
    %v914 = vpop.f32.mrb[0].mxu0
    %v915 = vadd.f32 0.0, %v914
    %v916 = vpop.f32.mrb[0].mxu0
    %v917 = vpop.f32.mrb[0].mxu0
    %v918 = vadd.f32 0.0, %v917
    %v919 = vpop.f32.mrb[0].mxu0
    %920 = vmatprep.mubr.bf16.mxu0 0
    %921 = vmatmul.mubr.bf16.gmra.mrb[0].mxu0 %v872
    %v922 = vpop.f32.mrb[0].mxu0
    %v923 = vadd.f32 0.0, %v922
    %v924 = vpop.f32.mrb[0].mxu0
    %v925 = vpop.f32.mrb[0].mxu0
    %v926 = vadd.f32 0.0, %v925
    %v927 = vpop.f32.mrb[0].mxu0
    %928 = vmatprep.mubr.bf16.mxu0 0
    %929 = vmatmul.mubr.bf16.gmra.mrb[0].mxu0 %v875
    %v930 = vpop.f32.mrb[0].mxu0
    %v931 = vadd.f32 0.0, %v930
    %v932 = vpop.f32.mrb[0].mxu0
    %v933 = vpop.f32.mrb[0].mxu0
    %v934 = vpop.f32.mrb[0].mxu0
    %935 = vdwg.mxu0
    %936 = vrot.lane.b32.xlu0 %v495, 112
    %v937 = vpop.permute.xlu0 %936
    %938 = vrot.lane.b32.xlu0 %v496, 112
    %v939 = vpop.permute.xlu0 %938
    %940 = vrot.lane.b32.xlu0 %v497, 112
    %v941 = vpop.permute.xlu0 %940
    %942 = vrot.lane.b32.xlu0 %v495, 80
    %v943 = vpop.permute.xlu0 %942
    %944 = vrot.lane.b32.xlu0 %v496, 80
    %v945 = vpop.permute.xlu0 %944
    %946 = vrot.lane.b32.xlu0 %v497, 80
    %v947 = vpop.permute.xlu0 %946
    %v949 = vsel %vm90, %v937, 0
    %v952 = vsel %vm90, %v939, 0
    %v955 = vsel %vm90, %v941, 0
    %v958 = vsel %vm90, %v943, 0
    %v961 = vsel %vm90, %v945, 0
    %v964 = vsel %vm90, %v947, 0
    %966 = vmatprep.subr.bf16.mxu0 0
    %967 = vmatpush1.bf16.xpose.msra.mxu0 %v958
    %968 = vmatprep.subr.bf16.mxu0 0
    %969 = vmatpush1.bf16.xpose.msra.mxu0 %v961
    %970 = vmatprep.subr.bf16.mxu0 0
    %971 = vmatpush1.bf16.xpose.msra.mxu0 %v964
    %972 = vmatprep.subr.bf16.mxu0 0
    %973 = vmatpush1.bf16.xpose.msra.mxu0 0
    %974 = vmatprep.subr.bf16.mxu0 0
    %975 = vmatpush1.bf16.xpose.msra.mxu0 0
    %976 = vmatprep.subr.bf16.mxu0 0
    %977 = vmatpush1.bf16.xpose.msra.mxu0 0
    %978 = vmatprep.subr.bf16.mxu0 0
    %979 = vmatpush1.bf16.xpose.msra.mxu0 0
    %980 = vmatprep.subr.bf16.mxu0 0
    %981 = vmatpush1.bf16.xpose.msra.mxu0 0
    %982 = vmatprep.subr.bf16.mxu0 0
    %983 = vmatpush1.bf16.xpose.msra.mxu0 0
    %984 = vmatprep.subr.bf16.mxu0 0
    %985 = vmatpush1.bf16.xpose.msra.mxu0 0
    %986 = vmatprep.subr.bf16.mxu0 0
    %987 = vmatpush1.bf16.xpose.msra.mxu0 0
    %988 = vmatprep.subr.bf16.mxu0 0
    %989 = vmatpush1.bf16.xpose.msra.mxu0 0
    %990 = vmatprep.subr.bf16.mxu0 0
    %991 = vmatpush1.bf16.xpose.msra.mxu0 0
    %992 = vmatprep.subr.bf16.mxu0 0
    %993 = vmatpush1.bf16.xpose.msra.mxu0 0
    %994 = vmatprep.subr.bf16.mxu0 0
    %995 = vmatpush1.bf16.xpose.msra.mxu0 0
    %996 = vmatprep.subr.bf16.mxu0 0
    %997 = vmatpush1.bf16.xpose.msra.mxu0 0
    %998 = vmatprep.mubr.bf16.mxu0 0
    %999 = vmatmul.mubr.bf16.gmra.mrb[0].mxu0 %v949
    %v1000 = vpop.f32.mrb[0].mxu0
    %v1001 = vadd.f32 %v224, %v1000
    %v1002 = vpop.f32.mrb[0].mxu0
    %v1003 = vpop.f32.mrb[0].mxu0
    %v1004 = vadd.f32 %v224, %v1003
    %v1005 = vpop.f32.mrb[0].mxu0
    %1006 = vmatprep.mubr.bf16.mxu0 0
    %1007 = vmatmul.mubr.bf16.gmra.mrb[0].mxu0 %v952
    %v1008 = vpop.f32.mrb[0].mxu0
    %v1009 = vadd.f32 %v224, %v1008
    %v1010 = vpop.f32.mrb[0].mxu0
    %v1011 = vpop.f32.mrb[0].mxu0
    %v1012 = vadd.f32 %v224, %v1011
    %v1013 = vpop.f32.mrb[0].mxu0
    %1014 = vmatprep.mubr.bf16.mxu0 0
    %1015 = vmatmul.mubr.bf16.gmra.mrb[0].mxu0 %v955
    %v1016 = vpop.f32.mrb[0].mxu0
    %v1017 = vadd.f32 %v224, %v1016
    %v1018 = vpop.f32.mrb[0].mxu0
    %v1019 = vpop.f32.mrb[0].mxu0
    %v1020 = vpop.f32.mrb[0].mxu0
    %1021 = vdwg.mxu0
    %v1022 = vsel %vm581, %v1001, -inf
    %1023 = vmax.xlane.f32.xlu0 %v1022
    %v1024 = vpop.xlane.xlu0 %1023
    %v1025 = vsel %vm581, %v1004, -inf
    %1026 = vmax.xlane.f32.xlu0 %v1025
    %v1027 = vpop.xlane.xlu0 %1026
    %v1028 = vsel %vm581, %v1009, -inf
    %1029 = vmax.xlane.f32.xlu0 %v1028
    %v1030 = vpop.xlane.xlu0 %1029
    %v1031 = vsel %vm581, %v1012, -inf
    %1032 = vmax.xlane.f32.xlu0 %v1031
    %v1033 = vpop.xlane.xlu0 %1032
    %v1034 = vsel %vm581, %v1017, -inf
    %1035 = vmax.xlane.f32.xlu0 %v1034
    %v1036 = vpop.xlane.xlu0 %1035
    %v1037 = vsub.f32 %v1001, %v1024
    %v1038 = vsub.f32 %v1004, %v1027
    %v1039 = vsub.f32 %v1009, %v1030
    %v1040 = vsub.f32 %v1012, %v1033
    %v1041 = vsub.f32 %v1017, %v1036
    %v1042 = vmul.f32 %v1037, 1.442695
    %v1043 = vpow.pop %v1042
    %v1044 = vmul.f32 %v1038, 1.442695
    %v1045 = vpow.pop %v1044
    %v1046 = vmul.f32 %v1039, 1.442695
    %v1047 = vpow.pop %v1046
    %v1048 = vmul.f32 %v1040, 1.442695
    %v1049 = vpow.pop %v1048
    %v1050 = vmul.f32 %v1041, 1.442695
    %v1051 = vpow.pop %v1050
    %v1052 = vsel %vm581, %v1043, 0.0
    %1053 = vadd.xlane.f32.xlu0 %v1052
    %v1054 = vpop.xlane.xlu0 %1053
    %v1055 = vsel %vm581, %v1045, 0.0
    %1056 = vadd.xlane.f32.xlu0 %v1055
    %v1057 = vpop.xlane.xlu0 %1056
    %v1058 = vsel %vm581, %v1047, 0.0
    %1059 = vadd.xlane.f32.xlu0 %v1058
    %v1060 = vpop.xlane.xlu0 %1059
    %v1061 = vsel %vm581, %v1049, 0.0
    %1062 = vadd.xlane.f32.xlu0 %v1061
    %v1063 = vpop.xlane.xlu0 %1062
    %v1064 = vsel %vm581, %v1051, 0.0
    %1065 = vadd.xlane.f32.xlu0 %v1064
    %v1066 = vpop.xlane.xlu0 %1065
    %v1067 = vrcp.pop %v1054
    %v1068 = vrcp.pop %v1057
    %v1069 = vrcp.pop %v1060
    %v1070 = vrcp.pop %v1063
    %v1071 = vrcp.pop %v1066
    %v1072 = vmul.f32 %v1043, %v1067
    %v1073 = vmul.f32 %v1045, %v1068
    %v1074 = vmul.f32 %v1047, %v1069
    %v1075 = vmul.f32 %v1049, %v1070
    %v1076 = vmul.f32 %v1051, %v1071
    %v1077 = vpack.c.bf16 %v1073, %v1072
    %v1078 = vpack.c.bf16 %v1075, %v1074
    %v1079 = vpack.c.bf16 %v1076, %v1076
    %1080 = vrot.lane.b32.xlu0 %v495, 48
    %v1081 = vpop.permute.xlu0 %1080
    %1082 = vrot.lane.b32.xlu0 %v496, 48
    %v1083 = vpop.permute.xlu0 %1082
    %1084 = vrot.lane.b32.xlu0 %v497, 48
    %v1085 = vpop.permute.xlu0 %1084
    %v1089 = vsel %vm581, %v1077, 0
    %v1092 = vsel %vm581, %v1078, 0
    %v1095 = vsel %vm581, %v1079, 0
    %v1098 = vsel %vm103, %v1085, 0
    %1100 = vmatprep.subr.bf16.mxu0 0
    %1101 = vmatpush1.bf16.msra.mxu0 %v1081
    %1102 = vmatprep.subr.bf16.mxu0 0
    %1103 = vmatpush1.bf16.msra.mxu0 %v1083
    %1104 = vmatprep.subr.bf16.mxu0 0
    %1105 = vmatpush1.bf16.msra.mxu0 %v1098
    %1106 = vmatprep.subr.bf16.mxu0 0
    %1107 = vmatpush1.bf16.msra.mxu0 0
    %1108 = vmatprep.subr.bf16.mxu0 0
    %1109 = vmatpush1.bf16.msra.mxu0 0
    %1110 = vmatprep.subr.bf16.mxu0 0
    %1111 = vmatpush1.bf16.msra.mxu0 0
    %1112 = vmatprep.subr.bf16.mxu0 0
    %1113 = vmatpush1.bf16.msra.mxu0 0
    %1114 = vmatprep.subr.bf16.mxu0 0
    %1115 = vmatpush1.bf16.msra.mxu0 0
    %1116 = vmatprep.subr.bf16.mxu0 0
    %1117 = vmatpush1.bf16.msra.mxu0 0
    %1118 = vmatprep.subr.bf16.mxu0 0
    %1119 = vmatpush1.bf16.msra.mxu0 0
    %1120 = vmatprep.subr.bf16.mxu0 0
    %1121 = vmatpush1.bf16.msra.mxu0 0
    %1122 = vmatprep.subr.bf16.mxu0 0
    %1123 = vmatpush1.bf16.msra.mxu0 0
    %1124 = vmatprep.subr.bf16.mxu0 0
    %1125 = vmatpush1.bf16.msra.mxu0 0
    %1126 = vmatprep.subr.bf16.mxu0 0
    %1127 = vmatpush1.bf16.msra.mxu0 0
    %1128 = vmatprep.subr.bf16.mxu0 0
    %1129 = vmatpush1.bf16.msra.mxu0 0
    %1130 = vmatprep.subr.bf16.mxu0 0
    %1131 = vmatpush1.bf16.msra.mxu0 0
    %1132 = vmatprep.mubr.bf16.mxu0 0
    %1133 = vmatmul.mubr.bf16.gmra.mrb[0].mxu0 %v1089
    %v1134 = vpop.f32.mrb[0].mxu0
    %v1135 = vadd.f32 0.0, %v1134
    %v1136 = vpop.f32.mrb[0].mxu0
    %v1137 = vpop.f32.mrb[0].mxu0
    %v1138 = vadd.f32 0.0, %v1137
    %v1139 = vpop.f32.mrb[0].mxu0
    %1140 = vmatprep.mubr.bf16.mxu0 0
    %1141 = vmatmul.mubr.bf16.gmra.mrb[0].mxu0 %v1092
    %v1142 = vpop.f32.mrb[0].mxu0
    %v1143 = vadd.f32 0.0, %v1142
    %v1144 = vpop.f32.mrb[0].mxu0
    %v1145 = vpop.f32.mrb[0].mxu0
    %v1146 = vadd.f32 0.0, %v1145
    %v1147 = vpop.f32.mrb[0].mxu0
    %1148 = vmatprep.mubr.bf16.mxu0 0
    %1149 = vmatmul.mubr.bf16.gmra.mrb[0].mxu0 %v1095
    %v1150 = vpop.f32.mrb[0].mxu0
    %v1151 = vadd.f32 0.0, %v1150
    %v1152 = vpop.f32.mrb[0].mxu0
    %v1153 = vpop.f32.mrb[0].mxu0
    %v1154 = vpop.f32.mrb[0].mxu0
    %1155 = vdwg.mxu0
    %1156 = vrot.lane.b32.xlu0 %v495, 104
    %v1157 = vpop.permute.xlu0 %1156
    %1158 = vrot.lane.b32.xlu0 %v496, 104
    %v1159 = vpop.permute.xlu0 %1158
    %1160 = vrot.lane.b32.xlu0 %v497, 104
    %v1161 = vpop.permute.xlu0 %1160
    %1162 = vrot.lane.b32.xlu0 %v495, 72
    %v1163 = vpop.permute.xlu0 %1162
    %1164 = vrot.lane.b32.xlu0 %v496, 72
    %v1165 = vpop.permute.xlu0 %1164
    %1166 = vrot.lane.b32.xlu0 %v497, 72
    %v1167 = vpop.permute.xlu0 %1166
    %v1169 = vsel %vm90, %v1157, 0
    %v1172 = vsel %vm90, %v1159, 0
    %v1175 = vsel %vm90, %v1161, 0
    %v1178 = vsel %vm90, %v1163, 0
    %v1181 = vsel %vm90, %v1165, 0
    %v1184 = vsel %vm90, %v1167, 0
    %1186 = vmatprep.subr.bf16.mxu0 0
    %1187 = vmatpush1.bf16.xpose.msra.mxu0 %v1178
    %1188 = vmatprep.subr.bf16.mxu0 0
    %1189 = vmatpush1.bf16.xpose.msra.mxu0 %v1181
    %1190 = vmatprep.subr.bf16.mxu0 0
    %1191 = vmatpush1.bf16.xpose.msra.mxu0 %v1184
    %1192 = vmatprep.subr.bf16.mxu0 0
    %1193 = vmatpush1.bf16.xpose.msra.mxu0 0
    %1194 = vmatprep.subr.bf16.mxu0 0
    %1195 = vmatpush1.bf16.xpose.msra.mxu0 0
    %1196 = vmatprep.subr.bf16.mxu0 0
    %1197 = vmatpush1.bf16.xpose.msra.mxu0 0
    %1198 = vmatprep.subr.bf16.mxu0 0
    %1199 = vmatpush1.bf16.xpose.msra.mxu0 0
    %1200 = vmatprep.subr.bf16.mxu0 0
    %1201 = vmatpush1.bf16.xpose.msra.mxu0 0
    %1202 = vmatprep.subr.bf16.mxu0 0
    %1203 = vmatpush1.bf16.xpose.msra.mxu0 0
    %1204 = vmatprep.subr.bf16.mxu0 0
    %1205 = vmatpush1.bf16.xpose.msra.mxu0 0
    %1206 = vmatprep.subr.bf16.mxu0 0
    %1207 = vmatpush1.bf16.xpose.msra.mxu0 0
    %1208 = vmatprep.subr.bf16.mxu0 0
    %1209 = vmatpush1.bf16.xpose.msra.mxu0 0
    %1210 = vmatprep.subr.bf16.mxu0 0
    %1211 = vmatpush1.bf16.xpose.msra.mxu0 0
    %1212 = vmatprep.subr.bf16.mxu0 0
    %1213 = vmatpush1.bf16.xpose.msra.mxu0 0
    %1214 = vmatprep.subr.bf16.mxu0 0
    %1215 = vmatpush1.bf16.xpose.msra.mxu0 0
    %1216 = vmatprep.subr.bf16.mxu0 0
    %1217 = vmatpush1.bf16.xpose.msra.mxu0 0
    %1218 = vmatprep.mubr.bf16.mxu0 0
    %1219 = vmatmul.mubr.bf16.gmra.mrb[0].mxu0 %v1169
    %v1220 = vpop.f32.mrb[0].mxu0
    %v1221 = vadd.f32 %v224, %v1220
    %v1222 = vpop.f32.mrb[0].mxu0
    %v1223 = vpop.f32.mrb[0].mxu0
    %v1224 = vadd.f32 %v224, %v1223
    %v1225 = vpop.f32.mrb[0].mxu0
    %1226 = vmatprep.mubr.bf16.mxu0 0
    %1227 = vmatmul.mubr.bf16.gmra.mrb[0].mxu0 %v1172
    %v1228 = vpop.f32.mrb[0].mxu0
    %v1229 = vadd.f32 %v224, %v1228
    %v1230 = vpop.f32.mrb[0].mxu0
    %v1231 = vpop.f32.mrb[0].mxu0
    %v1232 = vadd.f32 %v224, %v1231
    %v1233 = vpop.f32.mrb[0].mxu0
    %1234 = vmatprep.mubr.bf16.mxu0 0
    %1235 = vmatmul.mubr.bf16.gmra.mrb[0].mxu0 %v1175
    %v1236 = vpop.f32.mrb[0].mxu0
    %v1237 = vadd.f32 %v224, %v1236
    %v1238 = vpop.f32.mrb[0].mxu0
    %v1239 = vpop.f32.mrb[0].mxu0
    %v1240 = vpop.f32.mrb[0].mxu0
    %1241 = vdwg.mxu0
    %v1242 = vsel %vm581, %v1221, -inf
    %1243 = vmax.xlane.f32.xlu0 %v1242
    %v1244 = vpop.xlane.xlu0 %1243
    %v1245 = vsel %vm581, %v1224, -inf
    %1246 = vmax.xlane.f32.xlu0 %v1245
    %v1247 = vpop.xlane.xlu0 %1246
    %v1248 = vsel %vm581, %v1229, -inf
    %1249 = vmax.xlane.f32.xlu0 %v1248
    %v1250 = vpop.xlane.xlu0 %1249
    %v1251 = vsel %vm581, %v1232, -inf
    %1252 = vmax.xlane.f32.xlu0 %v1251
    %v1253 = vpop.xlane.xlu0 %1252
    %v1254 = vsel %vm581, %v1237, -inf
    %1255 = vmax.xlane.f32.xlu0 %v1254
    %v1256 = vpop.xlane.xlu0 %1255
    %v1257 = vsub.f32 %v1221, %v1244
    %v1258 = vsub.f32 %v1224, %v1247
    %v1259 = vsub.f32 %v1229, %v1250
    %v1260 = vsub.f32 %v1232, %v1253
    %v1261 = vsub.f32 %v1237, %v1256
    %v1262 = vmul.f32 %v1257, 1.442695
    %v1263 = vpow.pop %v1262
    %v1264 = vmul.f32 %v1258, 1.442695
    %v1265 = vpow.pop %v1264
    %v1266 = vmul.f32 %v1259, 1.442695
    %v1267 = vpow.pop %v1266
    %v1268 = vmul.f32 %v1260, 1.442695
    %v1269 = vpow.pop %v1268
    %v1270 = vmul.f32 %v1261, 1.442695
    %v1271 = vpow.pop %v1270
    %v1272 = vsel %vm581, %v1263, 0.0
    %1273 = vadd.xlane.f32.xlu0 %v1272
    %v1274 = vpop.xlane.xlu0 %1273
    %v1275 = vsel %vm581, %v1265, 0.0
    %1276 = vadd.xlane.f32.xlu0 %v1275
    %v1277 = vpop.xlane.xlu0 %1276
    %v1278 = vsel %vm581, %v1267, 0.0
    %1279 = vadd.xlane.f32.xlu0 %v1278
    %v1280 = vpop.xlane.xlu0 %1279
    %v1281 = vsel %vm581, %v1269, 0.0
    %1282 = vadd.xlane.f32.xlu0 %v1281
    %v1283 = vpop.xlane.xlu0 %1282
    %v1284 = vsel %vm581, %v1271, 0.0
    %1285 = vadd.xlane.f32.xlu0 %v1284
    %v1286 = vpop.xlane.xlu0 %1285
    %v1287 = vrcp.pop %v1274
    %v1288 = vrcp.pop %v1277
    %v1289 = vrcp.pop %v1280
    %v1290 = vrcp.pop %v1283
    %v1291 = vrcp.pop %v1286
    %v1292 = vmul.f32 %v1263, %v1287
    %v1293 = vmul.f32 %v1265, %v1288
    %v1294 = vmul.f32 %v1267, %v1289
    %v1295 = vmul.f32 %v1269, %v1290
    %v1296 = vmul.f32 %v1271, %v1291
    %v1297 = vpack.c.bf16 %v1293, %v1292
    %v1298 = vpack.c.bf16 %v1295, %v1294
    %v1299 = vpack.c.bf16 %v1296, %v1296
    %1300 = vrot.lane.b32.xlu0 %v495, 40
    %v1301 = vpop.permute.xlu0 %1300
    %1302 = vrot.lane.b32.xlu0 %v496, 40
    %v1303 = vpop.permute.xlu0 %1302
    %1304 = vrot.lane.b32.xlu0 %v497, 40
    %v1305 = vpop.permute.xlu0 %1304
    %v1309 = vsel %vm581, %v1297, 0
    %v1312 = vsel %vm581, %v1298, 0
    %v1315 = vsel %vm581, %v1299, 0
    %v1318 = vsel %vm103, %v1305, 0
    %1320 = vmatprep.subr.bf16.mxu0 0
    %1321 = vmatpush1.bf16.msra.mxu0 %v1301
    %1322 = vmatprep.subr.bf16.mxu0 0
    %1323 = vmatpush1.bf16.msra.mxu0 %v1303
    %1324 = vmatprep.subr.bf16.mxu0 0
    %1325 = vmatpush1.bf16.msra.mxu0 %v1318
    %1326 = vmatprep.subr.bf16.mxu0 0
    %1327 = vmatpush1.bf16.msra.mxu0 0
    %1328 = vmatprep.subr.bf16.mxu0 0
    %1329 = vmatpush1.bf16.msra.mxu0 0
    %1330 = vmatprep.subr.bf16.mxu0 0
    %1331 = vmatpush1.bf16.msra.mxu0 0
    %1332 = vmatprep.subr.bf16.mxu0 0
    %1333 = vmatpush1.bf16.msra.mxu0 0
    %1334 = vmatprep.subr.bf16.mxu0 0
    %1335 = vmatpush1.bf16.msra.mxu0 0
    %1336 = vmatprep.subr.bf16.mxu0 0
    %1337 = vmatpush1.bf16.msra.mxu0 0
    %1338 = vmatprep.subr.bf16.mxu0 0
    %1339 = vmatpush1.bf16.msra.mxu0 0
    %1340 = vmatprep.subr.bf16.mxu0 0
    %1341 = vmatpush1.bf16.msra.mxu0 0
    %1342 = vmatprep.subr.bf16.mxu0 0
    %1343 = vmatpush1.bf16.msra.mxu0 0
    %1344 = vmatprep.subr.bf16.mxu0 0
    %1345 = vmatpush1.bf16.msra.mxu0 0
    %1346 = vmatprep.subr.bf16.mxu0 0
    %1347 = vmatpush1.bf16.msra.mxu0 0
    %1348 = vmatprep.subr.bf16.mxu0 0
    %1349 = vmatpush1.bf16.msra.mxu0 0
    %1350 = vmatprep.subr.bf16.mxu0 0
    %1351 = vmatpush1.bf16.msra.mxu0 0
    %1352 = vmatprep.mubr.bf16.mxu0 0
    %1353 = vmatmul.mubr.bf16.gmra.mrb[0].mxu0 %v1309
    %v1354 = vpop.f32.mrb[0].mxu0
    %v1355 = vadd.f32 0.0, %v1354
    %v1356 = vpop.f32.mrb[0].mxu0
    %v1357 = vpop.f32.mrb[0].mxu0
    %v1358 = vadd.f32 0.0, %v1357
    %v1359 = vpop.f32.mrb[0].mxu0
    %1360 = vmatprep.mubr.bf16.mxu0 0
    %1361 = vmatmul.mubr.bf16.gmra.mrb[0].mxu0 %v1312
    %v1362 = vpop.f32.mrb[0].mxu0
    %v1363 = vadd.f32 0.0, %v1362
    %v1364 = vpop.f32.mrb[0].mxu0
    %v1365 = vpop.f32.mrb[0].mxu0
    %v1366 = vadd.f32 0.0, %v1365
    %v1367 = vpop.f32.mrb[0].mxu0
    %1368 = vmatprep.mubr.bf16.mxu0 0
    %1369 = vmatmul.mubr.bf16.gmra.mrb[0].mxu0 %v1315
    %v1370 = vpop.f32.mrb[0].mxu0
    %v1371 = vadd.f32 0.0, %v1370
    %v1372 = vpop.f32.mrb[0].mxu0
    %v1373 = vpop.f32.mrb[0].mxu0
    %v1374 = vpop.f32.mrb[0].mxu0
    %1375 = vdwg.mxu0
    %1381 = vrot.lane.b32.xlu0 %v915, 8
    %v1382 = vpop.permute.xlu0 %1381
    %1383 = vrot.lane.b32.xlu0 %v918, 8
    %v1384 = vpop.permute.xlu0 %1383
    %1385 = vrot.lane.b32.xlu0 %v923, 8
    %v1386 = vpop.permute.xlu0 %1385
    %1387 = vrot.lane.b32.xlu0 %v926, 8
    %v1388 = vpop.permute.xlu0 %1387
    %1389 = vrot.lane.b32.xlu0 %v931, 8
    %v1390 = vpop.permute.xlu0 %1389
    %1401 = vrot.lane.b32.xlu0 %v1135, 16
    %v1402 = vpop.permute.xlu0 %1401
    %1403 = vrot.lane.b32.xlu0 %v1138, 16
    %v1404 = vpop.permute.xlu0 %1403
    %1405 = vrot.lane.b32.xlu0 %v1143, 16
    %v1406 = vpop.permute.xlu0 %1405
    %1407 = vrot.lane.b32.xlu0 %v1146, 16
    %v1408 = vpop.permute.xlu0 %1407
    %1409 = vrot.lane.b32.xlu0 %v1151, 16
    %v1410 = vpop.permute.xlu0 %1409
    %1421 = vrot.lane.b32.xlu0 %v1355, 24
    %v1422 = vpop.permute.xlu0 %1421
    %1423 = vrot.lane.b32.xlu0 %v1358, 24
    %v1424 = vpop.permute.xlu0 %1423
    %1425 = vrot.lane.b32.xlu0 %v1363, 24
    %v1426 = vpop.permute.xlu0 %1425
    %1427 = vrot.lane.b32.xlu0 %v1366, 24
    %v1428 = vpop.permute.xlu0 %1427
    %1429 = vrot.lane.b32.xlu0 %v1371, 24
    %v1430 = vpop.permute.xlu0 %1429
    %v1436 = vsel %vm90, %v695, %v1382
    %v1437 = vsel %vm90, %v698, %v1384
    %v1438 = vsel %vm90, %v703, %v1386
    %v1439 = vsel %vm90, %v706, %v1388
    %v1440 = vsel %vm90, %v711, %v1390
    %vm1441 = vcmask 130048
    %v1442 = vsel %vm1441, %v1436, %v1402
    %v1443 = vsel %vm1441, %v1437, %v1404
    %v1444 = vsel %vm1441, %v1438, %v1406
    %v1445 = vsel %vm1441, %v1439, %v1408
    %v1446 = vsel %vm1441, %v1440, %v1410
    %vm1447 = vcmask 195584
    %v1448 = vsel %vm1447, %v1442, %v1422
    %v1449 = vsel %vm1447, %v1443, %v1424
    %v1450 = vsel %vm1447, %v1444, %v1426
    %v1451 = vsel %vm1447, %v1445, %v1428
    %v1452 = vsel %vm1447, %v1446, %v1430
    %v1453 = vpack.c.bf16 %v481, %v476
    %v1454 = vpack.c.bf16 %v489, %v484
    %v1455 = vpack.c.bf16 %v492, %v492
    %1459 = vrot.lane.b32.xlu0 %v1453, 96
    %v1460 = vpop.permute.xlu0 %1459
    %1461 = vrot.lane.b32.xlu0 %v1454, 96
    %v1462 = vpop.permute.xlu0 %1461
    %1463 = vrot.lane.b32.xlu0 %v1455, 96
    %v1464 = vpop.permute.xlu0 %1463
    %v1466 = vsel %vm90, %v1453, 0
    %v1469 = vsel %vm90, %v1454, 0
    %v1472 = vsel %vm90, %v1455, 0
    %v1475 = vsel %vm90, %v1460, 0
    %v1478 = vsel %vm90, %v1462, 0
    %v1481 = vsel %vm90, %v1464, 0
    %1483 = vmatprep.subr.bf16.mxu0 0
    %1484 = vmatpush1.bf16.xpose.msra.mxu0 %v1475
    %1485 = vmatprep.subr.bf16.mxu0 0
    %1486 = vmatpush1.bf16.xpose.msra.mxu0 %v1478
    %1487 = vmatprep.subr.bf16.mxu0 0
    %1488 = vmatpush1.bf16.xpose.msra.mxu0 %v1481
    %1489 = vmatprep.subr.bf16.mxu0 0
    %1490 = vmatpush1.bf16.xpose.msra.mxu0 0
    %1491 = vmatprep.subr.bf16.mxu0 0
    %1492 = vmatpush1.bf16.xpose.msra.mxu0 0
    %1493 = vmatprep.subr.bf16.mxu0 0
    %1494 = vmatpush1.bf16.xpose.msra.mxu0 0
    %1495 = vmatprep.subr.bf16.mxu0 0
    %1496 = vmatpush1.bf16.xpose.msra.mxu0 0
    %1497 = vmatprep.subr.bf16.mxu0 0
    %1498 = vmatpush1.bf16.xpose.msra.mxu0 0
    %1499 = vmatprep.subr.bf16.mxu0 0
    %1500 = vmatpush1.bf16.xpose.msra.mxu0 0
    %1501 = vmatprep.subr.bf16.mxu0 0
    %1502 = vmatpush1.bf16.xpose.msra.mxu0 0
    %1503 = vmatprep.subr.bf16.mxu0 0
    %1504 = vmatpush1.bf16.xpose.msra.mxu0 0
    %1505 = vmatprep.subr.bf16.mxu0 0
    %1506 = vmatpush1.bf16.xpose.msra.mxu0 0
    %1507 = vmatprep.subr.bf16.mxu0 0
    %1508 = vmatpush1.bf16.xpose.msra.mxu0 0
    %1509 = vmatprep.subr.bf16.mxu0 0
    %1510 = vmatpush1.bf16.xpose.msra.mxu0 0
    %1511 = vmatprep.subr.bf16.mxu0 0
    %1512 = vmatpush1.bf16.xpose.msra.mxu0 0
    %1513 = vmatprep.subr.bf16.mxu0 0
    %1514 = vmatpush1.bf16.xpose.msra.mxu0 0
    %1515 = vmatprep.mubr.bf16.mxu0 0
    %1516 = vmatmul.mubr.bf16.gmra.mrb[0].mxu0 %v1466
    %v1517 = vpop.f32.mrb[0].mxu0
    %v1518 = vadd.f32 %v224, %v1517
    %v1519 = vpop.f32.mrb[0].mxu0
    %v1520 = vpop.f32.mrb[0].mxu0
    %v1521 = vadd.f32 %v224, %v1520
    %v1522 = vpop.f32.mrb[0].mxu0
    %1523 = vmatprep.mubr.bf16.mxu0 0
    %1524 = vmatmul.mubr.bf16.gmra.mrb[0].mxu0 %v1469
    %v1525 = vpop.f32.mrb[0].mxu0
    %v1526 = vadd.f32 %v224, %v1525
    %v1527 = vpop.f32.mrb[0].mxu0
    %v1528 = vpop.f32.mrb[0].mxu0
    %v1529 = vadd.f32 %v224, %v1528
    %v1530 = vpop.f32.mrb[0].mxu0
    %1531 = vmatprep.mubr.bf16.mxu0 0
    %1532 = vmatmul.mubr.bf16.gmra.mrb[0].mxu0 %v1472
    %v1533 = vpop.f32.mrb[0].mxu0
    %v1534 = vadd.f32 %v224, %v1533
    %v1535 = vpop.f32.mrb[0].mxu0
    %v1536 = vpop.f32.mrb[0].mxu0
    %v1537 = vpop.f32.mrb[0].mxu0
    %1538 = vdwg.mxu0
    %v1539 = vsel %vm581, %v1518, -inf
    %1540 = vmax.xlane.f32.xlu0 %v1539
    %v1541 = vpop.xlane.xlu0 %1540
    %v1542 = vsel %vm581, %v1521, -inf
    %1543 = vmax.xlane.f32.xlu0 %v1542
    %v1544 = vpop.xlane.xlu0 %1543
    %v1545 = vsel %vm581, %v1526, -inf
    %1546 = vmax.xlane.f32.xlu0 %v1545
    %v1547 = vpop.xlane.xlu0 %1546
    %v1548 = vsel %vm581, %v1529, -inf
    %1549 = vmax.xlane.f32.xlu0 %v1548
    %v1550 = vpop.xlane.xlu0 %1549
    %v1551 = vsel %vm581, %v1534, -inf
    %1552 = vmax.xlane.f32.xlu0 %v1551
    %v1553 = vpop.xlane.xlu0 %1552
    %v1554 = vsub.f32 %v1518, %v1541
    %v1555 = vsub.f32 %v1521, %v1544
    %v1556 = vsub.f32 %v1526, %v1547
    %v1557 = vsub.f32 %v1529, %v1550
    %v1558 = vsub.f32 %v1534, %v1553
    %v1559 = vmul.f32 %v1554, 1.442695
    %v1560 = vpow.pop %v1559
    %v1561 = vmul.f32 %v1555, 1.442695
    %v1562 = vpow.pop %v1561
    %v1563 = vmul.f32 %v1556, 1.442695
    %v1564 = vpow.pop %v1563
    %v1565 = vmul.f32 %v1557, 1.442695
    %v1566 = vpow.pop %v1565
    %v1567 = vmul.f32 %v1558, 1.442695
    %v1568 = vpow.pop %v1567
    %v1569 = vsel %vm581, %v1560, 0.0
    %1570 = vadd.xlane.f32.xlu0 %v1569
    %v1571 = vpop.xlane.xlu0 %1570
    %v1572 = vsel %vm581, %v1562, 0.0
    %1573 = vadd.xlane.f32.xlu0 %v1572
    %v1574 = vpop.xlane.xlu0 %1573
    %v1575 = vsel %vm581, %v1564, 0.0
    %1576 = vadd.xlane.f32.xlu0 %v1575
    %v1577 = vpop.xlane.xlu0 %1576
    %v1578 = vsel %vm581, %v1566, 0.0
    %1579 = vadd.xlane.f32.xlu0 %v1578
    %v1580 = vpop.xlane.xlu0 %1579
    %v1581 = vsel %vm581, %v1568, 0.0
    %1582 = vadd.xlane.f32.xlu0 %v1581
    %v1583 = vpop.xlane.xlu0 %1582
    %v1584 = vrcp.pop %v1571
    %v1585 = vrcp.pop %v1574
    %v1586 = vrcp.pop %v1577
    %v1587 = vrcp.pop %v1580
    %v1588 = vrcp.pop %v1583
    %v1589 = vmul.f32 %v1560, %v1584
    %v1590 = vmul.f32 %v1562, %v1585
    %v1591 = vmul.f32 %v1564, %v1586
    %v1592 = vmul.f32 %v1566, %v1587
    %v1593 = vmul.f32 %v1568, %v1588
    %v1594 = vpack.c.bf16 %v1590, %v1589
    %v1595 = vpack.c.bf16 %v1592, %v1591
    %v1596 = vpack.c.bf16 %v1593, %v1593
    %1597 = vrot.lane.b32.xlu0 %v1453, 64
    %v1598 = vpop.permute.xlu0 %1597
    %1599 = vrot.lane.b32.xlu0 %v1454, 64
    %v1600 = vpop.permute.xlu0 %1599
    %1601 = vrot.lane.b32.xlu0 %v1455, 64
    %v1602 = vpop.permute.xlu0 %1601
    %v1606 = vsel %vm581, %v1594, 0
    %v1609 = vsel %vm581, %v1595, 0
    %v1612 = vsel %vm581, %v1596, 0
    %v1615 = vsel %vm103, %v1602, 0
    %1617 = vmatprep.subr.bf16.mxu0 0
    %1618 = vmatpush1.bf16.msra.mxu0 %v1598
    %1619 = vmatprep.subr.bf16.mxu0 0
    %1620 = vmatpush1.bf16.msra.mxu0 %v1600
    %1621 = vmatprep.subr.bf16.mxu0 0
    %1622 = vmatpush1.bf16.msra.mxu0 %v1615
    %1623 = vmatprep.subr.bf16.mxu0 0
    %1624 = vmatpush1.bf16.msra.mxu0 0
    %1625 = vmatprep.subr.bf16.mxu0 0
    %1626 = vmatpush1.bf16.msra.mxu0 0
    %1627 = vmatprep.subr.bf16.mxu0 0
    %1628 = vmatpush1.bf16.msra.mxu0 0
    %1629 = vmatprep.subr.bf16.mxu0 0
    %1630 = vmatpush1.bf16.msra.mxu0 0
    %1631 = vmatprep.subr.bf16.mxu0 0
    %1632 = vmatpush1.bf16.msra.mxu0 0
    %1633 = vmatprep.subr.bf16.mxu0 0
    %1634 = vmatpush1.bf16.msra.mxu0 0
    %1635 = vmatprep.subr.bf16.mxu0 0
    %1636 = vmatpush1.bf16.msra.mxu0 0
    %1637 = vmatprep.subr.bf16.mxu0 0
    %1638 = vmatpush1.bf16.msra.mxu0 0
    %1639 = vmatprep.subr.bf16.mxu0 0
    %1640 = vmatpush1.bf16.msra.mxu0 0
    %1641 = vmatprep.subr.bf16.mxu0 0
    %1642 = vmatpush1.bf16.msra.mxu0 0
    %1643 = vmatprep.subr.bf16.mxu0 0
    %1644 = vmatpush1.bf16.msra.mxu0 0
    %1645 = vmatprep.subr.bf16.mxu0 0
    %1646 = vmatpush1.bf16.msra.mxu0 0
    %1647 = vmatprep.subr.bf16.mxu0 0
    %1648 = vmatpush1.bf16.msra.mxu0 0
    %1649 = vmatprep.mubr.bf16.mxu0 0
    %1650 = vmatmul.mubr.bf16.gmra.mrb[0].mxu0 %v1606
    %v1651 = vpop.f32.mrb[0].mxu0
    %v1652 = vadd.f32 0.0, %v1651
    %v1653 = vpop.f32.mrb[0].mxu0
    %v1654 = vpop.f32.mrb[0].mxu0
    %v1655 = vadd.f32 0.0, %v1654
    %v1656 = vpop.f32.mrb[0].mxu0
    %1657 = vmatprep.mubr.bf16.mxu0 0
    %1658 = vmatmul.mubr.bf16.gmra.mrb[0].mxu0 %v1609
    %v1659 = vpop.f32.mrb[0].mxu0
    %v1660 = vadd.f32 0.0, %v1659
    %v1661 = vpop.f32.mrb[0].mxu0
    %v1662 = vpop.f32.mrb[0].mxu0
    %v1663 = vadd.f32 0.0, %v1662
    %v1664 = vpop.f32.mrb[0].mxu0
    %1665 = vmatprep.mubr.bf16.mxu0 0
    %1666 = vmatmul.mubr.bf16.gmra.mrb[0].mxu0 %v1612
    %v1667 = vpop.f32.mrb[0].mxu0
    %v1668 = vadd.f32 0.0, %v1667
    %v1669 = vpop.f32.mrb[0].mxu0
    %v1670 = vpop.f32.mrb[0].mxu0
    %v1671 = vpop.f32.mrb[0].mxu0
    %1672 = vdwg.mxu0
    %1673 = vrot.lane.b32.xlu0 %v1453, 120
    %v1674 = vpop.permute.xlu0 %1673
    %1675 = vrot.lane.b32.xlu0 %v1454, 120
    %v1676 = vpop.permute.xlu0 %1675
    %1677 = vrot.lane.b32.xlu0 %v1455, 120
    %v1678 = vpop.permute.xlu0 %1677
    %1679 = vrot.lane.b32.xlu0 %v1453, 88
    %v1680 = vpop.permute.xlu0 %1679
    %1681 = vrot.lane.b32.xlu0 %v1454, 88
    %v1682 = vpop.permute.xlu0 %1681
    %1683 = vrot.lane.b32.xlu0 %v1455, 88
    %v1684 = vpop.permute.xlu0 %1683
    %v1686 = vsel %vm90, %v1674, 0
    %v1689 = vsel %vm90, %v1676, 0
    %v1692 = vsel %vm90, %v1678, 0
    %v1695 = vsel %vm90, %v1680, 0
    %v1698 = vsel %vm90, %v1682, 0
    %v1701 = vsel %vm90, %v1684, 0
    %1703 = vmatprep.subr.bf16.mxu0 0
    %1704 = vmatpush1.bf16.xpose.msra.mxu0 %v1695
    %1705 = vmatprep.subr.bf16.mxu0 0
    %1706 = vmatpush1.bf16.xpose.msra.mxu0 %v1698
    %1707 = vmatprep.subr.bf16.mxu0 0
    %1708 = vmatpush1.bf16.xpose.msra.mxu0 %v1701
    %1709 = vmatprep.subr.bf16.mxu0 0
    %1710 = vmatpush1.bf16.xpose.msra.mxu0 0
    %1711 = vmatprep.subr.bf16.mxu0 0
    %1712 = vmatpush1.bf16.xpose.msra.mxu0 0
    %1713 = vmatprep.subr.bf16.mxu0 0
    %1714 = vmatpush1.bf16.xpose.msra.mxu0 0
    %1715 = vmatprep.subr.bf16.mxu0 0
    %1716 = vmatpush1.bf16.xpose.msra.mxu0 0
    %1717 = vmatprep.subr.bf16.mxu0 0
    %1718 = vmatpush1.bf16.xpose.msra.mxu0 0
    %1719 = vmatprep.subr.bf16.mxu0 0
    %1720 = vmatpush1.bf16.xpose.msra.mxu0 0
    %1721 = vmatprep.subr.bf16.mxu0 0
    %1722 = vmatpush1.bf16.xpose.msra.mxu0 0
    %1723 = vmatprep.subr.bf16.mxu0 0
    %1724 = vmatpush1.bf16.xpose.msra.mxu0 0
    %1725 = vmatprep.subr.bf16.mxu0 0
    %1726 = vmatpush1.bf16.xpose.msra.mxu0 0
    %1727 = vmatprep.subr.bf16.mxu0 0
    %1728 = vmatpush1.bf16.xpose.msra.mxu0 0
    %1729 = vmatprep.subr.bf16.mxu0 0
    %1730 = vmatpush1.bf16.xpose.msra.mxu0 0
    %1731 = vmatprep.subr.bf16.mxu0 0
    %1732 = vmatpush1.bf16.xpose.msra.mxu0 0
    %1733 = vmatprep.subr.bf16.mxu0 0
    %1734 = vmatpush1.bf16.xpose.msra.mxu0 0
    %1735 = vmatprep.mubr.bf16.mxu0 0
    %1736 = vmatmul.mubr.bf16.gmra.mrb[0].mxu0 %v1686
    %v1737 = vpop.f32.mrb[0].mxu0
    %v1738 = vadd.f32 %v224, %v1737
    %v1739 = vpop.f32.mrb[0].mxu0
    %v1740 = vpop.f32.mrb[0].mxu0
    %v1741 = vadd.f32 %v224, %v1740
    %v1742 = vpop.f32.mrb[0].mxu0
    %1743 = vmatprep.mubr.bf16.mxu0 0
    %1744 = vmatmul.mubr.bf16.gmra.mrb[0].mxu0 %v1689
    %v1745 = vpop.f32.mrb[0].mxu0
    %v1746 = vadd.f32 %v224, %v1745
    %v1747 = vpop.f32.mrb[0].mxu0
    %v1748 = vpop.f32.mrb[0].mxu0
    %v1749 = vadd.f32 %v224, %v1748
    %v1750 = vpop.f32.mrb[0].mxu0
    %1751 = vmatprep.mubr.bf16.mxu0 0
    %1752 = vmatmul.mubr.bf16.gmra.mrb[0].mxu0 %v1692
    %v1753 = vpop.f32.mrb[0].mxu0
    %v1754 = vadd.f32 %v224, %v1753
    %v1755 = vpop.f32.mrb[0].mxu0
    %v1756 = vpop.f32.mrb[0].mxu0
    %v1757 = vpop.f32.mrb[0].mxu0
    %1758 = vdwg.mxu0
    %v1759 = vsel %vm581, %v1738, -inf
    %1760 = vmax.xlane.f32.xlu0 %v1759
    %v1761 = vpop.xlane.xlu0 %1760
    %v1762 = vsel %vm581, %v1741, -inf
    %1763 = vmax.xlane.f32.xlu0 %v1762
    %v1764 = vpop.xlane.xlu0 %1763
    %v1765 = vsel %vm581, %v1746, -inf
    %1766 = vmax.xlane.f32.xlu0 %v1765
    %v1767 = vpop.xlane.xlu0 %1766
    %v1768 = vsel %vm581, %v1749, -inf
    %1769 = vmax.xlane.f32.xlu0 %v1768
    %v1770 = vpop.xlane.xlu0 %1769
    %v1771 = vsel %vm581, %v1754, -inf
    %1772 = vmax.xlane.f32.xlu0 %v1771
    %v1773 = vpop.xlane.xlu0 %1772
    %v1774 = vsub.f32 %v1738, %v1761
    %v1775 = vsub.f32 %v1741, %v1764
    %v1776 = vsub.f32 %v1746, %v1767
    %v1777 = vsub.f32 %v1749, %v1770
    %v1778 = vsub.f32 %v1754, %v1773
    %v1779 = vmul.f32 %v1774, 1.442695
    %v1780 = vpow.pop %v1779
    %v1781 = vmul.f32 %v1775, 1.442695
    %v1782 = vpow.pop %v1781
    %v1783 = vmul.f32 %v1776, 1.442695
    %v1784 = vpow.pop %v1783
    %v1785 = vmul.f32 %v1777, 1.442695
    %v1786 = vpow.pop %v1785
    %v1787 = vmul.f32 %v1778, 1.442695
    %v1788 = vpow.pop %v1787
    %v1789 = vsel %vm581, %v1780, 0.0
    %1790 = vadd.xlane.f32.xlu0 %v1789
    %v1791 = vpop.xlane.xlu0 %1790
    %v1792 = vsel %vm581, %v1782, 0.0
    %1793 = vadd.xlane.f32.xlu0 %v1792
    %v1794 = vpop.xlane.xlu0 %1793
    %v1795 = vsel %vm581, %v1784, 0.0
    %1796 = vadd.xlane.f32.xlu0 %v1795
    %v1797 = vpop.xlane.xlu0 %1796
    %v1798 = vsel %vm581, %v1786, 0.0
    %1799 = vadd.xlane.f32.xlu0 %v1798
    %v1800 = vpop.xlane.xlu0 %1799
    %v1801 = vsel %vm581, %v1788, 0.0
    %1802 = vadd.xlane.f32.xlu0 %v1801
    %v1803 = vpop.xlane.xlu0 %1802
    %v1804 = vrcp.pop %v1791
    %v1805 = vrcp.pop %v1794
    %v1806 = vrcp.pop %v1797
    %v1807 = vrcp.pop %v1800
    %v1808 = vrcp.pop %v1803
    %v1809 = vmul.f32 %v1780, %v1804
    %v1810 = vmul.f32 %v1782, %v1805
    %v1811 = vmul.f32 %v1784, %v1806
    %v1812 = vmul.f32 %v1786, %v1807
    %v1813 = vmul.f32 %v1788, %v1808
    %v1814 = vpack.c.bf16 %v1810, %v1809
    %v1815 = vpack.c.bf16 %v1812, %v1811
    %v1816 = vpack.c.bf16 %v1813, %v1813
    %1817 = vrot.lane.b32.xlu0 %v1453, 56
    %v1818 = vpop.permute.xlu0 %1817
    %1819 = vrot.lane.b32.xlu0 %v1454, 56
    %v1820 = vpop.permute.xlu0 %1819
    %1821 = vrot.lane.b32.xlu0 %v1455, 56
    %v1822 = vpop.permute.xlu0 %1821
    %v1826 = vsel %vm581, %v1814, 0
    %v1829 = vsel %vm581, %v1815, 0
    %v1832 = vsel %vm581, %v1816, 0
    %v1835 = vsel %vm103, %v1822, 0
    %1837 = vmatprep.subr.bf16.mxu0 0
    %1838 = vmatpush1.bf16.msra.mxu0 %v1818
    %1839 = vmatprep.subr.bf16.mxu0 0
    %1840 = vmatpush1.bf16.msra.mxu0 %v1820
    %1841 = vmatprep.subr.bf16.mxu0 0
    %1842 = vmatpush1.bf16.msra.mxu0 %v1835
    %1843 = vmatprep.subr.bf16.mxu0 0
    %1844 = vmatpush1.bf16.msra.mxu0 0
    %1845 = vmatprep.subr.bf16.mxu0 0
    %1846 = vmatpush1.bf16.msra.mxu0 0
    %1847 = vmatprep.subr.bf16.mxu0 0
    %1848 = vmatpush1.bf16.msra.mxu0 0
    %1849 = vmatprep.subr.bf16.mxu0 0
    %1850 = vmatpush1.bf16.msra.mxu0 0
    %1851 = vmatprep.subr.bf16.mxu0 0
    %1852 = vmatpush1.bf16.msra.mxu0 0
    %1853 = vmatprep.subr.bf16.mxu0 0
    %1854 = vmatpush1.bf16.msra.mxu0 0
    %1855 = vmatprep.subr.bf16.mxu0 0
    %1856 = vmatpush1.bf16.msra.mxu0 0
    %1857 = vmatprep.subr.bf16.mxu0 0
    %1858 = vmatpush1.bf16.msra.mxu0 0
    %1859 = vmatprep.subr.bf16.mxu0 0
    %1860 = vmatpush1.bf16.msra.mxu0 0
    %1861 = vmatprep.subr.bf16.mxu0 0
    %1862 = vmatpush1.bf16.msra.mxu0 0
    %1863 = vmatprep.subr.bf16.mxu0 0
    %1864 = vmatpush1.bf16.msra.mxu0 0
    %1865 = vmatprep.subr.bf16.mxu0 0
    %1866 = vmatpush1.bf16.msra.mxu0 0
    %1867 = vmatprep.subr.bf16.mxu0 0
    %1868 = vmatpush1.bf16.msra.mxu0 0
    %1869 = vmatprep.mubr.bf16.mxu0 0
    %1870 = vmatmul.mubr.bf16.gmra.mrb[0].mxu0 %v1826
    %v1871 = vpop.f32.mrb[0].mxu0
    %v1872 = vadd.f32 0.0, %v1871
    %v1873 = vpop.f32.mrb[0].mxu0
    %v1874 = vpop.f32.mrb[0].mxu0
    %v1875 = vadd.f32 0.0, %v1874
    %v1876 = vpop.f32.mrb[0].mxu0
    %1877 = vmatprep.mubr.bf16.mxu0 0
    %1878 = vmatmul.mubr.bf16.gmra.mrb[0].mxu0 %v1829
    %v1879 = vpop.f32.mrb[0].mxu0
    %v1880 = vadd.f32 0.0, %v1879
    %v1881 = vpop.f32.mrb[0].mxu0
    %v1882 = vpop.f32.mrb[0].mxu0
    %v1883 = vadd.f32 0.0, %v1882
    %v1884 = vpop.f32.mrb[0].mxu0
    %1885 = vmatprep.mubr.bf16.mxu0 0
    %1886 = vmatmul.mubr.bf16.gmra.mrb[0].mxu0 %v1832
    %v1887 = vpop.f32.mrb[0].mxu0
    %v1888 = vadd.f32 0.0, %v1887
    %v1889 = vpop.f32.mrb[0].mxu0
    %v1890 = vpop.f32.mrb[0].mxu0
    %v1891 = vpop.f32.mrb[0].mxu0
    %1892 = vdwg.mxu0
    %1893 = vrot.lane.b32.xlu0 %v1453, 112
    %v1894 = vpop.permute.xlu0 %1893
    %1895 = vrot.lane.b32.xlu0 %v1454, 112
    %v1896 = vpop.permute.xlu0 %1895
    %1897 = vrot.lane.b32.xlu0 %v1455, 112
    %v1898 = vpop.permute.xlu0 %1897
    %1899 = vrot.lane.b32.xlu0 %v1453, 80
    %v1900 = vpop.permute.xlu0 %1899
    %1901 = vrot.lane.b32.xlu0 %v1454, 80
    %v1902 = vpop.permute.xlu0 %1901
    %1903 = vrot.lane.b32.xlu0 %v1455, 80
    %v1904 = vpop.permute.xlu0 %1903
    %v1906 = vsel %vm90, %v1894, 0
    %v1909 = vsel %vm90, %v1896, 0
    %v1912 = vsel %vm90, %v1898, 0
    %v1915 = vsel %vm90, %v1900, 0
    %v1918 = vsel %vm90, %v1902, 0
    %v1921 = vsel %vm90, %v1904, 0
    %1923 = vmatprep.subr.bf16.mxu0 0
    %1924 = vmatpush1.bf16.xpose.msra.mxu0 %v1915
    %1925 = vmatprep.subr.bf16.mxu0 0
    %1926 = vmatpush1.bf16.xpose.msra.mxu0 %v1918
    %1927 = vmatprep.subr.bf16.mxu0 0
    %1928 = vmatpush1.bf16.xpose.msra.mxu0 %v1921
    %1929 = vmatprep.subr.bf16.mxu0 0
    %1930 = vmatpush1.bf16.xpose.msra.mxu0 0
    %1931 = vmatprep.subr.bf16.mxu0 0
    %1932 = vmatpush1.bf16.xpose.msra.mxu0 0
    %1933 = vmatprep.subr.bf16.mxu0 0
    %1934 = vmatpush1.bf16.xpose.msra.mxu0 0
    %1935 = vmatprep.subr.bf16.mxu0 0
    %1936 = vmatpush1.bf16.xpose.msra.mxu0 0
    %1937 = vmatprep.subr.bf16.mxu0 0
    %1938 = vmatpush1.bf16.xpose.msra.mxu0 0
    %1939 = vmatprep.subr.bf16.mxu0 0
    %1940 = vmatpush1.bf16.xpose.msra.mxu0 0
    %1941 = vmatprep.subr.bf16.mxu0 0
    %1942 = vmatpush1.bf16.xpose.msra.mxu0 0
    %1943 = vmatprep.subr.bf16.mxu0 0
    %1944 = vmatpush1.bf16.xpose.msra.mxu0 0
    %1945 = vmatprep.subr.bf16.mxu0 0
    %1946 = vmatpush1.bf16.xpose.msra.mxu0 0
    %1947 = vmatprep.subr.bf16.mxu0 0
    %1948 = vmatpush1.bf16.xpose.msra.mxu0 0
    %1949 = vmatprep.subr.bf16.mxu0 0
    %1950 = vmatpush1.bf16.xpose.msra.mxu0 0
    %1951 = vmatprep.subr.bf16.mxu0 0
    %1952 = vmatpush1.bf16.xpose.msra.mxu0 0
    %1953 = vmatprep.subr.bf16.mxu0 0
    %1954 = vmatpush1.bf16.xpose.msra.mxu0 0
    %1955 = vmatprep.mubr.bf16.mxu0 0
    %1956 = vmatmul.mubr.bf16.gmra.mrb[0].mxu0 %v1906
    %v1957 = vpop.f32.mrb[0].mxu0
    %v1958 = vadd.f32 %v224, %v1957
    %v1959 = vpop.f32.mrb[0].mxu0
    %v1960 = vpop.f32.mrb[0].mxu0
    %v1961 = vadd.f32 %v224, %v1960
    %v1962 = vpop.f32.mrb[0].mxu0
    %1963 = vmatprep.mubr.bf16.mxu0 0
    %1964 = vmatmul.mubr.bf16.gmra.mrb[0].mxu0 %v1909
    %v1965 = vpop.f32.mrb[0].mxu0
    %v1966 = vadd.f32 %v224, %v1965
    %v1967 = vpop.f32.mrb[0].mxu0
    %v1968 = vpop.f32.mrb[0].mxu0
    %v1969 = vadd.f32 %v224, %v1968
    %v1970 = vpop.f32.mrb[0].mxu0
    %1971 = vmatprep.mubr.bf16.mxu0 0
    %1972 = vmatmul.mubr.bf16.gmra.mrb[0].mxu0 %v1912
    %v1973 = vpop.f32.mrb[0].mxu0
    %v1974 = vadd.f32 %v224, %v1973
    %v1975 = vpop.f32.mrb[0].mxu0
    %v1976 = vpop.f32.mrb[0].mxu0
    %v1977 = vpop.f32.mrb[0].mxu0
    %1978 = vdwg.mxu0
    %v1979 = vsel %vm581, %v1958, -inf
    %1980 = vmax.xlane.f32.xlu0 %v1979
    %v1981 = vpop.xlane.xlu0 %1980
    %v1982 = vsel %vm581, %v1961, -inf
    %1983 = vmax.xlane.f32.xlu0 %v1982
    %v1984 = vpop.xlane.xlu0 %1983
    %v1985 = vsel %vm581, %v1966, -inf
    %1986 = vmax.xlane.f32.xlu0 %v1985
    %v1987 = vpop.xlane.xlu0 %1986
    %v1988 = vsel %vm581, %v1969, -inf
    %1989 = vmax.xlane.f32.xlu0 %v1988
    %v1990 = vpop.xlane.xlu0 %1989
    %v1991 = vsel %vm581, %v1974, -inf
    %1992 = vmax.xlane.f32.xlu0 %v1991
    %v1993 = vpop.xlane.xlu0 %1992
    %v1994 = vsub.f32 %v1958, %v1981
    %v1995 = vsub.f32 %v1961, %v1984
    %v1996 = vsub.f32 %v1966, %v1987
    %v1997 = vsub.f32 %v1969, %v1990
    %v1998 = vsub.f32 %v1974, %v1993
    %v1999 = vmul.f32 %v1994, 1.442695
    %v2000 = vpow.pop %v1999
    %v2001 = vmul.f32 %v1995, 1.442695
    %v2002 = vpow.pop %v2001
    %v2003 = vmul.f32 %v1996, 1.442695
    %v2004 = vpow.pop %v2003
    %v2005 = vmul.f32 %v1997, 1.442695
    %v2006 = vpow.pop %v2005
    %v2007 = vmul.f32 %v1998, 1.442695
    %v2008 = vpow.pop %v2007
    %v2009 = vsel %vm581, %v2000, 0.0
    %2010 = vadd.xlane.f32.xlu0 %v2009
    %v2011 = vpop.xlane.xlu0 %2010
    %v2012 = vsel %vm581, %v2002, 0.0
    %2013 = vadd.xlane.f32.xlu0 %v2012
    %v2014 = vpop.xlane.xlu0 %2013
    %v2015 = vsel %vm581, %v2004, 0.0
    %2016 = vadd.xlane.f32.xlu0 %v2015
    %v2017 = vpop.xlane.xlu0 %2016
    %v2018 = vsel %vm581, %v2006, 0.0
    %2019 = vadd.xlane.f32.xlu0 %v2018
    %v2020 = vpop.xlane.xlu0 %2019
    %v2021 = vsel %vm581, %v2008, 0.0
    %2022 = vadd.xlane.f32.xlu0 %v2021
    %v2023 = vpop.xlane.xlu0 %2022
    %v2024 = vrcp.pop %v2011
    %v2025 = vrcp.pop %v2014
    %v2026 = vrcp.pop %v2017
    %v2027 = vrcp.pop %v2020
    %v2028 = vrcp.pop %v2023
    %v2029 = vmul.f32 %v2000, %v2024
    %v2030 = vmul.f32 %v2002, %v2025
    %v2031 = vmul.f32 %v2004, %v2026
    %v2032 = vmul.f32 %v2006, %v2027
    %v2033 = vmul.f32 %v2008, %v2028
    %v2034 = vpack.c.bf16 %v2030, %v2029
    %v2035 = vpack.c.bf16 %v2032, %v2031
    %v2036 = vpack.c.bf16 %v2033, %v2033
    %2037 = vrot.lane.b32.xlu0 %v1453, 48
    %v2038 = vpop.permute.xlu0 %2037
    %2039 = vrot.lane.b32.xlu0 %v1454, 48
    %v2040 = vpop.permute.xlu0 %2039
    %2041 = vrot.lane.b32.xlu0 %v1455, 48
    %v2042 = vpop.permute.xlu0 %2041
    %v2046 = vsel %vm581, %v2034, 0
    %v2049 = vsel %vm581, %v2035, 0
    %v2052 = vsel %vm581, %v2036, 0
    %v2055 = vsel %vm103, %v2042, 0
    %2057 = vmatprep.subr.bf16.mxu0 0
    %2058 = vmatpush1.bf16.msra.mxu0 %v2038
    %2059 = vmatprep.subr.bf16.mxu0 0
    %2060 = vmatpush1.bf16.msra.mxu0 %v2040
    %2061 = vmatprep.subr.bf16.mxu0 0
    %2062 = vmatpush1.bf16.msra.mxu0 %v2055
    %2063 = vmatprep.subr.bf16.mxu0 0
    %2064 = vmatpush1.bf16.msra.mxu0 0
    %2065 = vmatprep.subr.bf16.mxu0 0
    %2066 = vmatpush1.bf16.msra.mxu0 0
    %2067 = vmatprep.subr.bf16.mxu0 0
    %2068 = vmatpush1.bf16.msra.mxu0 0
    %2069 = vmatprep.subr.bf16.mxu0 0
    %2070 = vmatpush1.bf16.msra.mxu0 0
    %2071 = vmatprep.subr.bf16.mxu0 0
    %2072 = vmatpush1.bf16.msra.mxu0 0
    %2073 = vmatprep.subr.bf16.mxu0 0
    %2074 = vmatpush1.bf16.msra.mxu0 0
    %2075 = vmatprep.subr.bf16.mxu0 0
    %2076 = vmatpush1.bf16.msra.mxu0 0
    %2077 = vmatprep.subr.bf16.mxu0 0
    %2078 = vmatpush1.bf16.msra.mxu0 0
    %2079 = vmatprep.subr.bf16.mxu0 0
    %2080 = vmatpush1.bf16.msra.mxu0 0
    %2081 = vmatprep.subr.bf16.mxu0 0
    %2082 = vmatpush1.bf16.msra.mxu0 0
    %2083 = vmatprep.subr.bf16.mxu0 0
    %2084 = vmatpush1.bf16.msra.mxu0 0
    %2085 = vmatprep.subr.bf16.mxu0 0
    %2086 = vmatpush1.bf16.msra.mxu0 0
    %2087 = vmatprep.subr.bf16.mxu0 0
    %2088 = vmatpush1.bf16.msra.mxu0 0
    %2089 = vmatprep.mubr.bf16.mxu0 0
    %2090 = vmatmul.mubr.bf16.gmra.mrb[0].mxu0 %v2046
    %v2091 = vpop.f32.mrb[0].mxu0
    %v2092 = vadd.f32 0.0, %v2091
    %v2093 = vpop.f32.mrb[0].mxu0
    %v2094 = vpop.f32.mrb[0].mxu0
    %v2095 = vadd.f32 0.0, %v2094
    %v2096 = vpop.f32.mrb[0].mxu0
    %2097 = vmatprep.mubr.bf16.mxu0 0
    %2098 = vmatmul.mubr.bf16.gmra.mrb[0].mxu0 %v2049
    %v2099 = vpop.f32.mrb[0].mxu0
    %v2100 = vadd.f32 0.0, %v2099
    %v2101 = vpop.f32.mrb[0].mxu0
    %v2102 = vpop.f32.mrb[0].mxu0
    %v2103 = vadd.f32 0.0, %v2102
    %v2104 = vpop.f32.mrb[0].mxu0
    %2105 = vmatprep.mubr.bf16.mxu0 0
    %2106 = vmatmul.mubr.bf16.gmra.mrb[0].mxu0 %v2052
    %v2107 = vpop.f32.mrb[0].mxu0
    %v2108 = vadd.f32 0.0, %v2107
    %v2109 = vpop.f32.mrb[0].mxu0
    %v2110 = vpop.f32.mrb[0].mxu0
    %v2111 = vpop.f32.mrb[0].mxu0
    %2112 = vdwg.mxu0
    %2113 = vrot.lane.b32.xlu0 %v1453, 104
    %v2114 = vpop.permute.xlu0 %2113
    %2115 = vrot.lane.b32.xlu0 %v1454, 104
    %v2116 = vpop.permute.xlu0 %2115
    %2117 = vrot.lane.b32.xlu0 %v1455, 104
    %v2118 = vpop.permute.xlu0 %2117
    %2119 = vrot.lane.b32.xlu0 %v1453, 72
    %v2120 = vpop.permute.xlu0 %2119
    %2121 = vrot.lane.b32.xlu0 %v1454, 72
    %v2122 = vpop.permute.xlu0 %2121
    %2123 = vrot.lane.b32.xlu0 %v1455, 72
    %v2124 = vpop.permute.xlu0 %2123
    %v2126 = vsel %vm90, %v2114, 0
    %v2129 = vsel %vm90, %v2116, 0
    %v2132 = vsel %vm90, %v2118, 0
    %v2135 = vsel %vm90, %v2120, 0
    %v2138 = vsel %vm90, %v2122, 0
    %v2141 = vsel %vm90, %v2124, 0
    %2143 = vmatprep.subr.bf16.mxu0 0
    %2144 = vmatpush1.bf16.xpose.msra.mxu0 %v2135
    %2145 = vmatprep.subr.bf16.mxu0 0
    %2146 = vmatpush1.bf16.xpose.msra.mxu0 %v2138
    %2147 = vmatprep.subr.bf16.mxu0 0
    %2148 = vmatpush1.bf16.xpose.msra.mxu0 %v2141
    %2149 = vmatprep.subr.bf16.mxu0 0
    %2150 = vmatpush1.bf16.xpose.msra.mxu0 0
    %2151 = vmatprep.subr.bf16.mxu0 0
    %2152 = vmatpush1.bf16.xpose.msra.mxu0 0
    %2153 = vmatprep.subr.bf16.mxu0 0
    %2154 = vmatpush1.bf16.xpose.msra.mxu0 0
    %2155 = vmatprep.subr.bf16.mxu0 0
    %2156 = vmatpush1.bf16.xpose.msra.mxu0 0
    %2157 = vmatprep.subr.bf16.mxu0 0
    %2158 = vmatpush1.bf16.xpose.msra.mxu0 0
    %2159 = vmatprep.subr.bf16.mxu0 0
    %2160 = vmatpush1.bf16.xpose.msra.mxu0 0
    %2161 = vmatprep.subr.bf16.mxu0 0
    %2162 = vmatpush1.bf16.xpose.msra.mxu0 0
    %2163 = vmatprep.subr.bf16.mxu0 0
    %2164 = vmatpush1.bf16.xpose.msra.mxu0 0
    %2165 = vmatprep.subr.bf16.mxu0 0
    %2166 = vmatpush1.bf16.xpose.msra.mxu0 0
    %2167 = vmatprep.subr.bf16.mxu0 0
    %2168 = vmatpush1.bf16.xpose.msra.mxu0 0
    %2169 = vmatprep.subr.bf16.mxu0 0
    %2170 = vmatpush1.bf16.xpose.msra.mxu0 0
    %2171 = vmatprep.subr.bf16.mxu0 0
    %2172 = vmatpush1.bf16.xpose.msra.mxu0 0
    %2173 = vmatprep.subr.bf16.mxu0 0
    %2174 = vmatpush1.bf16.xpose.msra.mxu0 0
    %2175 = vmatprep.mubr.bf16.mxu0 0
    %2176 = vmatmul.mubr.bf16.gmra.mrb[0].mxu0 %v2126
    %v2177 = vpop.f32.mrb[0].mxu0
    %v2178 = vadd.f32 %v224, %v2177
    %v2179 = vpop.f32.mrb[0].mxu0
    %v2180 = vpop.f32.mrb[0].mxu0
    %v2181 = vadd.f32 %v224, %v2180
    %v2182 = vpop.f32.mrb[0].mxu0
    %2183 = vmatprep.mubr.bf16.mxu0 0
    %2184 = vmatmul.mubr.bf16.gmra.mrb[0].mxu0 %v2129
    %v2185 = vpop.f32.mrb[0].mxu0
    %v2186 = vadd.f32 %v224, %v2185
    %v2187 = vpop.f32.mrb[0].mxu0
    %v2188 = vpop.f32.mrb[0].mxu0
    %v2189 = vadd.f32 %v224, %v2188
    %v2190 = vpop.f32.mrb[0].mxu0
    %2191 = vmatprep.mubr.bf16.mxu0 0
    %2192 = vmatmul.mubr.bf16.gmra.mrb[0].mxu0 %v2132
    %v2193 = vpop.f32.mrb[0].mxu0
    %v2194 = vadd.f32 %v224, %v2193
    %v2195 = vpop.f32.mrb[0].mxu0
    %v2196 = vpop.f32.mrb[0].mxu0
    %v2197 = vpop.f32.mrb[0].mxu0
    %2198 = vdwg.mxu0
    %v2199 = vsel %vm581, %v2178, -inf
    %2200 = vmax.xlane.f32.xlu0 %v2199
    %v2201 = vpop.xlane.xlu0 %2200
    %v2202 = vsel %vm581, %v2181, -inf
    %2203 = vmax.xlane.f32.xlu0 %v2202
    %v2204 = vpop.xlane.xlu0 %2203
    %v2205 = vsel %vm581, %v2186, -inf
    %2206 = vmax.xlane.f32.xlu0 %v2205
    %v2207 = vpop.xlane.xlu0 %2206
    %v2208 = vsel %vm581, %v2189, -inf
    %2209 = vmax.xlane.f32.xlu0 %v2208
    %v2210 = vpop.xlane.xlu0 %2209
    %v2211 = vsel %vm581, %v2194, -inf
    %2212 = vmax.xlane.f32.xlu0 %v2211
    %v2213 = vpop.xlane.xlu0 %2212
    %v2214 = vsub.f32 %v2178, %v2201
    %v2215 = vsub.f32 %v2181, %v2204
    %v2216 = vsub.f32 %v2186, %v2207
    %v2217 = vsub.f32 %v2189, %v2210
    %v2218 = vsub.f32 %v2194, %v2213
    %v2219 = vmul.f32 %v2214, 1.442695
    %v2220 = vpow.pop %v2219
    %v2221 = vmul.f32 %v2215, 1.442695
    %v2222 = vpow.pop %v2221
    %v2223 = vmul.f32 %v2216, 1.442695
    %v2224 = vpow.pop %v2223
    %v2225 = vmul.f32 %v2217, 1.442695
    %v2226 = vpow.pop %v2225
    %v2227 = vmul.f32 %v2218, 1.442695
    %v2228 = vpow.pop %v2227
    %v2229 = vsel %vm581, %v2220, 0.0
    %2230 = vadd.xlane.f32.xlu0 %v2229
    %v2231 = vpop.xlane.xlu0 %2230
    %v2232 = vsel %vm581, %v2222, 0.0
    %2233 = vadd.xlane.f32.xlu0 %v2232
    %v2234 = vpop.xlane.xlu0 %2233
    %v2235 = vsel %vm581, %v2224, 0.0
    %2236 = vadd.xlane.f32.xlu0 %v2235
    %v2237 = vpop.xlane.xlu0 %2236
    %v2238 = vsel %vm581, %v2226, 0.0
    %2239 = vadd.xlane.f32.xlu0 %v2238
    %v2240 = vpop.xlane.xlu0 %2239
    %v2241 = vsel %vm581, %v2228, 0.0
    %2242 = vadd.xlane.f32.xlu0 %v2241
    %v2243 = vpop.xlane.xlu0 %2242
    %v2244 = vrcp.pop %v2231
    %v2245 = vrcp.pop %v2234
    %v2246 = vrcp.pop %v2237
    %v2247 = vrcp.pop %v2240
    %v2248 = vrcp.pop %v2243
    %v2249 = vmul.f32 %v2220, %v2244
    %v2250 = vmul.f32 %v2222, %v2245
    %v2251 = vmul.f32 %v2224, %v2246
    %v2252 = vmul.f32 %v2226, %v2247
    %v2253 = vmul.f32 %v2228, %v2248
    %v2254 = vpack.c.bf16 %v2250, %v2249
    %v2255 = vpack.c.bf16 %v2252, %v2251
    %v2256 = vpack.c.bf16 %v2253, %v2253
    %2257 = vrot.lane.b32.xlu0 %v1453, 40
    %v2258 = vpop.permute.xlu0 %2257
    %2259 = vrot.lane.b32.xlu0 %v1454, 40
    %v2260 = vpop.permute.xlu0 %2259
    %2261 = vrot.lane.b32.xlu0 %v1455, 40
    %v2262 = vpop.permute.xlu0 %2261
    %v2266 = vsel %vm581, %v2254, 0
    %v2269 = vsel %vm581, %v2255, 0
    %v2272 = vsel %vm581, %v2256, 0
    %v2275 = vsel %vm103, %v2262, 0
    %2277 = vmatprep.subr.bf16.mxu0 0
    %2278 = vmatpush1.bf16.msra.mxu0 %v2258
    %2279 = vmatprep.subr.bf16.mxu0 0
    %2280 = vmatpush1.bf16.msra.mxu0 %v2260
    %2281 = vmatprep.subr.bf16.mxu0 0
    %2282 = vmatpush1.bf16.msra.mxu0 %v2275
    %2283 = vmatprep.subr.bf16.mxu0 0
    %2284 = vmatpush1.bf16.msra.mxu0 0
    %2285 = vmatprep.subr.bf16.mxu0 0
    %2286 = vmatpush1.bf16.msra.mxu0 0
    %2287 = vmatprep.subr.bf16.mxu0 0
    %2288 = vmatpush1.bf16.msra.mxu0 0
    %2289 = vmatprep.subr.bf16.mxu0 0
    %2290 = vmatpush1.bf16.msra.mxu0 0
    %2291 = vmatprep.subr.bf16.mxu0 0
    %2292 = vmatpush1.bf16.msra.mxu0 0
    %2293 = vmatprep.subr.bf16.mxu0 0
    %2294 = vmatpush1.bf16.msra.mxu0 0
    %2295 = vmatprep.subr.bf16.mxu0 0
    %2296 = vmatpush1.bf16.msra.mxu0 0
    %2297 = vmatprep.subr.bf16.mxu0 0
    %2298 = vmatpush1.bf16.msra.mxu0 0
    %2299 = vmatprep.subr.bf16.mxu0 0
    %2300 = vmatpush1.bf16.msra.mxu0 0
    %2301 = vmatprep.subr.bf16.mxu0 0
    %2302 = vmatpush1.bf16.msra.mxu0 0
    %2303 = vmatprep.subr.bf16.mxu0 0
    %2304 = vmatpush1.bf16.msra.mxu0 0
    %2305 = vmatprep.subr.bf16.mxu0 0
    %2306 = vmatpush1.bf16.msra.mxu0 0
    %2307 = vmatprep.subr.bf16.mxu0 0
    %2308 = vmatpush1.bf16.msra.mxu0 0
    %2309 = vmatprep.mubr.bf16.mxu0 0
    %2310 = vmatmul.mubr.bf16.gmra.mrb[0].mxu0 %v2266
    %v2311 = vpop.f32.mrb[0].mxu0
    %v2312 = vadd.f32 0.0, %v2311
    %v2313 = vpop.f32.mrb[0].mxu0
    %v2314 = vpop.f32.mrb[0].mxu0
    %v2315 = vadd.f32 0.0, %v2314
    %v2316 = vpop.f32.mrb[0].mxu0
    %2317 = vmatprep.mubr.bf16.mxu0 0
    %2318 = vmatmul.mubr.bf16.gmra.mrb[0].mxu0 %v2269
    %v2319 = vpop.f32.mrb[0].mxu0
    %v2320 = vadd.f32 0.0, %v2319
    %v2321 = vpop.f32.mrb[0].mxu0
    %v2322 = vpop.f32.mrb[0].mxu0
    %v2323 = vadd.f32 0.0, %v2322
    %v2324 = vpop.f32.mrb[0].mxu0
    %2325 = vmatprep.mubr.bf16.mxu0 0
    %2326 = vmatmul.mubr.bf16.gmra.mrb[0].mxu0 %v2272
    %v2327 = vpop.f32.mrb[0].mxu0
    %v2328 = vadd.f32 0.0, %v2327
    %v2329 = vpop.f32.mrb[0].mxu0
    %v2330 = vpop.f32.mrb[0].mxu0
    %v2331 = vpop.f32.mrb[0].mxu0
    %2332 = vdwg.mxu0
    %2338 = vrot.lane.b32.xlu0 %v1872, 8
    %v2339 = vpop.permute.xlu0 %2338
    %2340 = vrot.lane.b32.xlu0 %v1875, 8
    %v2341 = vpop.permute.xlu0 %2340
    %2342 = vrot.lane.b32.xlu0 %v1880, 8
    %v2343 = vpop.permute.xlu0 %2342
    %2344 = vrot.lane.b32.xlu0 %v1883, 8
    %v2345 = vpop.permute.xlu0 %2344
    %2346 = vrot.lane.b32.xlu0 %v1888, 8
    %v2347 = vpop.permute.xlu0 %2346
    %2358 = vrot.lane.b32.xlu0 %v2092, 16
    %v2359 = vpop.permute.xlu0 %2358
    %2360 = vrot.lane.b32.xlu0 %v2095, 16
    %v2361 = vpop.permute.xlu0 %2360
    %2362 = vrot.lane.b32.xlu0 %v2100, 16
    %v2363 = vpop.permute.xlu0 %2362
    %2364 = vrot.lane.b32.xlu0 %v2103, 16
    %v2365 = vpop.permute.xlu0 %2364
    %2366 = vrot.lane.b32.xlu0 %v2108, 16
    %v2367 = vpop.permute.xlu0 %2366
    %2378 = vrot.lane.b32.xlu0 %v2312, 24
    %v2379 = vpop.permute.xlu0 %2378
    %2380 = vrot.lane.b32.xlu0 %v2315, 24
    %v2381 = vpop.permute.xlu0 %2380
    %2382 = vrot.lane.b32.xlu0 %v2320, 24
    %v2383 = vpop.permute.xlu0 %2382
    %2384 = vrot.lane.b32.xlu0 %v2323, 24
    %v2385 = vpop.permute.xlu0 %2384
    %2386 = vrot.lane.b32.xlu0 %v2328, 24
    %v2387 = vpop.permute.xlu0 %2386
    %v2393 = vsel %vm90, %v1652, %v2339
    %v2394 = vsel %vm90, %v1655, %v2341
    %v2395 = vsel %vm90, %v1660, %v2343
    %v2396 = vsel %vm90, %v1663, %v2345
    %v2397 = vsel %vm90, %v1668, %v2347
    %v2398 = vsel %vm1441, %v2393, %v2359
    %v2399 = vsel %vm1441, %v2394, %v2361
    %v2400 = vsel %vm1441, %v2395, %v2363
    %v2401 = vsel %vm1441, %v2396, %v2365
    %v2402 = vsel %vm1441, %v2397, %v2367
    %v2403 = vsel %vm1447, %v2398, %v2379
    %v2404 = vsel %vm1447, %v2399, %v2381
    %v2405 = vsel %vm1447, %v2400, %v2383
    %v2406 = vsel %vm1447, %v2401, %v2385
    %v2407 = vsel %vm1447, %v2402, %v2387
    %v2408 = vpack.c.bf16 %v1449, %v1448
    %v2409 = vpack.c.bf16 %v1451, %v1450
    %v2410 = vpack.c.bf16 %v2403, %v1452
    %v2411 = vpack.c.bf16 %v2405, %v2404
    %v2412 = vpack.c.bf16 %v2407, %v2406
    %v2413 = vld [vmem:[%s6] sm:$0xf]
    %v2414 = vld [vmem:[%s6 + $0x4] sm:$0xf]
    %v2415 = vld [vmem:[%s6 + $0x8] sm:$0xf]
    %v2416 = vld [vmem:[%s6 + $0xc] sm:$0xf]
    %v2421 = vunpack.c.l.b16 %v2413
    %v2422 = vunpack.c.l.b16 %v2414
    %v2423 = vunpack.c.l.b16 %v2415
    %v2424 = vunpack.c.l.b16 %v2416
    %v2425 = vpack.c.b16 %v2422, %v2421
    %v2426 = vpack.c.b16 %v2424, %v2423
    %v2430 = vsel %vm226, %v2408, 0
    %v2433 = vsel %vm226, %v2409, 0
    %v2436 = vsel %vm226, %v2410, 0
    %v2439 = vsel %vm226, %v2411, 0
    %v2442 = vsel %vm226, %v2412, 0
    %2444 = vmatprep.subr.bf16.mxu0 0
    %2445 = vmatpush1.bf16.msra.mxu0 %v2425
    %2446 = vmatprep.subr.bf16.mxu0 0
    %2447 = vmatpush1.bf16.msra.mxu0 %v2426
    %2448 = vmatprep.subr.bf16.mxu0 0
    %2449 = vmatpush1.bf16.msra.mxu0 0
    %2450 = vmatprep.subr.bf16.mxu0 0
    %2451 = vmatpush1.bf16.msra.mxu0 0
    %2452 = vmatprep.subr.bf16.mxu0 0
    %2453 = vmatpush1.bf16.msra.mxu0 0
    %2454 = vmatprep.subr.bf16.mxu0 0
    %2455 = vmatpush1.bf16.msra.mxu0 0
    %2456 = vmatprep.subr.bf16.mxu0 0
    %2457 = vmatpush1.bf16.msra.mxu0 0
    %2458 = vmatprep.subr.bf16.mxu0 0
    %2459 = vmatpush1.bf16.msra.mxu0 0
    %2460 = vmatprep.subr.bf16.mxu0 0
    %2461 = vmatpush1.bf16.msra.mxu0 0
    %2462 = vmatprep.subr.bf16.mxu0 0
    %2463 = vmatpush1.bf16.msra.mxu0 0
    %2464 = vmatprep.subr.bf16.mxu0 0
    %2465 = vmatpush1.bf16.msra.mxu0 0
    %2466 = vmatprep.subr.bf16.mxu0 0
    %2467 = vmatpush1.bf16.msra.mxu0 0
    %2468 = vmatprep.subr.bf16.mxu0 0
    %2469 = vmatpush1.bf16.msra.mxu0 0
    %2470 = vmatprep.subr.bf16.mxu0 0
    %2471 = vmatpush1.bf16.msra.mxu0 0
    %2472 = vmatprep.subr.bf16.mxu0 0
    %2473 = vmatpush1.bf16.msra.mxu0 0
    %2474 = vmatprep.subr.bf16.mxu0 0
    %2475 = vmatpush1.bf16.msra.mxu0 0
    %2476 = vmatprep.mubr.bf16.mxu0 0
    %2477 = vmatmul.mubr.bf16.gmra.mrb[0].mxu0 %v2430
    %v2478 = vpop.f32.mrb[0].mxu0
    %v2479 = vadd.f32 0.0, %v2478
    %v2480 = vpop.f32.mrb[0].mxu0
    %v2481 = vpop.f32.mrb[0].mxu0
    %v2482 = vadd.f32 0.0, %v2481
    %v2483 = vpop.f32.mrb[0].mxu0
    %2484 = vmatprep.mubr.bf16.mxu0 0
    %2485 = vmatmul.mubr.bf16.gmra.mrb[0].mxu0 %v2433
    %v2486 = vpop.f32.mrb[0].mxu0
    %v2487 = vadd.f32 0.0, %v2486
    %v2488 = vpop.f32.mrb[0].mxu0
    %v2489 = vpop.f32.mrb[0].mxu0
    %v2490 = vadd.f32 0.0, %v2489
    %v2491 = vpop.f32.mrb[0].mxu0
    %2492 = vmatprep.mubr.bf16.mxu0 0
    %2493 = vmatmul.mubr.bf16.gmra.mrb[0].mxu0 %v2436
    %v2494 = vpop.f32.mrb[0].mxu0
    %v2495 = vadd.f32 0.0, %v2494
    %v2496 = vpop.f32.mrb[0].mxu0
    %v2497 = vpop.f32.mrb[0].mxu0
    %v2498 = vadd.f32 0.0, %v2497
    %v2499 = vpop.f32.mrb[0].mxu0
    %2500 = vmatprep.mubr.bf16.mxu0 0
    %2501 = vmatmul.mubr.bf16.gmra.mrb[0].mxu0 %v2439
    %v2502 = vpop.f32.mrb[0].mxu0
    %v2503 = vadd.f32 0.0, %v2502
    %v2504 = vpop.f32.mrb[0].mxu0
    %v2505 = vpop.f32.mrb[0].mxu0
    %v2506 = vadd.f32 0.0, %v2505
    %v2507 = vpop.f32.mrb[0].mxu0
    %2508 = vmatprep.mubr.bf16.mxu0 0
    %2509 = vmatmul.mubr.bf16.gmra.mrb[0].mxu0 %v2442
    %v2510 = vpop.f32.mrb[0].mxu0
    %v2511 = vadd.f32 0.0, %v2510
    %v2512 = vpop.f32.mrb[0].mxu0
    %v2513 = vpop.f32.mrb[0].mxu0
    %v2514 = vadd.f32 0.0, %v2513
    %v2515 = vpop.f32.mrb[0].mxu0
    %2516 = vdwg.mxu0
    %v2517 = vadd.f32 %v217, %v2479
    %v2518 = vadd.f32 %v191, %v2482
    %v2519 = vadd.f32 %v193, %v2487
    %v2520 = vadd.f32 %v195, %v2490
    %v2521 = vadd.f32 %v218, %v2495
    %v2522 = vadd.f32 %v219, %v2498
    %v2523 = vadd.f32 %v207, %v2503
    %v2524 = vadd.f32 %v209, %v2506
    %v2525 = vadd.f32 %v211, %v2511
    %v2526 = vadd.f32 %v220, %v2514
    %v2527 = vlaneseq
    %v2528 = vshrl.u32 %v2527, 7
    %v2529 = vsub.s32 2, %v2528
    %v2530 = vrot.slane %v225, %v2529
    %v2531 = vadd.f32 %v2517, %v2530
    %v2532 = vadd.f32 %v2518, %v2530
    %v2533 = vadd.f32 %v2519, %v2530
    %v2534 = vadd.f32 %v2520, %v2530
    %v2535 = vadd.f32 %v2521, %v2530
    %v2536 = vadd.f32 %v2522, %v2530
    %v2537 = vadd.f32 %v2523, %v2530
    %v2538 = vadd.f32 %v2524, %v2530
    %v2539 = vadd.f32 %v2525, %v2530
    %v2540 = vadd.f32 %v2526, %v2530
    %v2541 = vsel %vm226, %v2531, 0.0
    %2542 = vadd.xlane.f32.xlu0 %v2541
    %v2543 = vpop.xlane.xlu0 %2542
    %v2544 = vsel %vm226, %v2532, 0.0
    %2545 = vadd.xlane.f32.xlu0 %v2544
    %v2546 = vpop.xlane.xlu0 %2545
    %v2547 = vsel %vm226, %v2533, 0.0
    %2548 = vadd.xlane.f32.xlu0 %v2547
    %v2549 = vpop.xlane.xlu0 %2548
    %v2550 = vsel %vm226, %v2534, 0.0
    %2551 = vadd.xlane.f32.xlu0 %v2550
    %v2552 = vpop.xlane.xlu0 %2551
    %v2553 = vsel %vm226, %v2535, 0.0
    %2554 = vadd.xlane.f32.xlu0 %v2553
    %v2555 = vpop.xlane.xlu0 %2554
    %v2556 = vsel %vm226, %v2536, 0.0
    %2557 = vadd.xlane.f32.xlu0 %v2556
    %v2558 = vpop.xlane.xlu0 %2557
    %v2559 = vsel %vm226, %v2537, 0.0
    %2560 = vadd.xlane.f32.xlu0 %v2559
    %v2561 = vpop.xlane.xlu0 %2560
    %v2562 = vsel %vm226, %v2538, 0.0
    %2563 = vadd.xlane.f32.xlu0 %v2562
    %v2564 = vpop.xlane.xlu0 %2563
    %v2565 = vsel %vm226, %v2539, 0.0
    %2566 = vadd.xlane.f32.xlu0 %v2565
    %v2567 = vpop.xlane.xlu0 %2566
    %v2568 = vsel %vm226, %v2540, 0.0
    %2569 = vadd.xlane.f32.xlu0 %v2568
    %v2570 = vpop.xlane.xlu0 %2569
    %v2571 = vmul.f32 %v2543, %v257
    %v2572 = vmul.f32 %v2546, %v257
    %v2573 = vmul.f32 %v2549, %v257
    %v2574 = vmul.f32 %v2552, %v257
    %v2575 = vmul.f32 %v2555, %v257
    %v2576 = vmul.f32 %v2558, %v257
    %v2577 = vmul.f32 %v2561, %v257
    %v2578 = vmul.f32 %v2564, %v257
    %v2579 = vmul.f32 %v2567, %v257
    %v2580 = vmul.f32 %v2570, %v257
    %v2581 = vsub.f32 %v2531, %v2571
    %v2582 = vsub.f32 %v2532, %v2572
    %v2583 = vsub.f32 %v2533, %v2573
    %v2584 = vsub.f32 %v2534, %v2574
    %v2585 = vsub.f32 %v2535, %v2575
    %v2586 = vsub.f32 %v2536, %v2576
    %v2587 = vsub.f32 %v2537, %v2577
    %v2588 = vsub.f32 %v2538, %v2578
    %v2589 = vsub.f32 %v2539, %v2579
    %v2590 = vsub.f32 %v2540, %v2580
    %v2591 = vmul.f32 %v2581, %v2581
    %v2592 = vmul.f32 %v2582, %v2582
    %v2593 = vmul.f32 %v2583, %v2583
    %v2594 = vmul.f32 %v2584, %v2584
    %v2595 = vmul.f32 %v2585, %v2585
    %v2596 = vmul.f32 %v2586, %v2586
    %v2597 = vmul.f32 %v2587, %v2587
    %v2598 = vmul.f32 %v2588, %v2588
    %v2599 = vmul.f32 %v2589, %v2589
    %v2600 = vmul.f32 %v2590, %v2590
    %v2601 = vsel %vm226, %v2591, 0.0
    %2602 = vadd.xlane.f32.xlu0 %v2601
    %v2603 = vpop.xlane.xlu0 %2602
    %v2604 = vsel %vm226, %v2592, 0.0
    %2605 = vadd.xlane.f32.xlu0 %v2604
    %v2606 = vpop.xlane.xlu0 %2605
    %v2607 = vsel %vm226, %v2593, 0.0
    %2608 = vadd.xlane.f32.xlu0 %v2607
    %v2609 = vpop.xlane.xlu0 %2608
    %v2610 = vsel %vm226, %v2594, 0.0
    %2611 = vadd.xlane.f32.xlu0 %v2610
    %v2612 = vpop.xlane.xlu0 %2611
    %v2613 = vsel %vm226, %v2595, 0.0
    %2614 = vadd.xlane.f32.xlu0 %v2613
    %v2615 = vpop.xlane.xlu0 %2614
    %v2616 = vsel %vm226, %v2596, 0.0
    %2617 = vadd.xlane.f32.xlu0 %v2616
    %v2618 = vpop.xlane.xlu0 %2617
    %v2619 = vsel %vm226, %v2597, 0.0
    %2620 = vadd.xlane.f32.xlu0 %v2619
    %v2621 = vpop.xlane.xlu0 %2620
    %v2622 = vsel %vm226, %v2598, 0.0
    %2623 = vadd.xlane.f32.xlu0 %v2622
    %v2624 = vpop.xlane.xlu0 %2623
    %v2625 = vsel %vm226, %v2599, 0.0
    %2626 = vadd.xlane.f32.xlu0 %v2625
    %v2627 = vpop.xlane.xlu0 %2626
    %v2628 = vsel %vm226, %v2600, 0.0
    %2629 = vadd.xlane.f32.xlu0 %v2628
    %v2630 = vpop.xlane.xlu0 %2629
    %v2631 = vmul.f32 %v2603, %v257
    %v2632 = vmul.f32 %v2606, %v257
    %v2633 = vmul.f32 %v2609, %v257
    %v2634 = vmul.f32 %v2612, %v257
    %v2635 = vmul.f32 %v2615, %v257
    %v2636 = vmul.f32 %v2618, %v257
    %v2637 = vmul.f32 %v2621, %v257
    %v2638 = vmul.f32 %v2624, %v257
    %v2639 = vmul.f32 %v2627, %v257
    %v2640 = vmul.f32 %v2630, %v257
    %v2641 = vadd.f32 %v2631, 1e-05
    %v2642 = vadd.f32 %v2632, 1e-05
    %v2643 = vadd.f32 %v2633, 1e-05
    %v2644 = vadd.f32 %v2634, 1e-05
    %v2645 = vadd.f32 %v2635, 1e-05
    %v2646 = vadd.f32 %v2636, 1e-05
    %v2647 = vadd.f32 %v2637, 1e-05
    %v2648 = vadd.f32 %v2638, 1e-05
    %v2649 = vadd.f32 %v2639, 1e-05
    %v2650 = vadd.f32 %v2640, 1e-05
    %v2651 = vrsqrt.pop %v2641
    %v2652 = vrsqrt.pop %v2642
    %v2653 = vrsqrt.pop %v2643
    %v2654 = vrsqrt.pop %v2644
    %v2655 = vrsqrt.pop %v2645
    %v2656 = vrsqrt.pop %v2646
    %v2657 = vrsqrt.pop %v2647
    %v2658 = vrsqrt.pop %v2648
    %v2659 = vrsqrt.pop %v2649
    %v2660 = vrsqrt.pop %v2650
    %v2661 = vmul.f32 %v2581, %v2651
    %v2662 = vmul.f32 %v2582, %v2652
    %v2663 = vmul.f32 %v2583, %v2653
    %v2664 = vmul.f32 %v2584, %v2654
    %v2665 = vmul.f32 %v2585, %v2655
    %v2666 = vmul.f32 %v2586, %v2656
    %v2667 = vmul.f32 %v2587, %v2657
    %v2668 = vmul.f32 %v2588, %v2658
    %v2669 = vmul.f32 %v2589, %v2659
    %v2670 = vmul.f32 %v2590, %v2660
    %v2671 = vlaneseq
    %v2672 = vshrl.u32 %v2671, 7
    %v2673 = vsub.s32 3, %v2672
    %v2674 = vrot.slane %v225, %v2673
    %v2675 = vmul.f32 %v2661, %v2674
    %v2676 = vmul.f32 %v2662, %v2674
    %v2677 = vmul.f32 %v2663, %v2674
    %v2678 = vmul.f32 %v2664, %v2674
    %v2679 = vmul.f32 %v2665, %v2674
    %v2680 = vmul.f32 %v2666, %v2674
    %v2681 = vmul.f32 %v2667, %v2674
    %v2682 = vmul.f32 %v2668, %v2674
    %v2683 = vmul.f32 %v2669, %v2674
    %v2684 = vmul.f32 %v2670, %v2674
    %v2685 = vlaneseq
    %v2686 = vshrl.u32 %v2685, 7
    %v2687 = vsub.s32 4, %v2686
    %v2688 = vrot.slane %v225, %v2687
    %v2689 = vadd.f32 %v2675, %v2688
    %v2690 = vadd.f32 %v2676, %v2688
    %v2691 = vadd.f32 %v2677, %v2688
    %v2692 = vadd.f32 %v2678, %v2688
    %v2693 = vadd.f32 %v2679, %v2688
    %v2694 = vadd.f32 %v2680, %v2688
    %v2695 = vadd.f32 %v2681, %v2688
    %v2696 = vadd.f32 %v2682, %v2688
    %v2697 = vadd.f32 %v2683, %v2688
    %v2698 = vadd.f32 %v2684, %v2688
    %v2699 = vpack.c.bf16 %v2690, %v2689
    %v2700 = vpack.c.bf16 %v2692, %v2691
    %v2701 = vpack.c.bf16 %v2694, %v2693
    %v2702 = vpack.c.bf16 %v2696, %v2695
    %v2703 = vpack.c.bf16 %v2698, %v2697
    %v2704 = vld [vmem:[#allocation7] sm:$0xf]
    %v2705 = vld [vmem:[#allocation7 + $0x4] sm:$0xf]
    %v2706 = vld [vmem:[#allocation7 + $0x8] sm:$0xf]
    %v2707 = vld [vmem:[#allocation7 + $0xc] sm:$0xf]
    %v2708 = vlaneseq
    %v2709 = vshrl.u32 %v2708, 7
    %v2710 = vsub.s32 6, %v2709
    %v2711 = vrot.slane %v225, %v2710
    %v2716 = vunpack.c.l.b16 %v2704
    %v2717 = vunpack.c.l.b16 %v2705
    %v2718 = vunpack.c.l.b16 %v2706
    %v2719 = vunpack.c.l.b16 %v2707
    %v2720 = vpack.c.b16 %v2717, %v2716
    %v2721 = vpack.c.b16 %v2719, %v2718
    %v2725 = vsel %vm226, %v2699, 0
    %v2728 = vsel %vm226, %v2700, 0
    %v2731 = vsel %vm226, %v2701, 0
    %v2734 = vsel %vm226, %v2702, 0
    %v2737 = vsel %vm226, %v2703, 0
    %2739 = vmatprep.subr.bf16.mxu0 0
    %2740 = vmatpush1.bf16.msra.mxu0 %v2720
    %2741 = vmatprep.subr.bf16.mxu0 0
    %2742 = vmatpush1.bf16.msra.mxu0 %v2721
    %2743 = vmatprep.subr.bf16.mxu0 0
    %2744 = vmatpush1.bf16.msra.mxu0 0
    %2745 = vmatprep.subr.bf16.mxu0 0
    %2746 = vmatpush1.bf16.msra.mxu0 0
    %2747 = vmatprep.subr.bf16.mxu0 0
    %2748 = vmatpush1.bf16.msra.mxu0 0
    %2749 = vmatprep.subr.bf16.mxu0 0
    %2750 = vmatpush1.bf16.msra.mxu0 0
    %2751 = vmatprep.subr.bf16.mxu0 0
    %2752 = vmatpush1.bf16.msra.mxu0 0
    %2753 = vmatprep.subr.bf16.mxu0 0
    %2754 = vmatpush1.bf16.msra.mxu0 0
    %2755 = vmatprep.subr.bf16.mxu0 0
    %2756 = vmatpush1.bf16.msra.mxu0 0
    %2757 = vmatprep.subr.bf16.mxu0 0
    %2758 = vmatpush1.bf16.msra.mxu0 0
    %2759 = vmatprep.subr.bf16.mxu0 0
    %2760 = vmatpush1.bf16.msra.mxu0 0
    %2761 = vmatprep.subr.bf16.mxu0 0
    %2762 = vmatpush1.bf16.msra.mxu0 0
    %2763 = vmatprep.subr.bf16.mxu0 0
    %2764 = vmatpush1.bf16.msra.mxu0 0
    %2765 = vmatprep.subr.bf16.mxu0 0
    %2766 = vmatpush1.bf16.msra.mxu0 0
    %2767 = vmatprep.subr.bf16.mxu0 0
    %2768 = vmatpush1.bf16.msra.mxu0 0
    %2769 = vmatprep.subr.bf16.mxu0 0
    %2770 = vmatpush1.bf16.msra.mxu0 0
    %2771 = vmatprep.mubr.bf16.mxu0 0
    %2772 = vmatmul.mubr.bf16.gmra.mrb[0].mxu0 %v2725
    %v2773 = vpop.f32.mrb[0].mxu0
    %v2774 = vadd.f32 %v2711, %v2773
    %v2775 = vpop.f32.mrb[0].mxu0
    %v2776 = vpop.f32.mrb[0].mxu0
    %v2777 = vadd.f32 %v2711, %v2776
    %v2778 = vpop.f32.mrb[0].mxu0
    %2779 = vmatprep.mubr.bf16.mxu0 0
    %2780 = vmatmul.mubr.bf16.gmra.mrb[0].mxu0 %v2728
    %v2781 = vpop.f32.mrb[0].mxu0
    %v2782 = vadd.f32 %v2711, %v2781
    %v2783 = vpop.f32.mrb[0].mxu0
    %v2784 = vpop.f32.mrb[0].mxu0
    %v2785 = vadd.f32 %v2711, %v2784
    %v2786 = vpop.f32.mrb[0].mxu0
    %2787 = vmatprep.mubr.bf16.mxu0 0
    %2788 = vmatmul.mubr.bf16.gmra.mrb[0].mxu0 %v2731
    %v2789 = vpop.f32.mrb[0].mxu0
    %v2790 = vadd.f32 %v2711, %v2789
    %v2791 = vpop.f32.mrb[0].mxu0
    %v2792 = vpop.f32.mrb[0].mxu0
    %v2793 = vadd.f32 %v2711, %v2792
    %v2794 = vpop.f32.mrb[0].mxu0
    %2795 = vmatprep.mubr.bf16.mxu0 0
    %2796 = vmatmul.mubr.bf16.gmra.mrb[0].mxu0 %v2734
    %v2797 = vpop.f32.mrb[0].mxu0
    %v2798 = vadd.f32 %v2711, %v2797
    %v2799 = vpop.f32.mrb[0].mxu0
    %v2800 = vpop.f32.mrb[0].mxu0
    %v2801 = vadd.f32 %v2711, %v2800
    %v2802 = vpop.f32.mrb[0].mxu0
    %2803 = vmatprep.mubr.bf16.mxu0 0
    %2804 = vmatmul.mubr.bf16.gmra.mrb[0].mxu0 %v2737
    %v2805 = vpop.f32.mrb[0].mxu0
    %v2806 = vadd.f32 %v2711, %v2805
    %v2807 = vpop.f32.mrb[0].mxu0
    %v2808 = vpop.f32.mrb[0].mxu0
    %v2809 = vadd.f32 %v2711, %v2808
    %v2810 = vpop.f32.mrb[0].mxu0
    %2811 = vdwg.mxu0
    %v2812 = vmul.f32 %v2774, %v2774
    %v2813 = vmul.f32 %v2777, %v2777
    %v2814 = vmul.f32 %v2782, %v2782
    %v2815 = vmul.f32 %v2785, %v2785
    %v2816 = vmul.f32 %v2790, %v2790
    %v2817 = vmul.f32 %v2793, %v2793
    %v2818 = vmul.f32 %v2798, %v2798
    %v2819 = vmul.f32 %v2801, %v2801
    %v2820 = vmul.f32 %v2806, %v2806
    %v2821 = vmul.f32 %v2809, %v2809
    %v2822 = vmul.f32 %v2774, %v2812
    %v2823 = vmul.f32 %v2777, %v2813
    %v2824 = vmul.f32 %v2782, %v2814
    %v2825 = vmul.f32 %v2785, %v2815
    %v2826 = vmul.f32 %v2790, %v2816
    %v2827 = vmul.f32 %v2793, %v2817
    %v2828 = vmul.f32 %v2798, %v2818
    %v2829 = vmul.f32 %v2801, %v2819
    %v2830 = vmul.f32 %v2806, %v2820
    %v2831 = vmul.f32 %v2809, %v2821
    %v2832 = vmul.f32 %v2822, 0.044715
    %v2833 = vmul.f32 %v2823, 0.044715
    %v2834 = vmul.f32 %v2824, 0.044715
    %v2835 = vmul.f32 %v2825, 0.044715
    %v2836 = vmul.f32 %v2826, 0.044715
    %v2837 = vmul.f32 %v2827, 0.044715
    %v2838 = vmul.f32 %v2828, 0.044715
    %v2839 = vmul.f32 %v2829, 0.044715
    %v2840 = vmul.f32 %v2830, 0.044715
    %v2841 = vmul.f32 %v2831, 0.044715
    %v2842 = vadd.f32 %v2774, %v2832
    %v2843 = vadd.f32 %v2777, %v2833
    %v2844 = vadd.f32 %v2782, %v2834
    %v2845 = vadd.f32 %v2785, %v2835
    %v2846 = vadd.f32 %v2790, %v2836
    %v2847 = vadd.f32 %v2793, %v2837
    %v2848 = vadd.f32 %v2798, %v2838
    %v2849 = vadd.f32 %v2801, %v2839
    %v2850 = vadd.f32 %v2806, %v2840
    %v2851 = vadd.f32 %v2809, %v2841
    %v2852 = vmul.f32 %v2842, 0.7978846
    %v2853 = vmul.f32 %v2843, 0.7978846
    %v2854 = vmul.f32 %v2844, 0.7978846
    %v2855 = vmul.f32 %v2845, 0.7978846
    %v2856 = vmul.f32 %v2846, 0.7978846
    %v2857 = vmul.f32 %v2847, 0.7978846
    %v2858 = vmul.f32 %v2848, 0.7978846
    %v2859 = vmul.f32 %v2849, 0.7978846
    %v2860 = vmul.f32 %v2850, 0.7978846
    %v2861 = vmul.f32 %v2851, 0.7978846
    %v2862 = vtanh.pop %v2852
    %v2863 = vtanh.pop %v2853
    %v2864 = vtanh.pop %v2854
    %v2865 = vtanh.pop %v2855
    %v2866 = vtanh.pop %v2856
    %v2867 = vtanh.pop %v2857
    %v2868 = vtanh.pop %v2858
    %v2869 = vtanh.pop %v2859
    %v2870 = vtanh.pop %v2860
    %v2871 = vtanh.pop %v2861
    %v2872 = vadd.f32 %v2862, 1.0
    %v2873 = vadd.f32 %v2863, 1.0
    %v2874 = vadd.f32 %v2864, 1.0
    %v2875 = vadd.f32 %v2865, 1.0
    %v2876 = vadd.f32 %v2866, 1.0
    %v2877 = vadd.f32 %v2867, 1.0
    %v2878 = vadd.f32 %v2868, 1.0
    %v2879 = vadd.f32 %v2869, 1.0
    %v2880 = vadd.f32 %v2870, 1.0
    %v2881 = vadd.f32 %v2871, 1.0
    %v2882 = vmul.f32 %v2872, 0.5
    %v2883 = vmul.f32 %v2873, 0.5
    %v2884 = vmul.f32 %v2874, 0.5
    %v2885 = vmul.f32 %v2875, 0.5
    %v2886 = vmul.f32 %v2876, 0.5
    %v2887 = vmul.f32 %v2877, 0.5
    %v2888 = vmul.f32 %v2878, 0.5
    %v2889 = vmul.f32 %v2879, 0.5
    %v2890 = vmul.f32 %v2880, 0.5
    %v2891 = vmul.f32 %v2881, 0.5
    %v2892 = vmul.f32 %v2774, %v2882
    %v2893 = vmul.f32 %v2777, %v2883
    %v2894 = vmul.f32 %v2782, %v2884
    %v2895 = vmul.f32 %v2785, %v2885
    %v2896 = vmul.f32 %v2790, %v2886
    %v2897 = vmul.f32 %v2793, %v2887
    %v2898 = vmul.f32 %v2798, %v2888
    %v2899 = vmul.f32 %v2801, %v2889
    %v2900 = vmul.f32 %v2806, %v2890
    %v2901 = vmul.f32 %v2809, %v2891
    %v2902 = vpack.c.bf16 %v2893, %v2892
    %v2903 = vpack.c.bf16 %v2895, %v2894
    %v2904 = vpack.c.bf16 %v2897, %v2896
    %v2905 = vpack.c.bf16 %v2899, %v2898
    %v2906 = vpack.c.bf16 %v2901, %v2900
    %v2907 = vld [vmem:[%s8] sm:$0xf]
    %v2908 = vld [vmem:[%s8 + $0x4] sm:$0xf]
    %v2909 = vld [vmem:[%s8 + $0x8] sm:$0xf]
    %v2910 = vld [vmem:[%s8 + $0xc] sm:$0xf]
    %v2911 = vld [vmem:[%s8 + $0x10] sm:$0xf]
    %v2912 = vld [vmem:[%s8 + $0x14] sm:$0xf]
    %v2913 = vld [vmem:[%s8 + $0x18] sm:$0xf]
    %v2914 = vld [vmem:[%s8 + $0x1c] sm:$0xf]
    %v2915 = vld [vmem:[%s8 + $0x20] sm:$0xf]
    %v2916 = vld [vmem:[%s8 + $0x24] sm:$0xf]
    %v2917 = vld [vmem:[%s8 + $0x28] sm:$0xf]
    %v2918 = vld [vmem:[%s8 + $0x2c] sm:$0xf]
    %v2919 = vld [vmem:[%s8 + $0x30] sm:$0xf]
    %v2920 = vld [vmem:[%s8 + $0x34] sm:$0xf]
    %v2921 = vld [vmem:[%s8 + $0x38] sm:$0xf]
    %v2922 = vld [vmem:[%s8 + $0x3c] sm:$0xf]
    %v2923 = vlaneseq
    %v2924 = vshrl.u32 %v2923, 7
    %v2925 = vsub.s32 5, %v2924
    %v2926 = vrot.slane %v225, %v2925
    %v2943 = vunpack.c.l.b16 %v2907
    %v2944 = vunpack.c.l.b16 %v2908
    %v2945 = vunpack.c.l.b16 %v2909
    %v2946 = vunpack.c.l.b16 %v2910
    %v2947 = vunpack.c.l.b16 %v2911
    %v2948 = vunpack.c.l.b16 %v2912
    %v2949 = vunpack.c.l.b16 %v2913
    %v2950 = vunpack.c.l.b16 %v2914
    %v2951 = vunpack.c.l.b16 %v2915
    %v2952 = vunpack.c.l.b16 %v2916
    %v2953 = vunpack.c.l.b16 %v2917
    %v2954 = vunpack.c.l.b16 %v2918
    %v2955 = vunpack.c.l.b16 %v2919
    %v2956 = vunpack.c.l.b16 %v2920
    %v2957 = vunpack.c.l.b16 %v2921
    %v2958 = vunpack.c.l.b16 %v2922
    %v2959 = vpack.c.b16 %v2944, %v2943
    %v2960 = vpack.c.b16 %v2946, %v2945
    %v2961 = vpack.c.b16 %v2948, %v2947
    %v2962 = vpack.c.b16 %v2950, %v2949
    %v2963 = vpack.c.b16 %v2952, %v2951
    %v2964 = vpack.c.b16 %v2954, %v2953
    %v2965 = vpack.c.b16 %v2956, %v2955
    %v2966 = vpack.c.b16 %v2958, %v2957
    %2975 = vmatprep.subr.bf16.mxu0 0
    %2976 = vmatpush1.bf16.msra.mxu0 %v2959
    %2977 = vmatprep.subr.bf16.mxu0 0
    %2978 = vmatpush1.bf16.msra.mxu0 %v2960
    %2979 = vmatprep.subr.bf16.mxu0 0
    %2980 = vmatpush1.bf16.msra.mxu0 %v2961
    %2981 = vmatprep.subr.bf16.mxu0 0
    %2982 = vmatpush1.bf16.msra.mxu0 %v2962
    %2983 = vmatprep.subr.bf16.mxu0 0
    %2984 = vmatpush1.bf16.msra.mxu0 %v2963
    %2985 = vmatprep.subr.bf16.mxu0 0
    %2986 = vmatpush1.bf16.msra.mxu0 %v2964
    %2987 = vmatprep.subr.bf16.mxu0 0
    %2988 = vmatpush1.bf16.msra.mxu0 %v2965
    %2989 = vmatprep.subr.bf16.mxu0 0
    %2990 = vmatpush1.bf16.msra.mxu0 %v2966
    %2991 = vmatprep.subr.bf16.mxu0 0
    %2992 = vmatpush1.bf16.msra.mxu0 0
    %2993 = vmatprep.subr.bf16.mxu0 0
    %2994 = vmatpush1.bf16.msra.mxu0 0
    %2995 = vmatprep.subr.bf16.mxu0 0
    %2996 = vmatpush1.bf16.msra.mxu0 0
    %2997 = vmatprep.subr.bf16.mxu0 0
    %2998 = vmatpush1.bf16.msra.mxu0 0
    %2999 = vmatprep.subr.bf16.mxu0 0
    %3000 = vmatpush1.bf16.msra.mxu0 0
    %3001 = vmatprep.subr.bf16.mxu0 0
    %3002 = vmatpush1.bf16.msra.mxu0 0
    %3003 = vmatprep.subr.bf16.mxu0 0
    %3004 = vmatpush1.bf16.msra.mxu0 0
    %3005 = vmatprep.subr.bf16.mxu0 0
    %3006 = vmatpush1.bf16.msra.mxu0 0
    %3007 = vmatprep.mubr.bf16.mxu0 0
    %3008 = vmatmul.mubr.bf16.gmra.mrb[0].mxu0 %v2902
    %v3009 = vpop.f32.mrb[0].mxu0
    %v3010 = vadd.f32 %v2926, %v3009
    %v3011 = vpop.f32.mrb[0].mxu0
    %v3012 = vpop.f32.mrb[0].mxu0
    %v3013 = vadd.f32 %v2926, %v3012
    %v3014 = vpop.f32.mrb[0].mxu0
    %3015 = vmatprep.mubr.bf16.mxu0 0
    %3016 = vmatmul.mubr.bf16.gmra.mrb[0].mxu0 %v2903
    %v3017 = vpop.f32.mrb[0].mxu0
    %v3018 = vadd.f32 %v2926, %v3017
    %v3019 = vpop.f32.mrb[0].mxu0
    %v3020 = vpop.f32.mrb[0].mxu0
    %v3021 = vadd.f32 %v2926, %v3020
    %v3022 = vpop.f32.mrb[0].mxu0
    %3023 = vmatprep.mubr.bf16.mxu0 0
    %3024 = vmatmul.mubr.bf16.gmra.mrb[0].mxu0 %v2904
    %v3025 = vpop.f32.mrb[0].mxu0
    %v3026 = vadd.f32 %v2926, %v3025
    %v3027 = vpop.f32.mrb[0].mxu0
    %v3028 = vpop.f32.mrb[0].mxu0
    %v3029 = vadd.f32 %v2926, %v3028
    %v3030 = vpop.f32.mrb[0].mxu0
    %3031 = vmatprep.mubr.bf16.mxu0 0
    %3032 = vmatmul.mubr.bf16.gmra.mrb[0].mxu0 %v2905
    %v3033 = vpop.f32.mrb[0].mxu0
    %v3034 = vadd.f32 %v2926, %v3033
    %v3035 = vpop.f32.mrb[0].mxu0
    %v3036 = vpop.f32.mrb[0].mxu0
    %v3037 = vadd.f32 %v2926, %v3036
    %v3038 = vpop.f32.mrb[0].mxu0
    %3039 = vmatprep.mubr.bf16.mxu0 0
    %3040 = vmatmul.mubr.bf16.gmra.mrb[0].mxu0 %v2906
    %v3041 = vpop.f32.mrb[0].mxu0
    %v3042 = vadd.f32 %v2926, %v3041
    %v3043 = vpop.f32.mrb[0].mxu0
    %v3044 = vpop.f32.mrb[0].mxu0
    %v3045 = vadd.f32 %v2926, %v3044
    %v3046 = vpop.f32.mrb[0].mxu0
    %3047 = vdwg.mxu0
    %v3048 = vadd.f32 %v2531, %v3010
    %v3049 = vadd.f32 %v2532, %v3013
    %v3050 = vadd.f32 %v2533, %v3018
    %v3051 = vadd.f32 %v2534, %v3021
    %v3052 = vadd.f32 %v2535, %v3026
    %v3053 = vadd.f32 %v2536, %v3029
    %v3054 = vadd.f32 %v2537, %v3034
    %v3055 = vadd.f32 %v2538, %v3037
    %v3056 = vadd.f32 %v2539, %v3042
    %v3057 = vadd.f32 %v2540, %v3045
    %s3058 = scalar_lea.vmem [#allocation5], 8
    %v3059 = vld [vmem:[%s3058] sm:$0xff]
    %v3060 = vsel %vm226, %v3048, 0.0
    %3061 = vadd.xlane.f32.xlu0 %v3060
    %v3062 = vpop.xlane.xlu0 %3061
    %v3063 = vsel %vm226, %v3049, 0.0
    %3064 = vadd.xlane.f32.xlu0 %v3063
    %v3065 = vpop.xlane.xlu0 %3064
    %v3066 = vsel %vm226, %v3050, 0.0
    %3067 = vadd.xlane.f32.xlu0 %v3066
    %v3068 = vpop.xlane.xlu0 %3067
    %v3069 = vsel %vm226, %v3051, 0.0
    %3070 = vadd.xlane.f32.xlu0 %v3069
    %v3071 = vpop.xlane.xlu0 %3070
    %v3072 = vsel %vm226, %v3052, 0.0
    %3073 = vadd.xlane.f32.xlu0 %v3072
    %v3074 = vpop.xlane.xlu0 %3073
    %v3075 = vsel %vm226, %v3053, 0.0
    %3076 = vadd.xlane.f32.xlu0 %v3075
    %v3077 = vpop.xlane.xlu0 %3076
    %v3078 = vsel %vm226, %v3054, 0.0
    %3079 = vadd.xlane.f32.xlu0 %v3078
    %v3080 = vpop.xlane.xlu0 %3079
    %v3081 = vsel %vm226, %v3055, 0.0
    %3082 = vadd.xlane.f32.xlu0 %v3081
    %v3083 = vpop.xlane.xlu0 %3082
    %v3084 = vsel %vm226, %v3056, 0.0
    %3085 = vadd.xlane.f32.xlu0 %v3084
    %v3086 = vpop.xlane.xlu0 %3085
    %v3087 = vsel %vm226, %v3057, 0.0
    %3088 = vadd.xlane.f32.xlu0 %v3087
    %v3089 = vpop.xlane.xlu0 %3088
    %v3090 = vmul.f32 %v3062, %v257
    %v3091 = vmul.f32 %v3065, %v257
    %v3092 = vmul.f32 %v3068, %v257
    %v3093 = vmul.f32 %v3071, %v257
    %v3094 = vmul.f32 %v3074, %v257
    %v3095 = vmul.f32 %v3077, %v257
    %v3096 = vmul.f32 %v3080, %v257
    %v3097 = vmul.f32 %v3083, %v257
    %v3098 = vmul.f32 %v3086, %v257
    %v3099 = vmul.f32 %v3089, %v257
    %v3100 = vsub.f32 %v3048, %v3090
    %v3101 = vsub.f32 %v3049, %v3091
    %v3102 = vsub.f32 %v3050, %v3092
    %v3103 = vsub.f32 %v3051, %v3093
    %v3104 = vsub.f32 %v3052, %v3094
    %v3105 = vsub.f32 %v3053, %v3095
    %v3106 = vsub.f32 %v3054, %v3096
    %v3107 = vsub.f32 %v3055, %v3097
    %v3108 = vsub.f32 %v3056, %v3098
    %v3109 = vsub.f32 %v3057, %v3099
    %v3110 = vmul.f32 %v3100, %v3100
    %v3111 = vmul.f32 %v3101, %v3101
    %v3112 = vmul.f32 %v3102, %v3102
    %v3113 = vmul.f32 %v3103, %v3103
    %v3114 = vmul.f32 %v3104, %v3104
    %v3115 = vmul.f32 %v3105, %v3105
    %v3116 = vmul.f32 %v3106, %v3106
    %v3117 = vmul.f32 %v3107, %v3107
    %v3118 = vmul.f32 %v3108, %v3108
    %v3119 = vmul.f32 %v3109, %v3109
    %v3120 = vsel %vm226, %v3110, 0.0
    %3121 = vadd.xlane.f32.xlu0 %v3120
    %v3122 = vpop.xlane.xlu0 %3121
    %v3123 = vsel %vm226, %v3111, 0.0
    %3124 = vadd.xlane.f32.xlu0 %v3123
    %v3125 = vpop.xlane.xlu0 %3124
    %v3126 = vsel %vm226, %v3112, 0.0
    %3127 = vadd.xlane.f32.xlu0 %v3126
    %v3128 = vpop.xlane.xlu0 %3127
    %v3129 = vsel %vm226, %v3113, 0.0
    %3130 = vadd.xlane.f32.xlu0 %v3129
    %v3131 = vpop.xlane.xlu0 %3130
    %v3132 = vsel %vm226, %v3114, 0.0
    %3133 = vadd.xlane.f32.xlu0 %v3132
    %v3134 = vpop.xlane.xlu0 %3133
    %v3135 = vsel %vm226, %v3115, 0.0
    %3136 = vadd.xlane.f32.xlu0 %v3135
    %v3137 = vpop.xlane.xlu0 %3136
    %v3138 = vsel %vm226, %v3116, 0.0
    %3139 = vadd.xlane.f32.xlu0 %v3138
    %v3140 = vpop.xlane.xlu0 %3139
    %v3141 = vsel %vm226, %v3117, 0.0
    %3142 = vadd.xlane.f32.xlu0 %v3141
    %v3143 = vpop.xlane.xlu0 %3142
    %v3144 = vsel %vm226, %v3118, 0.0
    %3145 = vadd.xlane.f32.xlu0 %v3144
    %v3146 = vpop.xlane.xlu0 %3145
    %v3147 = vsel %vm226, %v3119, 0.0
    %3148 = vadd.xlane.f32.xlu0 %v3147
    %v3149 = vpop.xlane.xlu0 %3148
    %v3150 = vmul.f32 %v3122, %v257
    %v3151 = vmul.f32 %v3125, %v257
    %v3152 = vmul.f32 %v3128, %v257
    %v3153 = vmul.f32 %v3131, %v257
    %v3154 = vmul.f32 %v3134, %v257
    %v3155 = vmul.f32 %v3137, %v257
    %v3156 = vmul.f32 %v3140, %v257
    %v3157 = vmul.f32 %v3143, %v257
    %v3158 = vmul.f32 %v3146, %v257
    %v3159 = vmul.f32 %v3149, %v257
    %v3160 = vadd.f32 %v3150, 1e-05
    %v3161 = vadd.f32 %v3151, 1e-05
    %v3162 = vadd.f32 %v3152, 1e-05
    %v3163 = vadd.f32 %v3153, 1e-05
    %v3164 = vadd.f32 %v3154, 1e-05
    %v3165 = vadd.f32 %v3155, 1e-05
    %v3166 = vadd.f32 %v3156, 1e-05
    %v3167 = vadd.f32 %v3157, 1e-05
    %v3168 = vadd.f32 %v3158, 1e-05
    %v3169 = vadd.f32 %v3159, 1e-05
    %v3170 = vrsqrt.pop %v3160
    %v3171 = vrsqrt.pop %v3161
    %v3172 = vrsqrt.pop %v3162
    %v3173 = vrsqrt.pop %v3163
    %v3174 = vrsqrt.pop %v3164
    %v3175 = vrsqrt.pop %v3165
    %v3176 = vrsqrt.pop %v3166
    %v3177 = vrsqrt.pop %v3167
    %v3178 = vrsqrt.pop %v3168
    %v3179 = vrsqrt.pop %v3169
    %v3180 = vmul.f32 %v3100, %v3170
    %v3181 = vmul.f32 %v3101, %v3171
    %v3182 = vmul.f32 %v3102, %v3172
    %v3183 = vmul.f32 %v3103, %v3173
    %v3184 = vmul.f32 %v3104, %v3174
    %v3185 = vmul.f32 %v3105, %v3175
    %v3186 = vmul.f32 %v3106, %v3176
    %v3187 = vmul.f32 %v3107, %v3177
    %v3188 = vmul.f32 %v3108, %v3178
    %v3189 = vmul.f32 %v3109, %v3179
    %v3190 = vlaneseq
    %v3191 = vshrl.u32 %v3190, 7
    %v3192 = vsub.s32 0, %v3191
    %v3193 = vrot.slane %v3059, %v3192
    %v3194 = vmul.f32 %v3180, %v3193
    %v3195 = vmul.f32 %v3181, %v3193
    %v3196 = vmul.f32 %v3182, %v3193
    %v3197 = vmul.f32 %v3183, %v3193
    %v3198 = vmul.f32 %v3184, %v3193
    %v3199 = vmul.f32 %v3185, %v3193
    %v3200 = vmul.f32 %v3186, %v3193
    %v3201 = vmul.f32 %v3187, %v3193
    %v3202 = vmul.f32 %v3188, %v3193
    %v3203 = vmul.f32 %v3189, %v3193
    %v3204 = vlaneseq
    %v3205 = vshrl.u32 %v3204, 7
    %v3206 = vsub.s32 1, %v3205
    %v3207 = vrot.slane %v3059, %v3206
    %v3208 = vadd.f32 %v3194, %v3207
    %v3209 = vadd.f32 %v3195, %v3207
    %v3210 = vadd.f32 %v3196, %v3207
    %v3211 = vadd.f32 %v3197, %v3207
    %v3212 = vadd.f32 %v3198, %v3207
    %v3213 = vadd.f32 %v3199, %v3207
    %v3214 = vadd.f32 %v3200, %v3207
    %v3215 = vadd.f32 %v3201, %v3207
    %v3216 = vadd.f32 %v3202, %v3207
    %v3217 = vadd.f32 %v3203, %v3207
    %v3218 = vpack.c.bf16 %v3209, %v3208
    %v3219 = vpack.c.bf16 %v3211, %v3210
    %v3220 = vpack.c.bf16 %v3213, %v3212
    %v3221 = vpack.c.bf16 %v3215, %v3214
    %v3222 = vpack.c.bf16 %v3217, %v3216
    %s3223 = scalar_lea.vmem %s5, 16
    %v3224 = vld [vmem:[%s3223] sm:$0xf]
    %v3225 = vld [vmem:[%s3223 + $0x4] sm:$0xf]
    %v3226 = vld [vmem:[%s3223 + $0x8] sm:$0xf]
    %v3227 = vld [vmem:[%s3223 + $0xc] sm:$0xf]
    %v3232 = vunpack.c.l.b16 %v3224
    %v3233 = vunpack.c.l.b16 %v3225
    %v3234 = vunpack.c.l.b16 %v3226
    %v3235 = vunpack.c.l.b16 %v3227
    %v3236 = vpack.c.b16 %v3233, %v3232
    %v3237 = vpack.c.b16 %v3235, %v3234
    %v3241 = vsel %vm226, %v3218, 0
    %v3244 = vsel %vm226, %v3219, 0
    %v3247 = vsel %vm226, %v3220, 0
    %v3250 = vsel %vm226, %v3221, 0
    %v3253 = vsel %vm226, %v3222, 0
    %3255 = vmatprep.subr.bf16.mxu0 0
    %3256 = vmatpush1.bf16.msra.mxu0 %v3236
    %3257 = vmatprep.subr.bf16.mxu0 0
    %3258 = vmatpush1.bf16.msra.mxu0 %v3237
    %3259 = vmatprep.subr.bf16.mxu0 0
    %3260 = vmatpush1.bf16.msra.mxu0 0
    %3261 = vmatprep.subr.bf16.mxu0 0
    %3262 = vmatpush1.bf16.msra.mxu0 0
    %3263 = vmatprep.subr.bf16.mxu0 0
    %3264 = vmatpush1.bf16.msra.mxu0 0
    %3265 = vmatprep.subr.bf16.mxu0 0
    %3266 = vmatpush1.bf16.msra.mxu0 0
    %3267 = vmatprep.subr.bf16.mxu0 0
    %3268 = vmatpush1.bf16.msra.mxu0 0
    %3269 = vmatprep.subr.bf16.mxu0 0
    %3270 = vmatpush1.bf16.msra.mxu0 0
    %3271 = vmatprep.subr.bf16.mxu0 0
    %3272 = vmatpush1.bf16.msra.mxu0 0
    %3273 = vmatprep.subr.bf16.mxu0 0
    %3274 = vmatpush1.bf16.msra.mxu0 0
    %3275 = vmatprep.subr.bf16.mxu0 0
    %3276 = vmatpush1.bf16.msra.mxu0 0
    %3277 = vmatprep.subr.bf16.mxu0 0
    %3278 = vmatpush1.bf16.msra.mxu0 0
    %3279 = vmatprep.subr.bf16.mxu0 0
    %3280 = vmatpush1.bf16.msra.mxu0 0
    %3281 = vmatprep.subr.bf16.mxu0 0
    %3282 = vmatpush1.bf16.msra.mxu0 0
    %3283 = vmatprep.subr.bf16.mxu0 0
    %3284 = vmatpush1.bf16.msra.mxu0 0
    %3285 = vmatprep.subr.bf16.mxu0 0
    %3286 = vmatpush1.bf16.msra.mxu0 0
    %3287 = vmatprep.mubr.bf16.mxu0 0
    %3288 = vmatmul.mubr.bf16.gmra.mrb[0].mxu0 %v3241
    %v3289 = vpop.f32.mrb[0].mxu0
    %v3290 = vadd.f32 0.0, %v3289
    %v3291 = vpop.f32.mrb[0].mxu0
    %v3292 = vpop.f32.mrb[0].mxu0
    %v3293 = vadd.f32 0.0, %v3292
    %v3294 = vpop.f32.mrb[0].mxu0
    %3295 = vmatprep.mubr.bf16.mxu0 0
    %3296 = vmatmul.mubr.bf16.gmra.mrb[0].mxu0 %v3244
    %v3297 = vpop.f32.mrb[0].mxu0
    %v3298 = vadd.f32 0.0, %v3297
    %v3299 = vpop.f32.mrb[0].mxu0
    %v3300 = vpop.f32.mrb[0].mxu0
    %v3301 = vadd.f32 0.0, %v3300
    %v3302 = vpop.f32.mrb[0].mxu0
    %3303 = vmatprep.mubr.bf16.mxu0 0
    %3304 = vmatmul.mubr.bf16.gmra.mrb[0].mxu0 %v3247
    %v3305 = vpop.f32.mrb[0].mxu0
    %v3306 = vadd.f32 0.0, %v3305
    %v3307 = vpop.f32.mrb[0].mxu0
    %v3308 = vpop.f32.mrb[0].mxu0
    %v3309 = vadd.f32 0.0, %v3308
    %v3310 = vpop.f32.mrb[0].mxu0
    %3311 = vmatprep.mubr.bf16.mxu0 0
    %3312 = vmatmul.mubr.bf16.gmra.mrb[0].mxu0 %v3250
    %v3313 = vpop.f32.mrb[0].mxu0
    %v3314 = vadd.f32 0.0, %v3313
    %v3315 = vpop.f32.mrb[0].mxu0
    %v3316 = vpop.f32.mrb[0].mxu0
    %v3317 = vadd.f32 0.0, %v3316
    %v3318 = vpop.f32.mrb[0].mxu0
    %3319 = vmatprep.mubr.bf16.mxu0 0
    %3320 = vmatmul.mubr.bf16.gmra.mrb[0].mxu0 %v3253
    %v3321 = vpop.f32.mrb[0].mxu0
    %v3322 = vadd.f32 0.0, %v3321
    %v3323 = vpop.f32.mrb[0].mxu0
    %v3324 = vpop.f32.mrb[0].mxu0
    %v3325 = vadd.f32 0.0, %v3324
    %v3326 = vpop.f32.mrb[0].mxu0
    %3327 = vdwg.mxu0
    %v3328 = vpack.c.bf16 %v3293, %v3290
    %v3329 = vpack.c.bf16 %v3301, %v3298
    %v3330 = vpack.c.bf16 %v3306, %v3306
    %3334 = vrot.lane.b32.xlu0 %v3328, 96
    %v3335 = vpop.permute.xlu0 %3334
    %3336 = vrot.lane.b32.xlu0 %v3329, 96
    %v3337 = vpop.permute.xlu0 %3336
    %3338 = vrot.lane.b32.xlu0 %v3330, 96
    %v3339 = vpop.permute.xlu0 %3338
    %v3341 = vsel %vm90, %v3328, 0
    %v3344 = vsel %vm90, %v3329, 0
    %v3347 = vsel %vm90, %v3330, 0
    %v3350 = vsel %vm90, %v3335, 0
    %v3353 = vsel %vm90, %v3337, 0
    %v3356 = vsel %vm90, %v3339, 0
    %3358 = vmatprep.subr.bf16.mxu0 0
    %3359 = vmatpush1.bf16.xpose.msra.mxu0 %v3350
    %3360 = vmatprep.subr.bf16.mxu0 0
    %3361 = vmatpush1.bf16.xpose.msra.mxu0 %v3353
    %3362 = vmatprep.subr.bf16.mxu0 0
    %3363 = vmatpush1.bf16.xpose.msra.mxu0 %v3356
    %3364 = vmatprep.subr.bf16.mxu0 0
    %3365 = vmatpush1.bf16.xpose.msra.mxu0 0
    %3366 = vmatprep.subr.bf16.mxu0 0
    %3367 = vmatpush1.bf16.xpose.msra.mxu0 0
    %3368 = vmatprep.subr.bf16.mxu0 0
    %3369 = vmatpush1.bf16.xpose.msra.mxu0 0
    %3370 = vmatprep.subr.bf16.mxu0 0
    %3371 = vmatpush1.bf16.xpose.msra.mxu0 0
    %3372 = vmatprep.subr.bf16.mxu0 0
    %3373 = vmatpush1.bf16.xpose.msra.mxu0 0
    %3374 = vmatprep.subr.bf16.mxu0 0
    %3375 = vmatpush1.bf16.xpose.msra.mxu0 0
    %3376 = vmatprep.subr.bf16.mxu0 0
    %3377 = vmatpush1.bf16.xpose.msra.mxu0 0
    %3378 = vmatprep.subr.bf16.mxu0 0
    %3379 = vmatpush1.bf16.xpose.msra.mxu0 0
    %3380 = vmatprep.subr.bf16.mxu0 0
    %3381 = vmatpush1.bf16.xpose.msra.mxu0 0
    %3382 = vmatprep.subr.bf16.mxu0 0
    %3383 = vmatpush1.bf16.xpose.msra.mxu0 0
    %3384 = vmatprep.subr.bf16.mxu0 0
    %3385 = vmatpush1.bf16.xpose.msra.mxu0 0
    %3386 = vmatprep.subr.bf16.mxu0 0
    %3387 = vmatpush1.bf16.xpose.msra.mxu0 0
    %3388 = vmatprep.subr.bf16.mxu0 0
    %3389 = vmatpush1.bf16.xpose.msra.mxu0 0
    %3390 = vmatprep.mubr.bf16.mxu0 0
    %3391 = vmatmul.mubr.bf16.gmra.mrb[0].mxu0 %v3341
    %v3392 = vpop.f32.mrb[0].mxu0
    %v3393 = vadd.f32 %v224, %v3392
    %v3394 = vpop.f32.mrb[0].mxu0
    %v3395 = vpop.f32.mrb[0].mxu0
    %v3396 = vadd.f32 %v224, %v3395
    %v3397 = vpop.f32.mrb[0].mxu0
    %3398 = vmatprep.mubr.bf16.mxu0 0
    %3399 = vmatmul.mubr.bf16.gmra.mrb[0].mxu0 %v3344
    %v3400 = vpop.f32.mrb[0].mxu0
    %v3401 = vadd.f32 %v224, %v3400
    %v3402 = vpop.f32.mrb[0].mxu0
    %v3403 = vpop.f32.mrb[0].mxu0
    %v3404 = vadd.f32 %v224, %v3403
    %v3405 = vpop.f32.mrb[0].mxu0
    %3406 = vmatprep.mubr.bf16.mxu0 0
    %3407 = vmatmul.mubr.bf16.gmra.mrb[0].mxu0 %v3347
    %v3408 = vpop.f32.mrb[0].mxu0
    %v3409 = vadd.f32 %v224, %v3408
    %v3410 = vpop.f32.mrb[0].mxu0
    %v3411 = vpop.f32.mrb[0].mxu0
    %v3412 = vpop.f32.mrb[0].mxu0
    %3413 = vdwg.mxu0
    %v3414 = vsel %vm581, %v3393, -inf
    %3415 = vmax.xlane.f32.xlu0 %v3414
    %v3416 = vpop.xlane.xlu0 %3415
    %v3417 = vsel %vm581, %v3396, -inf
    %3418 = vmax.xlane.f32.xlu0 %v3417
    %v3419 = vpop.xlane.xlu0 %3418
    %v3420 = vsel %vm581, %v3401, -inf
    %3421 = vmax.xlane.f32.xlu0 %v3420
    %v3422 = vpop.xlane.xlu0 %3421
    %v3423 = vsel %vm581, %v3404, -inf
    %3424 = vmax.xlane.f32.xlu0 %v3423
    %v3425 = vpop.xlane.xlu0 %3424
    %v3426 = vsel %vm581, %v3409, -inf
    %3427 = vmax.xlane.f32.xlu0 %v3426
    %v3428 = vpop.xlane.xlu0 %3427
    %v3429 = vsub.f32 %v3393, %v3416
    %v3430 = vsub.f32 %v3396, %v3419
    %v3431 = vsub.f32 %v3401, %v3422
    %v3432 = vsub.f32 %v3404, %v3425
    %v3433 = vsub.f32 %v3409, %v3428
    %v3434 = vmul.f32 %v3429, 1.442695
    %v3435 = vpow.pop %v3434
    %v3436 = vmul.f32 %v3430, 1.442695
    %v3437 = vpow.pop %v3436
    %v3438 = vmul.f32 %v3431, 1.442695
    %v3439 = vpow.pop %v3438
    %v3440 = vmul.f32 %v3432, 1.442695
    %v3441 = vpow.pop %v3440
    %v3442 = vmul.f32 %v3433, 1.442695
    %v3443 = vpow.pop %v3442
    %v3444 = vsel %vm581, %v3435, 0.0
    %3445 = vadd.xlane.f32.xlu0 %v3444
    %v3446 = vpop.xlane.xlu0 %3445
    %v3447 = vsel %vm581, %v3437, 0.0
    %3448 = vadd.xlane.f32.xlu0 %v3447
    %v3449 = vpop.xlane.xlu0 %3448
    %v3450 = vsel %vm581, %v3439, 0.0
    %3451 = vadd.xlane.f32.xlu0 %v3450
    %v3452 = vpop.xlane.xlu0 %3451
    %v3453 = vsel %vm581, %v3441, 0.0
    %3454 = vadd.xlane.f32.xlu0 %v3453
    %v3455 = vpop.xlane.xlu0 %3454
    %v3456 = vsel %vm581, %v3443, 0.0
    %3457 = vadd.xlane.f32.xlu0 %v3456
    %v3458 = vpop.xlane.xlu0 %3457
    %v3459 = vrcp.pop %v3446
    %v3460 = vrcp.pop %v3449
    %v3461 = vrcp.pop %v3452
    %v3462 = vrcp.pop %v3455
    %v3463 = vrcp.pop %v3458
    %v3464 = vmul.f32 %v3435, %v3459
    %v3465 = vmul.f32 %v3437, %v3460
    %v3466 = vmul.f32 %v3439, %v3461
    %v3467 = vmul.f32 %v3441, %v3462
    %v3468 = vmul.f32 %v3443, %v3463
    %v3469 = vpack.c.bf16 %v3465, %v3464
    %v3470 = vpack.c.bf16 %v3467, %v3466
    %v3471 = vpack.c.bf16 %v3468, %v3468
    %3472 = vrot.lane.b32.xlu0 %v3328, 64
    %v3473 = vpop.permute.xlu0 %3472
    %3474 = vrot.lane.b32.xlu0 %v3329, 64
    %v3475 = vpop.permute.xlu0 %3474
    %3476 = vrot.lane.b32.xlu0 %v3330, 64
    %v3477 = vpop.permute.xlu0 %3476
    %v3481 = vsel %vm581, %v3469, 0
    %v3484 = vsel %vm581, %v3470, 0
    %v3487 = vsel %vm581, %v3471, 0
    %v3490 = vsel %vm103, %v3477, 0
    %3492 = vmatprep.subr.bf16.mxu0 0
    %3493 = vmatpush1.bf16.msra.mxu0 %v3473
    %3494 = vmatprep.subr.bf16.mxu0 0
    %3495 = vmatpush1.bf16.msra.mxu0 %v3475
    %3496 = vmatprep.subr.bf16.mxu0 0
    %3497 = vmatpush1.bf16.msra.mxu0 %v3490
    %3498 = vmatprep.subr.bf16.mxu0 0
    %3499 = vmatpush1.bf16.msra.mxu0 0
    %3500 = vmatprep.subr.bf16.mxu0 0
    %3501 = vmatpush1.bf16.msra.mxu0 0
    %3502 = vmatprep.subr.bf16.mxu0 0
    %3503 = vmatpush1.bf16.msra.mxu0 0
    %3504 = vmatprep.subr.bf16.mxu0 0
    %3505 = vmatpush1.bf16.msra.mxu0 0
    %3506 = vmatprep.subr.bf16.mxu0 0
    %3507 = vmatpush1.bf16.msra.mxu0 0
    %3508 = vmatprep.subr.bf16.mxu0 0
    %3509 = vmatpush1.bf16.msra.mxu0 0
    %3510 = vmatprep.subr.bf16.mxu0 0
    %3511 = vmatpush1.bf16.msra.mxu0 0
    %3512 = vmatprep.subr.bf16.mxu0 0
    %3513 = vmatpush1.bf16.msra.mxu0 0
    %3514 = vmatprep.subr.bf16.mxu0 0
    %3515 = vmatpush1.bf16.msra.mxu0 0
    %3516 = vmatprep.subr.bf16.mxu0 0
    %3517 = vmatpush1.bf16.msra.mxu0 0
    %3518 = vmatprep.subr.bf16.mxu0 0
    %3519 = vmatpush1.bf16.msra.mxu0 0
    %3520 = vmatprep.subr.bf16.mxu0 0
    %3521 = vmatpush1.bf16.msra.mxu0 0
    %3522 = vmatprep.subr.bf16.mxu0 0
    %3523 = vmatpush1.bf16.msra.mxu0 0
    %3524 = vmatprep.mubr.bf16.mxu0 0
    %3525 = vmatmul.mubr.bf16.gmra.mrb[0].mxu0 %v3481
    %v3526 = vpop.f32.mrb[0].mxu0
    %v3527 = vadd.f32 0.0, %v3526
    %v3528 = vpop.f32.mrb[0].mxu0
    %v3529 = vpop.f32.mrb[0].mxu0
    %v3530 = vadd.f32 0.0, %v3529
    %v3531 = vpop.f32.mrb[0].mxu0
    %3532 = vmatprep.mubr.bf16.mxu0 0
    %3533 = vmatmul.mubr.bf16.gmra.mrb[0].mxu0 %v3484
    %v3534 = vpop.f32.mrb[0].mxu0
    %v3535 = vadd.f32 0.0, %v3534
    %v3536 = vpop.f32.mrb[0].mxu0
    %v3537 = vpop.f32.mrb[0].mxu0
    %v3538 = vadd.f32 0.0, %v3537
    %v3539 = vpop.f32.mrb[0].mxu0
    %3540 = vmatprep.mubr.bf16.mxu0 0
    %3541 = vmatmul.mubr.bf16.gmra.mrb[0].mxu0 %v3487
    %v3542 = vpop.f32.mrb[0].mxu0
    %v3543 = vadd.f32 0.0, %v3542
    %v3544 = vpop.f32.mrb[0].mxu0
    %v3545 = vpop.f32.mrb[0].mxu0
    %v3546 = vpop.f32.mrb[0].mxu0
    %3547 = vdwg.mxu0
    %3548 = vrot.lane.b32.xlu0 %v3328, 120
    %v3549 = vpop.permute.xlu0 %3548
    %3550 = vrot.lane.b32.xlu0 %v3329, 120
    %v3551 = vpop.permute.xlu0 %3550
    %3552 = vrot.lane.b32.xlu0 %v3330, 120
    %v3553 = vpop.permute.xlu0 %3552
    %3554 = vrot.lane.b32.xlu0 %v3328, 88
    %v3555 = vpop.permute.xlu0 %3554
    %3556 = vrot.lane.b32.xlu0 %v3329, 88
    %v3557 = vpop.permute.xlu0 %3556
    %3558 = vrot.lane.b32.xlu0 %v3330, 88
    %v3559 = vpop.permute.xlu0 %3558
    %v3561 = vsel %vm90, %v3549, 0
    %v3564 = vsel %vm90, %v3551, 0
    %v3567 = vsel %vm90, %v3553, 0
    %v3570 = vsel %vm90, %v3555, 0
    %v3573 = vsel %vm90, %v3557, 0
    %v3576 = vsel %vm90, %v3559, 0
    %3578 = vmatprep.subr.bf16.mxu0 0
    %3579 = vmatpush1.bf16.xpose.msra.mxu0 %v3570
    %3580 = vmatprep.subr.bf16.mxu0 0
    %3581 = vmatpush1.bf16.xpose.msra.mxu0 %v3573
    %3582 = vmatprep.subr.bf16.mxu0 0
    %3583 = vmatpush1.bf16.xpose.msra.mxu0 %v3576
    %3584 = vmatprep.subr.bf16.mxu0 0
    %3585 = vmatpush1.bf16.xpose.msra.mxu0 0
    %3586 = vmatprep.subr.bf16.mxu0 0
    %3587 = vmatpush1.bf16.xpose.msra.mxu0 0
    %3588 = vmatprep.subr.bf16.mxu0 0
    %3589 = vmatpush1.bf16.xpose.msra.mxu0 0
    %3590 = vmatprep.subr.bf16.mxu0 0
    %3591 = vmatpush1.bf16.xpose.msra.mxu0 0
    %3592 = vmatprep.subr.bf16.mxu0 0
    %3593 = vmatpush1.bf16.xpose.msra.mxu0 0
    %3594 = vmatprep.subr.bf16.mxu0 0
    %3595 = vmatpush1.bf16.xpose.msra.mxu0 0
    %3596 = vmatprep.subr.bf16.mxu0 0
    %3597 = vmatpush1.bf16.xpose.msra.mxu0 0
    %3598 = vmatprep.subr.bf16.mxu0 0
    %3599 = vmatpush1.bf16.xpose.msra.mxu0 0
    %3600 = vmatprep.subr.bf16.mxu0 0
    %3601 = vmatpush1.bf16.xpose.msra.mxu0 0
    %3602 = vmatprep.subr.bf16.mxu0 0
    %3603 = vmatpush1.bf16.xpose.msra.mxu0 0
    %3604 = vmatprep.subr.bf16.mxu0 0
    %3605 = vmatpush1.bf16.xpose.msra.mxu0 0
    %3606 = vmatprep.subr.bf16.mxu0 0
    %3607 = vmatpush1.bf16.xpose.msra.mxu0 0
    %3608 = vmatprep.subr.bf16.mxu0 0
    %3609 = vmatpush1.bf16.xpose.msra.mxu0 0
    %3610 = vmatprep.mubr.bf16.mxu0 0
    %3611 = vmatmul.mubr.bf16.gmra.mrb[0].mxu0 %v3561
    %v3612 = vpop.f32.mrb[0].mxu0
    %v3613 = vadd.f32 %v224, %v3612
    %v3614 = vpop.f32.mrb[0].mxu0
    %v3615 = vpop.f32.mrb[0].mxu0
    %v3616 = vadd.f32 %v224, %v3615
    %v3617 = vpop.f32.mrb[0].mxu0
    %3618 = vmatprep.mubr.bf16.mxu0 0
    %3619 = vmatmul.mubr.bf16.gmra.mrb[0].mxu0 %v3564
    %v3620 = vpop.f32.mrb[0].mxu0
    %v3621 = vadd.f32 %v224, %v3620
    %v3622 = vpop.f32.mrb[0].mxu0
    %v3623 = vpop.f32.mrb[0].mxu0
    %v3624 = vadd.f32 %v224, %v3623
    %v3625 = vpop.f32.mrb[0].mxu0
    %3626 = vmatprep.mubr.bf16.mxu0 0
    %3627 = vmatmul.mubr.bf16.gmra.mrb[0].mxu0 %v3567
    %v3628 = vpop.f32.mrb[0].mxu0
    %v3629 = vadd.f32 %v224, %v3628
    %v3630 = vpop.f32.mrb[0].mxu0
    %v3631 = vpop.f32.mrb[0].mxu0
    %v3632 = vpop.f32.mrb[0].mxu0
    %3633 = vdwg.mxu0
    %v3634 = vsel %vm581, %v3613, -inf
    %3635 = vmax.xlane.f32.xlu0 %v3634
    %v3636 = vpop.xlane.xlu0 %3635
    %v3637 = vsel %vm581, %v3616, -inf
    %3638 = vmax.xlane.f32.xlu0 %v3637
    %v3639 = vpop.xlane.xlu0 %3638
    %v3640 = vsel %vm581, %v3621, -inf
    %3641 = vmax.xlane.f32.xlu0 %v3640
    %v3642 = vpop.xlane.xlu0 %3641
    %v3643 = vsel %vm581, %v3624, -inf
    %3644 = vmax.xlane.f32.xlu0 %v3643
    %v3645 = vpop.xlane.xlu0 %3644
    %v3646 = vsel %vm581, %v3629, -inf
    %3647 = vmax.xlane.f32.xlu0 %v3646
    %v3648 = vpop.xlane.xlu0 %3647
    %v3649 = vsub.f32 %v3613, %v3636
    %v3650 = vsub.f32 %v3616, %v3639
    %v3651 = vsub.f32 %v3621, %v3642
    %v3652 = vsub.f32 %v3624, %v3645
    %v3653 = vsub.f32 %v3629, %v3648
    %v3654 = vmul.f32 %v3649, 1.442695
    %v3655 = vpow.pop %v3654
    %v3656 = vmul.f32 %v3650, 1.442695
    %v3657 = vpow.pop %v3656
    %v3658 = vmul.f32 %v3651, 1.442695
    %v3659 = vpow.pop %v3658
    %v3660 = vmul.f32 %v3652, 1.442695
    %v3661 = vpow.pop %v3660
    %v3662 = vmul.f32 %v3653, 1.442695
    %v3663 = vpow.pop %v3662
    %v3664 = vsel %vm581, %v3655, 0.0
    %3665 = vadd.xlane.f32.xlu0 %v3664
    %v3666 = vpop.xlane.xlu0 %3665
    %v3667 = vsel %vm581, %v3657, 0.0
    %3668 = vadd.xlane.f32.xlu0 %v3667
    %v3669 = vpop.xlane.xlu0 %3668
    %v3670 = vsel %vm581, %v3659, 0.0
    %3671 = vadd.xlane.f32.xlu0 %v3670
    %v3672 = vpop.xlane.xlu0 %3671
    %v3673 = vsel %vm581, %v3661, 0.0
    %3674 = vadd.xlane.f32.xlu0 %v3673
    %v3675 = vpop.xlane.xlu0 %3674
    %v3676 = vsel %vm581, %v3663, 0.0
    %3677 = vadd.xlane.f32.xlu0 %v3676
    %v3678 = vpop.xlane.xlu0 %3677
    %v3679 = vrcp.pop %v3666
    %v3680 = vrcp.pop %v3669
    %v3681 = vrcp.pop %v3672
    %v3682 = vrcp.pop %v3675
    %v3683 = vrcp.pop %v3678
    %v3684 = vmul.f32 %v3655, %v3679
    %v3685 = vmul.f32 %v3657, %v3680
    %v3686 = vmul.f32 %v3659, %v3681
    %v3687 = vmul.f32 %v3661, %v3682
    %v3688 = vmul.f32 %v3663, %v3683
    %v3689 = vpack.c.bf16 %v3685, %v3684
    %v3690 = vpack.c.bf16 %v3687, %v3686
    %v3691 = vpack.c.bf16 %v3688, %v3688
    %3692 = vrot.lane.b32.xlu0 %v3328, 56
    %v3693 = vpop.permute.xlu0 %3692
    %3694 = vrot.lane.b32.xlu0 %v3329, 56
    %v3695 = vpop.permute.xlu0 %3694
    %3696 = vrot.lane.b32.xlu0 %v3330, 56
    %v3697 = vpop.permute.xlu0 %3696
    %v3701 = vsel %vm581, %v3689, 0
    %v3704 = vsel %vm581, %v3690, 0
    %v3707 = vsel %vm581, %v3691, 0
    %v3710 = vsel %vm103, %v3697, 0
    %3712 = vmatprep.subr.bf16.mxu0 0
    %3713 = vmatpush1.bf16.msra.mxu0 %v3693
    %3714 = vmatprep.subr.bf16.mxu0 0
    %3715 = vmatpush1.bf16.msra.mxu0 %v3695
    %3716 = vmatprep.subr.bf16.mxu0 0
    %3717 = vmatpush1.bf16.msra.mxu0 %v3710
    %3718 = vmatprep.subr.bf16.mxu0 0
    %3719 = vmatpush1.bf16.msra.mxu0 0
    %3720 = vmatprep.subr.bf16.mxu0 0
    %3721 = vmatpush1.bf16.msra.mxu0 0
    %3722 = vmatprep.subr.bf16.mxu0 0
    %3723 = vmatpush1.bf16.msra.mxu0 0
    %3724 = vmatprep.subr.bf16.mxu0 0
    %3725 = vmatpush1.bf16.msra.mxu0 0
    %3726 = vmatprep.subr.bf16.mxu0 0
    %3727 = vmatpush1.bf16.msra.mxu0 0
    %3728 = vmatprep.subr.bf16.mxu0 0
    %3729 = vmatpush1.bf16.msra.mxu0 0
    %3730 = vmatprep.subr.bf16.mxu0 0
    %3731 = vmatpush1.bf16.msra.mxu0 0
    %3732 = vmatprep.subr.bf16.mxu0 0
    %3733 = vmatpush1.bf16.msra.mxu0 0
    %3734 = vmatprep.subr.bf16.mxu0 0
    %3735 = vmatpush1.bf16.msra.mxu0 0
    %3736 = vmatprep.subr.bf16.mxu0 0
    %3737 = vmatpush1.bf16.msra.mxu0 0
    %3738 = vmatprep.subr.bf16.mxu0 0
    %3739 = vmatpush1.bf16.msra.mxu0 0
    %3740 = vmatprep.subr.bf16.mxu0 0
    %3741 = vmatpush1.bf16.msra.mxu0 0
    %3742 = vmatprep.subr.bf16.mxu0 0
    %3743 = vmatpush1.bf16.msra.mxu0 0
    %3744 = vmatprep.mubr.bf16.mxu0 0
    %3745 = vmatmul.mubr.bf16.gmra.mrb[0].mxu0 %v3701
    %v3746 = vpop.f32.mrb[0].mxu0
    %v3747 = vadd.f32 0.0, %v3746
    %v3748 = vpop.f32.mrb[0].mxu0
    %v3749 = vpop.f32.mrb[0].mxu0
    %v3750 = vadd.f32 0.0, %v3749
    %v3751 = vpop.f32.mrb[0].mxu0
    %3752 = vmatprep.mubr.bf16.mxu0 0
    %3753 = vmatmul.mubr.bf16.gmra.mrb[0].mxu0 %v3704
    %v3754 = vpop.f32.mrb[0].mxu0
    %v3755 = vadd.f32 0.0, %v3754
    %v3756 = vpop.f32.mrb[0].mxu0
    %v3757 = vpop.f32.mrb[0].mxu0
    %v3758 = vadd.f32 0.0, %v3757
    %v3759 = vpop.f32.mrb[0].mxu0
    %3760 = vmatprep.mubr.bf16.mxu0 0
    %3761 = vmatmul.mubr.bf16.gmra.mrb[0].mxu0 %v3707
    %v3762 = vpop.f32.mrb[0].mxu0
    %v3763 = vadd.f32 0.0, %v3762
    %v3764 = vpop.f32.mrb[0].mxu0
    %v3765 = vpop.f32.mrb[0].mxu0
    %v3766 = vpop.f32.mrb[0].mxu0
    %3767 = vdwg.mxu0
    %3768 = vrot.lane.b32.xlu0 %v3328, 112
    %v3769 = vpop.permute.xlu0 %3768
    %3770 = vrot.lane.b32.xlu0 %v3329, 112
    %v3771 = vpop.permute.xlu0 %3770
    %3772 = vrot.lane.b32.xlu0 %v3330, 112
    %v3773 = vpop.permute.xlu0 %3772
    %3774 = vrot.lane.b32.xlu0 %v3328, 80
    %v3775 = vpop.permute.xlu0 %3774
    %3776 = vrot.lane.b32.xlu0 %v3329, 80
    %v3777 = vpop.permute.xlu0 %3776
    %3778 = vrot.lane.b32.xlu0 %v3330, 80
    %v3779 = vpop.permute.xlu0 %3778
    %v3781 = vsel %vm90, %v3769, 0
    %v3784 = vsel %vm90, %v3771, 0
    %v3787 = vsel %vm90, %v3773, 0
    %v3790 = vsel %vm90, %v3775, 0
    %v3793 = vsel %vm90, %v3777, 0
    %v3796 = vsel %vm90, %v3779, 0
    %3798 = vmatprep.subr.bf16.mxu0 0
    %3799 = vmatpush1.bf16.xpose.msra.mxu0 %v3790
    %3800 = vmatprep.subr.bf16.mxu0 0
    %3801 = vmatpush1.bf16.xpose.msra.mxu0 %v3793
    %3802 = vmatprep.subr.bf16.mxu0 0
    %3803 = vmatpush1.bf16.xpose.msra.mxu0 %v3796
    %3804 = vmatprep.subr.bf16.mxu0 0
    %3805 = vmatpush1.bf16.xpose.msra.mxu0 0
    %3806 = vmatprep.subr.bf16.mxu0 0
    %3807 = vmatpush1.bf16.xpose.msra.mxu0 0
    %3808 = vmatprep.subr.bf16.mxu0 0
    %3809 = vmatpush1.bf16.xpose.msra.mxu0 0
    %3810 = vmatprep.subr.bf16.mxu0 0
    %3811 = vmatpush1.bf16.xpose.msra.mxu0 0
    %3812 = vmatprep.subr.bf16.mxu0 0
    %3813 = vmatpush1.bf16.xpose.msra.mxu0 0
    %3814 = vmatprep.subr.bf16.mxu0 0
    %3815 = vmatpush1.bf16.xpose.msra.mxu0 0
    %3816 = vmatprep.subr.bf16.mxu0 0
    %3817 = vmatpush1.bf16.xpose.msra.mxu0 0
    %3818 = vmatprep.subr.bf16.mxu0 0
    %3819 = vmatpush1.bf16.xpose.msra.mxu0 0
    %3820 = vmatprep.subr.bf16.mxu0 0
    %3821 = vmatpush1.bf16.xpose.msra.mxu0 0
    %3822 = vmatprep.subr.bf16.mxu0 0
    %3823 = vmatpush1.bf16.xpose.msra.mxu0 0
    %3824 = vmatprep.subr.bf16.mxu0 0
    %3825 = vmatpush1.bf16.xpose.msra.mxu0 0
    %3826 = vmatprep.subr.bf16.mxu0 0
    %3827 = vmatpush1.bf16.xpose.msra.mxu0 0
    %3828 = vmatprep.subr.bf16.mxu0 0
    %3829 = vmatpush1.bf16.xpose.msra.mxu0 0
    %3830 = vmatprep.mubr.bf16.mxu0 0
    %3831 = vmatmul.mubr.bf16.gmra.mrb[0].mxu0 %v3781
    %v3832 = vpop.f32.mrb[0].mxu0
    %v3833 = vadd.f32 %v224, %v3832
    %v3834 = vpop.f32.mrb[0].mxu0
    %v3835 = vpop.f32.mrb[0].mxu0
    %v3836 = vadd.f32 %v224, %v3835
    %v3837 = vpop.f32.mrb[0].mxu0
    %3838 = vmatprep.mubr.bf16.mxu0 0
    %3839 = vmatmul.mubr.bf16.gmra.mrb[0].mxu0 %v3784
    %v3840 = vpop.f32.mrb[0].mxu0
    %v3841 = vadd.f32 %v224, %v3840
    %v3842 = vpop.f32.mrb[0].mxu0
    %v3843 = vpop.f32.mrb[0].mxu0
    %v3844 = vadd.f32 %v224, %v3843
    %v3845 = vpop.f32.mrb[0].mxu0
    %3846 = vmatprep.mubr.bf16.mxu0 0
    %3847 = vmatmul.mubr.bf16.gmra.mrb[0].mxu0 %v3787
    %v3848 = vpop.f32.mrb[0].mxu0
    %v3849 = vadd.f32 %v224, %v3848
    %v3850 = vpop.f32.mrb[0].mxu0
    %v3851 = vpop.f32.mrb[0].mxu0
    %v3852 = vpop.f32.mrb[0].mxu0
    %3853 = vdwg.mxu0
    %v3854 = vsel %vm581, %v3833, -inf
    %3855 = vmax.xlane.f32.xlu0 %v3854
    %v3856 = vpop.xlane.xlu0 %3855
    %v3857 = vsel %vm581, %v3836, -inf
    %3858 = vmax.xlane.f32.xlu0 %v3857
    %v3859 = vpop.xlane.xlu0 %3858
    %v3860 = vsel %vm581, %v3841, -inf
    %3861 = vmax.xlane.f32.xlu0 %v3860
    %v3862 = vpop.xlane.xlu0 %3861
    %v3863 = vsel %vm581, %v3844, -inf
    %3864 = vmax.xlane.f32.xlu0 %v3863
    %v3865 = vpop.xlane.xlu0 %3864
    %v3866 = vsel %vm581, %v3849, -inf
    %3867 = vmax.xlane.f32.xlu0 %v3866
    %v3868 = vpop.xlane.xlu0 %3867
    %v3869 = vsub.f32 %v3833, %v3856
    %v3870 = vsub.f32 %v3836, %v3859
    %v3871 = vsub.f32 %v3841, %v3862
    %v3872 = vsub.f32 %v3844, %v3865
    %v3873 = vsub.f32 %v3849, %v3868
    %v3874 = vmul.f32 %v3869, 1.442695
    %v3875 = vpow.pop %v3874
    %v3876 = vmul.f32 %v3870, 1.442695
    %v3877 = vpow.pop %v3876
    %v3878 = vmul.f32 %v3871, 1.442695
    %v3879 = vpow.pop %v3878
    %v3880 = vmul.f32 %v3872, 1.442695
    %v3881 = vpow.pop %v3880
    %v3882 = vmul.f32 %v3873, 1.442695
    %v3883 = vpow.pop %v3882
    %v3884 = vsel %vm581, %v3875, 0.0
    %3885 = vadd.xlane.f32.xlu0 %v3884
    %v3886 = vpop.xlane.xlu0 %3885
    %v3887 = vsel %vm581, %v3877, 0.0
    %3888 = vadd.xlane.f32.xlu0 %v3887
    %v3889 = vpop.xlane.xlu0 %3888
    %v3890 = vsel %vm581, %v3879, 0.0
    %3891 = vadd.xlane.f32.xlu0 %v3890
    %v3892 = vpop.xlane.xlu0 %3891
    %v3893 = vsel %vm581, %v3881, 0.0
    %3894 = vadd.xlane.f32.xlu0 %v3893
    %v3895 = vpop.xlane.xlu0 %3894
    %v3896 = vsel %vm581, %v3883, 0.0
    %3897 = vadd.xlane.f32.xlu0 %v3896
    %v3898 = vpop.xlane.xlu0 %3897
    %v3899 = vrcp.pop %v3886
    %v3900 = vrcp.pop %v3889
    %v3901 = vrcp.pop %v3892
    %v3902 = vrcp.pop %v3895
    %v3903 = vrcp.pop %v3898
    %v3904 = vmul.f32 %v3875, %v3899
    %v3905 = vmul.f32 %v3877, %v3900
    %v3906 = vmul.f32 %v3879, %v3901
    %v3907 = vmul.f32 %v3881, %v3902
    %v3908 = vmul.f32 %v3883, %v3903
    %v3909 = vpack.c.bf16 %v3905, %v3904
    %v3910 = vpack.c.bf16 %v3907, %v3906
    %v3911 = vpack.c.bf16 %v3908, %v3908
    %3912 = vrot.lane.b32.xlu0 %v3328, 48
    %v3913 = vpop.permute.xlu0 %3912
    %3914 = vrot.lane.b32.xlu0 %v3329, 48
    %v3915 = vpop.permute.xlu0 %3914
    %3916 = vrot.lane.b32.xlu0 %v3330, 48
    %v3917 = vpop.permute.xlu0 %3916
    %v3921 = vsel %vm581, %v3909, 0
    %v3924 = vsel %vm581, %v3910, 0
    %v3927 = vsel %vm581, %v3911, 0
    %v3930 = vsel %vm103, %v3917, 0
    %3932 = vmatprep.subr.bf16.mxu0 0
    %3933 = vmatpush1.bf16.msra.mxu0 %v3913
    %3934 = vmatprep.subr.bf16.mxu0 0
    %3935 = vmatpush1.bf16.msra.mxu0 %v3915
    %3936 = vmatprep.subr.bf16.mxu0 0
    %3937 = vmatpush1.bf16.msra.mxu0 %v3930
    %3938 = vmatprep.subr.bf16.mxu0 0
    %3939 = vmatpush1.bf16.msra.mxu0 0
    %3940 = vmatprep.subr.bf16.mxu0 0
    %3941 = vmatpush1.bf16.msra.mxu0 0
    %3942 = vmatprep.subr.bf16.mxu0 0
    %3943 = vmatpush1.bf16.msra.mxu0 0
    %3944 = vmatprep.subr.bf16.mxu0 0
    %3945 = vmatpush1.bf16.msra.mxu0 0
    %3946 = vmatprep.subr.bf16.mxu0 0
    %3947 = vmatpush1.bf16.msra.mxu0 0
    %3948 = vmatprep.subr.bf16.mxu0 0
    %3949 = vmatpush1.bf16.msra.mxu0 0
    %3950 = vmatprep.subr.bf16.mxu0 0
    %3951 = vmatpush1.bf16.msra.mxu0 0
    %3952 = vmatprep.subr.bf16.mxu0 0
    %3953 = vmatpush1.bf16.msra.mxu0 0
    %3954 = vmatprep.subr.bf16.mxu0 0
    %3955 = vmatpush1.bf16.msra.mxu0 0
    %3956 = vmatprep.subr.bf16.mxu0 0
    %3957 = vmatpush1.bf16.msra.mxu0 0
    %3958 = vmatprep.subr.bf16.mxu0 0
    %3959 = vmatpush1.bf16.msra.mxu0 0
    %3960 = vmatprep.subr.bf16.mxu0 0
    %3961 = vmatpush1.bf16.msra.mxu0 0
    %3962 = vmatprep.subr.bf16.mxu0 0
    %3963 = vmatpush1.bf16.msra.mxu0 0
    %3964 = vmatprep.mubr.bf16.mxu0 0
    %3965 = vmatmul.mubr.bf16.gmra.mrb[0].mxu0 %v3921
    %v3966 = vpop.f32.mrb[0].mxu0
    %v3967 = vadd.f32 0.0, %v3966
    %v3968 = vpop.f32.mrb[0].mxu0
    %v3969 = vpop.f32.mrb[0].mxu0
    %v3970 = vadd.f32 0.0, %v3969
    %v3971 = vpop.f32.mrb[0].mxu0
    %3972 = vmatprep.mubr.bf16.mxu0 0
    %3973 = vmatmul.mubr.bf16.gmra.mrb[0].mxu0 %v3924
    %v3974 = vpop.f32.mrb[0].mxu0
    %v3975 = vadd.f32 0.0, %v3974
    %v3976 = vpop.f32.mrb[0].mxu0
    %v3977 = vpop.f32.mrb[0].mxu0
    %v3978 = vadd.f32 0.0, %v3977
    %v3979 = vpop.f32.mrb[0].mxu0
    %3980 = vmatprep.mubr.bf16.mxu0 0
    %3981 = vmatmul.mubr.bf16.gmra.mrb[0].mxu0 %v3927
    %v3982 = vpop.f32.mrb[0].mxu0
    %v3983 = vadd.f32 0.0, %v3982
    %v3984 = vpop.f32.mrb[0].mxu0
    %v3985 = vpop.f32.mrb[0].mxu0
    %v3986 = vpop.f32.mrb[0].mxu0
    %3987 = vdwg.mxu0
    %3988 = vrot.lane.b32.xlu0 %v3328, 104
    %v3989 = vpop.permute.xlu0 %3988
    %3990 = vrot.lane.b32.xlu0 %v3329, 104
    %v3991 = vpop.permute.xlu0 %3990
    %3992 = vrot.lane.b32.xlu0 %v3330, 104
    %v3993 = vpop.permute.xlu0 %3992
    %3994 = vrot.lane.b32.xlu0 %v3328, 72
    %v3995 = vpop.permute.xlu0 %3994
    %3996 = vrot.lane.b32.xlu0 %v3329, 72
    %v3997 = vpop.permute.xlu0 %3996
    %3998 = vrot.lane.b32.xlu0 %v3330, 72
    %v3999 = vpop.permute.xlu0 %3998
    %v4001 = vsel %vm90, %v3989, 0
    %v4004 = vsel %vm90, %v3991, 0
    %v4007 = vsel %vm90, %v3993, 0
    %v4010 = vsel %vm90, %v3995, 0
    %v4013 = vsel %vm90, %v3997, 0
    %v4016 = vsel %vm90, %v3999, 0
    %4018 = vmatprep.subr.bf16.mxu0 0
    %4019 = vmatpush1.bf16.xpose.msra.mxu0 %v4010
    %4020 = vmatprep.subr.bf16.mxu0 0
    %4021 = vmatpush1.bf16.xpose.msra.mxu0 %v4013
    %4022 = vmatprep.subr.bf16.mxu0 0
    %4023 = vmatpush1.bf16.xpose.msra.mxu0 %v4016
    %4024 = vmatprep.subr.bf16.mxu0 0
    %4025 = vmatpush1.bf16.xpose.msra.mxu0 0
    %4026 = vmatprep.subr.bf16.mxu0 0
    %4027 = vmatpush1.bf16.xpose.msra.mxu0 0
    %4028 = vmatprep.subr.bf16.mxu0 0
    %4029 = vmatpush1.bf16.xpose.msra.mxu0 0
    %4030 = vmatprep.subr.bf16.mxu0 0
    %4031 = vmatpush1.bf16.xpose.msra.mxu0 0
    %4032 = vmatprep.subr.bf16.mxu0 0
    %4033 = vmatpush1.bf16.xpose.msra.mxu0 0
    %4034 = vmatprep.subr.bf16.mxu0 0
    %4035 = vmatpush1.bf16.xpose.msra.mxu0 0
    %4036 = vmatprep.subr.bf16.mxu0 0
    %4037 = vmatpush1.bf16.xpose.msra.mxu0 0
    %4038 = vmatprep.subr.bf16.mxu0 0
    %4039 = vmatpush1.bf16.xpose.msra.mxu0 0
    %4040 = vmatprep.subr.bf16.mxu0 0
    %4041 = vmatpush1.bf16.xpose.msra.mxu0 0
    %4042 = vmatprep.subr.bf16.mxu0 0
    %4043 = vmatpush1.bf16.xpose.msra.mxu0 0
    %4044 = vmatprep.subr.bf16.mxu0 0
    %4045 = vmatpush1.bf16.xpose.msra.mxu0 0
    %4046 = vmatprep.subr.bf16.mxu0 0
    %4047 = vmatpush1.bf16.xpose.msra.mxu0 0
    %4048 = vmatprep.subr.bf16.mxu0 0
    %4049 = vmatpush1.bf16.xpose.msra.mxu0 0
    %4050 = vmatprep.mubr.bf16.mxu0 0
    %4051 = vmatmul.mubr.bf16.gmra.mrb[0].mxu0 %v4001
    %v4052 = vpop.f32.mrb[0].mxu0
    %v4053 = vadd.f32 %v224, %v4052
    %v4054 = vpop.f32.mrb[0].mxu0
    %v4055 = vpop.f32.mrb[0].mxu0
    %v4056 = vadd.f32 %v224, %v4055
    %v4057 = vpop.f32.mrb[0].mxu0
    %4058 = vmatprep.mubr.bf16.mxu0 0
    %4059 = vmatmul.mubr.bf16.gmra.mrb[0].mxu0 %v4004
    %v4060 = vpop.f32.mrb[0].mxu0
    %v4061 = vadd.f32 %v224, %v4060
    %v4062 = vpop.f32.mrb[0].mxu0
    %v4063 = vpop.f32.mrb[0].mxu0
    %v4064 = vadd.f32 %v224, %v4063
    %v4065 = vpop.f32.mrb[0].mxu0
    %4066 = vmatprep.mubr.bf16.mxu0 0
    %4067 = vmatmul.mubr.bf16.gmra.mrb[0].mxu0 %v4007
    %v4068 = vpop.f32.mrb[0].mxu0
    %v4069 = vadd.f32 %v224, %v4068
    %v4070 = vpop.f32.mrb[0].mxu0
    %v4071 = vpop.f32.mrb[0].mxu0
    %v4072 = vpop.f32.mrb[0].mxu0
    %4073 = vdwg.mxu0
    %v4074 = vsel %vm581, %v4053, -inf
    %4075 = vmax.xlane.f32.xlu0 %v4074
    %v4076 = vpop.xlane.xlu0 %4075
    %v4077 = vsel %vm581, %v4056, -inf
    %4078 = vmax.xlane.f32.xlu0 %v4077
    %v4079 = vpop.xlane.xlu0 %4078
    %v4080 = vsel %vm581, %v4061, -inf
    %4081 = vmax.xlane.f32.xlu0 %v4080
    %v4082 = vpop.xlane.xlu0 %4081
    %v4083 = vsel %vm581, %v4064, -inf
    %4084 = vmax.xlane.f32.xlu0 %v4083
    %v4085 = vpop.xlane.xlu0 %4084
    %v4086 = vsel %vm581, %v4069, -inf
    %4087 = vmax.xlane.f32.xlu0 %v4086
    %v4088 = vpop.xlane.xlu0 %4087
    %v4089 = vsub.f32 %v4053, %v4076
    %v4090 = vsub.f32 %v4056, %v4079
    %v4091 = vsub.f32 %v4061, %v4082
    %v4092 = vsub.f32 %v4064, %v4085
    %v4093 = vsub.f32 %v4069, %v4088
    %v4094 = vmul.f32 %v4089, 1.442695
    %v4095 = vpow.pop %v4094
    %v4096 = vmul.f32 %v4090, 1.442695
    %v4097 = vpow.pop %v4096
    %v4098 = vmul.f32 %v4091, 1.442695
    %v4099 = vpow.pop %v4098
    %v4100 = vmul.f32 %v4092, 1.442695
    %v4101 = vpow.pop %v4100
    %v4102 = vmul.f32 %v4093, 1.442695
    %v4103 = vpow.pop %v4102
    %v4104 = vsel %vm581, %v4095, 0.0
    %4105 = vadd.xlane.f32.xlu0 %v4104
    %v4106 = vpop.xlane.xlu0 %4105
    %v4107 = vsel %vm581, %v4097, 0.0
    %4108 = vadd.xlane.f32.xlu0 %v4107
    %v4109 = vpop.xlane.xlu0 %4108
    %v4110 = vsel %vm581, %v4099, 0.0
    %4111 = vadd.xlane.f32.xlu0 %v4110
    %v4112 = vpop.xlane.xlu0 %4111
    %v4113 = vsel %vm581, %v4101, 0.0
    %4114 = vadd.xlane.f32.xlu0 %v4113
    %v4115 = vpop.xlane.xlu0 %4114
    %v4116 = vsel %vm581, %v4103, 0.0
    %4117 = vadd.xlane.f32.xlu0 %v4116
    %v4118 = vpop.xlane.xlu0 %4117
    %v4119 = vrcp.pop %v4106
    %v4120 = vrcp.pop %v4109
    %v4121 = vrcp.pop %v4112
    %v4122 = vrcp.pop %v4115
    %v4123 = vrcp.pop %v4118
    %v4124 = vmul.f32 %v4095, %v4119
    %v4125 = vmul.f32 %v4097, %v4120
    %v4126 = vmul.f32 %v4099, %v4121
    %v4127 = vmul.f32 %v4101, %v4122
    %v4128 = vmul.f32 %v4103, %v4123
    %v4129 = vpack.c.bf16 %v4125, %v4124
    %v4130 = vpack.c.bf16 %v4127, %v4126
    %v4131 = vpack.c.bf16 %v4128, %v4128
    %4132 = vrot.lane.b32.xlu0 %v3328, 40
    %v4133 = vpop.permute.xlu0 %4132
    %4134 = vrot.lane.b32.xlu0 %v3329, 40
    %v4135 = vpop.permute.xlu0 %4134
    %4136 = vrot.lane.b32.xlu0 %v3330, 40
    %v4137 = vpop.permute.xlu0 %4136
    %v4141 = vsel %vm581, %v4129, 0
    %v4144 = vsel %vm581, %v4130, 0
    %v4147 = vsel %vm581, %v4131, 0
    %v4150 = vsel %vm103, %v4137, 0
    %4152 = vmatprep.subr.bf16.mxu0 0
    %4153 = vmatpush1.bf16.msra.mxu0 %v4133
    %4154 = vmatprep.subr.bf16.mxu0 0
    %4155 = vmatpush1.bf16.msra.mxu0 %v4135
    %4156 = vmatprep.subr.bf16.mxu0 0
    %4157 = vmatpush1.bf16.msra.mxu0 %v4150
    %4158 = vmatprep.subr.bf16.mxu0 0
    %4159 = vmatpush1.bf16.msra.mxu0 0
    %4160 = vmatprep.subr.bf16.mxu0 0
    %4161 = vmatpush1.bf16.msra.mxu0 0
    %4162 = vmatprep.subr.bf16.mxu0 0
    %4163 = vmatpush1.bf16.msra.mxu0 0
    %4164 = vmatprep.subr.bf16.mxu0 0
    %4165 = vmatpush1.bf16.msra.mxu0 0
    %4166 = vmatprep.subr.bf16.mxu0 0
    %4167 = vmatpush1.bf16.msra.mxu0 0
    %4168 = vmatprep.subr.bf16.mxu0 0
    %4169 = vmatpush1.bf16.msra.mxu0 0
    %4170 = vmatprep.subr.bf16.mxu0 0
    %4171 = vmatpush1.bf16.msra.mxu0 0
    %4172 = vmatprep.subr.bf16.mxu0 0
    %4173 = vmatpush1.bf16.msra.mxu0 0
    %4174 = vmatprep.subr.bf16.mxu0 0
    %4175 = vmatpush1.bf16.msra.mxu0 0
    %4176 = vmatprep.subr.bf16.mxu0 0
    %4177 = vmatpush1.bf16.msra.mxu0 0
    %4178 = vmatprep.subr.bf16.mxu0 0
    %4179 = vmatpush1.bf16.msra.mxu0 0
    %4180 = vmatprep.subr.bf16.mxu0 0
    %4181 = vmatpush1.bf16.msra.mxu0 0
    %4182 = vmatprep.subr.bf16.mxu0 0
    %4183 = vmatpush1.bf16.msra.mxu0 0
    %4184 = vmatprep.mubr.bf16.mxu0 0
    %4185 = vmatmul.mubr.bf16.gmra.mrb[0].mxu0 %v4141
    %v4186 = vpop.f32.mrb[0].mxu0
    %v4187 = vadd.f32 0.0, %v4186
    %v4188 = vpop.f32.mrb[0].mxu0
    %v4189 = vpop.f32.mrb[0].mxu0
    %v4190 = vadd.f32 0.0, %v4189
    %v4191 = vpop.f32.mrb[0].mxu0
    %4192 = vmatprep.mubr.bf16.mxu0 0
    %4193 = vmatmul.mubr.bf16.gmra.mrb[0].mxu0 %v4144
    %v4194 = vpop.f32.mrb[0].mxu0
    %v4195 = vadd.f32 0.0, %v4194
    %v4196 = vpop.f32.mrb[0].mxu0
    %v4197 = vpop.f32.mrb[0].mxu0
    %v4198 = vadd.f32 0.0, %v4197
    %v4199 = vpop.f32.mrb[0].mxu0
    %4200 = vmatprep.mubr.bf16.mxu0 0
    %4201 = vmatmul.mubr.bf16.gmra.mrb[0].mxu0 %v4147
    %v4202 = vpop.f32.mrb[0].mxu0
    %v4203 = vadd.f32 0.0, %v4202
    %v4204 = vpop.f32.mrb[0].mxu0
    %v4205 = vpop.f32.mrb[0].mxu0
    %v4206 = vpop.f32.mrb[0].mxu0
    %4207 = vdwg.mxu0
    %4213 = vrot.lane.b32.xlu0 %v3747, 8
    %v4214 = vpop.permute.xlu0 %4213
    %4215 = vrot.lane.b32.xlu0 %v3750, 8
    %v4216 = vpop.permute.xlu0 %4215
    %4217 = vrot.lane.b32.xlu0 %v3755, 8
    %v4218 = vpop.permute.xlu0 %4217
    %4219 = vrot.lane.b32.xlu0 %v3758, 8
    %v4220 = vpop.permute.xlu0 %4219
    %4221 = vrot.lane.b32.xlu0 %v3763, 8
    %v4222 = vpop.permute.xlu0 %4221
    %4233 = vrot.lane.b32.xlu0 %v3967, 16
    %v4234 = vpop.permute.xlu0 %4233
    %4235 = vrot.lane.b32.xlu0 %v3970, 16
    %v4236 = vpop.permute.xlu0 %4235
    %4237 = vrot.lane.b32.xlu0 %v3975, 16
    %v4238 = vpop.permute.xlu0 %4237
    %4239 = vrot.lane.b32.xlu0 %v3978, 16
    %v4240 = vpop.permute.xlu0 %4239
    %4241 = vrot.lane.b32.xlu0 %v3983, 16
    %v4242 = vpop.permute.xlu0 %4241
    %4253 = vrot.lane.b32.xlu0 %v4187, 24
    %v4254 = vpop.permute.xlu0 %4253
    %4255 = vrot.lane.b32.xlu0 %v4190, 24
    %v4256 = vpop.permute.xlu0 %4255
    %4257 = vrot.lane.b32.xlu0 %v4195, 24
    %v4258 = vpop.permute.xlu0 %4257
    %4259 = vrot.lane.b32.xlu0 %v4198, 24
    %v4260 = vpop.permute.xlu0 %4259
    %4261 = vrot.lane.b32.xlu0 %v4203, 24
    %v4262 = vpop.permute.xlu0 %4261
    %v4268 = vsel %vm90, %v3527, %v4214
    %v4269 = vsel %vm90, %v3530, %v4216
    %v4270 = vsel %vm90, %v3535, %v4218
    %v4271 = vsel %vm90, %v3538, %v4220
    %v4272 = vsel %vm90, %v3543, %v4222
    %v4273 = vsel %vm1441, %v4268, %v4234
    %v4274 = vsel %vm1441, %v4269, %v4236
    %v4275 = vsel %vm1441, %v4270, %v4238
    %v4276 = vsel %vm1441, %v4271, %v4240
    %v4277 = vsel %vm1441, %v4272, %v4242
    %v4278 = vsel %vm1447, %v4273, %v4254
    %v4279 = vsel %vm1447, %v4274, %v4256
    %v4280 = vsel %vm1447, %v4275, %v4258
    %v4281 = vsel %vm1447, %v4276, %v4260
    %v4282 = vsel %vm1447, %v4277, %v4262
    %v4283 = vpack.c.bf16 %v3314, %v3309
    %v4284 = vpack.c.bf16 %v3322, %v3317
    %v4285 = vpack.c.bf16 %v3325, %v3325
    %4289 = vrot.lane.b32.xlu0 %v4283, 96
    %v4290 = vpop.permute.xlu0 %4289
    %4291 = vrot.lane.b32.xlu0 %v4284, 96
    %v4292 = vpop.permute.xlu0 %4291
    %4293 = vrot.lane.b32.xlu0 %v4285, 96
    %v4294 = vpop.permute.xlu0 %4293
    %v4296 = vsel %vm90, %v4283, 0
    %v4299 = vsel %vm90, %v4284, 0
    %v4302 = vsel %vm90, %v4285, 0
    %v4305 = vsel %vm90, %v4290, 0
    %v4308 = vsel %vm90, %v4292, 0
    %v4311 = vsel %vm90, %v4294, 0
    %4313 = vmatprep.subr.bf16.mxu0 0
    %4314 = vmatpush1.bf16.xpose.msra.mxu0 %v4305
    %4315 = vmatprep.subr.bf16.mxu0 0
    %4316 = vmatpush1.bf16.xpose.msra.mxu0 %v4308
    %4317 = vmatprep.subr.bf16.mxu0 0
    %4318 = vmatpush1.bf16.xpose.msra.mxu0 %v4311
    %4319 = vmatprep.subr.bf16.mxu0 0
    %4320 = vmatpush1.bf16.xpose.msra.mxu0 0
    %4321 = vmatprep.subr.bf16.mxu0 0
    %4322 = vmatpush1.bf16.xpose.msra.mxu0 0
    %4323 = vmatprep.subr.bf16.mxu0 0
    %4324 = vmatpush1.bf16.xpose.msra.mxu0 0
    %4325 = vmatprep.subr.bf16.mxu0 0
    %4326 = vmatpush1.bf16.xpose.msra.mxu0 0
    %4327 = vmatprep.subr.bf16.mxu0 0
    %4328 = vmatpush1.bf16.xpose.msra.mxu0 0
    %4329 = vmatprep.subr.bf16.mxu0 0
    %4330 = vmatpush1.bf16.xpose.msra.mxu0 0
    %4331 = vmatprep.subr.bf16.mxu0 0
    %4332 = vmatpush1.bf16.xpose.msra.mxu0 0
    %4333 = vmatprep.subr.bf16.mxu0 0
    %4334 = vmatpush1.bf16.xpose.msra.mxu0 0
    %4335 = vmatprep.subr.bf16.mxu0 0
    %4336 = vmatpush1.bf16.xpose.msra.mxu0 0
    %4337 = vmatprep.subr.bf16.mxu0 0
    %4338 = vmatpush1.bf16.xpose.msra.mxu0 0
    %4339 = vmatprep.subr.bf16.mxu0 0
    %4340 = vmatpush1.bf16.xpose.msra.mxu0 0
    %4341 = vmatprep.subr.bf16.mxu0 0
    %4342 = vmatpush1.bf16.xpose.msra.mxu0 0
    %4343 = vmatprep.subr.bf16.mxu0 0
    %4344 = vmatpush1.bf16.xpose.msra.mxu0 0
    %4345 = vmatprep.mubr.bf16.mxu0 0
    %4346 = vmatmul.mubr.bf16.gmra.mrb[0].mxu0 %v4296
    %v4347 = vpop.f32.mrb[0].mxu0
    %v4348 = vadd.f32 %v224, %v4347
    %v4349 = vpop.f32.mrb[0].mxu0
    %v4350 = vpop.f32.mrb[0].mxu0
    %v4351 = vadd.f32 %v224, %v4350
    %v4352 = vpop.f32.mrb[0].mxu0
    %4353 = vmatprep.mubr.bf16.mxu0 0
    %4354 = vmatmul.mubr.bf16.gmra.mrb[0].mxu0 %v4299
    %v4355 = vpop.f32.mrb[0].mxu0
    %v4356 = vadd.f32 %v224, %v4355
    %v4357 = vpop.f32.mrb[0].mxu0
    %v4358 = vpop.f32.mrb[0].mxu0
    %v4359 = vadd.f32 %v224, %v4358
    %v4360 = vpop.f32.mrb[0].mxu0
    %4361 = vmatprep.mubr.bf16.mxu0 0
    %4362 = vmatmul.mubr.bf16.gmra.mrb[0].mxu0 %v4302
    %v4363 = vpop.f32.mrb[0].mxu0
    %v4364 = vadd.f32 %v224, %v4363
    %v4365 = vpop.f32.mrb[0].mxu0
    %v4366 = vpop.f32.mrb[0].mxu0
    %v4367 = vpop.f32.mrb[0].mxu0
    %4368 = vdwg.mxu0
    %v4369 = vsel %vm581, %v4348, -inf
    %4370 = vmax.xlane.f32.xlu0 %v4369
    %v4371 = vpop.xlane.xlu0 %4370
    %v4372 = vsel %vm581, %v4351, -inf
    %4373 = vmax.xlane.f32.xlu0 %v4372
    %v4374 = vpop.xlane.xlu0 %4373
    %v4375 = vsel %vm581, %v4356, -inf
    %4376 = vmax.xlane.f32.xlu0 %v4375
    %v4377 = vpop.xlane.xlu0 %4376
    %v4378 = vsel %vm581, %v4359, -inf
    %4379 = vmax.xlane.f32.xlu0 %v4378
    %v4380 = vpop.xlane.xlu0 %4379
    %v4381 = vsel %vm581, %v4364, -inf
    %4382 = vmax.xlane.f32.xlu0 %v4381
    %v4383 = vpop.xlane.xlu0 %4382
    %v4384 = vsub.f32 %v4348, %v4371
    %v4385 = vsub.f32 %v4351, %v4374
    %v4386 = vsub.f32 %v4356, %v4377
    %v4387 = vsub.f32 %v4359, %v4380
    %v4388 = vsub.f32 %v4364, %v4383
    %v4389 = vmul.f32 %v4384, 1.442695
    %v4390 = vpow.pop %v4389
    %v4391 = vmul.f32 %v4385, 1.442695
    %v4392 = vpow.pop %v4391
    %v4393 = vmul.f32 %v4386, 1.442695
    %v4394 = vpow.pop %v4393
    %v4395 = vmul.f32 %v4387, 1.442695
    %v4396 = vpow.pop %v4395
    %v4397 = vmul.f32 %v4388, 1.442695
    %v4398 = vpow.pop %v4397
    %v4399 = vsel %vm581, %v4390, 0.0
    %4400 = vadd.xlane.f32.xlu0 %v4399
    %v4401 = vpop.xlane.xlu0 %4400
    %v4402 = vsel %vm581, %v4392, 0.0
    %4403 = vadd.xlane.f32.xlu0 %v4402
    %v4404 = vpop.xlane.xlu0 %4403
    %v4405 = vsel %vm581, %v4394, 0.0
    %4406 = vadd.xlane.f32.xlu0 %v4405
    %v4407 = vpop.xlane.xlu0 %4406
    %v4408 = vsel %vm581, %v4396, 0.0
    %4409 = vadd.xlane.f32.xlu0 %v4408
    %v4410 = vpop.xlane.xlu0 %4409
    %v4411 = vsel %vm581, %v4398, 0.0
    %4412 = vadd.xlane.f32.xlu0 %v4411
    %v4413 = vpop.xlane.xlu0 %4412
    %v4414 = vrcp.pop %v4401
    %v4415 = vrcp.pop %v4404
    %v4416 = vrcp.pop %v4407
    %v4417 = vrcp.pop %v4410
    %v4418 = vrcp.pop %v4413
    %v4419 = vmul.f32 %v4390, %v4414
    %v4420 = vmul.f32 %v4392, %v4415
    %v4421 = vmul.f32 %v4394, %v4416
    %v4422 = vmul.f32 %v4396, %v4417
    %v4423 = vmul.f32 %v4398, %v4418
    %v4424 = vpack.c.bf16 %v4420, %v4419
    %v4425 = vpack.c.bf16 %v4422, %v4421
    %v4426 = vpack.c.bf16 %v4423, %v4423
    %4427 = vrot.lane.b32.xlu0 %v4283, 64
    %v4428 = vpop.permute.xlu0 %4427
    %4429 = vrot.lane.b32.xlu0 %v4284, 64
    %v4430 = vpop.permute.xlu0 %4429
    %4431 = vrot.lane.b32.xlu0 %v4285, 64
    %v4432 = vpop.permute.xlu0 %4431
    %v4436 = vsel %vm581, %v4424, 0
    %v4439 = vsel %vm581, %v4425, 0
    %v4442 = vsel %vm581, %v4426, 0
    %v4445 = vsel %vm103, %v4432, 0
    %4447 = vmatprep.subr.bf16.mxu0 0
    %4448 = vmatpush1.bf16.msra.mxu0 %v4428
    %4449 = vmatprep.subr.bf16.mxu0 0
    %4450 = vmatpush1.bf16.msra.mxu0 %v4430
    %4451 = vmatprep.subr.bf16.mxu0 0
    %4452 = vmatpush1.bf16.msra.mxu0 %v4445
    %4453 = vmatprep.subr.bf16.mxu0 0
    %4454 = vmatpush1.bf16.msra.mxu0 0
    %4455 = vmatprep.subr.bf16.mxu0 0
    %4456 = vmatpush1.bf16.msra.mxu0 0
    %4457 = vmatprep.subr.bf16.mxu0 0
    %4458 = vmatpush1.bf16.msra.mxu0 0
    %4459 = vmatprep.subr.bf16.mxu0 0
    %4460 = vmatpush1.bf16.msra.mxu0 0
    %4461 = vmatprep.subr.bf16.mxu0 0
    %4462 = vmatpush1.bf16.msra.mxu0 0
    %4463 = vmatprep.subr.bf16.mxu0 0
    %4464 = vmatpush1.bf16.msra.mxu0 0
    %4465 = vmatprep.subr.bf16.mxu0 0
    %4466 = vmatpush1.bf16.msra.mxu0 0
    %4467 = vmatprep.subr.bf16.mxu0 0
    %4468 = vmatpush1.bf16.msra.mxu0 0
    %4469 = vmatprep.subr.bf16.mxu0 0
    %4470 = vmatpush1.bf16.msra.mxu0 0
    %4471 = vmatprep.subr.bf16.mxu0 0
    %4472 = vmatpush1.bf16.msra.mxu0 0
    %4473 = vmatprep.subr.bf16.mxu0 0
    %4474 = vmatpush1.bf16.msra.mxu0 0
    %4475 = vmatprep.subr.bf16.mxu0 0
    %4476 = vmatpush1.bf16.msra.mxu0 0
    %4477 = vmatprep.subr.bf16.mxu0 0
    %4478 = vmatpush1.bf16.msra.mxu0 0
    %4479 = vmatprep.mubr.bf16.mxu0 0
    %4480 = vmatmul.mubr.bf16.gmra.mrb[0].mxu0 %v4436
    %v4481 = vpop.f32.mrb[0].mxu0
    %v4482 = vadd.f32 0.0, %v4481
    %v4483 = vpop.f32.mrb[0].mxu0
    %v4484 = vpop.f32.mrb[0].mxu0
    %v4485 = vadd.f32 0.0, %v4484
    %v4486 = vpop.f32.mrb[0].mxu0
    %4487 = vmatprep.mubr.bf16.mxu0 0
    %4488 = vmatmul.mubr.bf16.gmra.mrb[0].mxu0 %v4439
    %v4489 = vpop.f32.mrb[0].mxu0
    %v4490 = vadd.f32 0.0, %v4489
    %v4491 = vpop.f32.mrb[0].mxu0
    %v4492 = vpop.f32.mrb[0].mxu0
    %v4493 = vadd.f32 0.0, %v4492
    %v4494 = vpop.f32.mrb[0].mxu0
    %4495 = vmatprep.mubr.bf16.mxu0 0
    %4496 = vmatmul.mubr.bf16.gmra.mrb[0].mxu0 %v4442
    %v4497 = vpop.f32.mrb[0].mxu0
    %v4498 = vadd.f32 0.0, %v4497
    %v4499 = vpop.f32.mrb[0].mxu0
    %v4500 = vpop.f32.mrb[0].mxu0
    %v4501 = vpop.f32.mrb[0].mxu0
    %4502 = vdwg.mxu0
    %4503 = vrot.lane.b32.xlu0 %v4283, 120
    %v4504 = vpop.permute.xlu0 %4503
    %4505 = vrot.lane.b32.xlu0 %v4284, 120
    %v4506 = vpop.permute.xlu0 %4505
    %4507 = vrot.lane.b32.xlu0 %v4285, 120
    %v4508 = vpop.permute.xlu0 %4507
    %4509 = vrot.lane.b32.xlu0 %v4283, 88
    %v4510 = vpop.permute.xlu0 %4509
    %4511 = vrot.lane.b32.xlu0 %v4284, 88
    %v4512 = vpop.permute.xlu0 %4511
    %4513 = vrot.lane.b32.xlu0 %v4285, 88
    %v4514 = vpop.permute.xlu0 %4513
    %v4516 = vsel %vm90, %v4504, 0
    %v4519 = vsel %vm90, %v4506, 0
    %v4522 = vsel %vm90, %v4508, 0
    %v4525 = vsel %vm90, %v4510, 0
    %v4528 = vsel %vm90, %v4512, 0
    %v4531 = vsel %vm90, %v4514, 0
    %4533 = vmatprep.subr.bf16.mxu0 0
    %4534 = vmatpush1.bf16.xpose.msra.mxu0 %v4525
    %4535 = vmatprep.subr.bf16.mxu0 0
    %4536 = vmatpush1.bf16.xpose.msra.mxu0 %v4528
    %4537 = vmatprep.subr.bf16.mxu0 0
    %4538 = vmatpush1.bf16.xpose.msra.mxu0 %v4531
    %4539 = vmatprep.subr.bf16.mxu0 0
    %4540 = vmatpush1.bf16.xpose.msra.mxu0 0
    %4541 = vmatprep.subr.bf16.mxu0 0
    %4542 = vmatpush1.bf16.xpose.msra.mxu0 0
    %4543 = vmatprep.subr.bf16.mxu0 0
    %4544 = vmatpush1.bf16.xpose.msra.mxu0 0
    %4545 = vmatprep.subr.bf16.mxu0 0
    %4546 = vmatpush1.bf16.xpose.msra.mxu0 0
    %4547 = vmatprep.subr.bf16.mxu0 0
    %4548 = vmatpush1.bf16.xpose.msra.mxu0 0
    %4549 = vmatprep.subr.bf16.mxu0 0
    %4550 = vmatpush1.bf16.xpose.msra.mxu0 0
    %4551 = vmatprep.subr.bf16.mxu0 0
    %4552 = vmatpush1.bf16.xpose.msra.mxu0 0
    %4553 = vmatprep.subr.bf16.mxu0 0
    %4554 = vmatpush1.bf16.xpose.msra.mxu0 0
    %4555 = vmatprep.subr.bf16.mxu0 0
    %4556 = vmatpush1.bf16.xpose.msra.mxu0 0
    %4557 = vmatprep.subr.bf16.mxu0 0
    %4558 = vmatpush1.bf16.xpose.msra.mxu0 0
    %4559 = vmatprep.subr.bf16.mxu0 0
    %4560 = vmatpush1.bf16.xpose.msra.mxu0 0
    %4561 = vmatprep.subr.bf16.mxu0 0
    %4562 = vmatpush1.bf16.xpose.msra.mxu0 0
    %4563 = vmatprep.subr.bf16.mxu0 0
    %4564 = vmatpush1.bf16.xpose.msra.mxu0 0
    %4565 = vmatprep.mubr.bf16.mxu0 0
    %4566 = vmatmul.mubr.bf16.gmra.mrb[0].mxu0 %v4516
    %v4567 = vpop.f32.mrb[0].mxu0
    %v4568 = vadd.f32 %v224, %v4567
    %v4569 = vpop.f32.mrb[0].mxu0
    %v4570 = vpop.f32.mrb[0].mxu0
    %v4571 = vadd.f32 %v224, %v4570
    %v4572 = vpop.f32.mrb[0].mxu0
    %4573 = vmatprep.mubr.bf16.mxu0 0
    %4574 = vmatmul.mubr.bf16.gmra.mrb[0].mxu0 %v4519
    %v4575 = vpop.f32.mrb[0].mxu0
    %v4576 = vadd.f32 %v224, %v4575
    %v4577 = vpop.f32.mrb[0].mxu0
    %v4578 = vpop.f32.mrb[0].mxu0
    %v4579 = vadd.f32 %v224, %v4578
    %v4580 = vpop.f32.mrb[0].mxu0
    %4581 = vmatprep.mubr.bf16.mxu0 0
    %4582 = vmatmul.mubr.bf16.gmra.mrb[0].mxu0 %v4522
    %v4583 = vpop.f32.mrb[0].mxu0
    %v4584 = vadd.f32 %v224, %v4583
    %v4585 = vpop.f32.mrb[0].mxu0
    %v4586 = vpop.f32.mrb[0].mxu0
    %v4587 = vpop.f32.mrb[0].mxu0
    %4588 = vdwg.mxu0
    %v4589 = vsel %vm581, %v4568, -inf
    %4590 = vmax.xlane.f32.xlu0 %v4589
    %v4591 = vpop.xlane.xlu0 %4590
    %v4592 = vsel %vm581, %v4571, -inf
    %4593 = vmax.xlane.f32.xlu0 %v4592
    %v4594 = vpop.xlane.xlu0 %4593
    %v4595 = vsel %vm581, %v4576, -inf
    %4596 = vmax.xlane.f32.xlu0 %v4595
    %v4597 = vpop.xlane.xlu0 %4596
    %v4598 = vsel %vm581, %v4579, -inf
    %4599 = vmax.xlane.f32.xlu0 %v4598
    %v4600 = vpop.xlane.xlu0 %4599
    %v4601 = vsel %vm581, %v4584, -inf
    %4602 = vmax.xlane.f32.xlu0 %v4601
    %v4603 = vpop.xlane.xlu0 %4602
    %v4604 = vsub.f32 %v4568, %v4591
    %v4605 = vsub.f32 %v4571, %v4594
    %v4606 = vsub.f32 %v4576, %v4597
    %v4607 = vsub.f32 %v4579, %v4600
    %v4608 = vsub.f32 %v4584, %v4603
    %v4609 = vmul.f32 %v4604, 1.442695
    %v4610 = vpow.pop %v4609
    %v4611 = vmul.f32 %v4605, 1.442695
    %v4612 = vpow.pop %v4611
    %v4613 = vmul.f32 %v4606, 1.442695
    %v4614 = vpow.pop %v4613
    %v4615 = vmul.f32 %v4607, 1.442695
    %v4616 = vpow.pop %v4615
    %v4617 = vmul.f32 %v4608, 1.442695
    %v4618 = vpow.pop %v4617
    %v4619 = vsel %vm581, %v4610, 0.0
    %4620 = vadd.xlane.f32.xlu0 %v4619
    %v4621 = vpop.xlane.xlu0 %4620
    %v4622 = vsel %vm581, %v4612, 0.0
    %4623 = vadd.xlane.f32.xlu0 %v4622
    %v4624 = vpop.xlane.xlu0 %4623
    %v4625 = vsel %vm581, %v4614, 0.0
    %4626 = vadd.xlane.f32.xlu0 %v4625
    %v4627 = vpop.xlane.xlu0 %4626
    %v4628 = vsel %vm581, %v4616, 0.0
    %4629 = vadd.xlane.f32.xlu0 %v4628
    %v4630 = vpop.xlane.xlu0 %4629
    %v4631 = vsel %vm581, %v4618, 0.0
    %4632 = vadd.xlane.f32.xlu0 %v4631
    %v4633 = vpop.xlane.xlu0 %4632
    %v4634 = vrcp.pop %v4621
    %v4635 = vrcp.pop %v4624
    %v4636 = vrcp.pop %v4627
    %v4637 = vrcp.pop %v4630
    %v4638 = vrcp.pop %v4633
    %v4639 = vmul.f32 %v4610, %v4634
    %v4640 = vmul.f32 %v4612, %v4635
    %v4641 = vmul.f32 %v4614, %v4636
    %v4642 = vmul.f32 %v4616, %v4637
    %v4643 = vmul.f32 %v4618, %v4638
    %v4644 = vpack.c.bf16 %v4640, %v4639
    %v4645 = vpack.c.bf16 %v4642, %v4641
    %v4646 = vpack.c.bf16 %v4643, %v4643
    %4647 = vrot.lane.b32.xlu0 %v4283, 56
    %v4648 = vpop.permute.xlu0 %4647
    %4649 = vrot.lane.b32.xlu0 %v4284, 56
    %v4650 = vpop.permute.xlu0 %4649
    %4651 = vrot.lane.b32.xlu0 %v4285, 56
    %v4652 = vpop.permute.xlu0 %4651
    %v4656 = vsel %vm581, %v4644, 0
    %v4659 = vsel %vm581, %v4645, 0
    %v4662 = vsel %vm581, %v4646, 0
    %v4665 = vsel %vm103, %v4652, 0
    %4667 = vmatprep.subr.bf16.mxu0 0
    %4668 = vmatpush1.bf16.msra.mxu0 %v4648
    %4669 = vmatprep.subr.bf16.mxu0 0
    %4670 = vmatpush1.bf16.msra.mxu0 %v4650
    %4671 = vmatprep.subr.bf16.mxu0 0
    %4672 = vmatpush1.bf16.msra.mxu0 %v4665
    %4673 = vmatprep.subr.bf16.mxu0 0
    %4674 = vmatpush1.bf16.msra.mxu0 0
    %4675 = vmatprep.subr.bf16.mxu0 0
    %4676 = vmatpush1.bf16.msra.mxu0 0
    %4677 = vmatprep.subr.bf16.mxu0 0
    %4678 = vmatpush1.bf16.msra.mxu0 0
    %4679 = vmatprep.subr.bf16.mxu0 0
    %4680 = vmatpush1.bf16.msra.mxu0 0
    %4681 = vmatprep.subr.bf16.mxu0 0
    %4682 = vmatpush1.bf16.msra.mxu0 0
    %4683 = vmatprep.subr.bf16.mxu0 0
    %4684 = vmatpush1.bf16.msra.mxu0 0
    %4685 = vmatprep.subr.bf16.mxu0 0
    %4686 = vmatpush1.bf16.msra.mxu0 0
    %4687 = vmatprep.subr.bf16.mxu0 0
    %4688 = vmatpush1.bf16.msra.mxu0 0
    %4689 = vmatprep.subr.bf16.mxu0 0
    %4690 = vmatpush1.bf16.msra.mxu0 0
    %4691 = vmatprep.subr.bf16.mxu0 0
    %4692 = vmatpush1.bf16.msra.mxu0 0
    %4693 = vmatprep.subr.bf16.mxu0 0
    %4694 = vmatpush1.bf16.msra.mxu0 0
    %4695 = vmatprep.subr.bf16.mxu0 0
    %4696 = vmatpush1.bf16.msra.mxu0 0
    %4697 = vmatprep.subr.bf16.mxu0 0
    %4698 = vmatpush1.bf16.msra.mxu0 0
    %4699 = vmatprep.mubr.bf16.mxu0 0
    %4700 = vmatmul.mubr.bf16.gmra.mrb[0].mxu0 %v4656
    %v4701 = vpop.f32.mrb[0].mxu0
    %v4702 = vadd.f32 0.0, %v4701
    %v4703 = vpop.f32.mrb[0].mxu0
    %v4704 = vpop.f32.mrb[0].mxu0
    %v4705 = vadd.f32 0.0, %v4704
    %v4706 = vpop.f32.mrb[0].mxu0
    %4707 = vmatprep.mubr.bf16.mxu0 0
    %4708 = vmatmul.mubr.bf16.gmra.mrb[0].mxu0 %v4659
    %v4709 = vpop.f32.mrb[0].mxu0
    %v4710 = vadd.f32 0.0, %v4709
    %v4711 = vpop.f32.mrb[0].mxu0
    %v4712 = vpop.f32.mrb[0].mxu0
    %v4713 = vadd.f32 0.0, %v4712
    %v4714 = vpop.f32.mrb[0].mxu0
    %4715 = vmatprep.mubr.bf16.mxu0 0
    %4716 = vmatmul.mubr.bf16.gmra.mrb[0].mxu0 %v4662
    %v4717 = vpop.f32.mrb[0].mxu0
    %v4718 = vadd.f32 0.0, %v4717
    %v4719 = vpop.f32.mrb[0].mxu0
    %v4720 = vpop.f32.mrb[0].mxu0
    %v4721 = vpop.f32.mrb[0].mxu0
    %4722 = vdwg.mxu0
    %4723 = vrot.lane.b32.xlu0 %v4283, 112
    %v4724 = vpop.permute.xlu0 %4723
    %4725 = vrot.lane.b32.xlu0 %v4284, 112
    %v4726 = vpop.permute.xlu0 %4725
    %4727 = vrot.lane.b32.xlu0 %v4285, 112
    %v4728 = vpop.permute.xlu0 %4727
    %4729 = vrot.lane.b32.xlu0 %v4283, 80
    %v4730 = vpop.permute.xlu0 %4729
    %4731 = vrot.lane.b32.xlu0 %v4284, 80
    %v4732 = vpop.permute.xlu0 %4731
    %4733 = vrot.lane.b32.xlu0 %v4285, 80
    %v4734 = vpop.permute.xlu0 %4733
    %v4736 = vsel %vm90, %v4724, 0
    %v4739 = vsel %vm90, %v4726, 0
    %v4742 = vsel %vm90, %v4728, 0
    %v4745 = vsel %vm90, %v4730, 0
    %v4748 = vsel %vm90, %v4732, 0
    %v4751 = vsel %vm90, %v4734, 0
    %4753 = vmatprep.subr.bf16.mxu0 0
    %4754 = vmatpush1.bf16.xpose.msra.mxu0 %v4745
    %4755 = vmatprep.subr.bf16.mxu0 0
    %4756 = vmatpush1.bf16.xpose.msra.mxu0 %v4748
    %4757 = vmatprep.subr.bf16.mxu0 0
    %4758 = vmatpush1.bf16.xpose.msra.mxu0 %v4751
    %4759 = vmatprep.subr.bf16.mxu0 0
    %4760 = vmatpush1.bf16.xpose.msra.mxu0 0
    %4761 = vmatprep.subr.bf16.mxu0 0
    %4762 = vmatpush1.bf16.xpose.msra.mxu0 0
    %4763 = vmatprep.subr.bf16.mxu0 0
    %4764 = vmatpush1.bf16.xpose.msra.mxu0 0
    %4765 = vmatprep.subr.bf16.mxu0 0
    %4766 = vmatpush1.bf16.xpose.msra.mxu0 0
    %4767 = vmatprep.subr.bf16.mxu0 0
    %4768 = vmatpush1.bf16.xpose.msra.mxu0 0
    %4769 = vmatprep.subr.bf16.mxu0 0
    %4770 = vmatpush1.bf16.xpose.msra.mxu0 0
    %4771 = vmatprep.subr.bf16.mxu0 0
    %4772 = vmatpush1.bf16.xpose.msra.mxu0 0
    %4773 = vmatprep.subr.bf16.mxu0 0
    %4774 = vmatpush1.bf16.xpose.msra.mxu0 0
    %4775 = vmatprep.subr.bf16.mxu0 0
    %4776 = vmatpush1.bf16.xpose.msra.mxu0 0
    %4777 = vmatprep.subr.bf16.mxu0 0
    %4778 = vmatpush1.bf16.xpose.msra.mxu0 0
    %4779 = vmatprep.subr.bf16.mxu0 0
    %4780 = vmatpush1.bf16.xpose.msra.mxu0 0
    %4781 = vmatprep.subr.bf16.mxu0 0
    %4782 = vmatpush1.bf16.xpose.msra.mxu0 0
    %4783 = vmatprep.subr.bf16.mxu0 0
    %4784 = vmatpush1.bf16.xpose.msra.mxu0 0
    %4785 = vmatprep.mubr.bf16.mxu0 0
    %4786 = vmatmul.mubr.bf16.gmra.mrb[0].mxu0 %v4736
    %v4787 = vpop.f32.mrb[0].mxu0
    %v4788 = vadd.f32 %v224, %v4787
    %v4789 = vpop.f32.mrb[0].mxu0
    %v4790 = vpop.f32.mrb[0].mxu0
    %v4791 = vadd.f32 %v224, %v4790
    %v4792 = vpop.f32.mrb[0].mxu0
    %4793 = vmatprep.mubr.bf16.mxu0 0
    %4794 = vmatmul.mubr.bf16.gmra.mrb[0].mxu0 %v4739
    %v4795 = vpop.f32.mrb[0].mxu0
    %v4796 = vadd.f32 %v224, %v4795
    %v4797 = vpop.f32.mrb[0].mxu0
    %v4798 = vpop.f32.mrb[0].mxu0
    %v4799 = vadd.f32 %v224, %v4798
    %v4800 = vpop.f32.mrb[0].mxu0
    %4801 = vmatprep.mubr.bf16.mxu0 0
    %4802 = vmatmul.mubr.bf16.gmra.mrb[0].mxu0 %v4742
    %v4803 = vpop.f32.mrb[0].mxu0
    %v4804 = vadd.f32 %v224, %v4803
    %v4805 = vpop.f32.mrb[0].mxu0
    %v4806 = vpop.f32.mrb[0].mxu0
    %v4807 = vpop.f32.mrb[0].mxu0
    %4808 = vdwg.mxu0
    %v4809 = vsel %vm581, %v4788, -inf
    %4810 = vmax.xlane.f32.xlu0 %v4809
    %v4811 = vpop.xlane.xlu0 %4810
    %v4812 = vsel %vm581, %v4791, -inf
    %4813 = vmax.xlane.f32.xlu0 %v4812
    %v4814 = vpop.xlane.xlu0 %4813
    %v4815 = vsel %vm581, %v4796, -inf
    %4816 = vmax.xlane.f32.xlu0 %v4815
    %v4817 = vpop.xlane.xlu0 %4816
    %v4818 = vsel %vm581, %v4799, -inf
    %4819 = vmax.xlane.f32.xlu0 %v4818
    %v4820 = vpop.xlane.xlu0 %4819
    %v4821 = vsel %vm581, %v4804, -inf
    %4822 = vmax.xlane.f32.xlu0 %v4821
    %v4823 = vpop.xlane.xlu0 %4822
    %v4824 = vsub.f32 %v4788, %v4811
    %v4825 = vsub.f32 %v4791, %v4814
    %v4826 = vsub.f32 %v4796, %v4817
    %v4827 = vsub.f32 %v4799, %v4820
    %v4828 = vsub.f32 %v4804, %v4823
    %v4829 = vmul.f32 %v4824, 1.442695
    %v4830 = vpow.pop %v4829
    %v4831 = vmul.f32 %v4825, 1.442695
    %v4832 = vpow.pop %v4831
    %v4833 = vmul.f32 %v4826, 1.442695
    %v4834 = vpow.pop %v4833
    %v4835 = vmul.f32 %v4827, 1.442695
    %v4836 = vpow.pop %v4835
    %v4837 = vmul.f32 %v4828, 1.442695
    %v4838 = vpow.pop %v4837
    %v4839 = vsel %vm581, %v4830, 0.0
    %4840 = vadd.xlane.f32.xlu0 %v4839
    %v4841 = vpop.xlane.xlu0 %4840
    %v4842 = vsel %vm581, %v4832, 0.0
    %4843 = vadd.xlane.f32.xlu0 %v4842
    %v4844 = vpop.xlane.xlu0 %4843
    %v4845 = vsel %vm581, %v4834, 0.0
    %4846 = vadd.xlane.f32.xlu0 %v4845
    %v4847 = vpop.xlane.xlu0 %4846
    %v4848 = vsel %vm581, %v4836, 0.0
    %4849 = vadd.xlane.f32.xlu0 %v4848
    %v4850 = vpop.xlane.xlu0 %4849
    %v4851 = vsel %vm581, %v4838, 0.0
    %4852 = vadd.xlane.f32.xlu0 %v4851
    %v4853 = vpop.xlane.xlu0 %4852
    %v4854 = vrcp.pop %v4841
    %v4855 = vrcp.pop %v4844
    %v4856 = vrcp.pop %v4847
    %v4857 = vrcp.pop %v4850
    %v4858 = vrcp.pop %v4853
    %v4859 = vmul.f32 %v4830, %v4854
    %v4860 = vmul.f32 %v4832, %v4855
    %v4861 = vmul.f32 %v4834, %v4856
    %v4862 = vmul.f32 %v4836, %v4857
    %v4863 = vmul.f32 %v4838, %v4858
    %v4864 = vpack.c.bf16 %v4860, %v4859
    %v4865 = vpack.c.bf16 %v4862, %v4861
    %v4866 = vpack.c.bf16 %v4863, %v4863
    %4867 = vrot.lane.b32.xlu0 %v4283, 48
    %v4868 = vpop.permute.xlu0 %4867
    %4869 = vrot.lane.b32.xlu0 %v4284, 48
    %v4870 = vpop.permute.xlu0 %4869
    %4871 = vrot.lane.b32.xlu0 %v4285, 48
    %v4872 = vpop.permute.xlu0 %4871
    %v4876 = vsel %vm581, %v4864, 0
    %v4879 = vsel %vm581, %v4865, 0
    %v4882 = vsel %vm581, %v4866, 0
    %v4885 = vsel %vm103, %v4872, 0
    %4887 = vmatprep.subr.bf16.mxu0 0
    %4888 = vmatpush1.bf16.msra.mxu0 %v4868
    %4889 = vmatprep.subr.bf16.mxu0 0
    %4890 = vmatpush1.bf16.msra.mxu0 %v4870
    %4891 = vmatprep.subr.bf16.mxu0 0
    %4892 = vmatpush1.bf16.msra.mxu0 %v4885
    %4893 = vmatprep.subr.bf16.mxu0 0
    %4894 = vmatpush1.bf16.msra.mxu0 0
    %4895 = vmatprep.subr.bf16.mxu0 0
    %4896 = vmatpush1.bf16.msra.mxu0 0
    %4897 = vmatprep.subr.bf16.mxu0 0
    %4898 = vmatpush1.bf16.msra.mxu0 0
    %4899 = vmatprep.subr.bf16.mxu0 0
    %4900 = vmatpush1.bf16.msra.mxu0 0
    %4901 = vmatprep.subr.bf16.mxu0 0
    %4902 = vmatpush1.bf16.msra.mxu0 0
    %4903 = vmatprep.subr.bf16.mxu0 0
    %4904 = vmatpush1.bf16.msra.mxu0 0
    %4905 = vmatprep.subr.bf16.mxu0 0
    %4906 = vmatpush1.bf16.msra.mxu0 0
    %4907 = vmatprep.subr.bf16.mxu0 0
    %4908 = vmatpush1.bf16.msra.mxu0 0
    %4909 = vmatprep.subr.bf16.mxu0 0
    %4910 = vmatpush1.bf16.msra.mxu0 0
    %4911 = vmatprep.subr.bf16.mxu0 0
    %4912 = vmatpush1.bf16.msra.mxu0 0
    %4913 = vmatprep.subr.bf16.mxu0 0
    %4914 = vmatpush1.bf16.msra.mxu0 0
    %4915 = vmatprep.subr.bf16.mxu0 0
    %4916 = vmatpush1.bf16.msra.mxu0 0
    %4917 = vmatprep.subr.bf16.mxu0 0
    %4918 = vmatpush1.bf16.msra.mxu0 0
    %4919 = vmatprep.mubr.bf16.mxu0 0
    %4920 = vmatmul.mubr.bf16.gmra.mrb[0].mxu0 %v4876
    %v4921 = vpop.f32.mrb[0].mxu0
    %v4922 = vadd.f32 0.0, %v4921
    %v4923 = vpop.f32.mrb[0].mxu0
    %v4924 = vpop.f32.mrb[0].mxu0
    %v4925 = vadd.f32 0.0, %v4924
    %v4926 = vpop.f32.mrb[0].mxu0
    %4927 = vmatprep.mubr.bf16.mxu0 0
    %4928 = vmatmul.mubr.bf16.gmra.mrb[0].mxu0 %v4879
    %v4929 = vpop.f32.mrb[0].mxu0
    %v4930 = vadd.f32 0.0, %v4929
    %v4931 = vpop.f32.mrb[0].mxu0
    %v4932 = vpop.f32.mrb[0].mxu0
    %v4933 = vadd.f32 0.0, %v4932
    %v4934 = vpop.f32.mrb[0].mxu0
    %4935 = vmatprep.mubr.bf16.mxu0 0
    %4936 = vmatmul.mubr.bf16.gmra.mrb[0].mxu0 %v4882
    %v4937 = vpop.f32.mrb[0].mxu0
    %v4938 = vadd.f32 0.0, %v4937
    %v4939 = vpop.f32.mrb[0].mxu0
    %v4940 = vpop.f32.mrb[0].mxu0
    %v4941 = vpop.f32.mrb[0].mxu0
    %4942 = vdwg.mxu0
    %4943 = vrot.lane.b32.xlu0 %v4283, 104
    %v4944 = vpop.permute.xlu0 %4943
    %4945 = vrot.lane.b32.xlu0 %v4284, 104
    %v4946 = vpop.permute.xlu0 %4945
    %4947 = vrot.lane.b32.xlu0 %v4285, 104
    %v4948 = vpop.permute.xlu0 %4947
    %4949 = vrot.lane.b32.xlu0 %v4283, 72
    %v4950 = vpop.permute.xlu0 %4949
    %4951 = vrot.lane.b32.xlu0 %v4284, 72
    %v4952 = vpop.permute.xlu0 %4951
    %4953 = vrot.lane.b32.xlu0 %v4285, 72
    %v4954 = vpop.permute.xlu0 %4953
    %v4956 = vsel %vm90, %v4944, 0
    %v4959 = vsel %vm90, %v4946, 0
    %v4962 = vsel %vm90, %v4948, 0
    %v4965 = vsel %vm90, %v4950, 0
    %v4968 = vsel %vm90, %v4952, 0
    %v4971 = vsel %vm90, %v4954, 0
    %4973 = vmatprep.subr.bf16.mxu0 0
    %4974 = vmatpush1.bf16.xpose.msra.mxu0 %v4965
    %4975 = vmatprep.subr.bf16.mxu0 0
    %4976 = vmatpush1.bf16.xpose.msra.mxu0 %v4968
    %4977 = vmatprep.subr.bf16.mxu0 0
    %4978 = vmatpush1.bf16.xpose.msra.mxu0 %v4971
    %4979 = vmatprep.subr.bf16.mxu0 0
    %4980 = vmatpush1.bf16.xpose.msra.mxu0 0
    %4981 = vmatprep.subr.bf16.mxu0 0
    %4982 = vmatpush1.bf16.xpose.msra.mxu0 0
    %4983 = vmatprep.subr.bf16.mxu0 0
    %4984 = vmatpush1.bf16.xpose.msra.mxu0 0
    %4985 = vmatprep.subr.bf16.mxu0 0
    %4986 = vmatpush1.bf16.xpose.msra.mxu0 0
    %4987 = vmatprep.subr.bf16.mxu0 0
    %4988 = vmatpush1.bf16.xpose.msra.mxu0 0
    %4989 = vmatprep.subr.bf16.mxu0 0
    %4990 = vmatpush1.bf16.xpose.msra.mxu0 0
    %4991 = vmatprep.subr.bf16.mxu0 0
    %4992 = vmatpush1.bf16.xpose.msra.mxu0 0
    %4993 = vmatprep.subr.bf16.mxu0 0
    %4994 = vmatpush1.bf16.xpose.msra.mxu0 0
    %4995 = vmatprep.subr.bf16.mxu0 0
    %4996 = vmatpush1.bf16.xpose.msra.mxu0 0
    %4997 = vmatprep.subr.bf16.mxu0 0
    %4998 = vmatpush1.bf16.xpose.msra.mxu0 0
    %4999 = vmatprep.subr.bf16.mxu0 0
    %5000 = vmatpush1.bf16.xpose.msra.mxu0 0
    %5001 = vmatprep.subr.bf16.mxu0 0
    %5002 = vmatpush1.bf16.xpose.msra.mxu0 0
    %5003 = vmatprep.subr.bf16.mxu0 0
    %5004 = vmatpush1.bf16.xpose.msra.mxu0 0
    %5005 = vmatprep.mubr.bf16.mxu0 0
    %5006 = vmatmul.mubr.bf16.gmra.mrb[0].mxu0 %v4956
    %v5007 = vpop.f32.mrb[0].mxu0
    %v5008 = vadd.f32 %v224, %v5007
    %v5009 = vpop.f32.mrb[0].mxu0
    %v5010 = vpop.f32.mrb[0].mxu0
    %v5011 = vadd.f32 %v224, %v5010
    %v5012 = vpop.f32.mrb[0].mxu0
    %5013 = vmatprep.mubr.bf16.mxu0 0
    %5014 = vmatmul.mubr.bf16.gmra.mrb[0].mxu0 %v4959
    %v5015 = vpop.f32.mrb[0].mxu0
    %v5016 = vadd.f32 %v224, %v5015
    %v5017 = vpop.f32.mrb[0].mxu0
    %v5018 = vpop.f32.mrb[0].mxu0
    %v5019 = vadd.f32 %v224, %v5018
    %v5020 = vpop.f32.mrb[0].mxu0
    %5021 = vmatprep.mubr.bf16.mxu0 0
    %5022 = vmatmul.mubr.bf16.gmra.mrb[0].mxu0 %v4962
    %v5023 = vpop.f32.mrb[0].mxu0
    %v5024 = vadd.f32 %v224, %v5023
    %v5025 = vpop.f32.mrb[0].mxu0
    %v5026 = vpop.f32.mrb[0].mxu0
    %v5027 = vpop.f32.mrb[0].mxu0
    %5028 = vdwg.mxu0
    %v5029 = vsel %vm581, %v5008, -inf
    %5030 = vmax.xlane.f32.xlu0 %v5029
    %v5031 = vpop.xlane.xlu0 %5030
    %v5032 = vsel %vm581, %v5011, -inf
    %5033 = vmax.xlane.f32.xlu0 %v5032
    %v5034 = vpop.xlane.xlu0 %5033
    %v5035 = vsel %vm581, %v5016, -inf
    %5036 = vmax.xlane.f32.xlu0 %v5035
    %v5037 = vpop.xlane.xlu0 %5036
    %v5038 = vsel %vm581, %v5019, -inf
    %5039 = vmax.xlane.f32.xlu0 %v5038
    %v5040 = vpop.xlane.xlu0 %5039
    %v5041 = vsel %vm581, %v5024, -inf
    %5042 = vmax.xlane.f32.xlu0 %v5041
    %v5043 = vpop.xlane.xlu0 %5042
    %v5044 = vsub.f32 %v5008, %v5031
    %v5045 = vsub.f32 %v5011, %v5034
    %v5046 = vsub.f32 %v5016, %v5037
    %v5047 = vsub.f32 %v5019, %v5040
    %v5048 = vsub.f32 %v5024, %v5043
    %v5049 = vmul.f32 %v5044, 1.442695
    %v5050 = vpow.pop %v5049
    %v5051 = vmul.f32 %v5045, 1.442695
    %v5052 = vpow.pop %v5051
    %v5053 = vmul.f32 %v5046, 1.442695
    %v5054 = vpow.pop %v5053
    %v5055 = vmul.f32 %v5047, 1.442695
    %v5056 = vpow.pop %v5055
    %v5057 = vmul.f32 %v5048, 1.442695
    %v5058 = vpow.pop %v5057
    %v5059 = vsel %vm581, %v5050, 0.0
    %5060 = vadd.xlane.f32.xlu0 %v5059
    %v5061 = vpop.xlane.xlu0 %5060
    %v5062 = vsel %vm581, %v5052, 0.0
    %5063 = vadd.xlane.f32.xlu0 %v5062
    %v5064 = vpop.xlane.xlu0 %5063
    %v5065 = vsel %vm581, %v5054, 0.0
    %5066 = vadd.xlane.f32.xlu0 %v5065
    %v5067 = vpop.xlane.xlu0 %5066
    %v5068 = vsel %vm581, %v5056, 0.0
    %5069 = vadd.xlane.f32.xlu0 %v5068
    %v5070 = vpop.xlane.xlu0 %5069
    %v5071 = vsel %vm581, %v5058, 0.0
    %5072 = vadd.xlane.f32.xlu0 %v5071
    %v5073 = vpop.xlane.xlu0 %5072
    %v5074 = vrcp.pop %v5061
    %v5075 = vrcp.pop %v5064
    %v5076 = vrcp.pop %v5067
    %v5077 = vrcp.pop %v5070
    %v5078 = vrcp.pop %v5073
    %v5079 = vmul.f32 %v5050, %v5074
    %v5080 = vmul.f32 %v5052, %v5075
    %v5081 = vmul.f32 %v5054, %v5076
    %v5082 = vmul.f32 %v5056, %v5077
    %v5083 = vmul.f32 %v5058, %v5078
    %v5084 = vpack.c.bf16 %v5080, %v5079
    %v5085 = vpack.c.bf16 %v5082, %v5081
    %v5086 = vpack.c.bf16 %v5083, %v5083
    %5087 = vrot.lane.b32.xlu0 %v4283, 40
    %v5088 = vpop.permute.xlu0 %5087
    %5089 = vrot.lane.b32.xlu0 %v4284, 40
    %v5090 = vpop.permute.xlu0 %5089
    %5091 = vrot.lane.b32.xlu0 %v4285, 40
    %v5092 = vpop.permute.xlu0 %5091
    %v5096 = vsel %vm581, %v5084, 0
    %v5099 = vsel %vm581, %v5085, 0
    %v5102 = vsel %vm581, %v5086, 0
    %v5105 = vsel %vm103, %v5092, 0
    %5107 = vmatprep.subr.bf16.mxu0 0
    %5108 = vmatpush1.bf16.msra.mxu0 %v5088
    %5109 = vmatprep.subr.bf16.mxu0 0
    %5110 = vmatpush1.bf16.msra.mxu0 %v5090
    %5111 = vmatprep.subr.bf16.mxu0 0
    %5112 = vmatpush1.bf16.msra.mxu0 %v5105
    %5113 = vmatprep.subr.bf16.mxu0 0
    %5114 = vmatpush1.bf16.msra.mxu0 0
    %5115 = vmatprep.subr.bf16.mxu0 0
    %5116 = vmatpush1.bf16.msra.mxu0 0
    %5117 = vmatprep.subr.bf16.mxu0 0
    %5118 = vmatpush1.bf16.msra.mxu0 0
    %5119 = vmatprep.subr.bf16.mxu0 0
    %5120 = vmatpush1.bf16.msra.mxu0 0
    %5121 = vmatprep.subr.bf16.mxu0 0
    %5122 = vmatpush1.bf16.msra.mxu0 0
    %5123 = vmatprep.subr.bf16.mxu0 0
    %5124 = vmatpush1.bf16.msra.mxu0 0
    %5125 = vmatprep.subr.bf16.mxu0 0
    %5126 = vmatpush1.bf16.msra.mxu0 0
    %5127 = vmatprep.subr.bf16.mxu0 0
    %5128 = vmatpush1.bf16.msra.mxu0 0
    %5129 = vmatprep.subr.bf16.mxu0 0
    %5130 = vmatpush1.bf16.msra.mxu0 0
    %5131 = vmatprep.subr.bf16.mxu0 0
    %5132 = vmatpush1.bf16.msra.mxu0 0
    %5133 = vmatprep.subr.bf16.mxu0 0
    %5134 = vmatpush1.bf16.msra.mxu0 0
    %5135 = vmatprep.subr.bf16.mxu0 0
    %5136 = vmatpush1.bf16.msra.mxu0 0
    %5137 = vmatprep.subr.bf16.mxu0 0
    %5138 = vmatpush1.bf16.msra.mxu0 0
    %5139 = vmatprep.mubr.bf16.mxu0 0
    %5140 = vmatmul.mubr.bf16.gmra.mrb[0].mxu0 %v5096
    %v5141 = vpop.f32.mrb[0].mxu0
    %v5142 = vadd.f32 0.0, %v5141
    %v5143 = vpop.f32.mrb[0].mxu0
    %v5144 = vpop.f32.mrb[0].mxu0
    %v5145 = vadd.f32 0.0, %v5144
    %v5146 = vpop.f32.mrb[0].mxu0
    %5147 = vmatprep.mubr.bf16.mxu0 0
    %5148 = vmatmul.mubr.bf16.gmra.mrb[0].mxu0 %v5099
    %v5149 = vpop.f32.mrb[0].mxu0
    %v5150 = vadd.f32 0.0, %v5149
    %v5151 = vpop.f32.mrb[0].mxu0
    %v5152 = vpop.f32.mrb[0].mxu0
    %v5153 = vadd.f32 0.0, %v5152
    %v5154 = vpop.f32.mrb[0].mxu0
    %5155 = vmatprep.mubr.bf16.mxu0 0
    %5156 = vmatmul.mubr.bf16.gmra.mrb[0].mxu0 %v5102
    %v5157 = vpop.f32.mrb[0].mxu0
    %v5158 = vadd.f32 0.0, %v5157
    %v5159 = vpop.f32.mrb[0].mxu0
    %v5160 = vpop.f32.mrb[0].mxu0
    %v5161 = vpop.f32.mrb[0].mxu0
    %5162 = vdwg.mxu0
    %5168 = vrot.lane.b32.xlu0 %v4702, 8
    %v5169 = vpop.permute.xlu0 %5168
    %5170 = vrot.lane.b32.xlu0 %v4705, 8
    %v5171 = vpop.permute.xlu0 %5170
    %5172 = vrot.lane.b32.xlu0 %v4710, 8
    %v5173 = vpop.permute.xlu0 %5172
    %5174 = vrot.lane.b32.xlu0 %v4713, 8
    %v5175 = vpop.permute.xlu0 %5174
    %5176 = vrot.lane.b32.xlu0 %v4718, 8
    %v5177 = vpop.permute.xlu0 %5176
    %5188 = vrot.lane.b32.xlu0 %v4922, 16
    %v5189 = vpop.permute.xlu0 %5188
    %5190 = vrot.lane.b32.xlu0 %v4925, 16
    %v5191 = vpop.permute.xlu0 %5190
    %5192 = vrot.lane.b32.xlu0 %v4930, 16
    %v5193 = vpop.permute.xlu0 %5192
    %5194 = vrot.lane.b32.xlu0 %v4933, 16
    %v5195 = vpop.permute.xlu0 %5194
    %5196 = vrot.lane.b32.xlu0 %v4938, 16
    %v5197 = vpop.permute.xlu0 %5196
    %5208 = vrot.lane.b32.xlu0 %v5142, 24
    %v5209 = vpop.permute.xlu0 %5208
    %5210 = vrot.lane.b32.xlu0 %v5145, 24
    %v5211 = vpop.permute.xlu0 %5210
    %5212 = vrot.lane.b32.xlu0 %v5150, 24
    %v5213 = vpop.permute.xlu0 %5212
    %5214 = vrot.lane.b32.xlu0 %v5153, 24
    %v5215 = vpop.permute.xlu0 %5214
    %5216 = vrot.lane.b32.xlu0 %v5158, 24
    %v5217 = vpop.permute.xlu0 %5216
    %v5223 = vsel %vm90, %v4482, %v5169
    %v5224 = vsel %vm90, %v4485, %v5171
    %v5225 = vsel %vm90, %v4490, %v5173
    %v5226 = vsel %vm90, %v4493, %v5175
    %v5227 = vsel %vm90, %v4498, %v5177
    %v5228 = vsel %vm1441, %v5223, %v5189
    %v5229 = vsel %vm1441, %v5224, %v5191
    %v5230 = vsel %vm1441, %v5225, %v5193
    %v5231 = vsel %vm1441, %v5226, %v5195
    %v5232 = vsel %vm1441, %v5227, %v5197
    %v5233 = vsel %vm1447, %v5228, %v5209
    %v5234 = vsel %vm1447, %v5229, %v5211
    %v5235 = vsel %vm1447, %v5230, %v5213
    %v5236 = vsel %vm1447, %v5231, %v5215
    %v5237 = vsel %vm1447, %v5232, %v5217
    %v5238 = vpack.c.bf16 %v4279, %v4278
    %v5239 = vpack.c.bf16 %v4281, %v4280
    %v5240 = vpack.c.bf16 %v5233, %v4282
    %v5241 = vpack.c.bf16 %v5235, %v5234
    %v5242 = vpack.c.bf16 %v5237, %v5236
    %s5243 = scalar_lea.vmem %s6, 16
    %v5244 = vld [vmem:[%s5243] sm:$0xf]
    %v5245 = vld [vmem:[%s5243 + $0x4] sm:$0xf]
    %v5246 = vld [vmem:[%s5243 + $0x8] sm:$0xf]
    %v5247 = vld [vmem:[%s5243 + $0xc] sm:$0xf]
    %v5252 = vunpack.c.l.b16 %v5244
    %v5253 = vunpack.c.l.b16 %v5245
    %v5254 = vunpack.c.l.b16 %v5246
    %v5255 = vunpack.c.l.b16 %v5247
    %v5256 = vpack.c.b16 %v5253, %v5252
    %v5257 = vpack.c.b16 %v5255, %v5254
    %v5261 = vsel %vm226, %v5238, 0
    %v5264 = vsel %vm226, %v5239, 0
    %v5267 = vsel %vm226, %v5240, 0
    %v5270 = vsel %vm226, %v5241, 0
    %v5273 = vsel %vm226, %v5242, 0
    %5275 = vmatprep.subr.bf16.mxu0 0
    %5276 = vmatpush1.bf16.msra.mxu0 %v5256
    %5277 = vmatprep.subr.bf16.mxu0 0
    %5278 = vmatpush1.bf16.msra.mxu0 %v5257
    %5279 = vmatprep.subr.bf16.mxu0 0
    %5280 = vmatpush1.bf16.msra.mxu0 0
    %5281 = vmatprep.subr.bf16.mxu0 0
    %5282 = vmatpush1.bf16.msra.mxu0 0
    %5283 = vmatprep.subr.bf16.mxu0 0
    %5284 = vmatpush1.bf16.msra.mxu0 0
    %5285 = vmatprep.subr.bf16.mxu0 0
    %5286 = vmatpush1.bf16.msra.mxu0 0
    %5287 = vmatprep.subr.bf16.mxu0 0
    %5288 = vmatpush1.bf16.msra.mxu0 0
    %5289 = vmatprep.subr.bf16.mxu0 0
    %5290 = vmatpush1.bf16.msra.mxu0 0
    %5291 = vmatprep.subr.bf16.mxu0 0
    %5292 = vmatpush1.bf16.msra.mxu0 0
    %5293 = vmatprep.subr.bf16.mxu0 0
    %5294 = vmatpush1.bf16.msra.mxu0 0
    %5295 = vmatprep.subr.bf16.mxu0 0
    %5296 = vmatpush1.bf16.msra.mxu0 0
    %5297 = vmatprep.subr.bf16.mxu0 0
    %5298 = vmatpush1.bf16.msra.mxu0 0
    %5299 = vmatprep.subr.bf16.mxu0 0
    %5300 = vmatpush1.bf16.msra.mxu0 0
    %5301 = vmatprep.subr.bf16.mxu0 0
    %5302 = vmatpush1.bf16.msra.mxu0 0
    %5303 = vmatprep.subr.bf16.mxu0 0
    %5304 = vmatpush1.bf16.msra.mxu0 0
    %5305 = vmatprep.subr.bf16.mxu0 0
    %5306 = vmatpush1.bf16.msra.mxu0 0
    %5307 = vmatprep.mubr.bf16.mxu0 0
    %5308 = vmatmul.mubr.bf16.gmra.mrb[0].mxu0 %v5261
    %v5309 = vpop.f32.mrb[0].mxu0
    %v5310 = vadd.f32 0.0, %v5309
    %v5311 = vpop.f32.mrb[0].mxu0
    %v5312 = vpop.f32.mrb[0].mxu0
    %v5313 = vadd.f32 0.0, %v5312
    %v5314 = vpop.f32.mrb[0].mxu0
    %5315 = vmatprep.mubr.bf16.mxu0 0
    %5316 = vmatmul.mubr.bf16.gmra.mrb[0].mxu0 %v5264
    %v5317 = vpop.f32.mrb[0].mxu0
    %v5318 = vadd.f32 0.0, %v5317
    %v5319 = vpop.f32.mrb[0].mxu0
    %v5320 = vpop.f32.mrb[0].mxu0
    %v5321 = vadd.f32 0.0, %v5320
    %v5322 = vpop.f32.mrb[0].mxu0
    %5323 = vmatprep.mubr.bf16.mxu0 0
    %5324 = vmatmul.mubr.bf16.gmra.mrb[0].mxu0 %v5267
    %v5325 = vpop.f32.mrb[0].mxu0
    %v5326 = vadd.f32 0.0, %v5325
    %v5327 = vpop.f32.mrb[0].mxu0
    %v5328 = vpop.f32.mrb[0].mxu0
    %v5329 = vadd.f32 0.0, %v5328
    %v5330 = vpop.f32.mrb[0].mxu0
    %5331 = vmatprep.mubr.bf16.mxu0 0
    %5332 = vmatmul.mubr.bf16.gmra.mrb[0].mxu0 %v5270
    %v5333 = vpop.f32.mrb[0].mxu0
    %v5334 = vadd.f32 0.0, %v5333
    %v5335 = vpop.f32.mrb[0].mxu0
    %v5336 = vpop.f32.mrb[0].mxu0
    %v5337 = vadd.f32 0.0, %v5336
    %v5338 = vpop.f32.mrb[0].mxu0
    %5339 = vmatprep.mubr.bf16.mxu0 0
    %5340 = vmatmul.mubr.bf16.gmra.mrb[0].mxu0 %v5273
    %v5341 = vpop.f32.mrb[0].mxu0
    %v5342 = vadd.f32 0.0, %v5341
    %v5343 = vpop.f32.mrb[0].mxu0
    %v5344 = vpop.f32.mrb[0].mxu0
    %v5345 = vadd.f32 0.0, %v5344
    %v5346 = vpop.f32.mrb[0].mxu0
    %5347 = vdwg.mxu0
    %v5348 = vadd.f32 %v3048, %v5310
    %v5349 = vadd.f32 %v3049, %v5313
    %v5350 = vadd.f32 %v3050, %v5318
    %v5351 = vadd.f32 %v3051, %v5321
    %v5352 = vadd.f32 %v3052, %v5326
    %v5353 = vadd.f32 %v3053, %v5329
    %v5354 = vadd.f32 %v3054, %v5334
    %v5355 = vadd.f32 %v3055, %v5337
    %v5356 = vadd.f32 %v3056, %v5342
    %v5357 = vadd.f32 %v3057, %v5345
    %v5358 = vlaneseq
    %v5359 = vshrl.u32 %v5358, 7
    %v5360 = vsub.s32 2, %v5359
    %v5361 = vrot.slane %v3059, %v5360
    %v5362 = vadd.f32 %v5348, %v5361
    %v5363 = vadd.f32 %v5349, %v5361
    %v5364 = vadd.f32 %v5350, %v5361
    %v5365 = vadd.f32 %v5351, %v5361
    %v5366 = vadd.f32 %v5352, %v5361
    %v5367 = vadd.f32 %v5353, %v5361
    %v5368 = vadd.f32 %v5354, %v5361
    %v5369 = vadd.f32 %v5355, %v5361
    %v5370 = vadd.f32 %v5356, %v5361
    %v5371 = vadd.f32 %v5357, %v5361
    %v5372 = vsel %vm226, %v5362, 0.0
    %5373 = vadd.xlane.f32.xlu0 %v5372
    %v5374 = vpop.xlane.xlu0 %5373
    %v5375 = vsel %vm226, %v5363, 0.0
    %5376 = vadd.xlane.f32.xlu0 %v5375
    %v5377 = vpop.xlane.xlu0 %5376
    %v5378 = vsel %vm226, %v5364, 0.0
    %5379 = vadd.xlane.f32.xlu0 %v5378
    %v5380 = vpop.xlane.xlu0 %5379
    %v5381 = vsel %vm226, %v5365, 0.0
    %5382 = vadd.xlane.f32.xlu0 %v5381
    %v5383 = vpop.xlane.xlu0 %5382
    %v5384 = vsel %vm226, %v5366, 0.0
    %5385 = vadd.xlane.f32.xlu0 %v5384
    %v5386 = vpop.xlane.xlu0 %5385
    %v5387 = vsel %vm226, %v5367, 0.0
    %5388 = vadd.xlane.f32.xlu0 %v5387
    %v5389 = vpop.xlane.xlu0 %5388
    %v5390 = vsel %vm226, %v5368, 0.0
    %5391 = vadd.xlane.f32.xlu0 %v5390
    %v5392 = vpop.xlane.xlu0 %5391
    %v5393 = vsel %vm226, %v5369, 0.0
    %5394 = vadd.xlane.f32.xlu0 %v5393
    %v5395 = vpop.xlane.xlu0 %5394
    %v5396 = vsel %vm226, %v5370, 0.0
    %5397 = vadd.xlane.f32.xlu0 %v5396
    %v5398 = vpop.xlane.xlu0 %5397
    %v5399 = vsel %vm226, %v5371, 0.0
    %5400 = vadd.xlane.f32.xlu0 %v5399
    %v5401 = vpop.xlane.xlu0 %5400
    %v5402 = vmul.f32 %v5374, %v257
    %v5403 = vmul.f32 %v5377, %v257
    %v5404 = vmul.f32 %v5380, %v257
    %v5405 = vmul.f32 %v5383, %v257
    %v5406 = vmul.f32 %v5386, %v257
    %v5407 = vmul.f32 %v5389, %v257
    %v5408 = vmul.f32 %v5392, %v257
    %v5409 = vmul.f32 %v5395, %v257
    %v5410 = vmul.f32 %v5398, %v257
    %v5411 = vmul.f32 %v5401, %v257
    %v5412 = vsub.f32 %v5362, %v5402
    %v5413 = vsub.f32 %v5363, %v5403
    %v5414 = vsub.f32 %v5364, %v5404
    %v5415 = vsub.f32 %v5365, %v5405
    %v5416 = vsub.f32 %v5366, %v5406
    %v5417 = vsub.f32 %v5367, %v5407
    %v5418 = vsub.f32 %v5368, %v5408
    %v5419 = vsub.f32 %v5369, %v5409
    %v5420 = vsub.f32 %v5370, %v5410
    %v5421 = vsub.f32 %v5371, %v5411
    %v5422 = vmul.f32 %v5412, %v5412
    %v5423 = vmul.f32 %v5413, %v5413
    %v5424 = vmul.f32 %v5414, %v5414
    %v5425 = vmul.f32 %v5415, %v5415
    %v5426 = vmul.f32 %v5416, %v5416
    %v5427 = vmul.f32 %v5417, %v5417
    %v5428 = vmul.f32 %v5418, %v5418
    %v5429 = vmul.f32 %v5419, %v5419
    %v5430 = vmul.f32 %v5420, %v5420
    %v5431 = vmul.f32 %v5421, %v5421
    %v5432 = vsel %vm226, %v5422, 0.0
    %5433 = vadd.xlane.f32.xlu0 %v5432
    %v5434 = vpop.xlane.xlu0 %5433
    %v5435 = vsel %vm226, %v5423, 0.0
    %5436 = vadd.xlane.f32.xlu0 %v5435
    %v5437 = vpop.xlane.xlu0 %5436
    %v5438 = vsel %vm226, %v5424, 0.0
    %5439 = vadd.xlane.f32.xlu0 %v5438
    %v5440 = vpop.xlane.xlu0 %5439
    %v5441 = vsel %vm226, %v5425, 0.0
    %5442 = vadd.xlane.f32.xlu0 %v5441
    %v5443 = vpop.xlane.xlu0 %5442
    %v5444 = vsel %vm226, %v5426, 0.0
    %5445 = vadd.xlane.f32.xlu0 %v5444
    %v5446 = vpop.xlane.xlu0 %5445
    %v5447 = vsel %vm226, %v5427, 0.0
    %5448 = vadd.xlane.f32.xlu0 %v5447
    %v5449 = vpop.xlane.xlu0 %5448
    %v5450 = vsel %vm226, %v5428, 0.0
    %5451 = vadd.xlane.f32.xlu0 %v5450
    %v5452 = vpop.xlane.xlu0 %5451
    %v5453 = vsel %vm226, %v5429, 0.0
    %5454 = vadd.xlane.f32.xlu0 %v5453
    %v5455 = vpop.xlane.xlu0 %5454
    %v5456 = vsel %vm226, %v5430, 0.0
    %5457 = vadd.xlane.f32.xlu0 %v5456
    %v5458 = vpop.xlane.xlu0 %5457
    %v5459 = vsel %vm226, %v5431, 0.0
    %5460 = vadd.xlane.f32.xlu0 %v5459
    %v5461 = vpop.xlane.xlu0 %5460
    %v5462 = vmul.f32 %v5434, %v257
    %v5463 = vmul.f32 %v5437, %v257
    %v5464 = vmul.f32 %v5440, %v257
    %v5465 = vmul.f32 %v5443, %v257
    %v5466 = vmul.f32 %v5446, %v257
    %v5467 = vmul.f32 %v5449, %v257
    %v5468 = vmul.f32 %v5452, %v257
    %v5469 = vmul.f32 %v5455, %v257
    %v5470 = vmul.f32 %v5458, %v257
    %v5471 = vmul.f32 %v5461, %v257
    %v5472 = vadd.f32 %v5462, 1e-05
    %v5473 = vadd.f32 %v5463, 1e-05
    %v5474 = vadd.f32 %v5464, 1e-05
    %v5475 = vadd.f32 %v5465, 1e-05
    %v5476 = vadd.f32 %v5466, 1e-05
    %v5477 = vadd.f32 %v5467, 1e-05
    %v5478 = vadd.f32 %v5468, 1e-05
    %v5479 = vadd.f32 %v5469, 1e-05
    %v5480 = vadd.f32 %v5470, 1e-05
    %v5481 = vadd.f32 %v5471, 1e-05
    %v5482 = vrsqrt.pop %v5472
    %v5483 = vrsqrt.pop %v5473
    %v5484 = vrsqrt.pop %v5474
    %v5485 = vrsqrt.pop %v5475
    %v5486 = vrsqrt.pop %v5476
    %v5487 = vrsqrt.pop %v5477
    %v5488 = vrsqrt.pop %v5478
    %v5489 = vrsqrt.pop %v5479
    %v5490 = vrsqrt.pop %v5480
    %v5491 = vrsqrt.pop %v5481
    %v5492 = vmul.f32 %v5412, %v5482
    %v5493 = vmul.f32 %v5413, %v5483
    %v5494 = vmul.f32 %v5414, %v5484
    %v5495 = vmul.f32 %v5415, %v5485
    %v5496 = vmul.f32 %v5416, %v5486
    %v5497 = vmul.f32 %v5417, %v5487
    %v5498 = vmul.f32 %v5418, %v5488
    %v5499 = vmul.f32 %v5419, %v5489
    %v5500 = vmul.f32 %v5420, %v5490
    %v5501 = vmul.f32 %v5421, %v5491
    %v5502 = vlaneseq
    %v5503 = vshrl.u32 %v5502, 7
    %v5504 = vsub.s32 3, %v5503
    %v5505 = vrot.slane %v3059, %v5504
    %v5506 = vmul.f32 %v5492, %v5505
    %v5507 = vmul.f32 %v5493, %v5505
    %v5508 = vmul.f32 %v5494, %v5505
    %v5509 = vmul.f32 %v5495, %v5505
    %v5510 = vmul.f32 %v5496, %v5505
    %v5511 = vmul.f32 %v5497, %v5505
    %v5512 = vmul.f32 %v5498, %v5505
    %v5513 = vmul.f32 %v5499, %v5505
    %v5514 = vmul.f32 %v5500, %v5505
    %v5515 = vmul.f32 %v5501, %v5505
    %v5516 = vlaneseq
    %v5517 = vshrl.u32 %v5516, 7
    %v5518 = vsub.s32 4, %v5517
    %v5519 = vrot.slane %v3059, %v5518
    %v5520 = vadd.f32 %v5506, %v5519
    %v5521 = vadd.f32 %v5507, %v5519
    %v5522 = vadd.f32 %v5508, %v5519
    %v5523 = vadd.f32 %v5509, %v5519
    %v5524 = vadd.f32 %v5510, %v5519
    %v5525 = vadd.f32 %v5511, %v5519
    %v5526 = vadd.f32 %v5512, %v5519
    %v5527 = vadd.f32 %v5513, %v5519
    %v5528 = vadd.f32 %v5514, %v5519
    %v5529 = vadd.f32 %v5515, %v5519
    %v5530 = vpack.c.bf16 %v5521, %v5520
    %v5531 = vpack.c.bf16 %v5523, %v5522
    %v5532 = vpack.c.bf16 %v5525, %v5524
    %v5533 = vpack.c.bf16 %v5527, %v5526
    %v5534 = vpack.c.bf16 %v5529, %v5528
    %s5535 = scalar_lea.vmem [#allocation7], 16
    %v5536 = vld [vmem:[%s5535] sm:$0xf]
    %v5537 = vld [vmem:[%s5535 + $0x4] sm:$0xf]
    %v5538 = vld [vmem:[%s5535 + $0x8] sm:$0xf]
    %v5539 = vld [vmem:[%s5535 + $0xc] sm:$0xf]
    %v5540 = vlaneseq
    %v5541 = vshrl.u32 %v5540, 7
    %v5542 = vsub.s32 6, %v5541
    %v5543 = vrot.slane %v3059, %v5542
    %v5548 = vunpack.c.l.b16 %v5536
    %v5549 = vunpack.c.l.b16 %v5537
    %v5550 = vunpack.c.l.b16 %v5538
    %v5551 = vunpack.c.l.b16 %v5539
    %v5552 = vpack.c.b16 %v5549, %v5548
    %v5553 = vpack.c.b16 %v5551, %v5550
    %v5557 = vsel %vm226, %v5530, 0
    %v5560 = vsel %vm226, %v5531, 0
    %v5563 = vsel %vm226, %v5532, 0
    %v5566 = vsel %vm226, %v5533, 0
    %v5569 = vsel %vm226, %v5534, 0
    %5571 = vmatprep.subr.bf16.mxu0 0
    %5572 = vmatpush1.bf16.msra.mxu0 %v5552
    %5573 = vmatprep.subr.bf16.mxu0 0
    %5574 = vmatpush1.bf16.msra.mxu0 %v5553
    %5575 = vmatprep.subr.bf16.mxu0 0
    %5576 = vmatpush1.bf16.msra.mxu0 0
    %5577 = vmatprep.subr.bf16.mxu0 0
    %5578 = vmatpush1.bf16.msra.mxu0 0
    %5579 = vmatprep.subr.bf16.mxu0 0
    %5580 = vmatpush1.bf16.msra.mxu0 0
    %5581 = vmatprep.subr.bf16.mxu0 0
    %5582 = vmatpush1.bf16.msra.mxu0 0
    %5583 = vmatprep.subr.bf16.mxu0 0
    %5584 = vmatpush1.bf16.msra.mxu0 0
    %5585 = vmatprep.subr.bf16.mxu0 0
    %5586 = vmatpush1.bf16.msra.mxu0 0
    %5587 = vmatprep.subr.bf16.mxu0 0
    %5588 = vmatpush1.bf16.msra.mxu0 0
    %5589 = vmatprep.subr.bf16.mxu0 0
    %5590 = vmatpush1.bf16.msra.mxu0 0
    %5591 = vmatprep.subr.bf16.mxu0 0
    %5592 = vmatpush1.bf16.msra.mxu0 0
    %5593 = vmatprep.subr.bf16.mxu0 0
    %5594 = vmatpush1.bf16.msra.mxu0 0
    %5595 = vmatprep.subr.bf16.mxu0 0
    %5596 = vmatpush1.bf16.msra.mxu0 0
    %5597 = vmatprep.subr.bf16.mxu0 0
    %5598 = vmatpush1.bf16.msra.mxu0 0
    %5599 = vmatprep.subr.bf16.mxu0 0
    %5600 = vmatpush1.bf16.msra.mxu0 0
    %5601 = vmatprep.subr.bf16.mxu0 0
    %5602 = vmatpush1.bf16.msra.mxu0 0
    %5603 = vmatprep.mubr.bf16.mxu0 0
    %5604 = vmatmul.mubr.bf16.gmra.mrb[0].mxu0 %v5557
    %v5605 = vpop.f32.mrb[0].mxu0
    %v5606 = vadd.f32 %v5543, %v5605
    %v5607 = vpop.f32.mrb[0].mxu0
    %v5608 = vpop.f32.mrb[0].mxu0
    %v5609 = vadd.f32 %v5543, %v5608
    %v5610 = vpop.f32.mrb[0].mxu0
    %5611 = vmatprep.mubr.bf16.mxu0 0
    %5612 = vmatmul.mubr.bf16.gmra.mrb[0].mxu0 %v5560
    %v5613 = vpop.f32.mrb[0].mxu0
    %v5614 = vadd.f32 %v5543, %v5613
    %v5615 = vpop.f32.mrb[0].mxu0
    %v5616 = vpop.f32.mrb[0].mxu0
    %v5617 = vadd.f32 %v5543, %v5616
    %v5618 = vpop.f32.mrb[0].mxu0
    %5619 = vmatprep.mubr.bf16.mxu0 0
    %5620 = vmatmul.mubr.bf16.gmra.mrb[0].mxu0 %v5563
    %v5621 = vpop.f32.mrb[0].mxu0
    %v5622 = vadd.f32 %v5543, %v5621
    %v5623 = vpop.f32.mrb[0].mxu0
    %v5624 = vpop.f32.mrb[0].mxu0
    %v5625 = vadd.f32 %v5543, %v5624
    %v5626 = vpop.f32.mrb[0].mxu0
    %5627 = vmatprep.mubr.bf16.mxu0 0
    %5628 = vmatmul.mubr.bf16.gmra.mrb[0].mxu0 %v5566
    %v5629 = vpop.f32.mrb[0].mxu0
    %v5630 = vadd.f32 %v5543, %v5629
    %v5631 = vpop.f32.mrb[0].mxu0
    %v5632 = vpop.f32.mrb[0].mxu0
    %v5633 = vadd.f32 %v5543, %v5632
    %v5634 = vpop.f32.mrb[0].mxu0
    %5635 = vmatprep.mubr.bf16.mxu0 0
    %5636 = vmatmul.mubr.bf16.gmra.mrb[0].mxu0 %v5569
    %v5637 = vpop.f32.mrb[0].mxu0
    %v5638 = vadd.f32 %v5543, %v5637
    %v5639 = vpop.f32.mrb[0].mxu0
    %v5640 = vpop.f32.mrb[0].mxu0
    %v5641 = vadd.f32 %v5543, %v5640
    %v5642 = vpop.f32.mrb[0].mxu0
    %5643 = vdwg.mxu0
    %v5644 = vmul.f32 %v5606, %v5606
    %v5645 = vmul.f32 %v5609, %v5609
    %v5646 = vmul.f32 %v5614, %v5614
    %v5647 = vmul.f32 %v5617, %v5617
    %v5648 = vmul.f32 %v5622, %v5622
    %v5649 = vmul.f32 %v5625, %v5625
    %v5650 = vmul.f32 %v5630, %v5630
    %v5651 = vmul.f32 %v5633, %v5633
    %v5652 = vmul.f32 %v5638, %v5638
    %v5653 = vmul.f32 %v5641, %v5641
    %v5654 = vmul.f32 %v5606, %v5644
    %v5655 = vmul.f32 %v5609, %v5645
    %v5656 = vmul.f32 %v5614, %v5646
    %v5657 = vmul.f32 %v5617, %v5647
    %v5658 = vmul.f32 %v5622, %v5648
    %v5659 = vmul.f32 %v5625, %v5649
    %v5660 = vmul.f32 %v5630, %v5650
    %v5661 = vmul.f32 %v5633, %v5651
    %v5662 = vmul.f32 %v5638, %v5652
    %v5663 = vmul.f32 %v5641, %v5653
    %v5664 = vmul.f32 %v5654, 0.044715
    %v5665 = vmul.f32 %v5655, 0.044715
    %v5666 = vmul.f32 %v5656, 0.044715
    %v5667 = vmul.f32 %v5657, 0.044715
    %v5668 = vmul.f32 %v5658, 0.044715
    %v5669 = vmul.f32 %v5659, 0.044715
    %v5670 = vmul.f32 %v5660, 0.044715
    %v5671 = vmul.f32 %v5661, 0.044715
    %v5672 = vmul.f32 %v5662, 0.044715
    %v5673 = vmul.f32 %v5663, 0.044715
    %v5674 = vadd.f32 %v5606, %v5664
    %v5675 = vadd.f32 %v5609, %v5665
    %v5676 = vadd.f32 %v5614, %v5666
    %v5677 = vadd.f32 %v5617, %v5667
    %v5678 = vadd.f32 %v5622, %v5668
    %v5679 = vadd.f32 %v5625, %v5669
    %v5680 = vadd.f32 %v5630, %v5670
    %v5681 = vadd.f32 %v5633, %v5671
    %v5682 = vadd.f32 %v5638, %v5672
    %v5683 = vadd.f32 %v5641, %v5673
    %v5684 = vmul.f32 %v5674, 0.7978846
    %v5685 = vmul.f32 %v5675, 0.7978846
    %v5686 = vmul.f32 %v5676, 0.7978846
    %v5687 = vmul.f32 %v5677, 0.7978846
    %v5688 = vmul.f32 %v5678, 0.7978846
    %v5689 = vmul.f32 %v5679, 0.7978846
    %v5690 = vmul.f32 %v5680, 0.7978846
    %v5691 = vmul.f32 %v5681, 0.7978846
    %v5692 = vmul.f32 %v5682, 0.7978846
    %v5693 = vmul.f32 %v5683, 0.7978846
    %v5694 = vtanh.pop %v5684
    %v5695 = vtanh.pop %v5685
    %v5696 = vtanh.pop %v5686
    %v5697 = vtanh.pop %v5687
    %v5698 = vtanh.pop %v5688
    %v5699 = vtanh.pop %v5689
    %v5700 = vtanh.pop %v5690
    %v5701 = vtanh.pop %v5691
    %v5702 = vtanh.pop %v5692
    %v5703 = vtanh.pop %v5693
    %v5704 = vadd.f32 %v5694, 1.0
    %v5705 = vadd.f32 %v5695, 1.0
    %v5706 = vadd.f32 %v5696, 1.0
    %v5707 = vadd.f32 %v5697, 1.0
    %v5708 = vadd.f32 %v5698, 1.0
    %v5709 = vadd.f32 %v5699, 1.0
    %v5710 = vadd.f32 %v5700, 1.0
    %v5711 = vadd.f32 %v5701, 1.0
    %v5712 = vadd.f32 %v5702, 1.0
    %v5713 = vadd.f32 %v5703, 1.0
    %v5714 = vmul.f32 %v5704, 0.5
    %v5715 = vmul.f32 %v5705, 0.5
    %v5716 = vmul.f32 %v5706, 0.5
    %v5717 = vmul.f32 %v5707, 0.5
    %v5718 = vmul.f32 %v5708, 0.5
    %v5719 = vmul.f32 %v5709, 0.5
    %v5720 = vmul.f32 %v5710, 0.5
    %v5721 = vmul.f32 %v5711, 0.5
    %v5722 = vmul.f32 %v5712, 0.5
    %v5723 = vmul.f32 %v5713, 0.5
    %v5724 = vmul.f32 %v5606, %v5714
    %v5725 = vmul.f32 %v5609, %v5715
    %v5726 = vmul.f32 %v5614, %v5716
    %v5727 = vmul.f32 %v5617, %v5717
    %v5728 = vmul.f32 %v5622, %v5718
    %v5729 = vmul.f32 %v5625, %v5719
    %v5730 = vmul.f32 %v5630, %v5720
    %v5731 = vmul.f32 %v5633, %v5721
    %v5732 = vmul.f32 %v5638, %v5722
    %v5733 = vmul.f32 %v5641, %v5723
    %v5734 = vpack.c.bf16 %v5725, %v5724
    %v5735 = vpack.c.bf16 %v5727, %v5726
    %v5736 = vpack.c.bf16 %v5729, %v5728
    %v5737 = vpack.c.bf16 %v5731, %v5730
    %v5738 = vpack.c.bf16 %v5733, %v5732
    %s5739 = scalar_lea.vmem %s8, 64
    %v5740 = vld [vmem:[%s5739] sm:$0xf]
    %v5741 = vld [vmem:[%s5739 + $0x4] sm:$0xf]
    %v5742 = vld [vmem:[%s5739 + $0x8] sm:$0xf]
    %v5743 = vld [vmem:[%s5739 + $0xc] sm:$0xf]
    %v5744 = vld [vmem:[%s5739 + $0x10] sm:$0xf]
    %v5745 = vld [vmem:[%s5739 + $0x14] sm:$0xf]
    %v5746 = vld [vmem:[%s5739 + $0x18] sm:$0xf]
    %v5747 = vld [vmem:[%s5739 + $0x1c] sm:$0xf]
    %v5748 = vld [vmem:[%s5739 + $0x20] sm:$0xf]
    %v5749 = vld [vmem:[%s5739 + $0x24] sm:$0xf]
    %v5750 = vld [vmem:[%s5739 + $0x28] sm:$0xf]
    %v5751 = vld [vmem:[%s5739 + $0x2c] sm:$0xf]
    %v5752 = vld [vmem:[%s5739 + $0x30] sm:$0xf]
    %v5753 = vld [vmem:[%s5739 + $0x34] sm:$0xf]
    %v5754 = vld [vmem:[%s5739 + $0x38] sm:$0xf]
    %v5755 = vld [vmem:[%s5739 + $0x3c] sm:$0xf]
    %v5756 = vlaneseq
    %v5757 = vshrl.u32 %v5756, 7
    %v5758 = vsub.s32 5, %v5757
    %v5759 = vrot.slane %v3059, %v5758
    %v5776 = vunpack.c.l.b16 %v5740
    %v5777 = vunpack.c.l.b16 %v5741
    %v5778 = vunpack.c.l.b16 %v5742
    %v5779 = vunpack.c.l.b16 %v5743
    %v5780 = vunpack.c.l.b16 %v5744
    %v5781 = vunpack.c.l.b16 %v5745
    %v5782 = vunpack.c.l.b16 %v5746
    %v5783 = vunpack.c.l.b16 %v5747
    %v5784 = vunpack.c.l.b16 %v5748
    %v5785 = vunpack.c.l.b16 %v5749
    %v5786 = vunpack.c.l.b16 %v5750
    %v5787 = vunpack.c.l.b16 %v5751
    %v5788 = vunpack.c.l.b16 %v5752
    %v5789 = vunpack.c.l.b16 %v5753
    %v5790 = vunpack.c.l.b16 %v5754
    %v5791 = vunpack.c.l.b16 %v5755
    %v5792 = vpack.c.b16 %v5777, %v5776
    %v5793 = vpack.c.b16 %v5779, %v5778
    %v5794 = vpack.c.b16 %v5781, %v5780
    %v5795 = vpack.c.b16 %v5783, %v5782
    %v5796 = vpack.c.b16 %v5785, %v5784
    %v5797 = vpack.c.b16 %v5787, %v5786
    %v5798 = vpack.c.b16 %v5789, %v5788
    %v5799 = vpack.c.b16 %v5791, %v5790
    %5808 = vmatprep.subr.bf16.mxu0 0
    %5809 = vmatpush1.bf16.msra.mxu0 %v5792
    %5810 = vmatprep.subr.bf16.mxu0 0
    %5811 = vmatpush1.bf16.msra.mxu0 %v5793
    %5812 = vmatprep.subr.bf16.mxu0 0
    %5813 = vmatpush1.bf16.msra.mxu0 %v5794
    %5814 = vmatprep.subr.bf16.mxu0 0
    %5815 = vmatpush1.bf16.msra.mxu0 %v5795
    %5816 = vmatprep.subr.bf16.mxu0 0
    %5817 = vmatpush1.bf16.msra.mxu0 %v5796
    %5818 = vmatprep.subr.bf16.mxu0 0
    %5819 = vmatpush1.bf16.msra.mxu0 %v5797
    %5820 = vmatprep.subr.bf16.mxu0 0
    %5821 = vmatpush1.bf16.msra.mxu0 %v5798
    %5822 = vmatprep.subr.bf16.mxu0 0
    %5823 = vmatpush1.bf16.msra.mxu0 %v5799
    %5824 = vmatprep.subr.bf16.mxu0 0
    %5825 = vmatpush1.bf16.msra.mxu0 0
    %5826 = vmatprep.subr.bf16.mxu0 0
    %5827 = vmatpush1.bf16.msra.mxu0 0
    %5828 = vmatprep.subr.bf16.mxu0 0
    %5829 = vmatpush1.bf16.msra.mxu0 0
    %5830 = vmatprep.subr.bf16.mxu0 0
    %5831 = vmatpush1.bf16.msra.mxu0 0
    %5832 = vmatprep.subr.bf16.mxu0 0
    %5833 = vmatpush1.bf16.msra.mxu0 0
    %5834 = vmatprep.subr.bf16.mxu0 0
    %5835 = vmatpush1.bf16.msra.mxu0 0
    %5836 = vmatprep.subr.bf16.mxu0 0
    %5837 = vmatpush1.bf16.msra.mxu0 0
    %5838 = vmatprep.subr.bf16.mxu0 0
    %5839 = vmatpush1.bf16.msra.mxu0 0
    %5840 = vmatprep.mubr.bf16.mxu0 0
    %5841 = vmatmul.mubr.bf16.gmra.mrb[0].mxu0 %v5734
    %v5842 = vpop.f32.mrb[0].mxu0
    %v5843 = vadd.f32 %v5759, %v5842
    %v5844 = vpop.f32.mrb[0].mxu0
    %v5845 = vpop.f32.mrb[0].mxu0
    %v5846 = vpop.f32.mrb[0].mxu0
    %5847 = vmatprep.mubr.bf16.mxu0 0
    %5848 = vmatmul.mubr.bf16.gmra.mrb[0].mxu0 %v5735
    %v5849 = vpop.f32.mrb[0].mxu0
    %v5850 = vpop.f32.mrb[0].mxu0
    %v5851 = vpop.f32.mrb[0].mxu0
    %v5852 = vpop.f32.mrb[0].mxu0
    %5853 = vmatprep.mubr.bf16.mxu0 0
    %5854 = vmatmul.mubr.bf16.gmra.mrb[0].mxu0 %v5736
    %v5855 = vpop.f32.mrb[0].mxu0
    %v5856 = vpop.f32.mrb[0].mxu0
    %v5857 = vpop.f32.mrb[0].mxu0
    %v5858 = vadd.f32 %v5759, %v5857
    %v5859 = vpop.f32.mrb[0].mxu0
    %5860 = vmatprep.mubr.bf16.mxu0 0
    %5861 = vmatmul.mubr.bf16.gmra.mrb[0].mxu0 %v5737
    %v5862 = vpop.f32.mrb[0].mxu0
    %v5863 = vpop.f32.mrb[0].mxu0
    %v5864 = vpop.f32.mrb[0].mxu0
    %v5865 = vpop.f32.mrb[0].mxu0
    %5866 = vmatprep.mubr.bf16.mxu0 0
    %5867 = vmatmul.mubr.bf16.gmra.mrb[0].mxu0 %v5738
    %v5868 = vpop.f32.mrb[0].mxu0
    %v5869 = vpop.f32.mrb[0].mxu0
    %v5870 = vpop.f32.mrb[0].mxu0
    %v5871 = vpop.f32.mrb[0].mxu0
    %5872 = vdwg.mxu0
    %v5873 = vadd.f32 %v5362, %v5843
    %v5874 = vadd.f32 %v5367, %v5858
    %v5876 = vrot.slane %v5874, 7
    %v5878 = vsel %vm188, %v5873, %v5876
    %vm5879 = vcmask 254976
    %v5880 = vsel %vm5879, %v5878, 0.0
    %5881 = vadd.xlane.f32.xlu0 %v5880
    %v5882 = vpop.xlane.xlu0 %5881
    %v5883 = vmul.f32 %v5882, %v257
    %v5884 = vsub.f32 %v5878, %v5883
    %v5885 = vmul.f32 %v5884, %v5884
    %v5886 = vsel %vm5879, %v5885, 0.0
    %5887 = vadd.xlane.f32.xlu0 %v5886
    %v5888 = vpop.xlane.xlu0 %5887
    %v5889 = vmul.f32 %v5888, %v257
    %v5890 = vadd.f32 %v5889, 1e-05
    %v5891 = vrsqrt.pop %v5890
    %v5892 = vmul.f32 %v5884, %v5891
    %v5893 = vlaneseq
    %v5894 = vshrl.u32 %v5893, 7
    %v5895 = vsub.s32 1, %v5894
    %v5896 = vrot.slane %v76, %v5895
    %v5897 = vmul.f32 %v5892, %v5896
    %v5898 = vlaneseq
    %v5899 = vshrl.u32 %v5898, 7
    %v5900 = vsub.s32 2, %v5899
    %v5901 = vrot.slane %v76, %v5900
    %v5902 = vadd.f32 %v5897, %v5901
    %v5903 = vsel %vm5879, %v5902, 0.0
    %5904 = vadd.xlane.f32.xlu0 %v5903
    %v5905 = vpop.xlane.xlu0 %5904
    %v5906 = vmul.f32 %v5905, %v257
    %v5907 = vsub.f32 %v5902, %v5906
    %v5908 = vmul.f32 %v5907, %v5907
    %v5909 = vsel %vm5879, %v5908, 0.0
    %5910 = vadd.xlane.f32.xlu0 %v5909
    %v5911 = vpop.xlane.xlu0 %5910
    %v5912 = vmul.f32 %v5911, %v257
    %v5913 = vadd.f32 %v5912, 1e-05
    %v5914 = vrsqrt.pop %v5913
    %v5915 = vmul.f32 %v5907, %v5914
    %v5916 = vlaneseq
    %v5917 = vshrl.u32 %v5916, 7
    %v5918 = vsub.s32 3, %v5917
    %v5919 = vrot.slane %v76, %v5918
    %v5920 = vmul.f32 %v5915, %v5919
    %v5921 = vlaneseq
    %v5922 = vshrl.u32 %v5921, 7
    %v5923 = vsub.s32 4, %v5922
    %v5924 = vrot.slane %v76, %v5923
    %v5925 = vadd.f32 %v5920, %v5924
    %v5926 = vpack.c.bf16 %v5925, %v5925
    %v5927 = vld [vmem:[%s9] sm:$0xf]
    %v5928 = vld [vmem:[%s9 + $0x4] sm:$0xf]
    %v5929 = vld [vmem:[%s9 + $0x8] sm:$0xf]
    %v5930 = vld [vmem:[%s9 + $0xc] sm:$0xf]
    %v5931 = vlaneseq
    %v5932 = vshrl.u32 %v5931, 7
    %v5933 = vsub.s32 5, %v5932
    %v5934 = vrot.slane %v76, %v5933
    %v5939 = vunpack.c.l.b16 %v5927
    %v5940 = vunpack.c.l.b16 %v5928
    %v5941 = vunpack.c.l.b16 %v5929
    %v5942 = vunpack.c.l.b16 %v5930
    %v5943 = vpack.c.b16 %v5940, %v5939
    %v5944 = vpack.c.b16 %v5942, %v5941
    %v5948 = vsel %vm226, %v5926, 0
    %5950 = vmatprep.subr.bf16.mxu0 0
    %5951 = vmatpush1.bf16.msra.mxu0 %v5943
    %5952 = vmatprep.subr.bf16.mxu0 0
    %5953 = vmatpush1.bf16.msra.mxu0 %v5944
    %5954 = vmatprep.subr.bf16.mxu0 0
    %5955 = vmatpush1.bf16.msra.mxu0 0
    %5956 = vmatprep.subr.bf16.mxu0 0
    %5957 = vmatpush1.bf16.msra.mxu0 0
    %5958 = vmatprep.subr.bf16.mxu0 0
    %5959 = vmatpush1.bf16.msra.mxu0 0
    %5960 = vmatprep.subr.bf16.mxu0 0
    %5961 = vmatpush1.bf16.msra.mxu0 0
    %5962 = vmatprep.subr.bf16.mxu0 0
    %5963 = vmatpush1.bf16.msra.mxu0 0
    %5964 = vmatprep.subr.bf16.mxu0 0
    %5965 = vmatpush1.bf16.msra.mxu0 0
    %5966 = vmatprep.subr.bf16.mxu0 0
    %5967 = vmatpush1.bf16.msra.mxu0 0
    %5968 = vmatprep.subr.bf16.mxu0 0
    %5969 = vmatpush1.bf16.msra.mxu0 0
    %5970 = vmatprep.subr.bf16.mxu0 0
    %5971 = vmatpush1.bf16.msra.mxu0 0
    %5972 = vmatprep.subr.bf16.mxu0 0
    %5973 = vmatpush1.bf16.msra.mxu0 0
    %5974 = vmatprep.subr.bf16.mxu0 0
    %5975 = vmatpush1.bf16.msra.mxu0 0
    %5976 = vmatprep.subr.bf16.mxu0 0
    %5977 = vmatpush1.bf16.msra.mxu0 0
    %5978 = vmatprep.subr.bf16.mxu0 0
    %5979 = vmatpush1.bf16.msra.mxu0 0
    %5980 = vmatprep.subr.bf16.mxu0 0
    %5981 = vmatpush1.bf16.msra.mxu0 0
    %5982 = vmatprep.mubr.bf16.mxu0 0
    %5983 = vmatmul.mubr.bf16.gmra.mrb[0].mxu0 %v5948
    %v5984 = vpop.f32.mrb[0].mxu0
    %v5985 = vadd.f32 %v5934, %v5984
    %v5986 = vpop.f32.mrb[0].mxu0
    %v5987 = vpop.f32.mrb[0].mxu0
    %v5988 = vpop.f32.mrb[0].mxu0
    %5989 = vdwg.mxu0
    %5990 = vst [vmem:[#allocation8] sm:$0x3] %v5985
    // Predicated region
    $region54: #{vanilla_tr_forward.1} parent=1 // pred_check
      _
    $region55: #{vanilla_tr_forward.1} parent=1 // pred_check_branch
      %5992 = sbr.rel (0) target = $region57
    $region56: #{vanilla_tr_forward.1} parent=1 // pred_region
      %s5994 = ssub.s32 32, 32
      %5995 = vsyncadd [#allocation4], %s5994
      %s5997 = sshll.u32 [#allocation8], 4
      %s5998 = int_to_ptr.vmem [resolvable:$true] %s5997
      %6000 = dma.vmem_to_hbm [thread:$0]  %s5998, 32, %s10, [#allocation4]
    $region57: #{vanilla_tr_forward.1} parent=1 // pred_fallthru
      _
    // Predicated region
    $region58: #{vanilla_tr_forward.1} parent=1 // pred_check
      _
    $region59: #{vanilla_tr_forward.1} parent=1 // pred_check_branch
      %6002 = sbr.rel (0) target = $region61
    $region60: #{vanilla_tr_forward.1} parent=1 // pred_region
      %6003 = dma.done [#allocation4], 32
    $region61: #{vanilla_tr_forward.1} parent=1 // pred_fallthru
      _
    %6004 = vsyncpa [#allocation3], 1
    %6005 = vsyncpa [#allocation6], 1
    %6006 = vsyncpa [#allocation4], 1

</llo_original>
